<compile_context>
chip_gen: v5e
topology: v5e:2x2
jax: 0.10.0
libtpu: 0.0.40
codegen_flags: <defaults>
</compile_context>

<pallas_src>
import functools

import jax
import jax.numpy as jnp
from jax import lax
from jax.experimental import pallas as pl
from jax.experimental.pallas import tpu as pltpu


def _round_up(x, m):
    return (x + m - 1) // m * m


# -----------------------------------------------------------------------------
# Fused Conv2d(k=2, s=1, p=2) + ReLU + MaxPool2d(2, 2): one batch tile per step
# -----------------------------------------------------------------------------
def _conv_stage_kernel(z_ref, w_ref, b_ref, o_ref, *, nb, ho2, wo2, cin):
    """All pooled positions of a batch tile flattened into one M dimension.

    z_ref: (nb, Hp2, Wp2, 4*Cin) bf16  space-to-depth of the padded input
    w_ref: (4*Cin, Cout)         bf16  tap-fused conv weight (tap-major rows)
    b_ref: (1, Cout)             f32
    o_ref: (nb, Ho2, Wo2, Cout)        pooled output
    """
    z = z_ref[...]
    m = nb * ho2 * wo2
    c4 = 4 * cin

    # Shifted views of the s2d slab, flattened over (n, p, q) -> M rows.
    views = {}
    for dp in (0, 1):
        for dq in (0, 1):
            v = z[:, dp:dp + ho2, dq:dq + wo2, :]
            views[(dp, dq)] = v.reshape(m, c4)

    w = w_ref[...]
    quad_max = None
    for a in (0, 1):            # pool-window row offset
        for bq in (0, 1):       # pool-window col offset
            if (a, bq) == (0, 0):
                slab = views[(0, 0)]                  # already in tap order
            else:
                parts = []
                for di in (0, 1):                     # conv-tap row offset
                    for dj in (0, 1):                 # conv-tap col offset
                        s, t = a + di, bq + dj
                        blk = (s % 2) * 2 + (t % 2)
                        v = views[(s // 2, t // 2)]
                        parts.append(v[:, blk * cin:(blk + 1) * cin])
                slab = jnp.concatenate(parts, axis=-1)          # (M, 4*Cin)
            acc = jnp.dot(slab, w, preferred_element_type=jnp.float32)
            quad_max = acc if quad_max is None else jnp.maximum(quad_max, acc)

    # max-pool(ReLU(conv + bias)) == ReLU(max-pool(conv) + bias); f32 epilogue.
    y = jnp.maximum(quad_max + b_ref[...], 0.0)
    o_ref[...] = y.reshape(nb, ho2, wo2, -1).astype(o_ref.dtype)


def conv2x2_relu_pool(z, w_flat, b, *, out_dtype=jnp.bfloat16):
    """z: (N, Hp2, Wp2, 4*Cin) space-to-depth'd padded input (bf16).
    w_flat: (4*Cin, Cout) tap-fused weight.  b: (1, Cout) f32.
    Returns the pooled NHWC feature map (N, Hp2-1, Wp2-1, Cout)."""
    N, hp2, wp2, c4 = z.shape
    cin = c4 // 4
    cout = w_flat.shape[-1]
    ho2, wo2 = hp2 - 1, wp2 - 1

    # Images per grid step: keep >= 2 steps (v7x megacore) while growing the
    # flattened dot-M toward ~256 rows when the batch allows it (v6e/v7x MXU).
    nb = max(1, min(pl.cdiv(N, 2), max(1, 256 // (ho2 * wo2))))
    nb = min(nb, N)

    kernel = functools.partial(_conv_stage_kernel,
                               nb=nb, ho2=ho2, wo2=wo2, cin=cin)
    return pl.pallas_call(
        kernel,
        out_shape=jax.ShapeDtypeStruct((N, ho2, wo2, cout), out_dtype),
        grid=(pl.cdiv(N, nb),),
        in_specs=[
            pl.BlockSpec((nb, hp2, wp2, c4), lambda i: (i, 0, 0, 0)),
            pl.BlockSpec((c4, cout), lambda i: (0, 0)),
            pl.BlockSpec((1, cout), lambda i: (0, 0)),
        ],
        out_specs=pl.BlockSpec((nb, ho2, wo2, cout), lambda i: (i, 0, 0, 0)),
        compiler_params=pltpu.CompilerParams(
            dimension_semantics=("parallel",),
            vmem_limit_bytes=32 * 1024 * 1024),
    )(z, w_flat, b)


# -----------------------------------------------------------------------------
# Fused fc1 + ReLU + fc2 kernel (hidden activation stays in VMEM)
# -----------------------------------------------------------------------------
def _mlp_kernel(x_ref, w1_ref, b1_ref, w2_ref, b2_ref, o_ref):
    h = jnp.dot(x_ref[...], w1_ref[...], preferred_element_type=jnp.float32)
    h = jnp.maximum(h + b1_ref[...], 0.0)                       # f32 epilogue
    y = jnp.dot(h.astype(w2_ref.dtype), w2_ref[...],
                preferred_element_type=jnp.float32)
    o_ref[...] = (y + b2_ref[...]).astype(o_ref.dtype)


def mlp_fused(x, w1, b1, w2, b2, *, tile_m=128):
    M, K = x.shape
    hd = w1.shape[1]
    od = w2.shape[1]
    if M <= 8:
        tm = M                      # block equals the full (tiny) M extent
    else:
        # >= 2 M-tiles so both v7x TensorCores get work; tile_m=128 keeps the
        # per-step block set (~7 MB with bf16 x / fc weights) well inside
        # v5e's 16 MiB scoped-VMEM default.
        tm = min(tile_m, _round_up(pl.cdiv(M, 2), 8))
    return pl.pallas_call(
        _mlp_kernel,
        out_shape=jax.ShapeDtypeStruct((M, od), jnp.float32),
        grid=(pl.cdiv(M, tm),),
        in_specs=[
            pl.BlockSpec((tm, K), lambda i: (i, 0)),
            pl.BlockSpec((K, hd), lambda i: (0, 0)),
            pl.BlockSpec((1, hd), lambda i: (0, 0)),
            pl.BlockSpec((hd, od), lambda i: (0, 0)),
            pl.BlockSpec((1, od), lambda i: (0, 0)),
        ],
        out_specs=pl.BlockSpec((tm, od), lambda i: (i, 0)),
        compiler_params=pltpu.CompilerParams(
            dimension_semantics=("parallel",),
            vmem_limit_bytes=32 * 1024 * 1024),
    )(x, w1, b1, w2, b2)


# -----------------------------------------------------------------------------
# Forward pass, parameters, reference
# -----------------------------------------------------------------------------
def _pad_space_to_depth(x):
    """NHWC -> (N, Hp2, Wp2, 4*C): pad by 2 (plus up to even extents) and
    pixel-unshuffle by 2 so every in-kernel access is a unit-stride slice."""
    n, h, w, c = x.shape
    ho2, wo2 = (h + 3) // 2, (w + 3) // 2
    hp2, wp2 = ho2 + 1, wo2 + 1
    xp = jnp.pad(x, ((0, 0),
                     (2, 2 * hp2 - h - 2),
                     (2, 2 * wp2 - w - 2),
                     (0, 0)))
    z = xp.reshape(n, hp2, 2, wp2, 2, c)
    return z.transpose(0, 1, 3, 2, 4, 5).reshape(n, hp2, wp2, 4 * c)


def simple_cnn_forward(x_nchw, p):
    # NCHW -> NHWC once; bf16 activations (dots in bf16, epilogues in f32).
    x = jnp.transpose(x_nchw, (0, 2, 3, 1)).astype(jnp.bfloat16)
    # TODO(synk): fold this pad + space-to-depth relayout into the producing
    # conv kernel's epilogue (emit the 4*Cout-lane z-layout directly) to remove
    # the remaining inter-stage XLA relayout and conv1's 64-lane masked stores.
    h = conv2x2_relu_pool(_pad_space_to_depth(x), p["conv1_w"], p["conv1_b"])
    h = conv2x2_relu_pool(_pad_space_to_depth(h), p["conv2_w"], p["conv2_b"])
    flat = h.reshape(h.shape[0], -1)   # NHWC flatten (perm folded into fc1_w)
    return mlp_fused(flat, p["fc1_w"], p["fc1_b"], p["fc2_w"], p["fc2_b"])


def init_torch_params(key, flat_h, flat_w):
    """Parameters in PyTorch layouts (Conv: OIHW, Linear: (out, in))."""
    flat_dim = 128 * flat_h * flat_w
    ks = jax.random.split(key, 8)
    s = 0.05
    return {
        "conv1_w": s * jax.random.normal(ks[0], (64, 3, 2, 2), jnp.float32),
        "conv1_b": s * jax.random.normal(ks[1], (64,), jnp.float32),
        "conv2_w": s * jax.random.normal(ks[2], (128, 64, 2, 2), jnp.float32),
        "conv2_b": s * jax.random.normal(ks[3], (128,), jnp.float32),
        "fc1_w": s * jax.random.normal(ks[4], (256, flat_dim), jnp.float32),
        "fc1_b": s * jax.random.normal(ks[5], (256,), jnp.float32),
        "fc2_w": s * jax.random.normal(ks[6], (128, 256), jnp.float32),
        "fc2_b": s * jax.random.normal(ks[7], (128,), jnp.float32),
    }


def prepare_params(tp, flat_h, flat_w):
    """One-time layout/dtype transforms, hoisted out of the forward pass."""
    bf16, f32 = jnp.bfloat16, jnp.float32

    def conv_w(w):   # torch OIHW (Cout, Cin, 2, 2) -> tap-major (4*Cin, Cout)
        cout = w.shape[0]
        return jnp.transpose(w, (2, 3, 1, 0)).reshape(-1, cout).astype(bf16)

    # Fold the NCHW Flatten permutation of the PyTorch reference into fc1's
    # weight so the forward pass flattens NHWC directly (no transpose).
    c2 = 128
    w_fc1 = tp["fc1_w"].reshape(256, c2, flat_h, flat_w)
    w_fc1 = w_fc1.transpose(2, 3, 1, 0).reshape(flat_h * flat_w * c2, 256)

    return {
        "conv1_w": conv_w(tp["conv1_w"]),
        "conv1_b": tp["conv1_b"].reshape(1, -1).astype(f32),
        "conv2_w": conv_w(tp["conv2_w"]),
        "conv2_b": tp["conv2_b"].reshape(1, -1).astype(f32),
        "fc1_w": w_fc1.astype(bf16),
        "fc1_b": tp["fc1_b"].reshape(1, -1).astype(f32),
        "fc2_w": jnp.transpose(tp["fc2_w"]).astype(bf16),     # (256, 128)
        "fc2_b": tp["fc2_b"].reshape(1, -1).astype(f32),
    }


def reference_forward(x_nchw, tp):
    """Pure-JAX f32 reference matching the PyTorch module (for validation)."""
    hi = lax.Precision.HIGHEST

    def conv_block(x, w, b):
        y = lax.conv_general_dilated(
            x, w, window_strides=(1, 1), padding=((2, 2), (2, 2)),
            dimension_numbers=("NCHW", "OIHW", "NCHW"), precision=hi)
        y = jnp.maximum(y + b[None, :, None, None], 0.0)
        return lax.reduce_window(y, -jnp.inf, lax.max,
                                 (1, 1, 2, 2), (1, 1, 2, 2), "VALID")

    y = conv_block(x_nchw, tp["conv1_w"], tp["conv1_b"])
    y = conv_block(y, tp["conv2_w"], tp["conv2_b"])
    flat = y.reshape(y.shape[0], -1)                 # NCHW flatten (torch order)
    h = jnp.maximum(jnp.dot(flat, tp["fc1_w"].T, precision=hi) + tp["fc1_b"], 0.0)
    return jnp.dot(h, tp["fc2_w"].T, precision=hi) + tp["fc2_b"]


if __name__ == "__main__":
    key = jax.random.PRNGKey(0)
    k_x, k_p = jax.random.split(key)

    # Small NCHW input (Conv2d(3, ...) fixes channels=3).
    N, C, H, W = 2, 3, 16, 16
    x = jax.random.normal(k_x, (N, C, H, W), jnp.float32)

    # Spatial sizes through the conv stack: conv(+3) -> pool(//2), twice.
    ph1, pw1 = (H + 3) // 2, (W + 3) // 2
    ph2, pw2 = (ph1 + 3) // 2, (pw1 + 3) // 2

    torch_params = init_torch_params(k_p, ph2, pw2)
    params = prepare_params(torch_params, ph2, pw2)

    fwd = jax.jit(simple_cnn_forward)
    out = jax.block_until_ready(fwd(x, params))
    assert out.shape == (N, 128), out.shape
    assert out.dtype == jnp.float32

    ref = jax.block_until_ready(reference_forward(x, torch_params))
    max_err = float(jnp.max(jnp.abs(out - ref)))
    # bf16 MXU operands (per perf review) -> tolerance loosened vs pure-f32.
    assert jnp.allclose(out, ref, atol=2e-2, rtol=2e-2), f"max|err|={max_err}"

    print("KERNEL_OK")
</pallas_src>

<mosaic_0001>
module attributes {stable_mosaic.version = 11 : i64} {
  func.func @_conv_stage_kernel(%arg0: i32, %arg1: memref<1x10x10x12xbf16, #tpu.memory_space<vmem>>, %arg2: memref<12x64xbf16, #tpu.memory_space<vmem>>, %arg3: memref<1x64xf32, #tpu.memory_space<vmem>>, %arg4: memref<1x9x9x64xbf16, #tpu.memory_space<vmem>>) attributes {dimension_semantics = [#tpu.dimension_semantics<parallel>], iteration_bounds = array<i64: 2>, scalar_prefetch = 0 : i64, scratch_operands = 0 : i64, tpu.core_type = #tpu.core_type<tc>, window_params = [{transform_indices = @transform_0, window_bounds = array<i64: 1, 10, 10, 12>}, {pipeline_mode = #tpu.pipeline_mode<synchronous>, transform_indices = @transform_1, window_bounds = array<i64: 12, 64>}, {pipeline_mode = #tpu.pipeline_mode<synchronous>, transform_indices = @transform_2, window_bounds = array<i64: 1, 64>}, {transform_indices = @transform_3, window_bounds = array<i64: 1, 9, 9, 64>}]} {
    %c0 = arith.constant 0 : index
    %c0_0 = arith.constant 0 : index
    %c0_1 = arith.constant 0 : index
    %c0_2 = arith.constant 0 : index
    %0 = vector.load %arg1[%c0, %c0_0, %c0_1, %c0_2] : memref<1x10x10x12xbf16, #tpu.memory_space<vmem>>, vector<1x10x10x12xbf16>
    %1 = vector.extract_strided_slice %0 {offsets = [0, 0, 0, 0], sizes = [1, 9, 9, 12], strides = [1, 1, 1, 1]} : vector<1x10x10x12xbf16> to vector<1x9x9x12xbf16>
    %2 = vector.shape_cast %1 : vector<1x9x9x12xbf16> to vector<81x12xbf16>
    %3 = vector.extract_strided_slice %0 {offsets = [0, 0, 1, 0], sizes = [1, 9, 9, 12], strides = [1, 1, 1, 1]} : vector<1x10x10x12xbf16> to vector<1x9x9x12xbf16>
    %4 = vector.shape_cast %3 : vector<1x9x9x12xbf16> to vector<81x12xbf16>
    %5 = vector.extract_strided_slice %0 {offsets = [0, 1, 0, 0], sizes = [1, 9, 9, 12], strides = [1, 1, 1, 1]} : vector<1x10x10x12xbf16> to vector<1x9x9x12xbf16>
    %6 = vector.shape_cast %5 : vector<1x9x9x12xbf16> to vector<81x12xbf16>
    %7 = vector.extract_strided_slice %0 {offsets = [0, 1, 1, 0], sizes = [1, 9, 9, 12], strides = [1, 1, 1, 1]} : vector<1x10x10x12xbf16> to vector<1x9x9x12xbf16>
    %8 = vector.shape_cast %7 : vector<1x9x9x12xbf16> to vector<81x12xbf16>
    %c0_3 = arith.constant 0 : index
    %c0_4 = arith.constant 0 : index
    %9 = vector.load %arg2[%c0_3, %c0_4] : memref<12x64xbf16, #tpu.memory_space<vmem>>, vector<12x64xbf16>
    %cst = arith.constant dense<0.000000e+00> : vector<81x64xf32>
    %10 = tpu.matmul %2, %9, %cst {dimension_numbers = #tpu.dot_dimension_numbers<[1], [0], [0], [1], [0, 0, 1, 1], [], []>} : vector<81x12xbf16>, vector<12x64xbf16>, vector<81x64xf32> -> vector<81x64xf32>
    %11 = vector.extract_strided_slice %2 {offsets = [0, 3], sizes = [81, 3], strides = [1, 1]} : vector<81x12xbf16> to vector<81x3xbf16>
    %12 = vector.extract_strided_slice %4 {offsets = [0, 0], sizes = [81, 3], strides = [1, 1]} : vector<81x12xbf16> to vector<81x3xbf16>
    %13 = vector.extract_strided_slice %2 {offsets = [0, 9], sizes = [81, 3], strides = [1, 1]} : vector<81x12xbf16> to vector<81x3xbf16>
    %14 = vector.extract_strided_slice %4 {offsets = [0, 6], sizes = [81, 3], strides = [1, 1]} : vector<81x12xbf16> to vector<81x3xbf16>
    %15 = tpu.concatenate %11, %12, %13, %14 in 1 : vector<81x3xbf16>, vector<81x3xbf16>, vector<81x3xbf16>, vector<81x3xbf16> -> vector<81x12xbf16>
    %cst_5 = arith.constant dense<0.000000e+00> : vector<81x64xf32>
    %16 = tpu.matmul %15, %9, %cst_5 {dimension_numbers = #tpu.dot_dimension_numbers<[1], [0], [0], [1], [0, 0, 1, 1], [], []>} : vector<81x12xbf16>, vector<12x64xbf16>, vector<81x64xf32> -> vector<81x64xf32>
    %17 = arith.maximumf %10, %16 : vector<81x64xf32>
    %18 = vector.extract_strided_slice %2 {offsets = [0, 6], sizes = [81, 3], strides = [1, 1]} : vector<81x12xbf16> to vector<81x3xbf16>
    %19 = vector.extract_strided_slice %2 {offsets = [0, 9], sizes = [81, 3], strides = [1, 1]} : vector<81x12xbf16> to vector<81x3xbf16>
    %20 = vector.extract_strided_slice %6 {offsets = [0, 0], sizes = [81, 3], strides = [1, 1]} : vector<81x12xbf16> to vector<81x3xbf16>
    %21 = vector.extract_strided_slice %6 {offsets = [0, 3], sizes = [81, 3], strides = [1, 1]} : vector<81x12xbf16> to vector<81x3xbf16>
    %22 = tpu.concatenate %18, %19, %20, %21 in 1 : vector<81x3xbf16>, vector<81x3xbf16>, vector<81x3xbf16>, vector<81x3xbf16> -> vector<81x12xbf16>
    %cst_6 = arith.constant dense<0.000000e+00> : vector<81x64xf32>
    %23 = tpu.matmul %22, %9, %cst_6 {dimension_numbers = #tpu.dot_dimension_numbers<[1], [0], [0], [1], [0, 0, 1, 1], [], []>} : vector<81x12xbf16>, vector<12x64xbf16>, vector<81x64xf32> -> vector<81x64xf32>
    %24 = arith.maximumf %17, %23 : vector<81x64xf32>
    %25 = vector.extract_strided_slice %2 {offsets = [0, 9], sizes = [81, 3], strides = [1, 1]} : vector<81x12xbf16> to vector<81x3xbf16>
    %26 = vector.extract_strided_slice %4 {offsets = [0, 6], sizes = [81, 3], strides = [1, 1]} : vector<81x12xbf16> to vector<81x3xbf16>
    %27 = vector.extract_strided_slice %6 {offsets = [0, 3], sizes = [81, 3], strides = [1, 1]} : vector<81x12xbf16> to vector<81x3xbf16>
    %28 = vector.extract_strided_slice %8 {offsets = [0, 0], sizes = [81, 3], strides = [1, 1]} : vector<81x12xbf16> to vector<81x3xbf16>
    %29 = tpu.concatenate %25, %26, %27, %28 in 1 : vector<81x3xbf16>, vector<81x3xbf16>, vector<81x3xbf16>, vector<81x3xbf16> -> vector<81x12xbf16>
    %cst_7 = arith.constant dense<0.000000e+00> : vector<81x64xf32>
    %30 = tpu.matmul %29, %9, %cst_7 {dimension_numbers = #tpu.dot_dimension_numbers<[1], [0], [0], [1], [0, 0, 1, 1], [], []>} : vector<81x12xbf16>, vector<12x64xbf16>, vector<81x64xf32> -> vector<81x64xf32>
    %31 = arith.maximumf %24, %30 : vector<81x64xf32>
    %c0_8 = arith.constant 0 : index
    %c0_9 = arith.constant 0 : index
    %32 = vector.load %arg3[%c0_8, %c0_9] : memref<1x64xf32, #tpu.memory_space<vmem>>, vector<1x64xf32>
    %33 = vector.broadcast %32 : vector<1x64xf32> to vector<81x64xf32>
    %34 = arith.addf %31, %33 : vector<81x64xf32>
    %cst_10 = arith.constant 0.000000e+00 : f32
    %35 = vector.broadcast %cst_10 : f32 to vector<81x64xf32>
    %36 = arith.maximumf %34, %35 : vector<81x64xf32>
    %37 = vector.shape_cast %36 : vector<81x64xf32> to vector<1x9x9x64xf32>
    %38 = arith.truncf %37 : vector<1x9x9x64xf32> to vector<1x9x9x64xbf16>
    %c0_11 = arith.constant 0 : index
    %c0_12 = arith.constant 0 : index
    %c0_13 = arith.constant 0 : index
    %c0_14 = arith.constant 0 : index
    %39 = vector.load %arg4[%c0_11, %c0_12, %c0_13, %c0_14] : memref<1x9x9x64xbf16, #tpu.memory_space<vmem>>, vector<1x9x9x64xbf16>
    tpu.vector_store %arg4[%c0_11, %c0_12, %c0_13, %c0_14], %38 {strides = array<i32>} : memref<1x9x9x64xbf16, #tpu.memory_space<vmem>>, vector<1x9x9x64xbf16>,
    return
  }
  func.func @transform_0(%arg0: i32) -> (i32, i32, i32, i32) {
    %c0_i32 = arith.constant 0 : i32
    %c0_i32_0 = arith.constant 0 : i32
    %c0_i32_1 = arith.constant 0 : i32
    %c0_i32_2 = arith.constant 0 : i32
    return %arg0, %c0_i32, %c0_i32_0, %c0_i32_1 : i32, i32, i32, i32
  }
  func.func @transform_1(%arg0: i32) -> (i32, i32) {
    %c0_i32 = arith.constant 0 : i32
    %c0_i32_0 = arith.constant 0 : i32
    %c0_i32_1 = arith.constant 0 : i32
    return %c0_i32, %c0_i32_0 : i32, i32
  }
  func.func @transform_2(%arg0: i32) -> (i32, i32) {
    %c0_i32 = arith.constant 0 : i32
    %c0_i32_0 = arith.constant 0 : i32
    %c0_i32_1 = arith.constant 0 : i32
    return %c0_i32, %c0_i32_0 : i32, i32
  }
  func.func @transform_3(%arg0: i32) -> (i32, i32, i32, i32) {
    %c0_i32 = arith.constant 0 : i32
    %c0_i32_0 = arith.constant 0 : i32
    %c0_i32_1 = arith.constant 0 : i32
    %c0_i32_2 = arith.constant 0 : i32
    return %arg0, %c0_i32, %c0_i32_0, %c0_i32_1 : i32, i32, i32, i32
  }
}

module attributes {stable_mosaic.version = 11 : i64} {
  func.func @_conv_stage_kernel(%arg0: i32, %arg1: memref<1x7x7x256xbf16, #tpu.memory_space<vmem>>, %arg2: memref<256x128xbf16, #tpu.memory_space<vmem>>, %arg3: memref<1x128xf32, #tpu.memory_space<vmem>>, %arg4: memref<1x6x6x128xbf16, #tpu.memory_space<vmem>>) attributes {dimension_semantics = [#tpu.dimension_semantics<parallel>], iteration_bounds = array<i64: 2>, scalar_prefetch = 0 : i64, scratch_operands = 0 : i64, tpu.core_type = #tpu.core_type<tc>, window_params = [{transform_indices = @transform_0, window_bounds = array<i64: 1, 7, 7, 256>}, {pipeline_mode = #tpu.pipeline_mode<synchronous>, transform_indices = @transform_1, window_bounds = array<i64: 256, 128>}, {pipeline_mode = #tpu.pipeline_mode<synchronous>, transform_indices = @transform_2, window_bounds = array<i64: 1, 128>}, {transform_indices = @transform_3, window_bounds = array<i64: 1, 6, 6, 128>}]} {
    %c0 = arith.constant 0 : index
    %c0_0 = arith.constant 0 : index
    %c0_1 = arith.constant 0 : index
    %c0_2 = arith.constant 0 : index
    %0 = vector.load %arg1[%c0, %c0_0, %c0_1, %c0_2] : memref<1x7x7x256xbf16, #tpu.memory_space<vmem>>, vector<1x7x7x256xbf16>
    %1 = vector.extract_strided_slice %0 {offsets = [0, 0, 0, 0], sizes = [1, 6, 6, 256], strides = [1, 1, 1, 1]} : vector<1x7x7x256xbf16> to vector<1x6x6x256xbf16>
    %2 = vector.shape_cast %1 : vector<1x6x6x256xbf16> to vector<36x256xbf16>
    %3 = vector.extract_strided_slice %0 {offsets = [0, 0, 1, 0], sizes = [1, 6, 6, 256], strides = [1, 1, 1, 1]} : vector<1x7x7x256xbf16> to vector<1x6x6x256xbf16>
    %4 = vector.shape_cast %3 : vector<1x6x6x256xbf16> to vector<36x256xbf16>
    %5 = vector.extract_strided_slice %0 {offsets = [0, 1, 0, 0], sizes = [1, 6, 6, 256], strides = [1, 1, 1, 1]} : vector<1x7x7x256xbf16> to vector<1x6x6x256xbf16>
    %6 = vector.shape_cast %5 : vector<1x6x6x256xbf16> to vector<36x256xbf16>
    %7 = vector.extract_strided_slice %0 {offsets = [0, 1, 1, 0], sizes = [1, 6, 6, 256], strides = [1, 1, 1, 1]} : vector<1x7x7x256xbf16> to vector<1x6x6x256xbf16>
    %8 = vector.shape_cast %7 : vector<1x6x6x256xbf16> to vector<36x256xbf16>
    %c0_3 = arith.constant 0 : index
    %c0_4 = arith.constant 0 : index
    %9 = vector.load %arg2[%c0_3, %c0_4] : memref<256x128xbf16, #tpu.memory_space<vmem>>, vector<256x128xbf16>
    %cst = arith.constant dense<0.000000e+00> : vector<36x128xf32>
    %10 = tpu.matmul %2, %9, %cst {dimension_numbers = #tpu.dot_dimension_numbers<[1], [0], [0], [1], [0, 0, 1, 1], [], []>} : vector<36x256xbf16>, vector<256x128xbf16>, vector<36x128xf32> -> vector<36x128xf32>
    %11 = vector.extract_strided_slice %2 {offsets = [0, 64], sizes = [36, 64], strides = [1, 1]} : vector<36x256xbf16> to vector<36x64xbf16>
    %12 = vector.extract_strided_slice %4 {offsets = [0, 0], sizes = [36, 64], strides = [1, 1]} : vector<36x256xbf16> to vector<36x64xbf16>
    %13 = vector.extract_strided_slice %2 {offsets = [0, 192], sizes = [36, 64], strides = [1, 1]} : vector<36x256xbf16> to vector<36x64xbf16>
    %14 = vector.extract_strided_slice %4 {offsets = [0, 128], sizes = [36, 64], strides = [1, 1]} : vector<36x256xbf16> to vector<36x64xbf16>
    %15 = tpu.concatenate %11, %12, %13, %14 in 1 : vector<36x64xbf16>, vector<36x64xbf16>, vector<36x64xbf16>, vector<36x64xbf16> -> vector<36x256xbf16>
    %cst_5 = arith.constant dense<0.000000e+00> : vector<36x128xf32>
    %16 = tpu.matmul %15, %9, %cst_5 {dimension_numbers = #tpu.dot_dimension_numbers<[1], [0], [0], [1], [0, 0, 1, 1], [], []>} : vector<36x256xbf16>, vector<256x128xbf16>, vector<36x128xf32> -> vector<36x128xf32>
    %17 = arith.maximumf %10, %16 : vector<36x128xf32>
    %18 = vector.extract_strided_slice %2 {offsets = [0, 128], sizes = [36, 64], strides = [1, 1]} : vector<36x256xbf16> to vector<36x64xbf16>
    %19 = vector.extract_strided_slice %2 {offsets = [0, 192], sizes = [36, 64], strides = [1, 1]} : vector<36x256xbf16> to vector<36x64xbf16>
    %20 = vector.extract_strided_slice %6 {offsets = [0, 0], sizes = [36, 64], strides = [1, 1]} : vector<36x256xbf16> to vector<36x64xbf16>
    %21 = vector.extract_strided_slice %6 {offsets = [0, 64], sizes = [36, 64], strides = [1, 1]} : vector<36x256xbf16> to vector<36x64xbf16>
    %22 = tpu.concatenate %18, %19, %20, %21 in 1 : vector<36x64xbf16>, vector<36x64xbf16>, vector<36x64xbf16>, vector<36x64xbf16> -> vector<36x256xbf16>
    %cst_6 = arith.constant dense<0.000000e+00> : vector<36x128xf32>
    %23 = tpu.matmul %22, %9, %cst_6 {dimension_numbers = #tpu.dot_dimension_numbers<[1], [0], [0], [1], [0, 0, 1, 1], [], []>} : vector<36x256xbf16>, vector<256x128xbf16>, vector<36x128xf32> -> vector<36x128xf32>
    %24 = arith.maximumf %17, %23 : vector<36x128xf32>
    %25 = vector.extract_strided_slice %2 {offsets = [0, 192], sizes = [36, 64], strides = [1, 1]} : vector<36x256xbf16> to vector<36x64xbf16>
    %26 = vector.extract_strided_slice %4 {offsets = [0, 128], sizes = [36, 64], strides = [1, 1]} : vector<36x256xbf16> to vector<36x64xbf16>
    %27 = vector.extract_strided_slice %6 {offsets = [0, 64], sizes = [36, 64], strides = [1, 1]} : vector<36x256xbf16> to vector<36x64xbf16>
    %28 = vector.extract_strided_slice %8 {offsets = [0, 0], sizes = [36, 64], strides = [1, 1]} : vector<36x256xbf16> to vector<36x64xbf16>
    %29 = tpu.concatenate %25, %26, %27, %28 in 1 : vector<36x64xbf16>, vector<36x64xbf16>, vector<36x64xbf16>, vector<36x64xbf16> -> vector<36x256xbf16>
    %cst_7 = arith.constant dense<0.000000e+00> : vector<36x128xf32>
    %30 = tpu.matmul %29, %9, %cst_7 {dimension_numbers = #tpu.dot_dimension_numbers<[1], [0], [0], [1], [0, 0, 1, 1], [], []>} : vector<36x256xbf16>, vector<256x128xbf16>, vector<36x128xf32> -> vector<36x128xf32>
    %31 = arith.maximumf %24, %30 : vector<36x128xf32>
    %c0_8 = arith.constant 0 : index
    %c0_9 = arith.constant 0 : index
    %32 = vector.load %arg3[%c0_8, %c0_9] : memref<1x128xf32, #tpu.memory_space<vmem>>, vector<1x128xf32>
    %33 = vector.broadcast %32 : vector<1x128xf32> to vector<36x128xf32>
    %34 = arith.addf %31, %33 : vector<36x128xf32>
    %cst_10 = arith.constant 0.000000e+00 : f32
    %35 = vector.broadcast %cst_10 : f32 to vector<36x128xf32>
    %36 = arith.maximumf %34, %35 : vector<36x128xf32>
    %37 = vector.shape_cast %36 : vector<36x128xf32> to vector<1x6x6x128xf32>
    %38 = arith.truncf %37 : vector<1x6x6x128xf32> to vector<1x6x6x128xbf16>
    %c0_11 = arith.constant 0 : index
    %c0_12 = arith.constant 0 : index
    %c0_13 = arith.constant 0 : index
    %c0_14 = arith.constant 0 : index
    %39 = vector.load %arg4[%c0_11, %c0_12, %c0_13, %c0_14] : memref<1x6x6x128xbf16, #tpu.memory_space<vmem>>, vector<1x6x6x128xbf16>
    tpu.vector_store %arg4[%c0_11, %c0_12, %c0_13, %c0_14], %38 {strides = array<i32>} : memref<1x6x6x128xbf16, #tpu.memory_space<vmem>>, vector<1x6x6x128xbf16>,
    return
  }
  func.func @transform_0(%arg0: i32) -> (i32, i32, i32, i32) {
    %c0_i32 = arith.constant 0 : i32
    %c0_i32_0 = arith.constant 0 : i32
    %c0_i32_1 = arith.constant 0 : i32
    %c0_i32_2 = arith.constant 0 : i32
    return %arg0, %c0_i32, %c0_i32_0, %c0_i32_1 : i32, i32, i32, i32
  }
  func.func @transform_1(%arg0: i32) -> (i32, i32) {
    %c0_i32 = arith.constant 0 : i32
    %c0_i32_0 = arith.constant 0 : i32
    %c0_i32_1 = arith.constant 0 : i32
    return %c0_i32, %c0_i32_0 : i32, i32
  }
  func.func @transform_2(%arg0: i32) -> (i32, i32) {
    %c0_i32 = arith.constant 0 : i32
    %c0_i32_0 = arith.constant 0 : i32
    %c0_i32_1 = arith.constant 0 : i32
    return %c0_i32, %c0_i32_0 : i32, i32
  }
  func.func @transform_3(%arg0: i32) -> (i32, i32, i32, i32) {
    %c0_i32 = arith.constant 0 : i32
    %c0_i32_0 = arith.constant 0 : i32
    %c0_i32_1 = arith.constant 0 : i32
    %c0_i32_2 = arith.constant 0 : i32
    return %arg0, %c0_i32, %c0_i32_0, %c0_i32_1 : i32, i32, i32, i32
  }
}

module attributes {stable_mosaic.version = 11 : i64} {
  func.func @_mlp_kernel(%arg0: i32, %arg1: memref<2x4608xbf16, #tpu.memory_space<vmem>>, %arg2: memref<4608x256xbf16, #tpu.memory_space<vmem>>, %arg3: memref<1x256xf32, #tpu.memory_space<vmem>>, %arg4: memref<256x128xbf16, #tpu.memory_space<vmem>>, %arg5: memref<1x128xf32, #tpu.memory_space<vmem>>, %arg6: memref<2x128xf32, #tpu.memory_space<vmem>>) attributes {dimension_semantics = [#tpu.dimension_semantics<parallel>], iteration_bounds = array<i64: 1>, scalar_prefetch = 0 : i64, scratch_operands = 0 : i64, tpu.core_type = #tpu.core_type<tc>, window_params = [{transform_indices = @transform_0, window_bounds = array<i64: 2, 4608>}, {pipeline_mode = #tpu.pipeline_mode<synchronous>, transform_indices = @transform_1, window_bounds = array<i64: 4608, 256>}, {pipeline_mode = #tpu.pipeline_mode<synchronous>, transform_indices = @transform_2, window_bounds = array<i64: 1, 256>}, {pipeline_mode = #tpu.pipeline_mode<synchronous>, transform_indices = @transform_3, window_bounds = array<i64: 256, 128>}, {pipeline_mode = #tpu.pipeline_mode<synchronous>, transform_indices = @transform_4, window_bounds = array<i64: 1, 128>}, {transform_indices = @transform_5, window_bounds = array<i64: 2, 128>}]} {
    %c0 = arith.constant 0 : index
    %c0_0 = arith.constant 0 : index
    %0 = vector.load %arg1[%c0, %c0_0] : memref<2x4608xbf16, #tpu.memory_space<vmem>>, vector<2x4608xbf16>
    %c0_1 = arith.constant 0 : index
    %c0_2 = arith.constant 0 : index
    %1 = vector.load %arg2[%c0_1, %c0_2] : memref<4608x256xbf16, #tpu.memory_space<vmem>>, vector<4608x256xbf16>
    %cst = arith.constant dense<0.000000e+00> : vector<2x256xf32>
    %2 = tpu.matmul %0, %1, %cst {dimension_numbers = #tpu.dot_dimension_numbers<[1], [0], [0], [1], [0, 0, 1, 1], [], []>} : vector<2x4608xbf16>, vector<4608x256xbf16>, vector<2x256xf32> -> vector<2x256xf32>
    %c0_3 = arith.constant 0 : index
    %c0_4 = arith.constant 0 : index
    %3 = vector.load %arg3[%c0_3, %c0_4] : memref<1x256xf32, #tpu.memory_space<vmem>>, vector<1x256xf32>
    %4 = vector.broadcast %3 : vector<1x256xf32> to vector<2x256xf32>
    %5 = arith.addf %2, %4 : vector<2x256xf32>
    %cst_5 = arith.constant 0.000000e+00 : f32
    %6 = vector.broadcast %cst_5 : f32 to vector<2x256xf32>
    %7 = arith.maximumf %5, %6 : vector<2x256xf32>
    %8 = arith.truncf %7 : vector<2x256xf32> to vector<2x256xbf16>
    %c0_6 = arith.constant 0 : index
    %c0_7 = arith.constant 0 : index
    %9 = vector.load %arg4[%c0_6, %c0_7] : memref<256x128xbf16, #tpu.memory_space<vmem>>, vector<256x128xbf16>
    %cst_8 = arith.constant dense<0.000000e+00> : vector<2x128xf32>
    %10 = tpu.matmul %8, %9, %cst_8 {dimension_numbers = #tpu.dot_dimension_numbers<[1], [0], [0], [1], [0, 0, 1, 1], [], []>} : vector<2x256xbf16>, vector<256x128xbf16>, vector<2x128xf32> -> vector<2x128xf32>
    %c0_9 = arith.constant 0 : index
    %c0_10 = arith.constant 0 : index
    %11 = vector.load %arg5[%c0_9, %c0_10] : memref<1x128xf32, #tpu.memory_space<vmem>>, vector<1x128xf32>
    %12 = vector.broadcast %11 : vector<1x128xf32> to vector<2x128xf32>
    %13 = arith.addf %10, %12 : vector<2x128xf32>
    %c0_11 = arith.constant 0 : index
    %c0_12 = arith.constant 0 : index
    %14 = vector.load %arg6[%c0_11, %c0_12] : memref<2x128xf32, #tpu.memory_space<vmem>>, vector<2x128xf32>
    tpu.vector_store %arg6[%c0_11, %c0_12], %13 {strides = array<i32>} : memref<2x128xf32, #tpu.memory_space<vmem>>, vector<2x128xf32>,
    return
  }
  func.func @transform_0(%arg0: i32) -> (i32, i32) {
    %c0_i32 = arith.constant 0 : i32
    %c0_i32_0 = arith.constant 0 : i32
    return %arg0, %c0_i32 : i32, i32
  }
  func.func @transform_1(%arg0: i32) -> (i32, i32) {
    %c0_i32 = arith.constant 0 : i32
    %c0_i32_0 = arith.constant 0 : i32
    %c0_i32_1 = arith.constant 0 : i32
    return %c0_i32, %c0_i32_0 : i32, i32
  }
  func.func @transform_2(%arg0: i32) -> (i32, i32) {
    %c0_i32 = arith.constant 0 : i32
    %c0_i32_0 = arith.constant 0 : i32
    %c0_i32_1 = arith.constant 0 : i32
    return %c0_i32, %c0_i32_0 : i32, i32
  }
  func.func @transform_3(%arg0: i32) -> (i32, i32) {
    %c0_i32 = arith.constant 0 : i32
    %c0_i32_0 = arith.constant 0 : i32
    %c0_i32_1 = arith.constant 0 : i32
    return %c0_i32, %c0_i32_0 : i32, i32
  }
  func.func @transform_4(%arg0: i32) -> (i32, i32) {
    %c0_i32 = arith.constant 0 : i32
    %c0_i32_0 = arith.constant 0 : i32
    %c0_i32_1 = arith.constant 0 : i32
    return %c0_i32, %c0_i32_0 : i32, i32
  }
  func.func @transform_5(%arg0: i32) -> (i32, i32) {
    %c0_i32 = arith.constant 0 : i32
    %c0_i32_0 = arith.constant 0 : i32
    return %arg0, %c0_i32 : i32, i32
  }
}

</mosaic_0001>

<llo_original>
// kernel: simple_cnn_forward.4
$region0: #{simple_cnn_forward.4}
  #allocation0 [shape = 'u32[]', space=smem, size = 0x4, offset = 0x4, fixed_abs, tag = 'smem constant byte address 0x4 - core index']
  #allocation1 [shape = 'u32[72,128]{1,0:T(1,128)}', space=vmem, size = 0x9000, scoped, tag = 'internal scratch']
  %s0 = inlined_call_operand.vmem [shape: bf16[2,7,7,256], index: 0, kind: input, shape index: {}]
  %s1 = inlined_call_operand.hbm [shape: bf16[256,128], index: 1, kind: input, shape index: {}]
  %s2 = inlined_call_operand.hbm [shape: f32[1,128], index: 2, kind: input, shape index: {}]
  %s3 = inlined_call_operand.vmem [shape: bf16[2,6,6,128], index: 3, kind: output, shape index: {}]
  %s4 = sld [smem:[#allocation0]]
  $region53: #{simple_cnn_forward.4} parent=0
    _
  %s6 = ssub.s32 1, %s4
  %s7 = scalar_select 0, %s6, %s4
  $region1: #{simple_cnn_forward.4} parent=0
    #allocation2 [shape = 'u8[65536]{0}', space=vmem, size = 0x10000, scoped, tag = 'input window, operand 1, single buffered']
    #allocation3 [shape = 's32[2]{0}', space=sflag, size = 0x8, scoped, tag = 'scoped memory for simple_cnn_forward.4']
    #allocation4 [shape = 'u8[512]{0}', space=vmem, size = 0x400, scoped, tag = 'input window, operand 2, single buffered']
    #allocation5 [shape = 's32[1]{0}', space=sflag, size = 0x4, scoped, tag = 'scoped memory for simple_cnn_forward.4']
    %8 = vsyncpa [#allocation3], 0
    %9 = vsyncpa [#allocation5], 0
    loop: start=0, step=1, limit=4
    $region2: #{simple_cnn_forward.4} parent=1 // loop_pre_header
      _
    $region3: #{simple_cnn_forward.4} parent=1 // loop_header
      %s11 = sphi 0, %s15
      %p12 = scmp.ge.s32.totalorder %s11, 4
      %s21 = sphi 0, %s23
      %s24 = sphi 0, %s21
      %s25 = sphi 0, %s24
      %s41 = sphi 0, %s25
      %s45 = sphi 0, %s45
      %s47 = sphi 0, %s45
      %s48 = sphi 0, %s47
      %s62 = sphi 0, %s48
      %s66 = sphi 0, %s66
      %s68 = sphi 0, %s66
      %s69 = sphi 0, %s68
      %s83 = sphi 0, %s69
      %s89 = sphi 0, %s91
      %s92 = sphi 0, %s89
      %s93 = sphi 0, %s92
      %s109 = sphi 0, %s93
    $region4: #{simple_cnn_forward.4} parent=1 // loop_header_branch
      %14 = sbr.rel (%p12) target = $region8
    $region5: #{simple_cnn_forward.4} parent=1 // loop_body
      %s16 = ssub.s32 %s11, 1
      %s17 = ssub.s32 %s11, 2
      %s18 = sadd.s32 %s11, 1
      %s19 = ssub.s32 %s11, %s18
      %p20 = scmp.eq.s32.totalorder %s19, 0
      %s22 = sadd.s32 %s21, 1
      %s23 = scalar_select %p20, %s21, %s22
      %p26 = pneg %p20
      %p27 = scmp.eq.s32.totalorder %s11, 1
      %p28 = por %p26, %p27
      %p29 = scmp.ne.s32.totalorder %s21, %s24
      %p30 = scmp.eq.s32.totalorder %s11, 0
      %p31 = por %p29, %p30
      %p32 = scmp.ne.s32.totalorder %s21, %s24
      %p33 = scmp.eq.s32.totalorder %s16, 1
      %p34 = por %p32, %p33
      %p35 = scmp.ne.s32.totalorder %s24, %s25
      %p36 = scmp.eq.s32.totalorder %s16, 0
      %p37 = por %p35, %p36
      %p38 = scmp.ne.s32.totalorder %s24, %s25
      %p39 = scmp.eq.s32.totalorder %s17, 1
      %p40 = por %p38, %p39
      %p42 = scmp.ne.s32.totalorder %s25, %s41
      %p43 = scmp.eq.s32.totalorder %s17, 0
      %p44 = por %p42, %p43
      %s46 = sadd.s32 %s45, 1
      %p49 = scmp.eq.s32.totalorder %s11, 1
      %p50 = scmp.ne.s32.totalorder %s45, %s47
      %p51 = scmp.eq.s32.totalorder %s11, 0
      %p52 = por %p50, %p51
      %p53 = scmp.ne.s32.totalorder %s45, %s47
      %p54 = scmp.eq.s32.totalorder %s16, 1
      %p55 = por %p53, %p54
      %p56 = scmp.ne.s32.totalorder %s47, %s48
      %p57 = scmp.eq.s32.totalorder %s16, 0
      %p58 = por %p56, %p57
      %p59 = scmp.ne.s32.totalorder %s47, %s48
      %p60 = scmp.eq.s32.totalorder %s17, 1
      %p61 = por %p59, %p60
      %p63 = scmp.ne.s32.totalorder %s48, %s62
      %p64 = scmp.eq.s32.totalorder %s17, 0
      %p65 = por %p63, %p64
      %s67 = sadd.s32 %s66, 1
      %p70 = scmp.eq.s32.totalorder %s11, 1
      %p71 = scmp.ne.s32.totalorder %s66, %s68
      %p72 = scmp.eq.s32.totalorder %s11, 0
      %p73 = por %p71, %p72
      %p74 = scmp.ne.s32.totalorder %s66, %s68
      %p75 = scmp.eq.s32.totalorder %s16, 1
      %p76 = por %p74, %p75
      %p77 = scmp.ne.s32.totalorder %s68, %s69
      %p78 = scmp.eq.s32.totalorder %s16, 0
      %p79 = por %p77, %p78
      %p80 = scmp.ne.s32.totalorder %s68, %s69
      %p81 = scmp.eq.s32.totalorder %s17, 1
      %p82 = por %p80, %p81
      %p84 = scmp.ne.s32.totalorder %s69, %s83
      %p85 = scmp.eq.s32.totalorder %s17, 0
      %p86 = por %p84, %p85
      %s87 = ssub.s32 %s11, %s18
      %p88 = scmp.eq.s32.totalorder %s87, 0
      %s90 = sadd.s32 %s89, 1
      %s91 = scalar_select %p88, %s89, %s90
      %p94 = pneg %p88
      %p95 = scmp.eq.s32.totalorder %s11, 1
      %p96 = por %p94, %p95
      %p97 = scmp.ne.s32.totalorder %s89, %s92
      %p98 = scmp.eq.s32.totalorder %s11, 0
      %p99 = por %p97, %p98
      %p100 = scmp.ne.s32.totalorder %s89, %s92
      %p101 = scmp.eq.s32.totalorder %s16, 1
      %p102 = por %p100, %p101
      %p103 = scmp.ne.s32.totalorder %s92, %s93
      %p104 = scmp.eq.s32.totalorder %s16, 0
      %p105 = por %p103, %p104
      %p106 = scmp.ne.s32.totalorder %s92, %s93
      %p107 = scmp.eq.s32.totalorder %s17, 1
      %p108 = por %p106, %p107
      %p110 = scmp.ne.s32.totalorder %s93, %s109
      %p111 = scmp.eq.s32.totalorder %s17, 0
      %p112 = por %p110, %p111
      %p113 = scmp.le.s32.totalorder 1, %s11
      %p114 = scmp.lt.s32.totalorder %s11, 3
      %p115 = pnand %p113, %p114
      %p116 = pneg %p115
      // Predicated region
      $region9: #{simple_cnn_forward.4} parent=5 // pred_check
        _
      $region10: #{simple_cnn_forward.4} parent=5 // pred_check_branch
        %118 = sbr.rel (%p115) target = $region12
      $region11: #{simple_cnn_forward.4} parent=5 // pred_region
        %s119 = ssub.s32 %s11, 1
        // Predicated region
        $region13: #{simple_cnn_forward.4} parent=11 // pred_check
          %p120 = pneg %p58
        $region14: #{simple_cnn_forward.4} parent=11 // pred_check_branch
          %122 = sbr.rel (%p120) target = $region16
        $region15: #{simple_cnn_forward.4} parent=11 // pred_region
          %124 = vsyncadd [#allocation3], 0
          %s125 = sshll.u32 %s1, 4
          %s126 = int_to_ptr.hbm [resolvable:$true] %s125
          %s127 = sshll.u32 [#allocation2], 4
          %s128 = int_to_ptr.vmem [resolvable:$true] %s127
          %133 = dma.hbm_to_vmem [thread:$0]  %s126, 2048, %s128, [#allocation3], 64, 64, 4
        $region16: #{simple_cnn_forward.4} parent=11 // pred_fallthru
          _
        // Predicated region
        $region17: #{simple_cnn_forward.4} parent=11 // pred_check
          %p134 = pneg %p79
        $region18: #{simple_cnn_forward.4} parent=11 // pred_check_branch
          %136 = sbr.rel (%p134) target = $region20
        $region19: #{simple_cnn_forward.4} parent=11 // pred_region
          %138 = vsyncadd [#allocation5], 0
          %s140 = sshll.u32 %s2, 4
          %s141 = int_to_ptr.hbm [resolvable:$true] %s140
          %s142 = sshll.u32 [#allocation4], 4
          %s143 = int_to_ptr.vmem [resolvable:$true] %s142
          %145 = dma.hbm_to_vmem [thread:$0]  %s141, 16, %s143, [#allocation5]
        $region20: #{simple_cnn_forward.4} parent=11 // pred_fallthru
          _
      $region12: #{simple_cnn_forward.4} parent=5 // pred_fallthru
        _
      %p146 = scmp.lt.s32.totalorder %s11, 2
      // Predicated region
      $region21: #{simple_cnn_forward.4} parent=5 // pred_check
        %p147 = pneg %p146
      $region22: #{simple_cnn_forward.4} parent=5 // pred_check_branch
        %149 = sbr.rel (%p147) target = $region24
      $region23: #{simple_cnn_forward.4} parent=5 // pred_region
        // Predicated region
        $region25: #{simple_cnn_forward.4} parent=23 // pred_check
          %p150 = pneg %p31
        $region26: #{simple_cnn_forward.4} parent=23 // pred_check_branch
          %152 = sbr.rel (%p150) target = $region28
        $region27: #{simple_cnn_forward.4} parent=23 // pred_region
          %p153 = scmp.lt.s32.totalorder %s11, 1
          %s154 = scalar_select %p153, %s11, 1
          %s155 = smul.addr %s154, 14
          %s156 = smul.addr %s155, 4
          %s157 = scalar_lea.vmem %s0, %s156
        $region28: #{simple_cnn_forward.4} parent=23 // pred_fallthru
          _
      $region24: #{simple_cnn_forward.4} parent=5 // pred_fallthru
        _
      %p158 = scmp.le.s32.totalorder 1, %s11
      %p159 = scmp.lt.s32.totalorder %s11, 3
      %p160 = pnand %p158, %p159
      %p161 = pneg %p160
      // Predicated region
      $region29: #{simple_cnn_forward.4} parent=5 // pred_check
        _
      $region30: #{simple_cnn_forward.4} parent=5 // pred_check_branch
        %163 = sbr.rel (%p160) target = $region32
      $region31: #{simple_cnn_forward.4} parent=5 // pred_region
        %s164 = ssub.s32 %s11, 1
        // Predicated region
        $region33: #{simple_cnn_forward.4} parent=31 // pred_check
          %p165 = pneg %p58
        $region34: #{simple_cnn_forward.4} parent=31 // pred_check_branch
          %167 = sbr.rel (%p165) target = $region36
        $region35: #{simple_cnn_forward.4} parent=31 // pred_region
          %169 = dma.done [#allocation3], 2048
        $region36: #{simple_cnn_forward.4} parent=31 // pred_fallthru
          _
        // Predicated region
        $region37: #{simple_cnn_forward.4} parent=31 // pred_check
          %p170 = pneg %p79
        $region38: #{simple_cnn_forward.4} parent=31 // pred_check_branch
          %172 = sbr.rel (%p170) target = $region40
        $region39: #{simple_cnn_forward.4} parent=31 // pred_region
          %174 = dma.done [#allocation5], 16
        $region40: #{simple_cnn_forward.4} parent=31 // pred_fallthru
          _
        %p175 = scmp.lt.s32.totalorder %s16, 1
        %s176 = scalar_select %p175, %s16, 1
        %s177 = smul.addr %s176, 14
        %s178 = smul.addr %s177, 4
        %s179 = scalar_lea.vmem %s0, %s178
        %p180 = pneg %p37
        %p181 = pneg %p34
        %p182 = pneg %p58
        %p183 = pneg %p55
        %p184 = pneg %p79
        %p185 = pneg %p76
        %p186 = pneg %p105
        %p187 = pneg %p102
        %p188 = scmp.lt.s32.totalorder %s16, 1
        %s189 = scalar_select %p188, %s16, 1
        %s190 = smul.addr %s189, 6
        %s191 = smul.addr %s190, 4
        %s192 = scalar_lea.vmem %s3, %s191
        %p193 = scmp.lt.s32.totalorder %s16, 1
        %s194 = scalar_select %p193, %s16, 1
        %s195 = smul.addr %s194, 14
        %s196 = smul.addr %s195, 4
        %s197 = scalar_lea.vmem %s0, %s196
        %p198 = scmp.lt.s32.totalorder %s16, 1
        %s199 = scalar_select %p198, %s16, 1
        %s200 = smul.addr %s199, 6
        %s201 = smul.addr %s200, 4
        %s202 = scalar_lea.vmem %s3, %s201
        %v203 = vld [vmem:[%s197] sm:$0xff]
        %v204 = vld [vmem:[%s197 + $0x8] sm:$0xff]
        %v205 = vld [vmem:[%s197 + $0x10] sm:$0xff]
        %v206 = vld [vmem:[%s197 + $0x18] sm:$0xff]
        %v207 = vld [vmem:[%s197 + $0x20] sm:$0xff]
        %v208 = vld [vmem:[%s197 + $0x28] sm:$0xff]
        %v209 = vld [vmem:[%s197 + $0x30] sm:$0xff]
        %v216 = vrot.slane %v203, 3
        %v217 = vrot.slane %v204, 3
        %v218 = vrot.slane %v205, 3
        %v219 = vrot.slane %v206, 3
        %v220 = vrot.slane %v207, 3
        %v221 = vrot.slane %v208, 3
        %vm222 = vcmask 1040384
        %v225 = vsel %vm222, %v203, %v216
        %vm226 = vcmask 1041409
        %v227 = vsel %vm226, %v203, %v216
        %v229 = vrot.slane %v227, 1
        %vm230 = vcmask 1042434
        %v231 = vsel %vm230, %v203, %v216
        %v233 = vrot.slane %v231, 2
        %v236 = vsel %vm222, %v204, %v217
        %v237 = vsel %vm226, %v204, %v217
        %v239 = vrot.slane %v237, 1
        %v240 = vsel %vm230, %v204, %v217
        %v242 = vrot.slane %v240, 2
        %v245 = vsel %vm222, %v205, %v218
        %v246 = vsel %vm226, %v205, %v218
        %v248 = vrot.slane %v246, 1
        %v249 = vsel %vm230, %v205, %v218
        %v251 = vrot.slane %v249, 2
        %v254 = vsel %vm222, %v206, %v219
        %v255 = vsel %vm226, %v206, %v219
        %v257 = vrot.slane %v255, 1
        %v258 = vsel %vm230, %v206, %v219
        %v260 = vrot.slane %v258, 2
        %v263 = vsel %vm222, %v207, %v220
        %v264 = vsel %vm226, %v207, %v220
        %v266 = vrot.slane %v264, 1
        %v267 = vsel %vm230, %v207, %v220
        %v269 = vrot.slane %v267, 2
        %v272 = vsel %vm222, %v208, %v221
        %v273 = vsel %vm226, %v208, %v221
        %v275 = vrot.slane %v273, 1
        %v276 = vsel %vm230, %v208, %v221
        %v278 = vrot.slane %v276, 2
        %vm279 = vcmask 1043459
        %v280 = vsel %vm279, %v203, %v216
        %v282 = vrot.slane %v280, 3
        %v283 = vsel %vm279, %v204, %v217
        %v285 = vrot.slane %v283, 3
        %v286 = vsel %vm279, %v205, %v218
        %v288 = vrot.slane %v286, 3
        %v289 = vsel %vm279, %v206, %v219
        %v291 = vrot.slane %v289, 3
        %v292 = vsel %vm279, %v207, %v220
        %v294 = vrot.slane %v292, 3
        %v295 = vsel %vm279, %v208, %v221
        %v297 = vrot.slane %v295, 3
        %vm298 = vsmask.f32 256
        %vm299 = vsmask.f32 1284
        %vm300 = vmor %vm298, %vm299
        %vm301 = vsmask.f32 2312
        %vm302 = vmor %vm300, %vm301
        %vm303 = vsmask.f32 3340
        %vm304 = vmor %vm302, %vm303
        %vm305 = vsmask.f32 4368
        %vm306 = vmor %vm304, %vm305
        %vm307 = vsmask.f32 5396
        %vm308 = vmor %vm306, %vm307
        %vm309 = vsmask.f32 6424
        %vm310 = vmor %vm308, %vm309
        %vm311 = vsmask.f32 7452
        %vm312 = vmor %vm310, %vm311
        %v313 = vshrl.u32 %v225, 16
        %v315 = vrot.slane %v313, 7
        %v316 = vrot.slane %v315, 1
        %v318 = vshll.u32 %v229, 16
        %v320 = vsel %vm312, %v316, %v318
        %v321 = vshrl.u32 %v229, 16
        %v323 = vrot.slane %v321, 7
        %v324 = vrot.slane %v323, 1
        %v326 = vshll.u32 %v233, 16
        %v328 = vsel %vm312, %v324, %v326
        %v329 = vshrl.u32 %v233, 16
        %v331 = vrot.slane %v329, 7
        %v332 = vrot.slane %v331, 1
        %v334 = vshll.u32 %v282, 16
        %v336 = vsel %vm312, %v332, %v334
        %v337 = vshrl.u32 %v236, 16
        %v339 = vrot.slane %v337, 7
        %v340 = vrot.slane %v339, 1
        %v342 = vshll.u32 %v239, 16
        %v344 = vsel %vm312, %v340, %v342
        %v345 = vshrl.u32 %v239, 16
        %v347 = vrot.slane %v345, 7
        %v348 = vrot.slane %v347, 1
        %v350 = vshll.u32 %v242, 16
        %v352 = vsel %vm312, %v348, %v350
        %v353 = vshrl.u32 %v242, 16
        %v355 = vrot.slane %v353, 7
        %v356 = vrot.slane %v355, 1
        %v358 = vshll.u32 %v285, 16
        %v360 = vsel %vm312, %v356, %v358
        %v361 = vshrl.u32 %v245, 16
        %v363 = vrot.slane %v361, 7
        %v364 = vrot.slane %v363, 1
        %v366 = vshll.u32 %v248, 16
        %v368 = vsel %vm312, %v364, %v366
        %v369 = vshrl.u32 %v248, 16
        %v371 = vrot.slane %v369, 7
        %v372 = vrot.slane %v371, 1
        %v374 = vshll.u32 %v251, 16
        %v376 = vsel %vm312, %v372, %v374
        %v377 = vshrl.u32 %v251, 16
        %v379 = vrot.slane %v377, 7
        %v380 = vrot.slane %v379, 1
        %v382 = vshll.u32 %v288, 16
        %v384 = vsel %vm312, %v380, %v382
        %v385 = vshrl.u32 %v254, 16
        %v387 = vrot.slane %v385, 7
        %v388 = vrot.slane %v387, 1
        %v390 = vshll.u32 %v257, 16
        %v392 = vsel %vm312, %v388, %v390
        %v393 = vshrl.u32 %v257, 16
        %v395 = vrot.slane %v393, 7
        %v396 = vrot.slane %v395, 1
        %v398 = vshll.u32 %v260, 16
        %v400 = vsel %vm312, %v396, %v398
        %v401 = vshrl.u32 %v260, 16
        %v403 = vrot.slane %v401, 7
        %v404 = vrot.slane %v403, 1
        %v406 = vshll.u32 %v291, 16
        %v408 = vsel %vm312, %v404, %v406
        %v409 = vshrl.u32 %v263, 16
        %v411 = vrot.slane %v409, 7
        %v412 = vrot.slane %v411, 1
        %v414 = vshll.u32 %v266, 16
        %v416 = vsel %vm312, %v412, %v414
        %v417 = vshrl.u32 %v266, 16
        %v419 = vrot.slane %v417, 7
        %v420 = vrot.slane %v419, 1
        %v422 = vshll.u32 %v269, 16
        %v424 = vsel %vm312, %v420, %v422
        %v425 = vshrl.u32 %v269, 16
        %v427 = vrot.slane %v425, 7
        %v428 = vrot.slane %v427, 1
        %v430 = vshll.u32 %v294, 16
        %v432 = vsel %vm312, %v428, %v430
        %v433 = vshrl.u32 %v272, 16
        %v435 = vrot.slane %v433, 7
        %v436 = vrot.slane %v435, 1
        %v438 = vshll.u32 %v275, 16
        %v440 = vsel %vm312, %v436, %v438
        %v441 = vshrl.u32 %v275, 16
        %v443 = vrot.slane %v441, 7
        %v444 = vrot.slane %v443, 1
        %v446 = vshll.u32 %v278, 16
        %v448 = vsel %vm312, %v444, %v446
        %v449 = vshrl.u32 %v278, 16
        %v451 = vrot.slane %v449, 7
        %v452 = vrot.slane %v451, 1
        %v454 = vshll.u32 %v297, 16
        %v456 = vsel %vm312, %v452, %v454
        %v458 = vrot.slane %v209, 3
        %v461 = vsel %vm222, %v209, %v458
        %v462 = vsel %vm226, %v209, %v458
        %v464 = vrot.slane %v462, 1
        %v465 = vsel %vm230, %v209, %v458
        %v467 = vrot.slane %v465, 2
        %v468 = vsel %vm279, %v209, %v458
        %v470 = vrot.slane %v468, 3
        %v471 = vshrl.u32 %v461, 16
        %v473 = vrot.slane %v471, 7
        %v474 = vrot.slane %v473, 1
        %v476 = vshll.u32 %v464, 16
        %v478 = vsel %vm312, %v474, %v476
        %v479 = vshrl.u32 %v464, 16
        %v481 = vrot.slane %v479, 7
        %v482 = vrot.slane %v481, 1
        %v484 = vshll.u32 %v467, 16
        %v486 = vsel %vm312, %v482, %v484
        %v487 = vshrl.u32 %v467, 16
        %v489 = vrot.slane %v487, 7
        %v490 = vrot.slane %v489, 1
        %v492 = vshll.u32 %v470, 16
        %v494 = vsel %vm312, %v490, %v492
        %v495 = vld [vmem:[#allocation2] sm:$0xf]
        %v496 = vld [vmem:[#allocation2 + $0x4] sm:$0xf]
        %v497 = vld [vmem:[#allocation2 + $0x8] sm:$0xf]
        %v498 = vld [vmem:[#allocation2 + $0xc] sm:$0xf]
        %v499 = vld [vmem:[#allocation2 + $0x10] sm:$0xf]
        %v500 = vld [vmem:[#allocation2 + $0x14] sm:$0xf]
        %v501 = vld [vmem:[#allocation2 + $0x18] sm:$0xf]
        %v502 = vld [vmem:[#allocation2 + $0x1c] sm:$0xf]
        %v503 = vld [vmem:[#allocation2 + $0x20] sm:$0xf]
        %v504 = vld [vmem:[#allocation2 + $0x24] sm:$0xf]
        %v505 = vld [vmem:[#allocation2 + $0x28] sm:$0xf]
        %v506 = vld [vmem:[#allocation2 + $0x2c] sm:$0xf]
        %v507 = vld [vmem:[#allocation2 + $0x30] sm:$0xf]
        %v508 = vld [vmem:[#allocation2 + $0x34] sm:$0xf]
        %v509 = vld [vmem:[#allocation2 + $0x38] sm:$0xf]
        %v510 = vld [vmem:[#allocation2 + $0x3c] sm:$0xf]
        %v511 = vld [vmem:[#allocation2 + $0x40] sm:$0xf]
        %v512 = vld [vmem:[#allocation2 + $0x44] sm:$0xf]
        %v513 = vld [vmem:[#allocation2 + $0x48] sm:$0xf]
        %v514 = vld [vmem:[#allocation2 + $0x4c] sm:$0xf]
        %v515 = vld [vmem:[#allocation2 + $0x50] sm:$0xf]
        %v516 = vld [vmem:[#allocation2 + $0x54] sm:$0xf]
        %v517 = vld [vmem:[#allocation2 + $0x58] sm:$0xf]
        %v518 = vld [vmem:[#allocation2 + $0x5c] sm:$0xf]
        %v519 = vld [vmem:[#allocation2 + $0x60] sm:$0xf]
        %v520 = vld [vmem:[#allocation2 + $0x64] sm:$0xf]
        %v521 = vld [vmem:[#allocation2 + $0x68] sm:$0xf]
        %v522 = vld [vmem:[#allocation2 + $0x6c] sm:$0xf]
        %v523 = vld [vmem:[#allocation2 + $0x70] sm:$0xf]
        %v524 = vld [vmem:[#allocation2 + $0x74] sm:$0xf]
        %v525 = vld [vmem:[#allocation2 + $0x78] sm:$0xf]
        %v526 = vld [vmem:[#allocation2 + $0x7c] sm:$0xf]
        %527 = vst [vmem:[#allocation1] ss:$9 sm:$0xff] %v225
        %s528 = scalar_lea.vmem [#allocation1], 1
        %529 = vst [vmem:[%s528] ss:$9 sm:$0xff] %v229
        %s530 = scalar_lea.vmem [#allocation1], 2
        %531 = vst [vmem:[%s530] ss:$9 sm:$0xff] %v233
        %s532 = scalar_lea.vmem [#allocation1], 3
        %533 = vst [vmem:[%s532] ss:$9 sm:$0xff] %v236
        %s534 = scalar_lea.vmem [#allocation1], 4
        %535 = vst [vmem:[%s534] ss:$9 sm:$0xff] %v239
        %s536 = scalar_lea.vmem [#allocation1], 5
        %537 = vst [vmem:[%s536] ss:$9 sm:$0xff] %v242
        %s538 = scalar_lea.vmem [#allocation1], 6
        %539 = vst [vmem:[%s538] ss:$9 sm:$0xff] %v245
        %s540 = scalar_lea.vmem [#allocation1], 7
        %541 = vst [vmem:[%s540] ss:$9 sm:$0xff] %v248
        %v542 = vld [vmem:[#allocation1] sm:$0xff]
        %v543 = vld [vmem:[#allocation1 + $0x9] sm:$0xff]
        %544 = vst [vmem:[#allocation1] ss:$9 sm:$0xff] %v251
        %545 = vst [vmem:[%s528] ss:$9 sm:$0xff] %v254
        %546 = vst [vmem:[%s530] ss:$9 sm:$0xff] %v257
        %547 = vst [vmem:[%s532] ss:$9 sm:$0xff] %v260
        %548 = vst [vmem:[%s534] ss:$9 sm:$0xff] %v263
        %549 = vst [vmem:[%s536] ss:$9 sm:$0xff] %v266
        %550 = vst [vmem:[%s538] ss:$9 sm:$0xff] %v269
        %551 = vst [vmem:[%s540] ss:$9 sm:$0xff] %v272
        %v552 = vld [vmem:[#allocation1] sm:$0xff]
        %v553 = vld [vmem:[#allocation1 + $0x9] sm:$0xff]
        %554 = vst [vmem:[#allocation1] ss:$9 sm:$0xff] %v275
        %555 = vst [vmem:[%s528] ss:$9 sm:$0xff] %v278
        %v556 = vld [vmem:[#allocation1] sm:$0xff]
        %v557 = vld [vmem:[#allocation1 + $0x9] sm:$0xff]
        %v596 = vunpack.c.l.b16 %v495
        %v597 = vunpack.c.l.b16 %v496
        %v598 = vunpack.c.l.b16 %v497
        %v599 = vunpack.c.l.b16 %v498
        %v600 = vunpack.c.l.b16 %v499
        %v601 = vunpack.c.l.b16 %v500
        %v602 = vunpack.c.l.b16 %v501
        %v603 = vunpack.c.l.b16 %v502
        %v604 = vunpack.c.l.b16 %v503
        %v605 = vunpack.c.l.b16 %v504
        %v606 = vunpack.c.l.b16 %v505
        %v607 = vunpack.c.l.b16 %v506
        %v608 = vunpack.c.l.b16 %v507
        %v609 = vunpack.c.l.b16 %v508
        %v610 = vunpack.c.l.b16 %v509
        %v611 = vunpack.c.l.b16 %v510
        %v612 = vunpack.c.l.b16 %v511
        %v613 = vunpack.c.l.b16 %v512
        %v614 = vunpack.c.l.b16 %v513
        %v615 = vunpack.c.l.b16 %v514
        %v616 = vunpack.c.l.b16 %v515
        %v617 = vunpack.c.l.b16 %v516
        %v618 = vunpack.c.l.b16 %v517
        %v619 = vunpack.c.l.b16 %v518
        %v620 = vunpack.c.l.b16 %v519
        %v621 = vunpack.c.l.b16 %v520
        %v622 = vunpack.c.l.b16 %v521
        %v623 = vunpack.c.l.b16 %v522
        %v624 = vunpack.c.l.b16 %v523
        %v625 = vunpack.c.l.b16 %v524
        %v626 = vunpack.c.l.b16 %v525
        %v627 = vunpack.c.l.b16 %v526
        %v628 = vpack.c.b16 %v597, %v596
        %v629 = vpack.c.b16 %v599, %v598
        %v630 = vpack.c.b16 %v601, %v600
        %v631 = vpack.c.b16 %v603, %v602
        %v632 = vpack.c.b16 %v605, %v604
        %v633 = vpack.c.b16 %v607, %v606
        %v634 = vpack.c.b16 %v609, %v608
        %v635 = vpack.c.b16 %v611, %v610
        %v636 = vpack.c.b16 %v613, %v612
        %v637 = vpack.c.b16 %v615, %v614
        %v638 = vpack.c.b16 %v617, %v616
        %v639 = vpack.c.b16 %v619, %v618
        %v640 = vpack.c.b16 %v621, %v620
        %v641 = vpack.c.b16 %v623, %v622
        %v642 = vpack.c.b16 %v625, %v624
        %v643 = vpack.c.b16 %v627, %v626
        %660 = vmatpush.bf16.msra.mxu0 %v635
        %661 = vmatpush.bf16.msra.mxu0 %v634
        %662 = vmatpush.bf16.msra.mxu0 %v633
        %663 = vmatpush.bf16.msra.mxu0 %v632
        %664 = vmatpush.bf16.msra.mxu0 %v631
        %665 = vmatpush.bf16.msra.mxu0 %v630
        %666 = vmatpush.bf16.msra.mxu0 %v629
        %667 = vmatpush.bf16.msra.mxu0 %v628
        %668 = vmatmul.bf16.gmra.mxu0 %v542
        %v669 = vpop.f32.mrf.mxu0
        %v670 = vadd.f32 0.0, %v669
        %v671 = vpop.f32.mrf.mxu0
        %v672 = vadd.f32 0.0, %v671
        %673 = vmatmul.bf16.gmra.mxu0 %v552
        %v674 = vpop.f32.mrf.mxu0
        %v675 = vadd.f32 0.0, %v674
        %v676 = vpop.f32.mrf.mxu0
        %v677 = vadd.f32 0.0, %v676
        %678 = vmatmul.bf16.gmra.mxu0 %v556
        %v679 = vpop.f32.mrf.mxu0
        %v680 = vadd.f32 0.0, %v679
        %v681 = vpop.f32.mrf.mxu0
        %682 = vdwg.mxu0
        %683 = vmatpush.bf16.msra.mxu0 %v643
        %684 = vmatpush.bf16.msra.mxu0 %v642
        %685 = vmatpush.bf16.msra.mxu0 %v641
        %686 = vmatpush.bf16.msra.mxu0 %v640
        %687 = vmatpush.bf16.msra.mxu0 %v639
        %688 = vmatpush.bf16.msra.mxu0 %v638
        %689 = vmatpush.bf16.msra.mxu0 %v637
        %690 = vmatpush.bf16.msra.mxu0 %v636
        %691 = vmatmul.bf16.gmra.mxu0 %v543
        %v692 = vpop.f32.mrf.mxu0
        %v693 = vadd.f32 %v670, %v692
        %v694 = vpop.f32.mrf.mxu0
        %v695 = vadd.f32 %v672, %v694
        %696 = vmatmul.bf16.gmra.mxu0 %v553
        %v697 = vpop.f32.mrf.mxu0
        %v698 = vadd.f32 %v675, %v697
        %v699 = vpop.f32.mrf.mxu0
        %v700 = vadd.f32 %v677, %v699
        %701 = vmatmul.bf16.gmra.mxu0 %v557
        %v702 = vpop.f32.mrf.mxu0
        %v703 = vadd.f32 %v680, %v702
        %v704 = vpop.f32.mrf.mxu0
        %705 = vdwg.mxu0
        %706 = vst [vmem:[#allocation1] ss:$9 sm:$0xff] %v225
        %s707 = scalar_lea.vmem [#allocation1], 1
        %708 = vst [vmem:[%s707] ss:$9 sm:$0xff] %v229
        %s709 = scalar_lea.vmem [#allocation1], 2
        %710 = vst [vmem:[%s709] ss:$9 sm:$0xff] %v233
        %s711 = scalar_lea.vmem [#allocation1], 3
        %712 = vst [vmem:[%s711] ss:$9 sm:$0xff] %v236
        %s713 = scalar_lea.vmem [#allocation1], 4
        %714 = vst [vmem:[%s713] ss:$9 sm:$0xff] %v239
        %s715 = scalar_lea.vmem [#allocation1], 5
        %716 = vst [vmem:[%s715] ss:$9 sm:$0xff] %v242
        %s717 = scalar_lea.vmem [#allocation1], 6
        %718 = vst [vmem:[%s717] ss:$9 sm:$0xff] %v245
        %s719 = scalar_lea.vmem [#allocation1], 7
        %720 = vst [vmem:[%s719] ss:$9 sm:$0xff] %v248
        %v721 = vld [vmem:[#allocation1] sm:$0xff]
        %723 = vst [vmem:[#allocation1] ss:$9 sm:$0xff] %v251
        %724 = vst [vmem:[%s707] ss:$9 sm:$0xff] %v254
        %725 = vst [vmem:[%s709] ss:$9 sm:$0xff] %v257
        %726 = vst [vmem:[%s711] ss:$9 sm:$0xff] %v260
        %727 = vst [vmem:[%s713] ss:$9 sm:$0xff] %v263
        %728 = vst [vmem:[%s715] ss:$9 sm:$0xff] %v266
        %729 = vst [vmem:[%s717] ss:$9 sm:$0xff] %v269
        %730 = vst [vmem:[%s719] ss:$9 sm:$0xff] %v272
        %v731 = vld [vmem:[#allocation1] sm:$0xff]
        %733 = vst [vmem:[#allocation1] ss:$9 sm:$0xff] %v275
        %734 = vst [vmem:[%s707] ss:$9 sm:$0xff] %v278
        %v735 = vld [vmem:[#allocation1] sm:$0xff]
        %737 = vrot.lane.b32.xlu0 %v721, 64
        %v738 = vpop.permute.xlu0 %737
        %739 = vrot.lane.b32.xlu0 %v731, 64
        %v740 = vpop.permute.xlu0 %739
        %741 = vrot.lane.b32.xlu0 %v735, 64
        %v742 = vpop.permute.xlu0 %741
        %744 = vst [vmem:[#allocation1] ss:$9 sm:$0xff] %v320
        %s746 = scalar_lea.vmem [#allocation1], 1
        %747 = vst [vmem:[%s746] ss:$9 sm:$0xff] %v328
        %s749 = scalar_lea.vmem [#allocation1], 2
        %750 = vst [vmem:[%s749] ss:$9 sm:$0xff] %v336
        %s752 = scalar_lea.vmem [#allocation1], 3
        %753 = vst [vmem:[%s752] ss:$9 sm:$0xff] %v344
        %s755 = scalar_lea.vmem [#allocation1], 4
        %756 = vst [vmem:[%s755] ss:$9 sm:$0xff] %v352
        %s758 = scalar_lea.vmem [#allocation1], 5
        %759 = vst [vmem:[%s758] ss:$9 sm:$0xff] %v360
        %s761 = scalar_lea.vmem [#allocation1], 6
        %762 = vst [vmem:[%s761] ss:$9 sm:$0xff] %v368
        %s764 = scalar_lea.vmem [#allocation1], 7
        %765 = vst [vmem:[%s764] ss:$9 sm:$0xff] %v376
        %v766 = vld [vmem:[#allocation1] sm:$0xff]
        %769 = vst [vmem:[#allocation1] ss:$9 sm:$0xff] %v384
        %771 = vst [vmem:[%s746] ss:$9 sm:$0xff] %v392
        %773 = vst [vmem:[%s749] ss:$9 sm:$0xff] %v400
        %775 = vst [vmem:[%s752] ss:$9 sm:$0xff] %v408
        %777 = vst [vmem:[%s755] ss:$9 sm:$0xff] %v416
        %779 = vst [vmem:[%s758] ss:$9 sm:$0xff] %v424
        %781 = vst [vmem:[%s761] ss:$9 sm:$0xff] %v432
        %783 = vst [vmem:[%s764] ss:$9 sm:$0xff] %v440
        %v784 = vld [vmem:[#allocation1] sm:$0xff]
        %787 = vst [vmem:[#allocation1] ss:$9 sm:$0xff] %v448
        %789 = vst [vmem:[%s746] ss:$9 sm:$0xff] %v456
        %v790 = vld [vmem:[#allocation1] sm:$0xff]
        %792 = vrot.lane.b32.xlu0 %v766, 64
        %v793 = vpop.permute.xlu0 %792
        %794 = vrot.lane.b32.xlu0 %v784, 64
        %v795 = vpop.permute.xlu0 %794
        %796 = vrot.lane.b32.xlu0 %v790, 64
        %v797 = vpop.permute.xlu0 %796
        %798 = vst [vmem:[#allocation1] ss:$9 sm:$0xff] %v225
        %s799 = scalar_lea.vmem [#allocation1], 1
        %800 = vst [vmem:[%s799] ss:$9 sm:$0xff] %v229
        %s801 = scalar_lea.vmem [#allocation1], 2
        %802 = vst [vmem:[%s801] ss:$9 sm:$0xff] %v233
        %s803 = scalar_lea.vmem [#allocation1], 3
        %804 = vst [vmem:[%s803] ss:$9 sm:$0xff] %v236
        %s805 = scalar_lea.vmem [#allocation1], 4
        %806 = vst [vmem:[%s805] ss:$9 sm:$0xff] %v239
        %s807 = scalar_lea.vmem [#allocation1], 5
        %808 = vst [vmem:[%s807] ss:$9 sm:$0xff] %v242
        %s809 = scalar_lea.vmem [#allocation1], 6
        %810 = vst [vmem:[%s809] ss:$9 sm:$0xff] %v245
        %s811 = scalar_lea.vmem [#allocation1], 7
        %812 = vst [vmem:[%s811] ss:$9 sm:$0xff] %v248
        %v813 = vld [vmem:[#allocation1 + $0x9] sm:$0xff]
        %815 = vst [vmem:[#allocation1] ss:$9 sm:$0xff] %v251
        %816 = vst [vmem:[%s799] ss:$9 sm:$0xff] %v254
        %817 = vst [vmem:[%s801] ss:$9 sm:$0xff] %v257
        %818 = vst [vmem:[%s803] ss:$9 sm:$0xff] %v260
        %819 = vst [vmem:[%s805] ss:$9 sm:$0xff] %v263
        %820 = vst [vmem:[%s807] ss:$9 sm:$0xff] %v266
        %821 = vst [vmem:[%s809] ss:$9 sm:$0xff] %v269
        %822 = vst [vmem:[%s811] ss:$9 sm:$0xff] %v272
        %v823 = vld [vmem:[#allocation1 + $0x9] sm:$0xff]
        %825 = vst [vmem:[#allocation1] ss:$9 sm:$0xff] %v275
        %826 = vst [vmem:[%s799] ss:$9 sm:$0xff] %v278
        %v827 = vld [vmem:[#allocation1 + $0x9] sm:$0xff]
        %829 = vrot.lane.b32.xlu0 %v813, 64
        %v830 = vpop.permute.xlu0 %829
        %831 = vrot.lane.b32.xlu0 %v823, 64
        %v832 = vpop.permute.xlu0 %831
        %833 = vrot.lane.b32.xlu0 %v827, 64
        %v834 = vpop.permute.xlu0 %833
        %835 = vst [vmem:[#allocation1] ss:$9 sm:$0xff] %v320
        %s836 = scalar_lea.vmem [#allocation1], 1
        %837 = vst [vmem:[%s836] ss:$9 sm:$0xff] %v328
        %s838 = scalar_lea.vmem [#allocation1], 2
        %839 = vst [vmem:[%s838] ss:$9 sm:$0xff] %v336
        %s840 = scalar_lea.vmem [#allocation1], 3
        %841 = vst [vmem:[%s840] ss:$9 sm:$0xff] %v344
        %s842 = scalar_lea.vmem [#allocation1], 4
        %843 = vst [vmem:[%s842] ss:$9 sm:$0xff] %v352
        %s844 = scalar_lea.vmem [#allocation1], 5
        %845 = vst [vmem:[%s844] ss:$9 sm:$0xff] %v360
        %s846 = scalar_lea.vmem [#allocation1], 6
        %847 = vst [vmem:[%s846] ss:$9 sm:$0xff] %v368
        %s848 = scalar_lea.vmem [#allocation1], 7
        %849 = vst [vmem:[%s848] ss:$9 sm:$0xff] %v376
        %v850 = vld [vmem:[#allocation1 + $0x9] sm:$0xff]
        %852 = vst [vmem:[#allocation1] ss:$9 sm:$0xff] %v384
        %853 = vst [vmem:[%s836] ss:$9 sm:$0xff] %v392
        %854 = vst [vmem:[%s838] ss:$9 sm:$0xff] %v400
        %855 = vst [vmem:[%s840] ss:$9 sm:$0xff] %v408
        %856 = vst [vmem:[%s842] ss:$9 sm:$0xff] %v416
        %857 = vst [vmem:[%s844] ss:$9 sm:$0xff] %v424
        %858 = vst [vmem:[%s846] ss:$9 sm:$0xff] %v432
        %859 = vst [vmem:[%s848] ss:$9 sm:$0xff] %v440
        %v860 = vld [vmem:[#allocation1 + $0x9] sm:$0xff]
        %862 = vst [vmem:[#allocation1] ss:$9 sm:$0xff] %v448
        %863 = vst [vmem:[%s836] ss:$9 sm:$0xff] %v456
        %v864 = vld [vmem:[#allocation1 + $0x9] sm:$0xff]
        %866 = vrot.lane.b32.xlu0 %v850, 64
        %v867 = vpop.permute.xlu0 %866
        %868 = vrot.lane.b32.xlu0 %v860, 64
        %v869 = vpop.permute.xlu0 %868
        %870 = vrot.lane.b32.xlu0 %v864, 64
        %v871 = vpop.permute.xlu0 %870
        %vm872 = vcmask 523264
        %v875 = vsel %vm872, %v738, %v793
        %v879 = vsel %vm872, %v740, %v795
        %v883 = vsel %vm872, %v742, %v797
        %v887 = vsel %vm872, %v830, %v867
        %v891 = vsel %vm872, %v832, %v869
        %v895 = vsel %vm872, %v834, %v871
        %897 = vmatpush.bf16.msra.mxu0 %v635
        %898 = vmatpush.bf16.msra.mxu0 %v634
        %899 = vmatpush.bf16.msra.mxu0 %v633
        %900 = vmatpush.bf16.msra.mxu0 %v632
        %901 = vmatpush.bf16.msra.mxu0 %v631
        %902 = vmatpush.bf16.msra.mxu0 %v630
        %903 = vmatpush.bf16.msra.mxu0 %v629
        %904 = vmatpush.bf16.msra.mxu0 %v628
        %905 = vmatmul.bf16.gmra.mxu0 %v875
        %v906 = vpop.f32.mrf.mxu0
        %v907 = vadd.f32 0.0, %v906
        %v908 = vpop.f32.mrf.mxu0
        %v909 = vadd.f32 0.0, %v908
        %910 = vmatmul.bf16.gmra.mxu0 %v879
        %v911 = vpop.f32.mrf.mxu0
        %v912 = vadd.f32 0.0, %v911
        %v913 = vpop.f32.mrf.mxu0
        %v914 = vadd.f32 0.0, %v913
        %915 = vmatmul.bf16.gmra.mxu0 %v883
        %v916 = vpop.f32.mrf.mxu0
        %v917 = vadd.f32 0.0, %v916
        %v918 = vpop.f32.mrf.mxu0
        %919 = vdwg.mxu0
        %920 = vmatpush.bf16.msra.mxu0 %v643
        %921 = vmatpush.bf16.msra.mxu0 %v642
        %922 = vmatpush.bf16.msra.mxu0 %v641
        %923 = vmatpush.bf16.msra.mxu0 %v640
        %924 = vmatpush.bf16.msra.mxu0 %v639
        %925 = vmatpush.bf16.msra.mxu0 %v638
        %926 = vmatpush.bf16.msra.mxu0 %v637
        %927 = vmatpush.bf16.msra.mxu0 %v636
        %928 = vmatmul.bf16.gmra.mxu0 %v887
        %v929 = vpop.f32.mrf.mxu0
        %v930 = vadd.f32 %v907, %v929
        %v931 = vpop.f32.mrf.mxu0
        %v932 = vadd.f32 %v909, %v931
        %933 = vmatmul.bf16.gmra.mxu0 %v891
        %v934 = vpop.f32.mrf.mxu0
        %v935 = vadd.f32 %v912, %v934
        %v936 = vpop.f32.mrf.mxu0
        %v937 = vadd.f32 %v914, %v936
        %938 = vmatmul.bf16.gmra.mxu0 %v895
        %v939 = vpop.f32.mrf.mxu0
        %v940 = vadd.f32 %v917, %v939
        %v941 = vpop.f32.mrf.mxu0
        %942 = vdwg.mxu0
        %v943 = vmax.f32 %v693, %v930
        %v944 = vmax.f32 %v695, %v932
        %v945 = vmax.f32 %v698, %v935
        %v946 = vmax.f32 %v700, %v937
        %v947 = vmax.f32 %v703, %v940
        %948 = vst [vmem:[#allocation1] ss:$9 sm:$0xff] %v225
        %s949 = scalar_lea.vmem [#allocation1], 1
        %950 = vst [vmem:[%s949] ss:$9 sm:$0xff] %v229
        %s951 = scalar_lea.vmem [#allocation1], 2
        %952 = vst [vmem:[%s951] ss:$9 sm:$0xff] %v233
        %s953 = scalar_lea.vmem [#allocation1], 3
        %954 = vst [vmem:[%s953] ss:$9 sm:$0xff] %v236
        %s955 = scalar_lea.vmem [#allocation1], 4
        %956 = vst [vmem:[%s955] ss:$9 sm:$0xff] %v239
        %s957 = scalar_lea.vmem [#allocation1], 5
        %958 = vst [vmem:[%s957] ss:$9 sm:$0xff] %v242
        %s959 = scalar_lea.vmem [#allocation1], 6
        %960 = vst [vmem:[%s959] ss:$9 sm:$0xff] %v245
        %s961 = scalar_lea.vmem [#allocation1], 7
        %962 = vst [vmem:[%s961] ss:$9 sm:$0xff] %v248
        %v963 = vld [vmem:[#allocation1 + $0x9] sm:$0xff]
        %964 = vst [vmem:[#allocation1] ss:$9 sm:$0xff] %v251
        %965 = vst [vmem:[%s949] ss:$9 sm:$0xff] %v254
        %966 = vst [vmem:[%s951] ss:$9 sm:$0xff] %v257
        %967 = vst [vmem:[%s953] ss:$9 sm:$0xff] %v260
        %968 = vst [vmem:[%s955] ss:$9 sm:$0xff] %v263
        %969 = vst [vmem:[%s957] ss:$9 sm:$0xff] %v266
        %970 = vst [vmem:[%s959] ss:$9 sm:$0xff] %v269
        %971 = vst [vmem:[%s961] ss:$9 sm:$0xff] %v272
        %v972 = vld [vmem:[#allocation1 + $0x9] sm:$0xff]
        %973 = vst [vmem:[#allocation1] ss:$9 sm:$0xff] %v275
        %974 = vst [vmem:[%s949] ss:$9 sm:$0xff] %v278
        %v975 = vld [vmem:[#allocation1 + $0x9] sm:$0xff]
        %976 = vst [vmem:[#allocation1] ss:$9 sm:$0xff] %v225
        %s977 = scalar_lea.vmem [#allocation1], 1
        %978 = vst [vmem:[%s977] ss:$9 sm:$0xff] %v229
        %s979 = scalar_lea.vmem [#allocation1], 2
        %980 = vst [vmem:[%s979] ss:$9 sm:$0xff] %v233
        %s981 = scalar_lea.vmem [#allocation1], 3
        %982 = vst [vmem:[%s981] ss:$9 sm:$0xff] %v236
        %s983 = scalar_lea.vmem [#allocation1], 4
        %984 = vst [vmem:[%s983] ss:$9 sm:$0xff] %v239
        %s985 = scalar_lea.vmem [#allocation1], 5
        %986 = vst [vmem:[%s985] ss:$9 sm:$0xff] %v242
        %s987 = scalar_lea.vmem [#allocation1], 6
        %988 = vst [vmem:[%s987] ss:$9 sm:$0xff] %v245
        %s989 = scalar_lea.vmem [#allocation1], 7
        %990 = vst [vmem:[%s989] ss:$9 sm:$0xff] %v248
        %v991 = vld [vmem:[#allocation1 + $0x9] sm:$0xff]
        %992 = vst [vmem:[#allocation1] ss:$9 sm:$0xff] %v251
        %993 = vst [vmem:[%s977] ss:$9 sm:$0xff] %v254
        %994 = vst [vmem:[%s979] ss:$9 sm:$0xff] %v257
        %995 = vst [vmem:[%s981] ss:$9 sm:$0xff] %v260
        %996 = vst [vmem:[%s983] ss:$9 sm:$0xff] %v263
        %997 = vst [vmem:[%s985] ss:$9 sm:$0xff] %v266
        %998 = vst [vmem:[%s987] ss:$9 sm:$0xff] %v269
        %999 = vst [vmem:[%s989] ss:$9 sm:$0xff] %v272
        %v1000 = vld [vmem:[#allocation1 + $0x9] sm:$0xff]
        %1001 = vst [vmem:[#allocation1] ss:$9 sm:$0xff] %v275
        %1002 = vst [vmem:[%s977] ss:$9 sm:$0xff] %v278
        %v1003 = vld [vmem:[#allocation1 + $0x9] sm:$0xff]
        %1004 = vst [vmem:[#allocation1] ss:$9 sm:$0xff] %v236
        %s1005 = scalar_lea.vmem [#allocation1], 1
        %1006 = vst [vmem:[%s1005] ss:$9 sm:$0xff] %v239
        %s1007 = scalar_lea.vmem [#allocation1], 2
        %1008 = vst [vmem:[%s1007] ss:$9 sm:$0xff] %v242
        %s1009 = scalar_lea.vmem [#allocation1], 3
        %1010 = vst [vmem:[%s1009] ss:$9 sm:$0xff] %v245
        %s1011 = scalar_lea.vmem [#allocation1], 4
        %1012 = vst [vmem:[%s1011] ss:$9 sm:$0xff] %v248
        %s1013 = scalar_lea.vmem [#allocation1], 5
        %1014 = vst [vmem:[%s1013] ss:$9 sm:$0xff] %v251
        %s1015 = scalar_lea.vmem [#allocation1], 6
        %1016 = vst [vmem:[%s1015] ss:$9 sm:$0xff] %v254
        %s1017 = scalar_lea.vmem [#allocation1], 7
        %1018 = vst [vmem:[%s1017] ss:$9 sm:$0xff] %v257
        %v1019 = vld [vmem:[#allocation1] sm:$0xff]
        %1020 = vst [vmem:[#allocation1] ss:$9 sm:$0xff] %v260
        %1021 = vst [vmem:[%s1005] ss:$9 sm:$0xff] %v263
        %1022 = vst [vmem:[%s1007] ss:$9 sm:$0xff] %v266
        %1023 = vst [vmem:[%s1009] ss:$9 sm:$0xff] %v269
        %1024 = vst [vmem:[%s1011] ss:$9 sm:$0xff] %v272
        %1025 = vst [vmem:[%s1013] ss:$9 sm:$0xff] %v275
        %1026 = vst [vmem:[%s1015] ss:$9 sm:$0xff] %v278
        %1027 = vst [vmem:[%s1017] ss:$9 sm:$0xff] %v461
        %v1028 = vld [vmem:[#allocation1] sm:$0xff]
        %1029 = vst [vmem:[#allocation1] ss:$9 sm:$0xff] %v464
        %1030 = vst [vmem:[%s1005] ss:$9 sm:$0xff] %v467
        %v1031 = vld [vmem:[#allocation1] sm:$0xff]
        %1032 = vst [vmem:[#allocation1] ss:$9 sm:$0xff] %v236
        %s1033 = scalar_lea.vmem [#allocation1], 1
        %1034 = vst [vmem:[%s1033] ss:$9 sm:$0xff] %v239
        %s1035 = scalar_lea.vmem [#allocation1], 2
        %1036 = vst [vmem:[%s1035] ss:$9 sm:$0xff] %v242
        %s1037 = scalar_lea.vmem [#allocation1], 3
        %1038 = vst [vmem:[%s1037] ss:$9 sm:$0xff] %v245
        %s1039 = scalar_lea.vmem [#allocation1], 4
        %1040 = vst [vmem:[%s1039] ss:$9 sm:$0xff] %v248
        %s1041 = scalar_lea.vmem [#allocation1], 5
        %1042 = vst [vmem:[%s1041] ss:$9 sm:$0xff] %v251
        %s1043 = scalar_lea.vmem [#allocation1], 6
        %1044 = vst [vmem:[%s1043] ss:$9 sm:$0xff] %v254
        %s1045 = scalar_lea.vmem [#allocation1], 7
        %1046 = vst [vmem:[%s1045] ss:$9 sm:$0xff] %v257
        %v1047 = vld [vmem:[#allocation1] sm:$0xff]
        %1048 = vst [vmem:[#allocation1] ss:$9 sm:$0xff] %v260
        %1049 = vst [vmem:[%s1033] ss:$9 sm:$0xff] %v263
        %1050 = vst [vmem:[%s1035] ss:$9 sm:$0xff] %v266
        %1051 = vst [vmem:[%s1037] ss:$9 sm:$0xff] %v269
        %1052 = vst [vmem:[%s1039] ss:$9 sm:$0xff] %v272
        %1053 = vst [vmem:[%s1041] ss:$9 sm:$0xff] %v275
        %1054 = vst [vmem:[%s1043] ss:$9 sm:$0xff] %v278
        %1055 = vst [vmem:[%s1045] ss:$9 sm:$0xff] %v461
        %v1056 = vld [vmem:[#allocation1] sm:$0xff]
        %1057 = vst [vmem:[#allocation1] ss:$9 sm:$0xff] %v464
        %1058 = vst [vmem:[%s1033] ss:$9 sm:$0xff] %v467
        %v1059 = vld [vmem:[#allocation1] sm:$0xff]
        %v1060 = vsel %vm872, %v963, %v991
        %v1062 = vsel %vm872, %v972, %v1000
        %v1064 = vsel %vm872, %v975, %v1003
        %v1066 = vsel %vm872, %v1019, %v1047
        %v1068 = vsel %vm872, %v1028, %v1056
        %v1070 = vsel %vm872, %v1031, %v1059
        %1072 = vmatpush.bf16.msra.mxu0 %v635
        %1073 = vmatpush.bf16.msra.mxu0 %v634
        %1074 = vmatpush.bf16.msra.mxu0 %v633
        %1075 = vmatpush.bf16.msra.mxu0 %v632
        %1076 = vmatpush.bf16.msra.mxu0 %v631
        %1077 = vmatpush.bf16.msra.mxu0 %v630
        %1078 = vmatpush.bf16.msra.mxu0 %v629
        %1079 = vmatpush.bf16.msra.mxu0 %v628
        %1080 = vmatmul.bf16.gmra.mxu0 %v1060
        %v1081 = vpop.f32.mrf.mxu0
        %v1082 = vadd.f32 0.0, %v1081
        %v1083 = vpop.f32.mrf.mxu0
        %v1084 = vadd.f32 0.0, %v1083
        %1085 = vmatmul.bf16.gmra.mxu0 %v1062
        %v1086 = vpop.f32.mrf.mxu0
        %v1087 = vadd.f32 0.0, %v1086
        %v1088 = vpop.f32.mrf.mxu0
        %v1089 = vadd.f32 0.0, %v1088
        %1090 = vmatmul.bf16.gmra.mxu0 %v1064
        %v1091 = vpop.f32.mrf.mxu0
        %v1092 = vadd.f32 0.0, %v1091
        %v1093 = vpop.f32.mrf.mxu0
        %1094 = vdwg.mxu0
        %1095 = vmatpush.bf16.msra.mxu0 %v643
        %1096 = vmatpush.bf16.msra.mxu0 %v642
        %1097 = vmatpush.bf16.msra.mxu0 %v641
        %1098 = vmatpush.bf16.msra.mxu0 %v640
        %1099 = vmatpush.bf16.msra.mxu0 %v639
        %1100 = vmatpush.bf16.msra.mxu0 %v638
        %1101 = vmatpush.bf16.msra.mxu0 %v637
        %1102 = vmatpush.bf16.msra.mxu0 %v636
        %1103 = vmatmul.bf16.gmra.mxu0 %v1066
        %v1104 = vpop.f32.mrf.mxu0
        %v1105 = vadd.f32 %v1082, %v1104
        %v1106 = vpop.f32.mrf.mxu0
        %v1107 = vadd.f32 %v1084, %v1106
        %1108 = vmatmul.bf16.gmra.mxu0 %v1068
        %v1109 = vpop.f32.mrf.mxu0
        %v1110 = vadd.f32 %v1087, %v1109
        %v1111 = vpop.f32.mrf.mxu0
        %v1112 = vadd.f32 %v1089, %v1111
        %1113 = vmatmul.bf16.gmra.mxu0 %v1070
        %v1114 = vpop.f32.mrf.mxu0
        %v1115 = vadd.f32 %v1092, %v1114
        %v1116 = vpop.f32.mrf.mxu0
        %1117 = vdwg.mxu0
        %v1118 = vmax.f32 %v943, %v1105
        %v1119 = vmax.f32 %v944, %v1107
        %v1120 = vmax.f32 %v945, %v1110
        %v1121 = vmax.f32 %v946, %v1112
        %v1122 = vmax.f32 %v947, %v1115
        %1123 = vst [vmem:[#allocation1] ss:$9 sm:$0xff] %v225
        %s1124 = scalar_lea.vmem [#allocation1], 1
        %1125 = vst [vmem:[%s1124] ss:$9 sm:$0xff] %v229
        %s1126 = scalar_lea.vmem [#allocation1], 2
        %1127 = vst [vmem:[%s1126] ss:$9 sm:$0xff] %v233
        %s1128 = scalar_lea.vmem [#allocation1], 3
        %1129 = vst [vmem:[%s1128] ss:$9 sm:$0xff] %v236
        %s1130 = scalar_lea.vmem [#allocation1], 4
        %1131 = vst [vmem:[%s1130] ss:$9 sm:$0xff] %v239
        %s1132 = scalar_lea.vmem [#allocation1], 5
        %1133 = vst [vmem:[%s1132] ss:$9 sm:$0xff] %v242
        %s1134 = scalar_lea.vmem [#allocation1], 6
        %1135 = vst [vmem:[%s1134] ss:$9 sm:$0xff] %v245
        %s1136 = scalar_lea.vmem [#allocation1], 7
        %1137 = vst [vmem:[%s1136] ss:$9 sm:$0xff] %v248
        %v1138 = vld [vmem:[#allocation1 + $0x9] sm:$0xff]
        %1140 = vst [vmem:[#allocation1] ss:$9 sm:$0xff] %v251
        %1141 = vst [vmem:[%s1124] ss:$9 sm:$0xff] %v254
        %1142 = vst [vmem:[%s1126] ss:$9 sm:$0xff] %v257
        %1143 = vst [vmem:[%s1128] ss:$9 sm:$0xff] %v260
        %1144 = vst [vmem:[%s1130] ss:$9 sm:$0xff] %v263
        %1145 = vst [vmem:[%s1132] ss:$9 sm:$0xff] %v266
        %1146 = vst [vmem:[%s1134] ss:$9 sm:$0xff] %v269
        %1147 = vst [vmem:[%s1136] ss:$9 sm:$0xff] %v272
        %v1148 = vld [vmem:[#allocation1 + $0x9] sm:$0xff]
        %1150 = vst [vmem:[#allocation1] ss:$9 sm:$0xff] %v275
        %1151 = vst [vmem:[%s1124] ss:$9 sm:$0xff] %v278
        %v1152 = vld [vmem:[#allocation1 + $0x9] sm:$0xff]
        %1154 = vrot.lane.b32.xlu0 %v1138, 64
        %v1155 = vpop.permute.xlu0 %1154
        %1156 = vrot.lane.b32.xlu0 %v1148, 64
        %v1157 = vpop.permute.xlu0 %1156
        %1158 = vrot.lane.b32.xlu0 %v1152, 64
        %v1159 = vpop.permute.xlu0 %1158
        %1160 = vst [vmem:[#allocation1] ss:$9 sm:$0xff] %v320
        %s1161 = scalar_lea.vmem [#allocation1], 1
        %1162 = vst [vmem:[%s1161] ss:$9 sm:$0xff] %v328
        %s1163 = scalar_lea.vmem [#allocation1], 2
        %1164 = vst [vmem:[%s1163] ss:$9 sm:$0xff] %v336
        %s1165 = scalar_lea.vmem [#allocation1], 3
        %1166 = vst [vmem:[%s1165] ss:$9 sm:$0xff] %v344
        %s1167 = scalar_lea.vmem [#allocation1], 4
        %1168 = vst [vmem:[%s1167] ss:$9 sm:$0xff] %v352
        %s1169 = scalar_lea.vmem [#allocation1], 5
        %1170 = vst [vmem:[%s1169] ss:$9 sm:$0xff] %v360
        %s1171 = scalar_lea.vmem [#allocation1], 6
        %1172 = vst [vmem:[%s1171] ss:$9 sm:$0xff] %v368
        %s1173 = scalar_lea.vmem [#allocation1], 7
        %1174 = vst [vmem:[%s1173] ss:$9 sm:$0xff] %v376
        %v1175 = vld [vmem:[#allocation1 + $0x9] sm:$0xff]
        %1177 = vst [vmem:[#allocation1] ss:$9 sm:$0xff] %v384
        %1178 = vst [vmem:[%s1161] ss:$9 sm:$0xff] %v392
        %1179 = vst [vmem:[%s1163] ss:$9 sm:$0xff] %v400
        %1180 = vst [vmem:[%s1165] ss:$9 sm:$0xff] %v408
        %1181 = vst [vmem:[%s1167] ss:$9 sm:$0xff] %v416
        %1182 = vst [vmem:[%s1169] ss:$9 sm:$0xff] %v424
        %1183 = vst [vmem:[%s1171] ss:$9 sm:$0xff] %v432
        %1184 = vst [vmem:[%s1173] ss:$9 sm:$0xff] %v440
        %v1185 = vld [vmem:[#allocation1 + $0x9] sm:$0xff]
        %1187 = vst [vmem:[#allocation1] ss:$9 sm:$0xff] %v448
        %1188 = vst [vmem:[%s1161] ss:$9 sm:$0xff] %v456
        %v1189 = vld [vmem:[#allocation1 + $0x9] sm:$0xff]
        %1191 = vrot.lane.b32.xlu0 %v1175, 64
        %v1192 = vpop.permute.xlu0 %1191
        %1193 = vrot.lane.b32.xlu0 %v1185, 64
        %v1194 = vpop.permute.xlu0 %1193
        %1195 = vrot.lane.b32.xlu0 %v1189, 64
        %v1196 = vpop.permute.xlu0 %1195
        %1197 = vst [vmem:[#allocation1] ss:$9 sm:$0xff] %v236
        %s1198 = scalar_lea.vmem [#allocation1], 1
        %1199 = vst [vmem:[%s1198] ss:$9 sm:$0xff] %v239
        %s1200 = scalar_lea.vmem [#allocation1], 2
        %1201 = vst [vmem:[%s1200] ss:$9 sm:$0xff] %v242
        %s1202 = scalar_lea.vmem [#allocation1], 3
        %1203 = vst [vmem:[%s1202] ss:$9 sm:$0xff] %v245
        %s1204 = scalar_lea.vmem [#allocation1], 4
        %1205 = vst [vmem:[%s1204] ss:$9 sm:$0xff] %v248
        %s1206 = scalar_lea.vmem [#allocation1], 5
        %1207 = vst [vmem:[%s1206] ss:$9 sm:$0xff] %v251
        %s1208 = scalar_lea.vmem [#allocation1], 6
        %1209 = vst [vmem:[%s1208] ss:$9 sm:$0xff] %v254
        %s1210 = scalar_lea.vmem [#allocation1], 7
        %1211 = vst [vmem:[%s1210] ss:$9 sm:$0xff] %v257
        %v1212 = vld [vmem:[#allocation1] sm:$0xff]
        %1214 = vst [vmem:[#allocation1] ss:$9 sm:$0xff] %v260
        %1215 = vst [vmem:[%s1198] ss:$9 sm:$0xff] %v263
        %1216 = vst [vmem:[%s1200] ss:$9 sm:$0xff] %v266
        %1217 = vst [vmem:[%s1202] ss:$9 sm:$0xff] %v269
        %1218 = vst [vmem:[%s1204] ss:$9 sm:$0xff] %v272
        %1219 = vst [vmem:[%s1206] ss:$9 sm:$0xff] %v275
        %1220 = vst [vmem:[%s1208] ss:$9 sm:$0xff] %v278
        %1221 = vst [vmem:[%s1210] ss:$9 sm:$0xff] %v461
        %v1222 = vld [vmem:[#allocation1] sm:$0xff]
        %1224 = vst [vmem:[#allocation1] ss:$9 sm:$0xff] %v464
        %1225 = vst [vmem:[%s1198] ss:$9 sm:$0xff] %v467
        %v1226 = vld [vmem:[#allocation1] sm:$0xff]
        %1228 = vrot.lane.b32.xlu0 %v1212, 64
        %v1229 = vpop.permute.xlu0 %1228
        %1230 = vrot.lane.b32.xlu0 %v1222, 64
        %v1231 = vpop.permute.xlu0 %1230
        %1232 = vrot.lane.b32.xlu0 %v1226, 64
        %v1233 = vpop.permute.xlu0 %1232
        %1234 = vst [vmem:[#allocation1] ss:$9 sm:$0xff] %v344
        %s1235 = scalar_lea.vmem [#allocation1], 1
        %1236 = vst [vmem:[%s1235] ss:$9 sm:$0xff] %v352
        %s1237 = scalar_lea.vmem [#allocation1], 2
        %1238 = vst [vmem:[%s1237] ss:$9 sm:$0xff] %v360
        %s1239 = scalar_lea.vmem [#allocation1], 3
        %1240 = vst [vmem:[%s1239] ss:$9 sm:$0xff] %v368
        %s1241 = scalar_lea.vmem [#allocation1], 4
        %1242 = vst [vmem:[%s1241] ss:$9 sm:$0xff] %v376
        %s1243 = scalar_lea.vmem [#allocation1], 5
        %1244 = vst [vmem:[%s1243] ss:$9 sm:$0xff] %v384
        %s1245 = scalar_lea.vmem [#allocation1], 6
        %1246 = vst [vmem:[%s1245] ss:$9 sm:$0xff] %v392
        %s1247 = scalar_lea.vmem [#allocation1], 7
        %1248 = vst [vmem:[%s1247] ss:$9 sm:$0xff] %v400
        %v1249 = vld [vmem:[#allocation1] sm:$0xff]
        %1251 = vst [vmem:[#allocation1] ss:$9 sm:$0xff] %v408
        %1252 = vst [vmem:[%s1235] ss:$9 sm:$0xff] %v416
        %1253 = vst [vmem:[%s1237] ss:$9 sm:$0xff] %v424
        %1254 = vst [vmem:[%s1239] ss:$9 sm:$0xff] %v432
        %1255 = vst [vmem:[%s1241] ss:$9 sm:$0xff] %v440
        %1256 = vst [vmem:[%s1243] ss:$9 sm:$0xff] %v448
        %1257 = vst [vmem:[%s1245] ss:$9 sm:$0xff] %v456
        %1259 = vst [vmem:[%s1247] ss:$9 sm:$0xff] %v478
        %v1260 = vld [vmem:[#allocation1] sm:$0xff]
        %1263 = vst [vmem:[#allocation1] ss:$9 sm:$0xff] %v486
        %1265 = vst [vmem:[%s1235] ss:$9 sm:$0xff] %v494
        %v1266 = vld [vmem:[#allocation1] sm:$0xff]
        %1268 = vrot.lane.b32.xlu0 %v1249, 64
        %v1269 = vpop.permute.xlu0 %1268
        %1270 = vrot.lane.b32.xlu0 %v1260, 64
        %v1271 = vpop.permute.xlu0 %1270
        %1272 = vrot.lane.b32.xlu0 %v1266, 64
        %v1273 = vpop.permute.xlu0 %1272
        %v1276 = vsel %vm872, %v1155, %v1192
        %v1280 = vsel %vm872, %v1157, %v1194
        %v1284 = vsel %vm872, %v1159, %v1196
        %v1288 = vsel %vm872, %v1229, %v1269
        %v1292 = vsel %vm872, %v1231, %v1271
        %v1296 = vsel %vm872, %v1233, %v1273
        %1298 = vmatpush.bf16.msra.mxu0 %v635
        %1299 = vmatpush.bf16.msra.mxu0 %v634
        %1300 = vmatpush.bf16.msra.mxu0 %v633
        %1301 = vmatpush.bf16.msra.mxu0 %v632
        %1302 = vmatpush.bf16.msra.mxu0 %v631
        %1303 = vmatpush.bf16.msra.mxu0 %v630
        %1304 = vmatpush.bf16.msra.mxu0 %v629
        %1305 = vmatpush.bf16.msra.mxu0 %v628
        %1306 = vmatmul.bf16.gmra.mxu0 %v1276
        %v1307 = vpop.f32.mrf.mxu0
        %v1308 = vadd.f32 0.0, %v1307
        %v1309 = vpop.f32.mrf.mxu0
        %v1310 = vadd.f32 0.0, %v1309
        %1311 = vmatmul.bf16.gmra.mxu0 %v1280
        %v1312 = vpop.f32.mrf.mxu0
        %v1313 = vadd.f32 0.0, %v1312
        %v1314 = vpop.f32.mrf.mxu0
        %v1315 = vadd.f32 0.0, %v1314
        %1316 = vmatmul.bf16.gmra.mxu0 %v1284
        %v1317 = vpop.f32.mrf.mxu0
        %v1318 = vadd.f32 0.0, %v1317
        %v1319 = vpop.f32.mrf.mxu0
        %1320 = vdwg.mxu0
        %1321 = vmatpush.bf16.msra.mxu0 %v643
        %1322 = vmatpush.bf16.msra.mxu0 %v642
        %1323 = vmatpush.bf16.msra.mxu0 %v641
        %1324 = vmatpush.bf16.msra.mxu0 %v640
        %1325 = vmatpush.bf16.msra.mxu0 %v639
        %1326 = vmatpush.bf16.msra.mxu0 %v638
        %1327 = vmatpush.bf16.msra.mxu0 %v637
        %1328 = vmatpush.bf16.msra.mxu0 %v636
        %1329 = vmatmul.bf16.gmra.mxu0 %v1288
        %v1330 = vpop.f32.mrf.mxu0
        %v1331 = vadd.f32 %v1308, %v1330
        %v1332 = vpop.f32.mrf.mxu0
        %v1333 = vadd.f32 %v1310, %v1332
        %1334 = vmatmul.bf16.gmra.mxu0 %v1292
        %v1335 = vpop.f32.mrf.mxu0
        %v1336 = vadd.f32 %v1313, %v1335
        %v1337 = vpop.f32.mrf.mxu0
        %v1338 = vadd.f32 %v1315, %v1337
        %1339 = vmatmul.bf16.gmra.mxu0 %v1296
        %v1340 = vpop.f32.mrf.mxu0
        %v1341 = vadd.f32 %v1318, %v1340
        %v1342 = vpop.f32.mrf.mxu0
        %1343 = vdwg.mxu0
        %v1344 = vmax.f32 %v1118, %v1331
        %v1345 = vmax.f32 %v1119, %v1333
        %v1346 = vmax.f32 %v1120, %v1336
        %v1347 = vmax.f32 %v1121, %v1338
        %v1348 = vmax.f32 %v1122, %v1341
        %v1349 = vld [vmem:[#allocation4] sm:$0x1]
        %v1351 = vperm.slane %v1349, 0
        %v1353 = vadd.f32 %v1344, %v1351
        %v1354 = vadd.f32 %v1345, %v1351
        %v1355 = vadd.f32 %v1346, %v1351
        %v1356 = vadd.f32 %v1347, %v1351
        %v1357 = vadd.f32 %v1348, %v1351
        %v1358 = vmax.f32 %v1353, 0.0
        %v1359 = vmax.f32 %v1354, 0.0
        %v1360 = vmax.f32 %v1355, 0.0
        %v1361 = vmax.f32 %v1356, 0.0
        %v1362 = vmax.f32 %v1357, 0.0
        %v1368 = vrot.slane %v1358, 2
        %v1369 = vrot.slane %v1358, 4
        %v1370 = vrot.slane %v1358, 6
        %v1371 = vrot.slane %v1359, 2
        %v1372 = vrot.slane %v1359, 4
        %v1373 = vrot.slane %v1359, 6
        %v1374 = vrot.slane %v1360, 2
        %v1375 = vrot.slane %v1360, 4
        %v1376 = vrot.slane %v1360, 6
        %v1377 = vrot.slane %v1361, 2
        %v1378 = vrot.slane %v1361, 4
        %v1379 = vrot.slane %v1361, 6
        %v1380 = vrot.slane %v1362, 2
        %1381 = vst [vmem:[#allocation1] ss:$4 sm:$0xff] %v1358
        %s1382 = scalar_lea.vmem [#allocation1], 1
        %1383 = vst [vmem:[%s1382] ss:$4 sm:$0xff] %v1368
        %s1384 = scalar_lea.vmem [#allocation1], 2
        %1385 = vst [vmem:[%s1384] ss:$4 sm:$0xff] %v1369
        %v1386 = vld.sshfl [vmem:[#allocation1] sm:$0xff pattern:$0x73625140]
        %s1387 = scalar_lea.vmem [#allocation1], 32
        %1388 = vst [vmem:[%s1387] ss:$4 sm:$0xff] %v1370
        %s1389 = scalar_lea.vmem [#allocation1], 33
        %1390 = vst [vmem:[%s1389] ss:$4 sm:$0xff] %v1359
        %s1391 = scalar_lea.vmem [#allocation1], 34
        %1392 = vst [vmem:[%s1391] ss:$4 sm:$0xff] %v1371
        %v1393 = vld.sshfl [vmem:[#allocation1 + $0x20] sm:$0xff pattern:$0x73625140]
        %1394 = vst [vmem:[#allocation1] ss:$4 sm:$0xff] %v1372
        %1395 = vst [vmem:[%s1382] ss:$4 sm:$0xff] %v1373
        %1396 = vst [vmem:[%s1384] ss:$4 sm:$0xff] %v1360
        %v1397 = vld.sshfl [vmem:[#allocation1] sm:$0xff pattern:$0x73625140]
        %1398 = vst [vmem:[%s1387] ss:$4 sm:$0xff] %v1374
        %1399 = vst [vmem:[%s1389] ss:$4 sm:$0xff] %v1375
        %1400 = vst [vmem:[%s1391] ss:$4 sm:$0xff] %v1376
        %v1401 = vld.sshfl [vmem:[#allocation1 + $0x20] sm:$0xff pattern:$0x73625140]
        %1402 = vst [vmem:[#allocation1] ss:$4 sm:$0xff] %v1361
        %1403 = vst [vmem:[%s1382] ss:$4 sm:$0xff] %v1377
        %1404 = vst [vmem:[%s1384] ss:$4 sm:$0xff] %v1378
        %v1405 = vld.sshfl [vmem:[#allocation1] sm:$0xff pattern:$0x73625140]
        %1406 = vst [vmem:[%s1387] ss:$4 sm:$0xff] %v1379
        %1407 = vst [vmem:[%s1389] ss:$4 sm:$0xff] %v1362
        %1408 = vst [vmem:[%s1391] ss:$4 sm:$0xff] %v1380
        %v1409 = vld.sshfl [vmem:[#allocation1 + $0x20] sm:$0xff pattern:$0x73625140]
        %v1416 = vpack.c.bf16 %v1386, %v1386
        %v1417 = vpack.c.bf16 %v1393, %v1393
        %v1418 = vpack.c.bf16 %v1397, %v1397
        %v1419 = vpack.c.bf16 %v1401, %v1401
        %v1420 = vpack.c.bf16 %v1405, %v1405
        %v1421 = vpack.c.bf16 %v1409, %v1409
        %1422 = vst [vmem:[%s202] sm:$0x7] %v1416
        %1423 = vst [vmem:[%s202 + $0x4] sm:$0x7] %v1417
        %1424 = vst [vmem:[%s202 + $0x8] sm:$0x7] %v1418
        %1425 = vst [vmem:[%s202 + $0xc] sm:$0x7] %v1419
        %1426 = vst [vmem:[%s202 + $0x10] sm:$0x7] %v1420
        %1427 = vst [vmem:[%s202 + $0x14] sm:$0x7] %v1421
        %p1428 = scmp.lt.s32.totalorder %s16, 1
        %s1429 = scalar_select %p1428, %s16, 1
        %s1430 = smul.addr %s1429, 6
        %s1431 = smul.addr %s1430, 4
        %s1432 = scalar_lea.vmem %s3, %s1431
        // Predicated region
        $region41: #{simple_cnn_forward.4} parent=31 // pred_check
          %p1433 = pneg %p102
        $region42: #{simple_cnn_forward.4} parent=31 // pred_check_branch
          %1435 = sbr.rel (%p1433) target = $region44
        $region43: #{simple_cnn_forward.4} parent=31 // pred_region
          _
        $region44: #{simple_cnn_forward.4} parent=31 // pred_fallthru
          _
      $region32: #{simple_cnn_forward.4} parent=5 // pred_fallthru
        _
      %p1436 = scmp.le.s32.totalorder 2, %s11
      // Predicated region
      $region45: #{simple_cnn_forward.4} parent=5 // pred_check
        %p1437 = pneg %p1436
      $region46: #{simple_cnn_forward.4} parent=5 // pred_check_branch
        %1439 = sbr.rel (%p1437) target = $region48
      $region47: #{simple_cnn_forward.4} parent=5 // pred_region
        %s1440 = ssub.s32 %s11, 2
        // Predicated region
        $region49: #{simple_cnn_forward.4} parent=47 // pred_check
          %p1441 = pneg %p108
        $region50: #{simple_cnn_forward.4} parent=47 // pred_check_branch
          %1443 = sbr.rel (%p1441) target = $region52
        $region51: #{simple_cnn_forward.4} parent=47 // pred_region
          %p1444 = scmp.lt.s32.totalorder %s17, 1
          %s1445 = scalar_select %p1444, %s17, 1
          %s1446 = smul.addr %s1445, 6
          %s1447 = smul.addr %s1446, 4
          %s1448 = scalar_lea.vmem %s3, %s1447
        $region52: #{simple_cnn_forward.4} parent=47 // pred_fallthru
          _
      $region48: #{simple_cnn_forward.4} parent=5 // pred_fallthru
        _
    $region6: #{simple_cnn_forward.4} parent=1 // loop_footer
      %s15 = sadd.s32 1, %s11
    $region7: #{simple_cnn_forward.4} parent=1 // loop_footer_branch
      %10 = sbr.rel target = $region3
    $region8: #{simple_cnn_forward.4} parent=1 // loop_exit
      _
    %1449 = vsyncpa [#allocation3], 1
    %s1450 = scalar_lea.sflag [#allocation3], 1
    %1451 = vsyncpa %s1450, 1
    %1452 = vsyncpa [#allocation5], 1

// kernel: simple_cnn_forward.3
$region0: #{simple_cnn_forward.3}
  #allocation0 [shape = 'u32[]', space=smem, size = 0x4, offset = 0x4, fixed_abs, tag = 'smem constant byte address 0x4 - core index']
  #allocation1 [shape = 'u32[72,128]{1,0:T(1,128)}', space=vmem, size = 0x9000, scoped, tag = 'internal scratch']
  %s0 = inlined_call_operand.vmem [shape: bf16[2,10,10,12], index: 0, kind: input, shape index: {}]
  %s1 = inlined_call_operand.hbm [shape: bf16[12,64], index: 1, kind: input, shape index: {}]
  %s2 = inlined_call_operand.hbm [shape: f32[1,64], index: 2, kind: input, shape index: {}]
  %s3 = inlined_call_operand.vmem [shape: bf16[2,9,9,64], index: 3, kind: output, shape index: {}]
  %s4 = sld [smem:[#allocation0]]
  $region53: #{simple_cnn_forward.3} parent=0
    _
  %s6 = ssub.s32 1, %s4
  %s7 = scalar_select 0, %s6, %s4
  $region1: #{simple_cnn_forward.3} parent=0
    #allocation2 [shape = 'u8[4096]{0}', space=vmem, size = 0x1000, scoped, tag = 'input window, operand 1, single buffered']
    #allocation3 [shape = 's32[2]{0}', space=sflag, size = 0x8, scoped, tag = 'scoped memory for simple_cnn_forward.3']
    #allocation4 [shape = 'u8[512]{0}', space=vmem, size = 0x400, scoped, tag = 'input window, operand 2, single buffered']
    #allocation5 [shape = 's32[1]{0}', space=sflag, size = 0x4, scoped, tag = 'scoped memory for simple_cnn_forward.3']
    %8 = vsyncpa [#allocation3], 0
    %9 = vsyncpa [#allocation5], 0
    loop: start=0, step=1, limit=4
    $region2: #{simple_cnn_forward.3} parent=1 // loop_pre_header
      _
    $region3: #{simple_cnn_forward.3} parent=1 // loop_header
      %s11 = sphi 0, %s15
      %p12 = scmp.ge.s32.totalorder %s11, 4
      %s21 = sphi 0, %s23
      %s24 = sphi 0, %s21
      %s25 = sphi 0, %s24
      %s41 = sphi 0, %s25
      %s45 = sphi 0, %s45
      %s47 = sphi 0, %s45
      %s48 = sphi 0, %s47
      %s62 = sphi 0, %s48
      %s66 = sphi 0, %s66
      %s68 = sphi 0, %s66
      %s69 = sphi 0, %s68
      %s83 = sphi 0, %s69
      %s89 = sphi 0, %s91
      %s92 = sphi 0, %s89
      %s93 = sphi 0, %s92
      %s109 = sphi 0, %s93
    $region4: #{simple_cnn_forward.3} parent=1 // loop_header_branch
      %14 = sbr.rel (%p12) target = $region8
    $region5: #{simple_cnn_forward.3} parent=1 // loop_body
      %s16 = ssub.s32 %s11, 1
      %s17 = ssub.s32 %s11, 2
      %s18 = sadd.s32 %s11, 1
      %s19 = ssub.s32 %s11, %s18
      %p20 = scmp.eq.s32.totalorder %s19, 0
      %s22 = sadd.s32 %s21, 1
      %s23 = scalar_select %p20, %s21, %s22
      %p26 = pneg %p20
      %p27 = scmp.eq.s32.totalorder %s11, 1
      %p28 = por %p26, %p27
      %p29 = scmp.ne.s32.totalorder %s21, %s24
      %p30 = scmp.eq.s32.totalorder %s11, 0
      %p31 = por %p29, %p30
      %p32 = scmp.ne.s32.totalorder %s21, %s24
      %p33 = scmp.eq.s32.totalorder %s16, 1
      %p34 = por %p32, %p33
      %p35 = scmp.ne.s32.totalorder %s24, %s25
      %p36 = scmp.eq.s32.totalorder %s16, 0
      %p37 = por %p35, %p36
      %p38 = scmp.ne.s32.totalorder %s24, %s25
      %p39 = scmp.eq.s32.totalorder %s17, 1
      %p40 = por %p38, %p39
      %p42 = scmp.ne.s32.totalorder %s25, %s41
      %p43 = scmp.eq.s32.totalorder %s17, 0
      %p44 = por %p42, %p43
      %s46 = sadd.s32 %s45, 1
      %p49 = scmp.eq.s32.totalorder %s11, 1
      %p50 = scmp.ne.s32.totalorder %s45, %s47
      %p51 = scmp.eq.s32.totalorder %s11, 0
      %p52 = por %p50, %p51
      %p53 = scmp.ne.s32.totalorder %s45, %s47
      %p54 = scmp.eq.s32.totalorder %s16, 1
      %p55 = por %p53, %p54
      %p56 = scmp.ne.s32.totalorder %s47, %s48
      %p57 = scmp.eq.s32.totalorder %s16, 0
      %p58 = por %p56, %p57
      %p59 = scmp.ne.s32.totalorder %s47, %s48
      %p60 = scmp.eq.s32.totalorder %s17, 1
      %p61 = por %p59, %p60
      %p63 = scmp.ne.s32.totalorder %s48, %s62
      %p64 = scmp.eq.s32.totalorder %s17, 0
      %p65 = por %p63, %p64
      %s67 = sadd.s32 %s66, 1
      %p70 = scmp.eq.s32.totalorder %s11, 1
      %p71 = scmp.ne.s32.totalorder %s66, %s68
      %p72 = scmp.eq.s32.totalorder %s11, 0
      %p73 = por %p71, %p72
      %p74 = scmp.ne.s32.totalorder %s66, %s68
      %p75 = scmp.eq.s32.totalorder %s16, 1
      %p76 = por %p74, %p75
      %p77 = scmp.ne.s32.totalorder %s68, %s69
      %p78 = scmp.eq.s32.totalorder %s16, 0
      %p79 = por %p77, %p78
      %p80 = scmp.ne.s32.totalorder %s68, %s69
      %p81 = scmp.eq.s32.totalorder %s17, 1
      %p82 = por %p80, %p81
      %p84 = scmp.ne.s32.totalorder %s69, %s83
      %p85 = scmp.eq.s32.totalorder %s17, 0
      %p86 = por %p84, %p85
      %s87 = ssub.s32 %s11, %s18
      %p88 = scmp.eq.s32.totalorder %s87, 0
      %s90 = sadd.s32 %s89, 1
      %s91 = scalar_select %p88, %s89, %s90
      %p94 = pneg %p88
      %p95 = scmp.eq.s32.totalorder %s11, 1
      %p96 = por %p94, %p95
      %p97 = scmp.ne.s32.totalorder %s89, %s92
      %p98 = scmp.eq.s32.totalorder %s11, 0
      %p99 = por %p97, %p98
      %p100 = scmp.ne.s32.totalorder %s89, %s92
      %p101 = scmp.eq.s32.totalorder %s16, 1
      %p102 = por %p100, %p101
      %p103 = scmp.ne.s32.totalorder %s92, %s93
      %p104 = scmp.eq.s32.totalorder %s16, 0
      %p105 = por %p103, %p104
      %p106 = scmp.ne.s32.totalorder %s92, %s93
      %p107 = scmp.eq.s32.totalorder %s17, 1
      %p108 = por %p106, %p107
      %p110 = scmp.ne.s32.totalorder %s93, %s109
      %p111 = scmp.eq.s32.totalorder %s17, 0
      %p112 = por %p110, %p111
      %p113 = scmp.le.s32.totalorder 1, %s11
      %p114 = scmp.lt.s32.totalorder %s11, 3
      %p115 = pnand %p113, %p114
      %p116 = pneg %p115
      // Predicated region
      $region9: #{simple_cnn_forward.3} parent=5 // pred_check
        _
      $region10: #{simple_cnn_forward.3} parent=5 // pred_check_branch
        %118 = sbr.rel (%p115) target = $region12
      $region11: #{simple_cnn_forward.3} parent=5 // pred_region
        %s119 = ssub.s32 %s11, 1
        // Predicated region
        $region13: #{simple_cnn_forward.3} parent=11 // pred_check
          %p120 = pneg %p58
        $region14: #{simple_cnn_forward.3} parent=11 // pred_check_branch
          %122 = sbr.rel (%p120) target = $region16
        $region15: #{simple_cnn_forward.3} parent=11 // pred_region
          %124 = vsyncadd [#allocation3], 0
          %s125 = sshll.u32 %s1, 4
          %s126 = int_to_ptr.hbm [resolvable:$true] %s125
          %s127 = sshll.u32 [#allocation2], 4
          %s128 = int_to_ptr.vmem [resolvable:$true] %s127
          %133 = dma.hbm_to_vmem [thread:$0]  %s126, 128, %s128, [#allocation3], 64, 64, 4
        $region16: #{simple_cnn_forward.3} parent=11 // pred_fallthru
          _
        // Predicated region
        $region17: #{simple_cnn_forward.3} parent=11 // pred_check
          %p134 = pneg %p79
        $region18: #{simple_cnn_forward.3} parent=11 // pred_check_branch
          %136 = sbr.rel (%p134) target = $region20
        $region19: #{simple_cnn_forward.3} parent=11 // pred_region
          %138 = vsyncadd [#allocation5], 0
          %s140 = sshll.u32 %s2, 4
          %s141 = int_to_ptr.hbm [resolvable:$true] %s140
          %s142 = sshll.u32 [#allocation4], 4
          %s143 = int_to_ptr.vmem [resolvable:$true] %s142
          %145 = dma.hbm_to_vmem [thread:$0]  %s141, 16, %s143, [#allocation5]
        $region20: #{simple_cnn_forward.3} parent=11 // pred_fallthru
          _
      $region12: #{simple_cnn_forward.3} parent=5 // pred_fallthru
        _
      %p146 = scmp.lt.s32.totalorder %s11, 2
      // Predicated region
      $region21: #{simple_cnn_forward.3} parent=5 // pred_check
        %p147 = pneg %p146
      $region22: #{simple_cnn_forward.3} parent=5 // pred_check_branch
        %149 = sbr.rel (%p147) target = $region24
      $region23: #{simple_cnn_forward.3} parent=5 // pred_region
        // Predicated region
        $region25: #{simple_cnn_forward.3} parent=23 // pred_check
          %p150 = pneg %p31
        $region26: #{simple_cnn_forward.3} parent=23 // pred_check_branch
          %152 = sbr.rel (%p150) target = $region28
        $region27: #{simple_cnn_forward.3} parent=23 // pred_region
          %p153 = scmp.lt.s32.totalorder %s11, 1
          %s154 = scalar_select %p153, %s11, 1
          %s155 = smul.addr %s154, 20
          %s156 = smul.addr %s155, 4
          %s157 = scalar_lea.vmem %s0, %s156
        $region28: #{simple_cnn_forward.3} parent=23 // pred_fallthru
          _
      $region24: #{simple_cnn_forward.3} parent=5 // pred_fallthru
        _
      %p158 = scmp.le.s32.totalorder 1, %s11
      %p159 = scmp.lt.s32.totalorder %s11, 3
      %p160 = pnand %p158, %p159
      %p161 = pneg %p160
      // Predicated region
      $region29: #{simple_cnn_forward.3} parent=5 // pred_check
        _
      $region30: #{simple_cnn_forward.3} parent=5 // pred_check_branch
        %163 = sbr.rel (%p160) target = $region32
      $region31: #{simple_cnn_forward.3} parent=5 // pred_region
        %s164 = ssub.s32 %s11, 1
        // Predicated region
        $region33: #{simple_cnn_forward.3} parent=31 // pred_check
          %p165 = pneg %p58
        $region34: #{simple_cnn_forward.3} parent=31 // pred_check_branch
          %167 = sbr.rel (%p165) target = $region36
        $region35: #{simple_cnn_forward.3} parent=31 // pred_region
          %169 = dma.done [#allocation3], 128
        $region36: #{simple_cnn_forward.3} parent=31 // pred_fallthru
          _
        // Predicated region
        $region37: #{simple_cnn_forward.3} parent=31 // pred_check
          %p170 = pneg %p79
        $region38: #{simple_cnn_forward.3} parent=31 // pred_check_branch
          %172 = sbr.rel (%p170) target = $region40
        $region39: #{simple_cnn_forward.3} parent=31 // pred_region
          %174 = dma.done [#allocation5], 16
        $region40: #{simple_cnn_forward.3} parent=31 // pred_fallthru
          _
        %p175 = scmp.lt.s32.totalorder %s16, 1
        %s176 = scalar_select %p175, %s16, 1
        %s177 = smul.addr %s176, 20
        %s178 = smul.addr %s177, 4
        %s179 = scalar_lea.vmem %s0, %s178
        %p180 = pneg %p37
        %p181 = pneg %p34
        %p182 = pneg %p58
        %p183 = pneg %p55
        %p184 = pneg %p79
        %p185 = pneg %p76
        %p186 = pneg %p105
        %p187 = pneg %p102
        %p188 = scmp.lt.s32.totalorder %s16, 1
        %s189 = scalar_select %p188, %s16, 1
        %s190 = smul.addr %s189, 18
        %s191 = smul.addr %s190, 4
        %s192 = scalar_lea.vmem %s3, %s191
        %p193 = scmp.lt.s32.totalorder %s16, 1
        %s194 = scalar_select %p193, %s16, 1
        %s195 = smul.addr %s194, 20
        %s196 = smul.addr %s195, 4
        %s197 = scalar_lea.vmem %s0, %s196
        %p198 = scmp.lt.s32.totalorder %s16, 1
        %s199 = scalar_select %p198, %s16, 1
        %s200 = smul.addr %s199, 18
        %s201 = smul.addr %s200, 4
        %s202 = scalar_lea.vmem %s3, %s201
        %v204 = vld [vmem:[%s197] sm:$0xf]
        %v205 = vld [vmem:[%s197 + $0x4] sm:$0x1]
        %v206 = vld [vmem:[%s197 + $0x8] sm:$0xf]
        %v207 = vld [vmem:[%s197 + $0xc] sm:$0x1]
        %v208 = vld [vmem:[%s197 + $0x10] sm:$0xf]
        %v209 = vld [vmem:[%s197 + $0x14] sm:$0x1]
        %v210 = vld [vmem:[%s197 + $0x18] sm:$0xf]
        %v211 = vld [vmem:[%s197 + $0x1c] sm:$0x1]
        %v212 = vld [vmem:[%s197 + $0x20] sm:$0xf]
        %v213 = vld [vmem:[%s197 + $0x24] sm:$0x1]
        %v214 = vld [vmem:[%s197 + $0x28] sm:$0xf]
        %v215 = vld [vmem:[%s197 + $0x2c] sm:$0x1]
        %v216 = vld [vmem:[%s197 + $0x30] sm:$0xf]
        %v217 = vld [vmem:[%s197 + $0x34] sm:$0x1]
        %v218 = vld [vmem:[%s197 + $0x38] sm:$0xf]
        %v219 = vld [vmem:[%s197 + $0x3c] sm:$0x1]
        %v220 = vld [vmem:[%s197 + $0x40] sm:$0xf]
        %v221 = vld [vmem:[%s197 + $0x44] sm:$0x1]
        %v222 = vld [vmem:[%s197 + $0x48] sm:$0xf]
        %v223 = vld [vmem:[%s197 + $0x4c] sm:$0x1]
        %v242 = vrot.slane %v204, 3
        %v243 = vrot.slane %v205, 3
        %v244 = vrot.slane %v206, 3
        %v245 = vrot.slane %v207, 3
        %v246 = vrot.slane %v208, 3
        %v247 = vrot.slane %v209, 3
        %v248 = vrot.slane %v210, 3
        %v249 = vrot.slane %v211, 3
        %v250 = vrot.slane %v212, 3
        %v251 = vrot.slane %v213, 3
        %v252 = vrot.slane %v214, 3
        %v253 = vrot.slane %v215, 3
        %v254 = vrot.slane %v216, 3
        %v255 = vrot.slane %v217, 3
        %v256 = vrot.slane %v218, 3
        %v257 = vrot.slane %v219, 3
        %v258 = vrot.slane %v220, 3
        %v259 = vrot.slane %v221, 3
        %vm260 = vcmask 1040384
        %v263 = vsel %vm260, %v204, %v242
        %vm265 = vcmask 1041409
        %v266 = vsel %vm265, %v204, %v242
        %v268 = vrot.slane %v266, 1
        %vm269 = vcmask 1042434
        %v270 = vsel %vm269, %v204, %v242
        %v272 = vrot.slane %v270, 2
        %vm273 = vcmask 1043459
        %v274 = vsel %vm273, %v204, %v242
        %v276 = vrot.slane %v274, 3
        %v279 = vsel %vm260, %v205, %v243
        %v283 = vsel %vm260, %v206, %v244
        %v285 = vsel %vm265, %v206, %v244
        %v287 = vrot.slane %v285, 1
        %v288 = vsel %vm269, %v206, %v244
        %v290 = vrot.slane %v288, 2
        %v291 = vsel %vm273, %v206, %v244
        %v293 = vrot.slane %v291, 3
        %v296 = vsel %vm260, %v207, %v245
        %v300 = vsel %vm260, %v208, %v246
        %v302 = vsel %vm265, %v208, %v246
        %v304 = vrot.slane %v302, 1
        %v305 = vsel %vm269, %v208, %v246
        %v307 = vrot.slane %v305, 2
        %v308 = vsel %vm273, %v208, %v246
        %v310 = vrot.slane %v308, 3
        %v313 = vsel %vm260, %v209, %v247
        %v317 = vsel %vm260, %v210, %v248
        %v319 = vsel %vm265, %v210, %v248
        %v321 = vrot.slane %v319, 1
        %v322 = vsel %vm269, %v210, %v248
        %v324 = vrot.slane %v322, 2
        %v325 = vsel %vm273, %v210, %v248
        %v327 = vrot.slane %v325, 3
        %v330 = vsel %vm260, %v211, %v249
        %v334 = vsel %vm260, %v212, %v250
        %v336 = vsel %vm265, %v212, %v250
        %v338 = vrot.slane %v336, 1
        %v339 = vsel %vm269, %v212, %v250
        %v341 = vrot.slane %v339, 2
        %v342 = vsel %vm273, %v212, %v250
        %v344 = vrot.slane %v342, 3
        %v347 = vsel %vm260, %v213, %v251
        %v351 = vsel %vm260, %v214, %v252
        %v353 = vsel %vm265, %v214, %v252
        %v355 = vrot.slane %v353, 1
        %v356 = vsel %vm269, %v214, %v252
        %v358 = vrot.slane %v356, 2
        %v359 = vsel %vm273, %v214, %v252
        %v361 = vrot.slane %v359, 3
        %v364 = vsel %vm260, %v215, %v253
        %v368 = vsel %vm260, %v216, %v254
        %v370 = vsel %vm265, %v216, %v254
        %v372 = vrot.slane %v370, 1
        %v373 = vsel %vm269, %v216, %v254
        %v375 = vrot.slane %v373, 2
        %v376 = vsel %vm273, %v216, %v254
        %v378 = vrot.slane %v376, 3
        %v381 = vsel %vm260, %v217, %v255
        %v385 = vsel %vm260, %v218, %v256
        %v387 = vsel %vm265, %v218, %v256
        %v389 = vrot.slane %v387, 1
        %v390 = vsel %vm269, %v218, %v256
        %v392 = vrot.slane %v390, 2
        %v393 = vsel %vm273, %v218, %v256
        %v395 = vrot.slane %v393, 3
        %v398 = vsel %vm260, %v219, %v257
        %v402 = vsel %vm260, %v220, %v258
        %v404 = vsel %vm265, %v220, %v258
        %v406 = vrot.slane %v404, 1
        %v407 = vsel %vm269, %v220, %v258
        %v409 = vrot.slane %v407, 2
        %v410 = vsel %vm273, %v220, %v258
        %v412 = vrot.slane %v410, 3
        %v415 = vsel %vm260, %v221, %v259
        %v417 = vunpack.i.l.s16 %v263
        %v418 = vunpack.i.h.s16 %v263
        %v419 = vunpack.i.l.s16 %v268
        %v420 = vunpack.i.h.s16 %v268
        %v421 = vunpack.i.l.s16 %v272
        %v422 = vunpack.i.h.s16 %v272
        %v423 = vunpack.i.l.s16 %v276
        %v424 = vunpack.i.h.s16 %v276
        %v425 = vunpack.i.l.s16 %v279
        %v426 = vunpack.i.l.s16 %v283
        %v427 = vunpack.i.h.s16 %v283
        %v428 = vunpack.i.l.s16 %v287
        %v429 = vunpack.i.h.s16 %v287
        %v430 = vunpack.i.l.s16 %v290
        %v431 = vunpack.i.h.s16 %v290
        %v432 = vunpack.i.l.s16 %v293
        %v433 = vunpack.i.h.s16 %v293
        %v434 = vunpack.i.l.s16 %v296
        %v435 = vunpack.i.l.s16 %v300
        %v436 = vunpack.i.h.s16 %v300
        %v437 = vunpack.i.l.s16 %v304
        %v438 = vunpack.i.h.s16 %v304
        %v439 = vunpack.i.l.s16 %v307
        %v440 = vunpack.i.h.s16 %v307
        %v441 = vunpack.i.l.s16 %v310
        %v442 = vunpack.i.h.s16 %v310
        %v443 = vunpack.i.l.s16 %v313
        %v444 = vunpack.i.l.s16 %v317
        %v445 = vunpack.i.h.s16 %v317
        %v446 = vunpack.i.l.s16 %v321
        %v447 = vunpack.i.h.s16 %v321
        %v448 = vunpack.i.l.s16 %v324
        %v449 = vunpack.i.h.s16 %v324
        %v450 = vunpack.i.l.s16 %v327
        %v451 = vunpack.i.h.s16 %v327
        %v452 = vunpack.i.l.s16 %v330
        %v453 = vunpack.i.l.s16 %v334
        %v454 = vunpack.i.h.s16 %v334
        %v455 = vunpack.i.l.s16 %v338
        %v456 = vunpack.i.h.s16 %v338
        %v457 = vunpack.i.l.s16 %v341
        %v458 = vunpack.i.h.s16 %v341
        %v459 = vunpack.i.l.s16 %v344
        %v460 = vunpack.i.h.s16 %v344
        %v461 = vunpack.i.l.s16 %v347
        %v462 = vunpack.i.l.s16 %v351
        %v463 = vunpack.i.h.s16 %v351
        %v464 = vunpack.i.l.s16 %v355
        %v465 = vunpack.i.h.s16 %v355
        %v466 = vunpack.i.l.s16 %v358
        %v467 = vunpack.i.h.s16 %v358
        %v468 = vunpack.i.l.s16 %v361
        %v469 = vunpack.i.h.s16 %v361
        %v470 = vunpack.i.l.s16 %v364
        %v471 = vunpack.i.l.s16 %v368
        %v472 = vunpack.i.h.s16 %v368
        %v473 = vunpack.i.l.s16 %v372
        %v474 = vunpack.i.h.s16 %v372
        %v475 = vunpack.i.l.s16 %v375
        %v476 = vunpack.i.h.s16 %v375
        %v477 = vunpack.i.l.s16 %v378
        %v478 = vunpack.i.h.s16 %v378
        %v479 = vunpack.i.l.s16 %v381
        %v480 = vunpack.i.l.s16 %v385
        %v481 = vunpack.i.h.s16 %v385
        %v482 = vunpack.i.l.s16 %v389
        %v483 = vunpack.i.h.s16 %v389
        %v484 = vunpack.i.l.s16 %v392
        %v485 = vunpack.i.h.s16 %v392
        %v486 = vunpack.i.l.s16 %v395
        %v487 = vunpack.i.h.s16 %v395
        %v488 = vunpack.i.l.s16 %v398
        %v489 = vunpack.i.l.s16 %v402
        %v490 = vunpack.i.h.s16 %v402
        %v491 = vunpack.i.l.s16 %v406
        %v492 = vunpack.i.h.s16 %v406
        %v493 = vunpack.i.l.s16 %v409
        %v494 = vunpack.i.h.s16 %v409
        %v495 = vunpack.i.l.s16 %v412
        %v496 = vunpack.i.h.s16 %v412
        %v497 = vunpack.i.l.s16 %v415
        %v498 = vunpack.i.h.s16 %v279
        %v499 = vunpack.i.h.s16 %v296
        %v500 = vunpack.i.h.s16 %v313
        %v501 = vunpack.i.h.s16 %v330
        %v502 = vunpack.i.h.s16 %v347
        %v503 = vunpack.i.h.s16 %v364
        %v504 = vunpack.i.h.s16 %v381
        %v505 = vunpack.i.h.s16 %v398
        %v506 = vunpack.i.h.s16 %v415
        %v509 = vrot.slane %v222, 3
        %v510 = vrot.slane %v223, 3
        %v513 = vsel %vm260, %v222, %v509
        %v515 = vsel %vm265, %v222, %v509
        %v517 = vrot.slane %v515, 1
        %v518 = vsel %vm269, %v222, %v509
        %v520 = vrot.slane %v518, 2
        %v521 = vsel %vm273, %v222, %v509
        %v523 = vrot.slane %v521, 3
        %v526 = vsel %vm260, %v223, %v510
        %v528 = vunpack.i.l.s16 %v513
        %v529 = vunpack.i.h.s16 %v513
        %v530 = vunpack.i.l.s16 %v517
        %v531 = vunpack.i.h.s16 %v517
        %v532 = vunpack.i.l.s16 %v520
        %v533 = vunpack.i.h.s16 %v520
        %v534 = vunpack.i.l.s16 %v523
        %v535 = vunpack.i.h.s16 %v523
        %v536 = vunpack.i.l.s16 %v526
        %v537 = vunpack.i.h.s16 %v526
        %v538 = vld [vmem:[#allocation2] sm:$0xf]
        %v539 = vld [vmem:[#allocation2 + $0x4] sm:$0x3]
        %v540 = vpack.i.b16 %v418, %v417
        %v541 = vpack.i.b16 %v420, %v419
        %v542 = vpack.i.b16 %v422, %v421
        %v543 = vpack.i.b16 %v424, %v423
        %v544 = vpack.i.b16 %v426, %v425
        %v545 = vpack.i.b16 %v428, %v427
        %v546 = vpack.i.b16 %v430, %v429
        %v547 = vpack.i.b16 %v432, %v431
        %v548 = vpack.i.b16 %v434, %v433
        %v549 = vpack.i.b16 %v436, %v435
        %v550 = vpack.i.b16 %v438, %v437
        %v551 = vpack.i.b16 %v440, %v439
        %v552 = vpack.i.b16 %v442, %v441
        %v553 = vpack.i.b16 %v444, %v443
        %v554 = vpack.i.b16 %v446, %v445
        %v555 = vpack.i.b16 %v448, %v447
        %v556 = vpack.i.b16 %v450, %v449
        %v557 = vpack.i.b16 %v452, %v451
        %v558 = vpack.i.b16 %v454, %v453
        %v559 = vpack.i.b16 %v456, %v455
        %v560 = vpack.i.b16 %v458, %v457
        %v561 = vpack.i.b16 %v460, %v459
        %v562 = vpack.i.b16 %v462, %v461
        %v563 = vpack.i.b16 %v464, %v463
        %v564 = vpack.i.b16 %v466, %v465
        %v565 = vpack.i.b16 %v468, %v467
        %v566 = vpack.i.b16 %v470, %v469
        %v567 = vpack.i.b16 %v472, %v471
        %v568 = vpack.i.b16 %v474, %v473
        %v569 = vpack.i.b16 %v476, %v475
        %v570 = vpack.i.b16 %v478, %v477
        %v571 = vpack.i.b16 %v480, %v479
        %v572 = vpack.i.b16 %v482, %v481
        %v573 = vpack.i.b16 %v484, %v483
        %v574 = vpack.i.b16 %v486, %v485
        %v575 = vpack.i.b16 %v488, %v487
        %v576 = vpack.i.b16 %v490, %v489
        %v577 = vpack.i.b16 %v492, %v491
        %v578 = vpack.i.b16 %v494, %v493
        %v579 = vpack.i.b16 %v496, %v495
        %582 = vst [vmem:[#allocation1] ss:$9 sm:$0xff] %v540
        %s584 = scalar_lea.vmem [#allocation1], 1
        %585 = vst [vmem:[%s584] ss:$9 sm:$0xff] %v541
        %s587 = scalar_lea.vmem [#allocation1], 2
        %588 = vst [vmem:[%s587] ss:$9 sm:$0xff] %v542
        %s590 = scalar_lea.vmem [#allocation1], 3
        %591 = vst [vmem:[%s590] ss:$9 sm:$0xff] %v543
        %s593 = scalar_lea.vmem [#allocation1], 4
        %594 = vst [vmem:[%s593] ss:$9 sm:$0xff] %v544
        %s596 = scalar_lea.vmem [#allocation1], 5
        %597 = vst [vmem:[%s596] ss:$9 sm:$0xff] %v545
        %s599 = scalar_lea.vmem [#allocation1], 6
        %600 = vst [vmem:[%s599] ss:$9 sm:$0xff] %v546
        %s602 = scalar_lea.vmem [#allocation1], 7
        %603 = vst [vmem:[%s602] ss:$9 sm:$0xff] %v547
        %v604 = vld [vmem:[#allocation1] sm:$0xff]
        %606 = vst [vmem:[#allocation1] ss:$9 sm:$0xff] %v548
        %608 = vst [vmem:[%s584] ss:$9 sm:$0xff] %v549
        %610 = vst [vmem:[%s587] ss:$9 sm:$0xff] %v550
        %612 = vst [vmem:[%s590] ss:$9 sm:$0xff] %v551
        %614 = vst [vmem:[%s593] ss:$9 sm:$0xff] %v552
        %616 = vst [vmem:[%s596] ss:$9 sm:$0xff] %v553
        %618 = vst [vmem:[%s599] ss:$9 sm:$0xff] %v554
        %620 = vst [vmem:[%s602] ss:$9 sm:$0xff] %v555
        %v621 = vld [vmem:[#allocation1] sm:$0xff]
        %623 = vst [vmem:[#allocation1] ss:$9 sm:$0xff] %v556
        %625 = vst [vmem:[%s584] ss:$9 sm:$0xff] %v557
        %627 = vst [vmem:[%s587] ss:$9 sm:$0xff] %v558
        %629 = vst [vmem:[%s590] ss:$9 sm:$0xff] %v559
        %631 = vst [vmem:[%s593] ss:$9 sm:$0xff] %v560
        %633 = vst [vmem:[%s596] ss:$9 sm:$0xff] %v561
        %635 = vst [vmem:[%s599] ss:$9 sm:$0xff] %v562
        %637 = vst [vmem:[%s602] ss:$9 sm:$0xff] %v563
        %v638 = vld [vmem:[#allocation1] sm:$0xff]
        %640 = vst [vmem:[#allocation1] ss:$9 sm:$0xff] %v564
        %642 = vst [vmem:[%s584] ss:$9 sm:$0xff] %v565
        %644 = vst [vmem:[%s587] ss:$9 sm:$0xff] %v566
        %646 = vst [vmem:[%s590] ss:$9 sm:$0xff] %v567
        %648 = vst [vmem:[%s593] ss:$9 sm:$0xff] %v568
        %650 = vst [vmem:[%s596] ss:$9 sm:$0xff] %v569
        %652 = vst [vmem:[%s599] ss:$9 sm:$0xff] %v570
        %654 = vst [vmem:[%s602] ss:$9 sm:$0xff] %v571
        %v655 = vld [vmem:[#allocation1] sm:$0xff]
        %657 = vst [vmem:[#allocation1] ss:$9 sm:$0xff] %v572
        %659 = vst [vmem:[%s584] ss:$9 sm:$0xff] %v573
        %661 = vst [vmem:[%s587] ss:$9 sm:$0xff] %v574
        %663 = vst [vmem:[%s590] ss:$9 sm:$0xff] %v575
        %665 = vst [vmem:[%s593] ss:$9 sm:$0xff] %v576
        %667 = vst [vmem:[%s596] ss:$9 sm:$0xff] %v577
        %669 = vst [vmem:[%s599] ss:$9 sm:$0xff] %v578
        %671 = vst [vmem:[%s602] ss:$9 sm:$0xff] %v579
        %v672 = vld [vmem:[#allocation1] sm:$0xff]
        %674 = vst [vmem:[#allocation1] ss:$9 sm:$0xff] %v497
        %v675 = vld [vmem:[#allocation1] sm:$0xff]
        %v678 = vunpack.c.l.b16 %v538
        %v679 = vunpack.c.l.b16 %v539
        %v680 = vpack.c.b16 %v679, %v678
        %vm681 = vcmask 97280
        %v682 = vsel %vm681, %v604, 0
        %v684 = vsel %vm681, %v621, 0
        %v686 = vsel %vm681, %v638, 0
        %v688 = vsel %vm681, %v655, 0
        %v690 = vsel %vm681, %v672, 0
        %v692 = vsel %vm681, %v675, 0
        %vm694 = vcmask 1045504
        %v696 = vsel %vm694, %v680, 0
        %698 = vmatpush.bf16.msra.mxu0 0
        %699 = vmatpush.bf16.msra.mxu0 0
        %700 = vmatpush.bf16.msra.mxu0 0
        %701 = vmatpush.bf16.msra.mxu0 0
        %702 = vmatpush.bf16.msra.mxu0 0
        %703 = vmatpush.bf16.msra.mxu0 0
        %704 = vmatpush.bf16.msra.mxu0 0
        %705 = vmatpush.bf16.msra.mxu0 %v696
        %706 = vmatmul.bf16.gmra.mxu0 %v682
        %v707 = vpop.f32.mrf.mxu0
        %v708 = vadd.f32 0.0, %v707
        %v709 = vpop.f32.mrf.mxu0
        %v710 = vadd.f32 0.0, %v709
        %711 = vmatmul.bf16.gmra.mxu0 %v684
        %v712 = vpop.f32.mrf.mxu0
        %v713 = vadd.f32 0.0, %v712
        %v714 = vpop.f32.mrf.mxu0
        %v715 = vadd.f32 0.0, %v714
        %716 = vmatmul.bf16.gmra.mxu0 %v686
        %v717 = vpop.f32.mrf.mxu0
        %v718 = vadd.f32 0.0, %v717
        %v719 = vpop.f32.mrf.mxu0
        %v720 = vadd.f32 0.0, %v719
        %721 = vmatmul.bf16.gmra.mxu0 %v688
        %v722 = vpop.f32.mrf.mxu0
        %v723 = vadd.f32 0.0, %v722
        %v724 = vpop.f32.mrf.mxu0
        %v725 = vadd.f32 0.0, %v724
        %726 = vmatmul.bf16.gmra.mxu0 %v690
        %v727 = vpop.f32.mrf.mxu0
        %v728 = vadd.f32 0.0, %v727
        %v729 = vpop.f32.mrf.mxu0
        %v730 = vadd.f32 0.0, %v729
        %731 = vmatmul.bf16.gmra.mxu0 %v692
        %v732 = vpop.f32.mrf.mxu0
        %v733 = vadd.f32 0.0, %v732
        %v734 = vpop.f32.mrf.mxu0
        %735 = vdwg.mxu0
        %736 = vst [vmem:[#allocation1] ss:$9 sm:$0xff] %v540
        %s737 = scalar_lea.vmem [#allocation1], 1
        %738 = vst [vmem:[%s737] ss:$9 sm:$0xff] %v541
        %s739 = scalar_lea.vmem [#allocation1], 2
        %740 = vst [vmem:[%s739] ss:$9 sm:$0xff] %v542
        %s741 = scalar_lea.vmem [#allocation1], 3
        %742 = vst [vmem:[%s741] ss:$9 sm:$0xff] %v543
        %s743 = scalar_lea.vmem [#allocation1], 4
        %744 = vst [vmem:[%s743] ss:$9 sm:$0xff] %v544
        %s745 = scalar_lea.vmem [#allocation1], 5
        %746 = vst [vmem:[%s745] ss:$9 sm:$0xff] %v545
        %s747 = scalar_lea.vmem [#allocation1], 6
        %748 = vst [vmem:[%s747] ss:$9 sm:$0xff] %v546
        %s749 = scalar_lea.vmem [#allocation1], 7
        %750 = vst [vmem:[%s749] ss:$9 sm:$0xff] %v547
        %v751 = vld [vmem:[#allocation1] sm:$0xff]
        %753 = vst [vmem:[#allocation1] ss:$9 sm:$0xff] %v548
        %754 = vst [vmem:[%s737] ss:$9 sm:$0xff] %v549
        %755 = vst [vmem:[%s739] ss:$9 sm:$0xff] %v550
        %756 = vst [vmem:[%s741] ss:$9 sm:$0xff] %v551
        %757 = vst [vmem:[%s743] ss:$9 sm:$0xff] %v552
        %758 = vst [vmem:[%s745] ss:$9 sm:$0xff] %v553
        %759 = vst [vmem:[%s747] ss:$9 sm:$0xff] %v554
        %760 = vst [vmem:[%s749] ss:$9 sm:$0xff] %v555
        %v761 = vld [vmem:[#allocation1] sm:$0xff]
        %763 = vst [vmem:[#allocation1] ss:$9 sm:$0xff] %v556
        %764 = vst [vmem:[%s737] ss:$9 sm:$0xff] %v557
        %765 = vst [vmem:[%s739] ss:$9 sm:$0xff] %v558
        %766 = vst [vmem:[%s741] ss:$9 sm:$0xff] %v559
        %767 = vst [vmem:[%s743] ss:$9 sm:$0xff] %v560
        %768 = vst [vmem:[%s745] ss:$9 sm:$0xff] %v561
        %769 = vst [vmem:[%s747] ss:$9 sm:$0xff] %v562
        %770 = vst [vmem:[%s749] ss:$9 sm:$0xff] %v563
        %v771 = vld [vmem:[#allocation1] sm:$0xff]
        %773 = vst [vmem:[#allocation1] ss:$9 sm:$0xff] %v564
        %774 = vst [vmem:[%s737] ss:$9 sm:$0xff] %v565
        %775 = vst [vmem:[%s739] ss:$9 sm:$0xff] %v566
        %776 = vst [vmem:[%s741] ss:$9 sm:$0xff] %v567
        %777 = vst [vmem:[%s743] ss:$9 sm:$0xff] %v568
        %778 = vst [vmem:[%s745] ss:$9 sm:$0xff] %v569
        %779 = vst [vmem:[%s747] ss:$9 sm:$0xff] %v570
        %780 = vst [vmem:[%s749] ss:$9 sm:$0xff] %v571
        %v781 = vld [vmem:[#allocation1] sm:$0xff]
        %783 = vst [vmem:[#allocation1] ss:$9 sm:$0xff] %v572
        %784 = vst [vmem:[%s737] ss:$9 sm:$0xff] %v573
        %785 = vst [vmem:[%s739] ss:$9 sm:$0xff] %v574
        %786 = vst [vmem:[%s741] ss:$9 sm:$0xff] %v575
        %787 = vst [vmem:[%s743] ss:$9 sm:$0xff] %v576
        %788 = vst [vmem:[%s745] ss:$9 sm:$0xff] %v577
        %789 = vst [vmem:[%s747] ss:$9 sm:$0xff] %v578
        %790 = vst [vmem:[%s749] ss:$9 sm:$0xff] %v579
        %v791 = vld [vmem:[#allocation1] sm:$0xff]
        %793 = vst [vmem:[#allocation1] ss:$9 sm:$0xff] %v497
        %v794 = vld [vmem:[#allocation1] sm:$0xff]
        %796 = vrot.lane.b32.xlu0 %v751, 125
        %v797 = vpop.permute.xlu0 %796
        %798 = vrot.lane.b32.xlu0 %v761, 125
        %v799 = vpop.permute.xlu0 %798
        %800 = vrot.lane.b32.xlu0 %v771, 125
        %v801 = vpop.permute.xlu0 %800
        %802 = vrot.lane.b32.xlu0 %v781, 125
        %v803 = vpop.permute.xlu0 %802
        %804 = vrot.lane.b32.xlu0 %v791, 125
        %v805 = vpop.permute.xlu0 %804
        %806 = vrot.lane.b32.xlu0 %v794, 125
        %v807 = vpop.permute.xlu0 %806
        %v808 = vpack.i.b16 %v419, %v418
        %v809 = vpack.i.b16 %v421, %v420
        %v810 = vpack.i.b16 %v423, %v422
        %v811 = vpack.i.b16 %v425, %v424
        %v812 = vpack.i.b16 %v427, %v498
        %v813 = vpack.i.b16 %v429, %v428
        %v814 = vpack.i.b16 %v431, %v430
        %v815 = vpack.i.b16 %v433, %v432
        %v816 = vpack.i.b16 %v499, %v434
        %v817 = vpack.i.b16 %v437, %v436
        %v818 = vpack.i.b16 %v439, %v438
        %v819 = vpack.i.b16 %v441, %v440
        %v820 = vpack.i.b16 %v443, %v442
        %v821 = vpack.i.b16 %v445, %v500
        %v822 = vpack.i.b16 %v447, %v446
        %v823 = vpack.i.b16 %v449, %v448
        %v824 = vpack.i.b16 %v451, %v450
        %v825 = vpack.i.b16 %v501, %v452
        %v826 = vpack.i.b16 %v455, %v454
        %v827 = vpack.i.b16 %v457, %v456
        %v828 = vpack.i.b16 %v459, %v458
        %v829 = vpack.i.b16 %v461, %v460
        %v830 = vpack.i.b16 %v463, %v502
        %v831 = vpack.i.b16 %v465, %v464
        %v832 = vpack.i.b16 %v467, %v466
        %v833 = vpack.i.b16 %v469, %v468
        %v834 = vpack.i.b16 %v503, %v470
        %v835 = vpack.i.b16 %v473, %v472
        %v836 = vpack.i.b16 %v475, %v474
        %v837 = vpack.i.b16 %v477, %v476
        %v838 = vpack.i.b16 %v479, %v478
        %v839 = vpack.i.b16 %v481, %v504
        %v840 = vpack.i.b16 %v483, %v482
        %v841 = vpack.i.b16 %v485, %v484
        %v842 = vpack.i.b16 %v487, %v486
        %v843 = vpack.i.b16 %v505, %v488
        %v844 = vpack.i.b16 %v491, %v490
        %v845 = vpack.i.b16 %v493, %v492
        %v846 = vpack.i.b16 %v495, %v494
        %v847 = vpack.i.b16 %v497, %v496
        %850 = vst [vmem:[#allocation1] ss:$9 sm:$0xff] %v808
        %s852 = scalar_lea.vmem [#allocation1], 1
        %853 = vst [vmem:[%s852] ss:$9 sm:$0xff] %v809
        %s855 = scalar_lea.vmem [#allocation1], 2
        %856 = vst [vmem:[%s855] ss:$9 sm:$0xff] %v810
        %s858 = scalar_lea.vmem [#allocation1], 3
        %859 = vst [vmem:[%s858] ss:$9 sm:$0xff] %v811
        %s861 = scalar_lea.vmem [#allocation1], 4
        %862 = vst [vmem:[%s861] ss:$9 sm:$0xff] %v812
        %s864 = scalar_lea.vmem [#allocation1], 5
        %865 = vst [vmem:[%s864] ss:$9 sm:$0xff] %v813
        %s867 = scalar_lea.vmem [#allocation1], 6
        %868 = vst [vmem:[%s867] ss:$9 sm:$0xff] %v814
        %s870 = scalar_lea.vmem [#allocation1], 7
        %871 = vst [vmem:[%s870] ss:$9 sm:$0xff] %v815
        %v872 = vld [vmem:[#allocation1] sm:$0xff]
        %875 = vst [vmem:[#allocation1] ss:$9 sm:$0xff] %v816
        %877 = vst [vmem:[%s852] ss:$9 sm:$0xff] %v817
        %879 = vst [vmem:[%s855] ss:$9 sm:$0xff] %v818
        %881 = vst [vmem:[%s858] ss:$9 sm:$0xff] %v819
        %883 = vst [vmem:[%s861] ss:$9 sm:$0xff] %v820
        %885 = vst [vmem:[%s864] ss:$9 sm:$0xff] %v821
        %887 = vst [vmem:[%s867] ss:$9 sm:$0xff] %v822
        %889 = vst [vmem:[%s870] ss:$9 sm:$0xff] %v823
        %v890 = vld [vmem:[#allocation1] sm:$0xff]
        %893 = vst [vmem:[#allocation1] ss:$9 sm:$0xff] %v824
        %895 = vst [vmem:[%s852] ss:$9 sm:$0xff] %v825
        %897 = vst [vmem:[%s855] ss:$9 sm:$0xff] %v826
        %899 = vst [vmem:[%s858] ss:$9 sm:$0xff] %v827
        %901 = vst [vmem:[%s861] ss:$9 sm:$0xff] %v828
        %903 = vst [vmem:[%s864] ss:$9 sm:$0xff] %v829
        %905 = vst [vmem:[%s867] ss:$9 sm:$0xff] %v830
        %907 = vst [vmem:[%s870] ss:$9 sm:$0xff] %v831
        %v908 = vld [vmem:[#allocation1] sm:$0xff]
        %911 = vst [vmem:[#allocation1] ss:$9 sm:$0xff] %v832
        %913 = vst [vmem:[%s852] ss:$9 sm:$0xff] %v833
        %915 = vst [vmem:[%s855] ss:$9 sm:$0xff] %v834
        %917 = vst [vmem:[%s858] ss:$9 sm:$0xff] %v835
        %919 = vst [vmem:[%s861] ss:$9 sm:$0xff] %v836
        %921 = vst [vmem:[%s864] ss:$9 sm:$0xff] %v837
        %923 = vst [vmem:[%s867] ss:$9 sm:$0xff] %v838
        %925 = vst [vmem:[%s870] ss:$9 sm:$0xff] %v839
        %v926 = vld [vmem:[#allocation1] sm:$0xff]
        %929 = vst [vmem:[#allocation1] ss:$9 sm:$0xff] %v840
        %931 = vst [vmem:[%s852] ss:$9 sm:$0xff] %v841
        %933 = vst [vmem:[%s855] ss:$9 sm:$0xff] %v842
        %935 = vst [vmem:[%s858] ss:$9 sm:$0xff] %v843
        %937 = vst [vmem:[%s861] ss:$9 sm:$0xff] %v844
        %939 = vst [vmem:[%s864] ss:$9 sm:$0xff] %v845
        %941 = vst [vmem:[%s867] ss:$9 sm:$0xff] %v846
        %943 = vst [vmem:[%s870] ss:$9 sm:$0xff] %v847
        %v944 = vld [vmem:[#allocation1] sm:$0xff]
        %947 = vst [vmem:[#allocation1] ss:$9 sm:$0xff] %v506
        %v948 = vld [vmem:[#allocation1] sm:$0xff]
        %950 = vrot.lane.b32.xlu0 %v872, 3
        %v951 = vpop.permute.xlu0 %950
        %952 = vrot.lane.b32.xlu0 %v890, 3
        %v953 = vpop.permute.xlu0 %952
        %954 = vrot.lane.b32.xlu0 %v908, 3
        %v955 = vpop.permute.xlu0 %954
        %956 = vrot.lane.b32.xlu0 %v926, 3
        %v957 = vpop.permute.xlu0 %956
        %958 = vrot.lane.b32.xlu0 %v944, 3
        %v959 = vpop.permute.xlu0 %958
        %960 = vrot.lane.b32.xlu0 %v948, 3
        %v961 = vpop.permute.xlu0 %960
        %962 = vst [vmem:[#allocation1] ss:$9 sm:$0xff] %v540
        %s963 = scalar_lea.vmem [#allocation1], 1
        %964 = vst [vmem:[%s963] ss:$9 sm:$0xff] %v541
        %s965 = scalar_lea.vmem [#allocation1], 2
        %966 = vst [vmem:[%s965] ss:$9 sm:$0xff] %v542
        %s967 = scalar_lea.vmem [#allocation1], 3
        %968 = vst [vmem:[%s967] ss:$9 sm:$0xff] %v543
        %s969 = scalar_lea.vmem [#allocation1], 4
        %970 = vst [vmem:[%s969] ss:$9 sm:$0xff] %v544
        %s971 = scalar_lea.vmem [#allocation1], 5
        %972 = vst [vmem:[%s971] ss:$9 sm:$0xff] %v545
        %s973 = scalar_lea.vmem [#allocation1], 6
        %974 = vst [vmem:[%s973] ss:$9 sm:$0xff] %v546
        %s975 = scalar_lea.vmem [#allocation1], 7
        %976 = vst [vmem:[%s975] ss:$9 sm:$0xff] %v547
        %v977 = vld [vmem:[#allocation1] sm:$0xff]
        %979 = vst [vmem:[#allocation1] ss:$9 sm:$0xff] %v548
        %980 = vst [vmem:[%s963] ss:$9 sm:$0xff] %v549
        %981 = vst [vmem:[%s965] ss:$9 sm:$0xff] %v550
        %982 = vst [vmem:[%s967] ss:$9 sm:$0xff] %v551
        %983 = vst [vmem:[%s969] ss:$9 sm:$0xff] %v552
        %984 = vst [vmem:[%s971] ss:$9 sm:$0xff] %v553
        %985 = vst [vmem:[%s973] ss:$9 sm:$0xff] %v554
        %986 = vst [vmem:[%s975] ss:$9 sm:$0xff] %v555
        %v987 = vld [vmem:[#allocation1] sm:$0xff]
        %989 = vst [vmem:[#allocation1] ss:$9 sm:$0xff] %v556
        %990 = vst [vmem:[%s963] ss:$9 sm:$0xff] %v557
        %991 = vst [vmem:[%s965] ss:$9 sm:$0xff] %v558
        %992 = vst [vmem:[%s967] ss:$9 sm:$0xff] %v559
        %993 = vst [vmem:[%s969] ss:$9 sm:$0xff] %v560
        %994 = vst [vmem:[%s971] ss:$9 sm:$0xff] %v561
        %995 = vst [vmem:[%s973] ss:$9 sm:$0xff] %v562
        %996 = vst [vmem:[%s975] ss:$9 sm:$0xff] %v563
        %v997 = vld [vmem:[#allocation1] sm:$0xff]
        %999 = vst [vmem:[#allocation1] ss:$9 sm:$0xff] %v564
        %1000 = vst [vmem:[%s963] ss:$9 sm:$0xff] %v565
        %1001 = vst [vmem:[%s965] ss:$9 sm:$0xff] %v566
        %1002 = vst [vmem:[%s967] ss:$9 sm:$0xff] %v567
        %1003 = vst [vmem:[%s969] ss:$9 sm:$0xff] %v568
        %1004 = vst [vmem:[%s971] ss:$9 sm:$0xff] %v569
        %1005 = vst [vmem:[%s973] ss:$9 sm:$0xff] %v570
        %1006 = vst [vmem:[%s975] ss:$9 sm:$0xff] %v571
        %v1007 = vld [vmem:[#allocation1] sm:$0xff]
        %1009 = vst [vmem:[#allocation1] ss:$9 sm:$0xff] %v572
        %1010 = vst [vmem:[%s963] ss:$9 sm:$0xff] %v573
        %1011 = vst [vmem:[%s965] ss:$9 sm:$0xff] %v574
        %1012 = vst [vmem:[%s967] ss:$9 sm:$0xff] %v575
        %1013 = vst [vmem:[%s969] ss:$9 sm:$0xff] %v576
        %1014 = vst [vmem:[%s971] ss:$9 sm:$0xff] %v577
        %1015 = vst [vmem:[%s973] ss:$9 sm:$0xff] %v578
        %1016 = vst [vmem:[%s975] ss:$9 sm:$0xff] %v579
        %v1017 = vld [vmem:[#allocation1] sm:$0xff]
        %1019 = vst [vmem:[#allocation1] ss:$9 sm:$0xff] %v497
        %v1020 = vld [vmem:[#allocation1] sm:$0xff]
        %1022 = vrot.lane.b32.xlu0 %v977, 125
        %v1023 = vpop.permute.xlu0 %1022
        %1024 = vrot.lane.b32.xlu0 %v987, 125
        %v1025 = vpop.permute.xlu0 %1024
        %1026 = vrot.lane.b32.xlu0 %v997, 125
        %v1027 = vpop.permute.xlu0 %1026
        %1028 = vrot.lane.b32.xlu0 %v1007, 125
        %v1029 = vpop.permute.xlu0 %1028
        %1030 = vrot.lane.b32.xlu0 %v1017, 125
        %v1031 = vpop.permute.xlu0 %1030
        %1032 = vrot.lane.b32.xlu0 %v1020, 125
        %v1033 = vpop.permute.xlu0 %1032
        %1034 = vst [vmem:[#allocation1] ss:$9 sm:$0xff] %v808
        %s1035 = scalar_lea.vmem [#allocation1], 1
        %1036 = vst [vmem:[%s1035] ss:$9 sm:$0xff] %v809
        %s1037 = scalar_lea.vmem [#allocation1], 2
        %1038 = vst [vmem:[%s1037] ss:$9 sm:$0xff] %v810
        %s1039 = scalar_lea.vmem [#allocation1], 3
        %1040 = vst [vmem:[%s1039] ss:$9 sm:$0xff] %v811
        %s1041 = scalar_lea.vmem [#allocation1], 4
        %1042 = vst [vmem:[%s1041] ss:$9 sm:$0xff] %v812
        %s1043 = scalar_lea.vmem [#allocation1], 5
        %1044 = vst [vmem:[%s1043] ss:$9 sm:$0xff] %v813
        %s1045 = scalar_lea.vmem [#allocation1], 6
        %1046 = vst [vmem:[%s1045] ss:$9 sm:$0xff] %v814
        %s1047 = scalar_lea.vmem [#allocation1], 7
        %1048 = vst [vmem:[%s1047] ss:$9 sm:$0xff] %v815
        %v1049 = vld [vmem:[#allocation1] sm:$0xff]
        %1051 = vst [vmem:[#allocation1] ss:$9 sm:$0xff] %v816
        %1052 = vst [vmem:[%s1035] ss:$9 sm:$0xff] %v817
        %1053 = vst [vmem:[%s1037] ss:$9 sm:$0xff] %v818
        %1054 = vst [vmem:[%s1039] ss:$9 sm:$0xff] %v819
        %1055 = vst [vmem:[%s1041] ss:$9 sm:$0xff] %v820
        %1056 = vst [vmem:[%s1043] ss:$9 sm:$0xff] %v821
        %1057 = vst [vmem:[%s1045] ss:$9 sm:$0xff] %v822
        %1058 = vst [vmem:[%s1047] ss:$9 sm:$0xff] %v823
        %v1059 = vld [vmem:[#allocation1] sm:$0xff]
        %1061 = vst [vmem:[#allocation1] ss:$9 sm:$0xff] %v824
        %1062 = vst [vmem:[%s1035] ss:$9 sm:$0xff] %v825
        %1063 = vst [vmem:[%s1037] ss:$9 sm:$0xff] %v826
        %1064 = vst [vmem:[%s1039] ss:$9 sm:$0xff] %v827
        %1065 = vst [vmem:[%s1041] ss:$9 sm:$0xff] %v828
        %1066 = vst [vmem:[%s1043] ss:$9 sm:$0xff] %v829
        %1067 = vst [vmem:[%s1045] ss:$9 sm:$0xff] %v830
        %1068 = vst [vmem:[%s1047] ss:$9 sm:$0xff] %v831
        %v1069 = vld [vmem:[#allocation1] sm:$0xff]
        %1071 = vst [vmem:[#allocation1] ss:$9 sm:$0xff] %v832
        %1072 = vst [vmem:[%s1035] ss:$9 sm:$0xff] %v833
        %1073 = vst [vmem:[%s1037] ss:$9 sm:$0xff] %v834
        %1074 = vst [vmem:[%s1039] ss:$9 sm:$0xff] %v835
        %1075 = vst [vmem:[%s1041] ss:$9 sm:$0xff] %v836
        %1076 = vst [vmem:[%s1043] ss:$9 sm:$0xff] %v837
        %1077 = vst [vmem:[%s1045] ss:$9 sm:$0xff] %v838
        %1078 = vst [vmem:[%s1047] ss:$9 sm:$0xff] %v839
        %v1079 = vld [vmem:[#allocation1] sm:$0xff]
        %1081 = vst [vmem:[#allocation1] ss:$9 sm:$0xff] %v840
        %1082 = vst [vmem:[%s1035] ss:$9 sm:$0xff] %v841
        %1083 = vst [vmem:[%s1037] ss:$9 sm:$0xff] %v842
        %1084 = vst [vmem:[%s1039] ss:$9 sm:$0xff] %v843
        %1085 = vst [vmem:[%s1041] ss:$9 sm:$0xff] %v844
        %1086 = vst [vmem:[%s1043] ss:$9 sm:$0xff] %v845
        %1087 = vst [vmem:[%s1045] ss:$9 sm:$0xff] %v846
        %1088 = vst [vmem:[%s1047] ss:$9 sm:$0xff] %v847
        %v1089 = vld [vmem:[#allocation1] sm:$0xff]
        %1091 = vst [vmem:[#allocation1] ss:$9 sm:$0xff] %v506
        %v1092 = vld [vmem:[#allocation1] sm:$0xff]
        %1094 = vrot.lane.b32.xlu0 %v1049, 3
        %v1095 = vpop.permute.xlu0 %1094
        %1096 = vrot.lane.b32.xlu0 %v1059, 3
        %v1097 = vpop.permute.xlu0 %1096
        %1098 = vrot.lane.b32.xlu0 %v1069, 3
        %v1099 = vpop.permute.xlu0 %1098
        %1100 = vrot.lane.b32.xlu0 %v1079, 3
        %v1101 = vpop.permute.xlu0 %1100
        %1102 = vrot.lane.b32.xlu0 %v1089, 3
        %v1103 = vpop.permute.xlu0 %1102
        %1104 = vrot.lane.b32.xlu0 %v1092, 3
        %v1105 = vpop.permute.xlu0 %1104
        %vm1106 = vcmask 23552
        %v1109 = vsel %vm1106, %v797, %v951
        %v1112 = vsel %vm1106, %v799, %v953
        %v1115 = vsel %vm1106, %v801, %v955
        %v1118 = vsel %vm1106, %v803, %v957
        %v1121 = vsel %vm1106, %v805, %v959
        %v1124 = vsel %vm1106, %v807, %v961
        %vm1125 = vcmask 48128
        %v1127 = vsel %vm1125, %v1109, %v1023
        %v1129 = vsel %vm1125, %v1112, %v1025
        %v1131 = vsel %vm1125, %v1115, %v1027
        %v1133 = vsel %vm1125, %v1118, %v1029
        %v1135 = vsel %vm1125, %v1121, %v1031
        %v1137 = vsel %vm1125, %v1124, %v1033
        %vm1138 = vcmask 72704
        %v1140 = vsel %vm1138, %v1127, %v1095
        %v1142 = vsel %vm1138, %v1129, %v1097
        %v1144 = vsel %vm1138, %v1131, %v1099
        %v1146 = vsel %vm1138, %v1133, %v1101
        %v1148 = vsel %vm1138, %v1135, %v1103
        %v1150 = vsel %vm1138, %v1137, %v1105
        %v1151 = vsel %vm681, %v1140, 0
        %v1153 = vsel %vm681, %v1142, 0
        %v1155 = vsel %vm681, %v1144, 0
        %v1157 = vsel %vm681, %v1146, 0
        %v1159 = vsel %vm681, %v1148, 0
        %v1161 = vsel %vm681, %v1150, 0
        %1163 = vmatpush.bf16.msra.mxu0 0
        %1164 = vmatpush.bf16.msra.mxu0 0
        %1165 = vmatpush.bf16.msra.mxu0 0
        %1166 = vmatpush.bf16.msra.mxu0 0
        %1167 = vmatpush.bf16.msra.mxu0 0
        %1168 = vmatpush.bf16.msra.mxu0 0
        %1169 = vmatpush.bf16.msra.mxu0 0
        %1170 = vmatpush.bf16.msra.mxu0 %v696
        %1171 = vmatmul.bf16.gmra.mxu0 %v1151
        %v1172 = vpop.f32.mrf.mxu0
        %v1173 = vadd.f32 0.0, %v1172
        %v1174 = vpop.f32.mrf.mxu0
        %v1175 = vadd.f32 0.0, %v1174
        %1176 = vmatmul.bf16.gmra.mxu0 %v1153
        %v1177 = vpop.f32.mrf.mxu0
        %v1178 = vadd.f32 0.0, %v1177
        %v1179 = vpop.f32.mrf.mxu0
        %v1180 = vadd.f32 0.0, %v1179
        %1181 = vmatmul.bf16.gmra.mxu0 %v1155
        %v1182 = vpop.f32.mrf.mxu0
        %v1183 = vadd.f32 0.0, %v1182
        %v1184 = vpop.f32.mrf.mxu0
        %v1185 = vadd.f32 0.0, %v1184
        %1186 = vmatmul.bf16.gmra.mxu0 %v1157
        %v1187 = vpop.f32.mrf.mxu0
        %v1188 = vadd.f32 0.0, %v1187
        %v1189 = vpop.f32.mrf.mxu0
        %v1190 = vadd.f32 0.0, %v1189
        %1191 = vmatmul.bf16.gmra.mxu0 %v1159
        %v1192 = vpop.f32.mrf.mxu0
        %v1193 = vadd.f32 0.0, %v1192
        %v1194 = vpop.f32.mrf.mxu0
        %v1195 = vadd.f32 0.0, %v1194
        %1196 = vmatmul.bf16.gmra.mxu0 %v1161
        %v1197 = vpop.f32.mrf.mxu0
        %v1198 = vadd.f32 0.0, %v1197
        %v1199 = vpop.f32.mrf.mxu0
        %1200 = vdwg.mxu0
        %v1201 = vmax.f32 %v708, %v1173
        %v1202 = vmax.f32 %v710, %v1175
        %v1203 = vmax.f32 %v713, %v1178
        %v1204 = vmax.f32 %v715, %v1180
        %v1205 = vmax.f32 %v718, %v1183
        %v1206 = vmax.f32 %v720, %v1185
        %v1207 = vmax.f32 %v723, %v1188
        %v1208 = vmax.f32 %v725, %v1190
        %v1209 = vmax.f32 %v728, %v1193
        %v1210 = vmax.f32 %v730, %v1195
        %v1211 = vmax.f32 %v733, %v1198
        %1212 = vst [vmem:[#allocation1] ss:$9 sm:$0xff] %v540
        %s1213 = scalar_lea.vmem [#allocation1], 1
        %1214 = vst [vmem:[%s1213] ss:$9 sm:$0xff] %v541
        %s1215 = scalar_lea.vmem [#allocation1], 2
        %1216 = vst [vmem:[%s1215] ss:$9 sm:$0xff] %v542
        %s1217 = scalar_lea.vmem [#allocation1], 3
        %1218 = vst [vmem:[%s1217] ss:$9 sm:$0xff] %v543
        %s1219 = scalar_lea.vmem [#allocation1], 4
        %1220 = vst [vmem:[%s1219] ss:$9 sm:$0xff] %v544
        %s1221 = scalar_lea.vmem [#allocation1], 5
        %1222 = vst [vmem:[%s1221] ss:$9 sm:$0xff] %v545
        %s1223 = scalar_lea.vmem [#allocation1], 6
        %1224 = vst [vmem:[%s1223] ss:$9 sm:$0xff] %v546
        %s1225 = scalar_lea.vmem [#allocation1], 7
        %1226 = vst [vmem:[%s1225] ss:$9 sm:$0xff] %v547
        %v1227 = vld [vmem:[#allocation1] sm:$0xff]
        %1229 = vst [vmem:[#allocation1] ss:$9 sm:$0xff] %v548
        %1230 = vst [vmem:[%s1213] ss:$9 sm:$0xff] %v549
        %1231 = vst [vmem:[%s1215] ss:$9 sm:$0xff] %v550
        %1232 = vst [vmem:[%s1217] ss:$9 sm:$0xff] %v551
        %1233 = vst [vmem:[%s1219] ss:$9 sm:$0xff] %v552
        %1234 = vst [vmem:[%s1221] ss:$9 sm:$0xff] %v553
        %1235 = vst [vmem:[%s1223] ss:$9 sm:$0xff] %v554
        %1236 = vst [vmem:[%s1225] ss:$9 sm:$0xff] %v555
        %v1237 = vld [vmem:[#allocation1] sm:$0xff]
        %1239 = vst [vmem:[#allocation1] ss:$9 sm:$0xff] %v556
        %1240 = vst [vmem:[%s1213] ss:$9 sm:$0xff] %v557
        %1241 = vst [vmem:[%s1215] ss:$9 sm:$0xff] %v558
        %1242 = vst [vmem:[%s1217] ss:$9 sm:$0xff] %v559
        %1243 = vst [vmem:[%s1219] ss:$9 sm:$0xff] %v560
        %1244 = vst [vmem:[%s1221] ss:$9 sm:$0xff] %v561
        %1245 = vst [vmem:[%s1223] ss:$9 sm:$0xff] %v562
        %1246 = vst [vmem:[%s1225] ss:$9 sm:$0xff] %v563
        %v1247 = vld [vmem:[#allocation1] sm:$0xff]
        %1249 = vst [vmem:[#allocation1] ss:$9 sm:$0xff] %v564
        %1250 = vst [vmem:[%s1213] ss:$9 sm:$0xff] %v565
        %1251 = vst [vmem:[%s1215] ss:$9 sm:$0xff] %v566
        %1252 = vst [vmem:[%s1217] ss:$9 sm:$0xff] %v567
        %1253 = vst [vmem:[%s1219] ss:$9 sm:$0xff] %v568
        %1254 = vst [vmem:[%s1221] ss:$9 sm:$0xff] %v569
        %1255 = vst [vmem:[%s1223] ss:$9 sm:$0xff] %v570
        %1256 = vst [vmem:[%s1225] ss:$9 sm:$0xff] %v571
        %v1257 = vld [vmem:[#allocation1] sm:$0xff]
        %1259 = vst [vmem:[#allocation1] ss:$9 sm:$0xff] %v572
        %1260 = vst [vmem:[%s1213] ss:$9 sm:$0xff] %v573
        %1261 = vst [vmem:[%s1215] ss:$9 sm:$0xff] %v574
        %1262 = vst [vmem:[%s1217] ss:$9 sm:$0xff] %v575
        %1263 = vst [vmem:[%s1219] ss:$9 sm:$0xff] %v576
        %1264 = vst [vmem:[%s1221] ss:$9 sm:$0xff] %v577
        %1265 = vst [vmem:[%s1223] ss:$9 sm:$0xff] %v578
        %1266 = vst [vmem:[%s1225] ss:$9 sm:$0xff] %v579
        %v1267 = vld [vmem:[#allocation1] sm:$0xff]
        %1269 = vst [vmem:[#allocation1] ss:$9 sm:$0xff] %v497
        %v1270 = vld [vmem:[#allocation1] sm:$0xff]
        %1272 = vrot.lane.b32.xlu0 %v1227, 122
        %v1273 = vpop.permute.xlu0 %1272
        %1274 = vrot.lane.b32.xlu0 %v1237, 122
        %v1275 = vpop.permute.xlu0 %1274
        %1276 = vrot.lane.b32.xlu0 %v1247, 122
        %v1277 = vpop.permute.xlu0 %1276
        %1278 = vrot.lane.b32.xlu0 %v1257, 122
        %v1279 = vpop.permute.xlu0 %1278
        %1280 = vrot.lane.b32.xlu0 %v1267, 122
        %v1281 = vpop.permute.xlu0 %1280
        %1282 = vrot.lane.b32.xlu0 %v1270, 122
        %v1283 = vpop.permute.xlu0 %1282
        %1284 = vst [vmem:[#allocation1] ss:$9 sm:$0xff] %v540
        %s1285 = scalar_lea.vmem [#allocation1], 1
        %1286 = vst [vmem:[%s1285] ss:$9 sm:$0xff] %v541
        %s1287 = scalar_lea.vmem [#allocation1], 2
        %1288 = vst [vmem:[%s1287] ss:$9 sm:$0xff] %v542
        %s1289 = scalar_lea.vmem [#allocation1], 3
        %1290 = vst [vmem:[%s1289] ss:$9 sm:$0xff] %v543
        %s1291 = scalar_lea.vmem [#allocation1], 4
        %1292 = vst [vmem:[%s1291] ss:$9 sm:$0xff] %v544
        %s1293 = scalar_lea.vmem [#allocation1], 5
        %1294 = vst [vmem:[%s1293] ss:$9 sm:$0xff] %v545
        %s1295 = scalar_lea.vmem [#allocation1], 6
        %1296 = vst [vmem:[%s1295] ss:$9 sm:$0xff] %v546
        %s1297 = scalar_lea.vmem [#allocation1], 7
        %1298 = vst [vmem:[%s1297] ss:$9 sm:$0xff] %v547
        %v1299 = vld [vmem:[#allocation1] sm:$0xff]
        %1301 = vst [vmem:[#allocation1] ss:$9 sm:$0xff] %v548
        %1302 = vst [vmem:[%s1285] ss:$9 sm:$0xff] %v549
        %1303 = vst [vmem:[%s1287] ss:$9 sm:$0xff] %v550
        %1304 = vst [vmem:[%s1289] ss:$9 sm:$0xff] %v551
        %1305 = vst [vmem:[%s1291] ss:$9 sm:$0xff] %v552
        %1306 = vst [vmem:[%s1293] ss:$9 sm:$0xff] %v553
        %1307 = vst [vmem:[%s1295] ss:$9 sm:$0xff] %v554
        %1308 = vst [vmem:[%s1297] ss:$9 sm:$0xff] %v555
        %v1309 = vld [vmem:[#allocation1] sm:$0xff]
        %1311 = vst [vmem:[#allocation1] ss:$9 sm:$0xff] %v556
        %1312 = vst [vmem:[%s1285] ss:$9 sm:$0xff] %v557
        %1313 = vst [vmem:[%s1287] ss:$9 sm:$0xff] %v558
        %1314 = vst [vmem:[%s1289] ss:$9 sm:$0xff] %v559
        %1315 = vst [vmem:[%s1291] ss:$9 sm:$0xff] %v560
        %1316 = vst [vmem:[%s1293] ss:$9 sm:$0xff] %v561
        %1317 = vst [vmem:[%s1295] ss:$9 sm:$0xff] %v562
        %1318 = vst [vmem:[%s1297] ss:$9 sm:$0xff] %v563
        %v1319 = vld [vmem:[#allocation1] sm:$0xff]
        %1321 = vst [vmem:[#allocation1] ss:$9 sm:$0xff] %v564
        %1322 = vst [vmem:[%s1285] ss:$9 sm:$0xff] %v565
        %1323 = vst [vmem:[%s1287] ss:$9 sm:$0xff] %v566
        %1324 = vst [vmem:[%s1289] ss:$9 sm:$0xff] %v567
        %1325 = vst [vmem:[%s1291] ss:$9 sm:$0xff] %v568
        %1326 = vst [vmem:[%s1293] ss:$9 sm:$0xff] %v569
        %1327 = vst [vmem:[%s1295] ss:$9 sm:$0xff] %v570
        %1328 = vst [vmem:[%s1297] ss:$9 sm:$0xff] %v571
        %v1329 = vld [vmem:[#allocation1] sm:$0xff]
        %1331 = vst [vmem:[#allocation1] ss:$9 sm:$0xff] %v572
        %1332 = vst [vmem:[%s1285] ss:$9 sm:$0xff] %v573
        %1333 = vst [vmem:[%s1287] ss:$9 sm:$0xff] %v574
        %1334 = vst [vmem:[%s1289] ss:$9 sm:$0xff] %v575
        %1335 = vst [vmem:[%s1291] ss:$9 sm:$0xff] %v576
        %1336 = vst [vmem:[%s1293] ss:$9 sm:$0xff] %v577
        %1337 = vst [vmem:[%s1295] ss:$9 sm:$0xff] %v578
        %1338 = vst [vmem:[%s1297] ss:$9 sm:$0xff] %v579
        %v1339 = vld [vmem:[#allocation1] sm:$0xff]
        %1341 = vst [vmem:[#allocation1] ss:$9 sm:$0xff] %v497
        %v1342 = vld [vmem:[#allocation1] sm:$0xff]
        %1344 = vrot.lane.b32.xlu0 %v1299, 122
        %v1345 = vpop.permute.xlu0 %1344
        %1346 = vrot.lane.b32.xlu0 %v1309, 122
        %v1347 = vpop.permute.xlu0 %1346
        %1348 = vrot.lane.b32.xlu0 %v1319, 122
        %v1349 = vpop.permute.xlu0 %1348
        %1350 = vrot.lane.b32.xlu0 %v1329, 122
        %v1351 = vpop.permute.xlu0 %1350
        %1352 = vrot.lane.b32.xlu0 %v1339, 122
        %v1353 = vpop.permute.xlu0 %1352
        %1354 = vrot.lane.b32.xlu0 %v1342, 122
        %v1355 = vpop.permute.xlu0 %1354
        %v1356 = vpack.i.b16 %v427, %v426
        %v1357 = vpack.i.b16 %v435, %v434
        %v1358 = vpack.i.b16 %v445, %v444
        %v1359 = vpack.i.b16 %v453, %v452
        %v1360 = vpack.i.b16 %v463, %v462
        %v1361 = vpack.i.b16 %v471, %v470
        %v1362 = vpack.i.b16 %v481, %v480
        %v1363 = vpack.i.b16 %v489, %v488
        %v1364 = vpack.i.b16 %v529, %v528
        %v1365 = vpack.i.b16 %v531, %v530
        %v1366 = vpack.i.b16 %v533, %v532
        %v1367 = vpack.i.b16 %v535, %v534
        %1370 = vst [vmem:[#allocation1] ss:$9 sm:$0xff] %v1356
        %s1371 = scalar_lea.vmem [#allocation1], 1
        %1372 = vst [vmem:[%s1371] ss:$9 sm:$0xff] %v813
        %s1373 = scalar_lea.vmem [#allocation1], 2
        %1374 = vst [vmem:[%s1373] ss:$9 sm:$0xff] %v814
        %s1375 = scalar_lea.vmem [#allocation1], 3
        %1376 = vst [vmem:[%s1375] ss:$9 sm:$0xff] %v815
        %s1378 = scalar_lea.vmem [#allocation1], 4
        %1379 = vst [vmem:[%s1378] ss:$9 sm:$0xff] %v1357
        %s1380 = scalar_lea.vmem [#allocation1], 5
        %1381 = vst [vmem:[%s1380] ss:$9 sm:$0xff] %v817
        %s1382 = scalar_lea.vmem [#allocation1], 6
        %1383 = vst [vmem:[%s1382] ss:$9 sm:$0xff] %v818
        %s1384 = scalar_lea.vmem [#allocation1], 7
        %1385 = vst [vmem:[%s1384] ss:$9 sm:$0xff] %v819
        %v1386 = vld [vmem:[#allocation1] sm:$0xff]
        %1388 = vst [vmem:[#allocation1] ss:$9 sm:$0xff] %v820
        %1390 = vst [vmem:[%s1371] ss:$9 sm:$0xff] %v1358
        %1391 = vst [vmem:[%s1373] ss:$9 sm:$0xff] %v822
        %1392 = vst [vmem:[%s1375] ss:$9 sm:$0xff] %v823
        %1393 = vst [vmem:[%s1378] ss:$9 sm:$0xff] %v824
        %1395 = vst [vmem:[%s1380] ss:$9 sm:$0xff] %v1359
        %1396 = vst [vmem:[%s1382] ss:$9 sm:$0xff] %v826
        %1397 = vst [vmem:[%s1384] ss:$9 sm:$0xff] %v827
        %v1398 = vld [vmem:[#allocation1] sm:$0xff]
        %1400 = vst [vmem:[#allocation1] ss:$9 sm:$0xff] %v828
        %1401 = vst [vmem:[%s1371] ss:$9 sm:$0xff] %v829
        %1403 = vst [vmem:[%s1373] ss:$9 sm:$0xff] %v1360
        %1404 = vst [vmem:[%s1375] ss:$9 sm:$0xff] %v831
        %1405 = vst [vmem:[%s1378] ss:$9 sm:$0xff] %v832
        %1406 = vst [vmem:[%s1380] ss:$9 sm:$0xff] %v833
        %1408 = vst [vmem:[%s1382] ss:$9 sm:$0xff] %v1361
        %1409 = vst [vmem:[%s1384] ss:$9 sm:$0xff] %v835
        %v1410 = vld [vmem:[#allocation1] sm:$0xff]
        %1412 = vst [vmem:[#allocation1] ss:$9 sm:$0xff] %v836
        %1413 = vst [vmem:[%s1371] ss:$9 sm:$0xff] %v837
        %1414 = vst [vmem:[%s1373] ss:$9 sm:$0xff] %v838
        %1416 = vst [vmem:[%s1375] ss:$9 sm:$0xff] %v1362
        %1417 = vst [vmem:[%s1378] ss:$9 sm:$0xff] %v840
        %1418 = vst [vmem:[%s1380] ss:$9 sm:$0xff] %v841
        %1419 = vst [vmem:[%s1382] ss:$9 sm:$0xff] %v842
        %1421 = vst [vmem:[%s1384] ss:$9 sm:$0xff] %v1363
        %v1422 = vld [vmem:[#allocation1] sm:$0xff]
        %1424 = vst [vmem:[#allocation1] ss:$9 sm:$0xff] %v844
        %1425 = vst [vmem:[%s1371] ss:$9 sm:$0xff] %v845
        %1426 = vst [vmem:[%s1373] ss:$9 sm:$0xff] %v846
        %1427 = vst [vmem:[%s1375] ss:$9 sm:$0xff] %v847
        %1429 = vst [vmem:[%s1378] ss:$9 sm:$0xff] %v1364
        %1431 = vst [vmem:[%s1380] ss:$9 sm:$0xff] %v1365
        %1433 = vst [vmem:[%s1382] ss:$9 sm:$0xff] %v1366
        %1435 = vst [vmem:[%s1384] ss:$9 sm:$0xff] %v1367
        %v1436 = vld [vmem:[#allocation1] sm:$0xff]
        %1439 = vst [vmem:[#allocation1] ss:$9 sm:$0xff] %v536
        %v1440 = vld [vmem:[#allocation1] sm:$0xff]
        %1442 = vrot.lane.b32.xlu0 %v1386, 6
        %v1443 = vpop.permute.xlu0 %1442
        %1444 = vrot.lane.b32.xlu0 %v1398, 6
        %v1445 = vpop.permute.xlu0 %1444
        %1446 = vrot.lane.b32.xlu0 %v1410, 6
        %v1447 = vpop.permute.xlu0 %1446
        %1448 = vrot.lane.b32.xlu0 %v1422, 6
        %v1449 = vpop.permute.xlu0 %1448
        %1450 = vrot.lane.b32.xlu0 %v1436, 6
        %v1451 = vpop.permute.xlu0 %1450
        %1452 = vrot.lane.b32.xlu0 %v1440, 6
        %v1453 = vpop.permute.xlu0 %1452
        %1454 = vst [vmem:[#allocation1] ss:$9 sm:$0xff] %v1356
        %s1455 = scalar_lea.vmem [#allocation1], 1
        %1456 = vst [vmem:[%s1455] ss:$9 sm:$0xff] %v813
        %s1457 = scalar_lea.vmem [#allocation1], 2
        %1458 = vst [vmem:[%s1457] ss:$9 sm:$0xff] %v814
        %s1459 = scalar_lea.vmem [#allocation1], 3
        %1460 = vst [vmem:[%s1459] ss:$9 sm:$0xff] %v815
        %s1461 = scalar_lea.vmem [#allocation1], 4
        %1462 = vst [vmem:[%s1461] ss:$9 sm:$0xff] %v1357
        %s1463 = scalar_lea.vmem [#allocation1], 5
        %1464 = vst [vmem:[%s1463] ss:$9 sm:$0xff] %v817
        %s1465 = scalar_lea.vmem [#allocation1], 6
        %1466 = vst [vmem:[%s1465] ss:$9 sm:$0xff] %v818
        %s1467 = scalar_lea.vmem [#allocation1], 7
        %1468 = vst [vmem:[%s1467] ss:$9 sm:$0xff] %v819
        %v1469 = vld [vmem:[#allocation1] sm:$0xff]
        %1471 = vst [vmem:[#allocation1] ss:$9 sm:$0xff] %v820
        %1472 = vst [vmem:[%s1455] ss:$9 sm:$0xff] %v1358
        %1473 = vst [vmem:[%s1457] ss:$9 sm:$0xff] %v822
        %1474 = vst [vmem:[%s1459] ss:$9 sm:$0xff] %v823
        %1475 = vst [vmem:[%s1461] ss:$9 sm:$0xff] %v824
        %1476 = vst [vmem:[%s1463] ss:$9 sm:$0xff] %v1359
        %1477 = vst [vmem:[%s1465] ss:$9 sm:$0xff] %v826
        %1478 = vst [vmem:[%s1467] ss:$9 sm:$0xff] %v827
        %v1479 = vld [vmem:[#allocation1] sm:$0xff]
        %1481 = vst [vmem:[#allocation1] ss:$9 sm:$0xff] %v828
        %1482 = vst [vmem:[%s1455] ss:$9 sm:$0xff] %v829
        %1483 = vst [vmem:[%s1457] ss:$9 sm:$0xff] %v1360
        %1484 = vst [vmem:[%s1459] ss:$9 sm:$0xff] %v831
        %1485 = vst [vmem:[%s1461] ss:$9 sm:$0xff] %v832
        %1486 = vst [vmem:[%s1463] ss:$9 sm:$0xff] %v833
        %1487 = vst [vmem:[%s1465] ss:$9 sm:$0xff] %v1361
        %1488 = vst [vmem:[%s1467] ss:$9 sm:$0xff] %v835
        %v1489 = vld [vmem:[#allocation1] sm:$0xff]
        %1491 = vst [vmem:[#allocation1] ss:$9 sm:$0xff] %v836
        %1492 = vst [vmem:[%s1455] ss:$9 sm:$0xff] %v837
        %1493 = vst [vmem:[%s1457] ss:$9 sm:$0xff] %v838
        %1494 = vst [vmem:[%s1459] ss:$9 sm:$0xff] %v1362
        %1495 = vst [vmem:[%s1461] ss:$9 sm:$0xff] %v840
        %1496 = vst [vmem:[%s1463] ss:$9 sm:$0xff] %v841
        %1497 = vst [vmem:[%s1465] ss:$9 sm:$0xff] %v842
        %1498 = vst [vmem:[%s1467] ss:$9 sm:$0xff] %v1363
        %v1499 = vld [vmem:[#allocation1] sm:$0xff]
        %1501 = vst [vmem:[#allocation1] ss:$9 sm:$0xff] %v844
        %1502 = vst [vmem:[%s1455] ss:$9 sm:$0xff] %v845
        %1503 = vst [vmem:[%s1457] ss:$9 sm:$0xff] %v846
        %1504 = vst [vmem:[%s1459] ss:$9 sm:$0xff] %v847
        %1505 = vst [vmem:[%s1461] ss:$9 sm:$0xff] %v1364
        %1506 = vst [vmem:[%s1463] ss:$9 sm:$0xff] %v1365
        %1507 = vst [vmem:[%s1465] ss:$9 sm:$0xff] %v1366
        %1508 = vst [vmem:[%s1467] ss:$9 sm:$0xff] %v1367
        %v1509 = vld [vmem:[#allocation1] sm:$0xff]
        %1511 = vst [vmem:[#allocation1] ss:$9 sm:$0xff] %v536
        %v1512 = vld [vmem:[#allocation1] sm:$0xff]
        %1514 = vrot.lane.b32.xlu0 %v1469, 6
        %v1515 = vpop.permute.xlu0 %1514
        %1516 = vrot.lane.b32.xlu0 %v1479, 6
        %v1517 = vpop.permute.xlu0 %1516
        %1518 = vrot.lane.b32.xlu0 %v1489, 6
        %v1519 = vpop.permute.xlu0 %1518
        %1520 = vrot.lane.b32.xlu0 %v1499, 6
        %v1521 = vpop.permute.xlu0 %1520
        %1522 = vrot.lane.b32.xlu0 %v1509, 6
        %v1523 = vpop.permute.xlu0 %1522
        %1524 = vrot.lane.b32.xlu0 %v1512, 6
        %v1525 = vpop.permute.xlu0 %1524
        %v1528 = vsel %vm1106, %v1273, %v1345
        %v1531 = vsel %vm1106, %v1275, %v1347
        %v1534 = vsel %vm1106, %v1277, %v1349
        %v1537 = vsel %vm1106, %v1279, %v1351
        %v1540 = vsel %vm1106, %v1281, %v1353
        %v1543 = vsel %vm1106, %v1283, %v1355
        %v1545 = vsel %vm1125, %v1528, %v1443
        %v1547 = vsel %vm1125, %v1531, %v1445
        %v1549 = vsel %vm1125, %v1534, %v1447
        %v1551 = vsel %vm1125, %v1537, %v1449
        %v1553 = vsel %vm1125, %v1540, %v1451
        %v1555 = vsel %vm1125, %v1543, %v1453
        %v1557 = vsel %vm1138, %v1545, %v1515
        %v1559 = vsel %vm1138, %v1547, %v1517
        %v1561 = vsel %vm1138, %v1549, %v1519
        %v1563 = vsel %vm1138, %v1551, %v1521
        %v1565 = vsel %vm1138, %v1553, %v1523
        %v1567 = vsel %vm1138, %v1555, %v1525
        %v1568 = vsel %vm681, %v1557, 0
        %v1570 = vsel %vm681, %v1559, 0
        %v1572 = vsel %vm681, %v1561, 0
        %v1574 = vsel %vm681, %v1563, 0
        %v1576 = vsel %vm681, %v1565, 0
        %v1578 = vsel %vm681, %v1567, 0
        %1580 = vmatpush.bf16.msra.mxu0 0
        %1581 = vmatpush.bf16.msra.mxu0 0
        %1582 = vmatpush.bf16.msra.mxu0 0
        %1583 = vmatpush.bf16.msra.mxu0 0
        %1584 = vmatpush.bf16.msra.mxu0 0
        %1585 = vmatpush.bf16.msra.mxu0 0
        %1586 = vmatpush.bf16.msra.mxu0 0
        %1587 = vmatpush.bf16.msra.mxu0 %v696
        %1588 = vmatmul.bf16.gmra.mxu0 %v1568
        %v1589 = vpop.f32.mrf.mxu0
        %v1590 = vadd.f32 0.0, %v1589
        %v1591 = vpop.f32.mrf.mxu0
        %v1592 = vadd.f32 0.0, %v1591
        %1593 = vmatmul.bf16.gmra.mxu0 %v1570
        %v1594 = vpop.f32.mrf.mxu0
        %v1595 = vadd.f32 0.0, %v1594
        %v1596 = vpop.f32.mrf.mxu0
        %v1597 = vadd.f32 0.0, %v1596
        %1598 = vmatmul.bf16.gmra.mxu0 %v1572
        %v1599 = vpop.f32.mrf.mxu0
        %v1600 = vadd.f32 0.0, %v1599
        %v1601 = vpop.f32.mrf.mxu0
        %v1602 = vadd.f32 0.0, %v1601
        %1603 = vmatmul.bf16.gmra.mxu0 %v1574
        %v1604 = vpop.f32.mrf.mxu0
        %v1605 = vadd.f32 0.0, %v1604
        %v1606 = vpop.f32.mrf.mxu0
        %v1607 = vadd.f32 0.0, %v1606
        %1608 = vmatmul.bf16.gmra.mxu0 %v1576
        %v1609 = vpop.f32.mrf.mxu0
        %v1610 = vadd.f32 0.0, %v1609
        %v1611 = vpop.f32.mrf.mxu0
        %v1612 = vadd.f32 0.0, %v1611
        %1613 = vmatmul.bf16.gmra.mxu0 %v1578
        %v1614 = vpop.f32.mrf.mxu0
        %v1615 = vadd.f32 0.0, %v1614
        %v1616 = vpop.f32.mrf.mxu0
        %1617 = vdwg.mxu0
        %v1618 = vmax.f32 %v1201, %v1590
        %v1619 = vmax.f32 %v1202, %v1592
        %v1620 = vmax.f32 %v1203, %v1595
        %v1621 = vmax.f32 %v1204, %v1597
        %v1622 = vmax.f32 %v1205, %v1600
        %v1623 = vmax.f32 %v1206, %v1602
        %v1624 = vmax.f32 %v1207, %v1605
        %v1625 = vmax.f32 %v1208, %v1607
        %v1626 = vmax.f32 %v1209, %v1610
        %v1627 = vmax.f32 %v1210, %v1612
        %v1628 = vmax.f32 %v1211, %v1615
        %1629 = vst [vmem:[#allocation1] ss:$9 sm:$0xff] %v540
        %s1630 = scalar_lea.vmem [#allocation1], 1
        %1631 = vst [vmem:[%s1630] ss:$9 sm:$0xff] %v541
        %s1632 = scalar_lea.vmem [#allocation1], 2
        %1633 = vst [vmem:[%s1632] ss:$9 sm:$0xff] %v542
        %s1634 = scalar_lea.vmem [#allocation1], 3
        %1635 = vst [vmem:[%s1634] ss:$9 sm:$0xff] %v543
        %s1636 = scalar_lea.vmem [#allocation1], 4
        %1637 = vst [vmem:[%s1636] ss:$9 sm:$0xff] %v544
        %s1638 = scalar_lea.vmem [#allocation1], 5
        %1639 = vst [vmem:[%s1638] ss:$9 sm:$0xff] %v545
        %s1640 = scalar_lea.vmem [#allocation1], 6
        %1641 = vst [vmem:[%s1640] ss:$9 sm:$0xff] %v546
        %s1642 = scalar_lea.vmem [#allocation1], 7
        %1643 = vst [vmem:[%s1642] ss:$9 sm:$0xff] %v547
        %v1644 = vld [vmem:[#allocation1] sm:$0xff]
        %1646 = vst [vmem:[#allocation1] ss:$9 sm:$0xff] %v548
        %1647 = vst [vmem:[%s1630] ss:$9 sm:$0xff] %v549
        %1648 = vst [vmem:[%s1632] ss:$9 sm:$0xff] %v550
        %1649 = vst [vmem:[%s1634] ss:$9 sm:$0xff] %v551
        %1650 = vst [vmem:[%s1636] ss:$9 sm:$0xff] %v552
        %1651 = vst [vmem:[%s1638] ss:$9 sm:$0xff] %v553
        %1652 = vst [vmem:[%s1640] ss:$9 sm:$0xff] %v554
        %1653 = vst [vmem:[%s1642] ss:$9 sm:$0xff] %v555
        %v1654 = vld [vmem:[#allocation1] sm:$0xff]
        %1656 = vst [vmem:[#allocation1] ss:$9 sm:$0xff] %v556
        %1657 = vst [vmem:[%s1630] ss:$9 sm:$0xff] %v557
        %1658 = vst [vmem:[%s1632] ss:$9 sm:$0xff] %v558
        %1659 = vst [vmem:[%s1634] ss:$9 sm:$0xff] %v559
        %1660 = vst [vmem:[%s1636] ss:$9 sm:$0xff] %v560
        %1661 = vst [vmem:[%s1638] ss:$9 sm:$0xff] %v561
        %1662 = vst [vmem:[%s1640] ss:$9 sm:$0xff] %v562
        %1663 = vst [vmem:[%s1642] ss:$9 sm:$0xff] %v563
        %v1664 = vld [vmem:[#allocation1] sm:$0xff]
        %1666 = vst [vmem:[#allocation1] ss:$9 sm:$0xff] %v564
        %1667 = vst [vmem:[%s1630] ss:$9 sm:$0xff] %v565
        %1668 = vst [vmem:[%s1632] ss:$9 sm:$0xff] %v566
        %1669 = vst [vmem:[%s1634] ss:$9 sm:$0xff] %v567
        %1670 = vst [vmem:[%s1636] ss:$9 sm:$0xff] %v568
        %1671 = vst [vmem:[%s1638] ss:$9 sm:$0xff] %v569
        %1672 = vst [vmem:[%s1640] ss:$9 sm:$0xff] %v570
        %1673 = vst [vmem:[%s1642] ss:$9 sm:$0xff] %v571
        %v1674 = vld [vmem:[#allocation1] sm:$0xff]
        %1676 = vst [vmem:[#allocation1] ss:$9 sm:$0xff] %v572
        %1677 = vst [vmem:[%s1630] ss:$9 sm:$0xff] %v573
        %1678 = vst [vmem:[%s1632] ss:$9 sm:$0xff] %v574
        %1679 = vst [vmem:[%s1634] ss:$9 sm:$0xff] %v575
        %1680 = vst [vmem:[%s1636] ss:$9 sm:$0xff] %v576
        %1681 = vst [vmem:[%s1638] ss:$9 sm:$0xff] %v577
        %1682 = vst [vmem:[%s1640] ss:$9 sm:$0xff] %v578
        %1683 = vst [vmem:[%s1642] ss:$9 sm:$0xff] %v579
        %v1684 = vld [vmem:[#allocation1] sm:$0xff]
        %1686 = vst [vmem:[#allocation1] ss:$9 sm:$0xff] %v497
        %v1687 = vld [vmem:[#allocation1] sm:$0xff]
        %1689 = vrot.lane.b32.xlu0 %v1644, 119
        %v1690 = vpop.permute.xlu0 %1689
        %1691 = vrot.lane.b32.xlu0 %v1654, 119
        %v1692 = vpop.permute.xlu0 %1691
        %1693 = vrot.lane.b32.xlu0 %v1664, 119
        %v1694 = vpop.permute.xlu0 %1693
        %1695 = vrot.lane.b32.xlu0 %v1674, 119
        %v1696 = vpop.permute.xlu0 %1695
        %1697 = vrot.lane.b32.xlu0 %v1684, 119
        %v1698 = vpop.permute.xlu0 %1697
        %1699 = vrot.lane.b32.xlu0 %v1687, 119
        %v1700 = vpop.permute.xlu0 %1699
        %1701 = vst [vmem:[#allocation1] ss:$9 sm:$0xff] %v808
        %s1702 = scalar_lea.vmem [#allocation1], 1
        %1703 = vst [vmem:[%s1702] ss:$9 sm:$0xff] %v809
        %s1704 = scalar_lea.vmem [#allocation1], 2
        %1705 = vst [vmem:[%s1704] ss:$9 sm:$0xff] %v810
        %s1706 = scalar_lea.vmem [#allocation1], 3
        %1707 = vst [vmem:[%s1706] ss:$9 sm:$0xff] %v811
        %s1708 = scalar_lea.vmem [#allocation1], 4
        %1709 = vst [vmem:[%s1708] ss:$9 sm:$0xff] %v812
        %s1710 = scalar_lea.vmem [#allocation1], 5
        %1711 = vst [vmem:[%s1710] ss:$9 sm:$0xff] %v813
        %s1712 = scalar_lea.vmem [#allocation1], 6
        %1713 = vst [vmem:[%s1712] ss:$9 sm:$0xff] %v814
        %s1714 = scalar_lea.vmem [#allocation1], 7
        %1715 = vst [vmem:[%s1714] ss:$9 sm:$0xff] %v815
        %v1716 = vld [vmem:[#allocation1] sm:$0xff]
        %1718 = vst [vmem:[#allocation1] ss:$9 sm:$0xff] %v816
        %1719 = vst [vmem:[%s1702] ss:$9 sm:$0xff] %v817
        %1720 = vst [vmem:[%s1704] ss:$9 sm:$0xff] %v818
        %1721 = vst [vmem:[%s1706] ss:$9 sm:$0xff] %v819
        %1722 = vst [vmem:[%s1708] ss:$9 sm:$0xff] %v820
        %1723 = vst [vmem:[%s1710] ss:$9 sm:$0xff] %v821
        %1724 = vst [vmem:[%s1712] ss:$9 sm:$0xff] %v822
        %1725 = vst [vmem:[%s1714] ss:$9 sm:$0xff] %v823
        %v1726 = vld [vmem:[#allocation1] sm:$0xff]
        %1728 = vst [vmem:[#allocation1] ss:$9 sm:$0xff] %v824
        %1729 = vst [vmem:[%s1702] ss:$9 sm:$0xff] %v825
        %1730 = vst [vmem:[%s1704] ss:$9 sm:$0xff] %v826
        %1731 = vst [vmem:[%s1706] ss:$9 sm:$0xff] %v827
        %1732 = vst [vmem:[%s1708] ss:$9 sm:$0xff] %v828
        %1733 = vst [vmem:[%s1710] ss:$9 sm:$0xff] %v829
        %1734 = vst [vmem:[%s1712] ss:$9 sm:$0xff] %v830
        %1735 = vst [vmem:[%s1714] ss:$9 sm:$0xff] %v831
        %v1736 = vld [vmem:[#allocation1] sm:$0xff]
        %1738 = vst [vmem:[#allocation1] ss:$9 sm:$0xff] %v832
        %1739 = vst [vmem:[%s1702] ss:$9 sm:$0xff] %v833
        %1740 = vst [vmem:[%s1704] ss:$9 sm:$0xff] %v834
        %1741 = vst [vmem:[%s1706] ss:$9 sm:$0xff] %v835
        %1742 = vst [vmem:[%s1708] ss:$9 sm:$0xff] %v836
        %1743 = vst [vmem:[%s1710] ss:$9 sm:$0xff] %v837
        %1744 = vst [vmem:[%s1712] ss:$9 sm:$0xff] %v838
        %1745 = vst [vmem:[%s1714] ss:$9 sm:$0xff] %v839
        %v1746 = vld [vmem:[#allocation1] sm:$0xff]
        %1748 = vst [vmem:[#allocation1] ss:$9 sm:$0xff] %v840
        %1749 = vst [vmem:[%s1702] ss:$9 sm:$0xff] %v841
        %1750 = vst [vmem:[%s1704] ss:$9 sm:$0xff] %v842
        %1751 = vst [vmem:[%s1706] ss:$9 sm:$0xff] %v843
        %1752 = vst [vmem:[%s1708] ss:$9 sm:$0xff] %v844
        %1753 = vst [vmem:[%s1710] ss:$9 sm:$0xff] %v845
        %1754 = vst [vmem:[%s1712] ss:$9 sm:$0xff] %v846
        %1755 = vst [vmem:[%s1714] ss:$9 sm:$0xff] %v847
        %v1756 = vld [vmem:[#allocation1] sm:$0xff]
        %1758 = vst [vmem:[#allocation1] ss:$9 sm:$0xff] %v506
        %v1759 = vld [vmem:[#allocation1] sm:$0xff]
        %1761 = vrot.lane.b32.xlu0 %v1716, 125
        %v1762 = vpop.permute.xlu0 %1761
        %1763 = vrot.lane.b32.xlu0 %v1726, 125
        %v1764 = vpop.permute.xlu0 %1763
        %1765 = vrot.lane.b32.xlu0 %v1736, 125
        %v1766 = vpop.permute.xlu0 %1765
        %1767 = vrot.lane.b32.xlu0 %v1746, 125
        %v1768 = vpop.permute.xlu0 %1767
        %1769 = vrot.lane.b32.xlu0 %v1756, 125
        %v1770 = vpop.permute.xlu0 %1769
        %1771 = vrot.lane.b32.xlu0 %v1759, 125
        %v1772 = vpop.permute.xlu0 %1771
        %1773 = vst [vmem:[#allocation1] ss:$9 sm:$0xff] %v1356
        %s1774 = scalar_lea.vmem [#allocation1], 1
        %1775 = vst [vmem:[%s1774] ss:$9 sm:$0xff] %v813
        %s1776 = scalar_lea.vmem [#allocation1], 2
        %1777 = vst [vmem:[%s1776] ss:$9 sm:$0xff] %v814
        %s1778 = scalar_lea.vmem [#allocation1], 3
        %1779 = vst [vmem:[%s1778] ss:$9 sm:$0xff] %v815
        %s1780 = scalar_lea.vmem [#allocation1], 4
        %1781 = vst [vmem:[%s1780] ss:$9 sm:$0xff] %v1357
        %s1782 = scalar_lea.vmem [#allocation1], 5
        %1783 = vst [vmem:[%s1782] ss:$9 sm:$0xff] %v817
        %s1784 = scalar_lea.vmem [#allocation1], 6
        %1785 = vst [vmem:[%s1784] ss:$9 sm:$0xff] %v818
        %s1786 = scalar_lea.vmem [#allocation1], 7
        %1787 = vst [vmem:[%s1786] ss:$9 sm:$0xff] %v819
        %v1788 = vld [vmem:[#allocation1] sm:$0xff]
        %1790 = vst [vmem:[#allocation1] ss:$9 sm:$0xff] %v820
        %1791 = vst [vmem:[%s1774] ss:$9 sm:$0xff] %v1358
        %1792 = vst [vmem:[%s1776] ss:$9 sm:$0xff] %v822
        %1793 = vst [vmem:[%s1778] ss:$9 sm:$0xff] %v823
        %1794 = vst [vmem:[%s1780] ss:$9 sm:$0xff] %v824
        %1795 = vst [vmem:[%s1782] ss:$9 sm:$0xff] %v1359
        %1796 = vst [vmem:[%s1784] ss:$9 sm:$0xff] %v826
        %1797 = vst [vmem:[%s1786] ss:$9 sm:$0xff] %v827
        %v1798 = vld [vmem:[#allocation1] sm:$0xff]
        %1800 = vst [vmem:[#allocation1] ss:$9 sm:$0xff] %v828
        %1801 = vst [vmem:[%s1774] ss:$9 sm:$0xff] %v829
        %1802 = vst [vmem:[%s1776] ss:$9 sm:$0xff] %v1360
        %1803 = vst [vmem:[%s1778] ss:$9 sm:$0xff] %v831
        %1804 = vst [vmem:[%s1780] ss:$9 sm:$0xff] %v832
        %1805 = vst [vmem:[%s1782] ss:$9 sm:$0xff] %v833
        %1806 = vst [vmem:[%s1784] ss:$9 sm:$0xff] %v1361
        %1807 = vst [vmem:[%s1786] ss:$9 sm:$0xff] %v835
        %v1808 = vld [vmem:[#allocation1] sm:$0xff]
        %1810 = vst [vmem:[#allocation1] ss:$9 sm:$0xff] %v836
        %1811 = vst [vmem:[%s1774] ss:$9 sm:$0xff] %v837
        %1812 = vst [vmem:[%s1776] ss:$9 sm:$0xff] %v838
        %1813 = vst [vmem:[%s1778] ss:$9 sm:$0xff] %v1362
        %1814 = vst [vmem:[%s1780] ss:$9 sm:$0xff] %v840
        %1815 = vst [vmem:[%s1782] ss:$9 sm:$0xff] %v841
        %1816 = vst [vmem:[%s1784] ss:$9 sm:$0xff] %v842
        %1817 = vst [vmem:[%s1786] ss:$9 sm:$0xff] %v1363
        %v1818 = vld [vmem:[#allocation1] sm:$0xff]
        %1820 = vst [vmem:[#allocation1] ss:$9 sm:$0xff] %v844
        %1821 = vst [vmem:[%s1774] ss:$9 sm:$0xff] %v845
        %1822 = vst [vmem:[%s1776] ss:$9 sm:$0xff] %v846
        %1823 = vst [vmem:[%s1778] ss:$9 sm:$0xff] %v847
        %1824 = vst [vmem:[%s1780] ss:$9 sm:$0xff] %v1364
        %1825 = vst [vmem:[%s1782] ss:$9 sm:$0xff] %v1365
        %1826 = vst [vmem:[%s1784] ss:$9 sm:$0xff] %v1366
        %1827 = vst [vmem:[%s1786] ss:$9 sm:$0xff] %v1367
        %v1828 = vld [vmem:[#allocation1] sm:$0xff]
        %1830 = vst [vmem:[#allocation1] ss:$9 sm:$0xff] %v536
        %v1831 = vld [vmem:[#allocation1] sm:$0xff]
        %1833 = vrot.lane.b32.xlu0 %v1788, 3
        %v1834 = vpop.permute.xlu0 %1833
        %1835 = vrot.lane.b32.xlu0 %v1798, 3
        %v1836 = vpop.permute.xlu0 %1835
        %1837 = vrot.lane.b32.xlu0 %v1808, 3
        %v1838 = vpop.permute.xlu0 %1837
        %1839 = vrot.lane.b32.xlu0 %v1818, 3
        %v1840 = vpop.permute.xlu0 %1839
        %1841 = vrot.lane.b32.xlu0 %v1828, 3
        %v1842 = vpop.permute.xlu0 %1841
        %1843 = vrot.lane.b32.xlu0 %v1831, 3
        %v1844 = vpop.permute.xlu0 %1843
        %v1845 = vpack.i.b16 %v436, %v499
        %v1846 = vpack.i.b16 %v500, %v443
        %v1847 = vpack.i.b16 %v454, %v501
        %v1848 = vpack.i.b16 %v502, %v461
        %v1849 = vpack.i.b16 %v472, %v503
        %v1850 = vpack.i.b16 %v504, %v479
        %v1851 = vpack.i.b16 %v490, %v505
        %v1852 = vpack.i.b16 %v506, %v497
        %v1853 = vpack.i.b16 %v530, %v529
        %v1854 = vpack.i.b16 %v532, %v531
        %v1855 = vpack.i.b16 %v534, %v533
        %v1856 = vpack.i.b16 %v536, %v535
        %1858 = vst [vmem:[#allocation1] ss:$9 sm:$0xff] %v545
        %s1859 = scalar_lea.vmem [#allocation1], 1
        %1860 = vst [vmem:[%s1859] ss:$9 sm:$0xff] %v546
        %s1861 = scalar_lea.vmem [#allocation1], 2
        %1862 = vst [vmem:[%s1861] ss:$9 sm:$0xff] %v547
        %s1863 = scalar_lea.vmem [#allocation1], 3
        %1864 = vst [vmem:[%s1863] ss:$9 sm:$0xff] %v548
        %s1866 = scalar_lea.vmem [#allocation1], 4
        %1867 = vst [vmem:[%s1866] ss:$9 sm:$0xff] %v1845
        %s1868 = scalar_lea.vmem [#allocation1], 5
        %1869 = vst [vmem:[%s1868] ss:$9 sm:$0xff] %v550
        %s1870 = scalar_lea.vmem [#allocation1], 6
        %1871 = vst [vmem:[%s1870] ss:$9 sm:$0xff] %v551
        %s1872 = scalar_lea.vmem [#allocation1], 7
        %1873 = vst [vmem:[%s1872] ss:$9 sm:$0xff] %v552
        %v1874 = vld [vmem:[#allocation1] sm:$0xff]
        %1877 = vst [vmem:[#allocation1] ss:$9 sm:$0xff] %v1846
        %1878 = vst [vmem:[%s1859] ss:$9 sm:$0xff] %v554
        %1879 = vst [vmem:[%s1861] ss:$9 sm:$0xff] %v555
        %1880 = vst [vmem:[%s1863] ss:$9 sm:$0xff] %v556
        %1881 = vst [vmem:[%s1866] ss:$9 sm:$0xff] %v557
        %1883 = vst [vmem:[%s1868] ss:$9 sm:$0xff] %v1847
        %1884 = vst [vmem:[%s1870] ss:$9 sm:$0xff] %v559
        %1885 = vst [vmem:[%s1872] ss:$9 sm:$0xff] %v560
        %v1886 = vld [vmem:[#allocation1] sm:$0xff]
        %1888 = vst [vmem:[#allocation1] ss:$9 sm:$0xff] %v561
        %1890 = vst [vmem:[%s1859] ss:$9 sm:$0xff] %v1848
        %1891 = vst [vmem:[%s1861] ss:$9 sm:$0xff] %v563
        %1892 = vst [vmem:[%s1863] ss:$9 sm:$0xff] %v564
        %1893 = vst [vmem:[%s1866] ss:$9 sm:$0xff] %v565
        %1894 = vst [vmem:[%s1868] ss:$9 sm:$0xff] %v566
        %1896 = vst [vmem:[%s1870] ss:$9 sm:$0xff] %v1849
        %1897 = vst [vmem:[%s1872] ss:$9 sm:$0xff] %v568
        %v1898 = vld [vmem:[#allocation1] sm:$0xff]
        %1900 = vst [vmem:[#allocation1] ss:$9 sm:$0xff] %v569
        %1901 = vst [vmem:[%s1859] ss:$9 sm:$0xff] %v570
        %1903 = vst [vmem:[%s1861] ss:$9 sm:$0xff] %v1850
        %1904 = vst [vmem:[%s1863] ss:$9 sm:$0xff] %v572
        %1905 = vst [vmem:[%s1866] ss:$9 sm:$0xff] %v573
        %1906 = vst [vmem:[%s1868] ss:$9 sm:$0xff] %v574
        %1907 = vst [vmem:[%s1870] ss:$9 sm:$0xff] %v575
        %1909 = vst [vmem:[%s1872] ss:$9 sm:$0xff] %v1851
        %v1910 = vld [vmem:[#allocation1] sm:$0xff]
        %1912 = vst [vmem:[#allocation1] ss:$9 sm:$0xff] %v577
        %1913 = vst [vmem:[%s1859] ss:$9 sm:$0xff] %v578
        %1914 = vst [vmem:[%s1861] ss:$9 sm:$0xff] %v579
        %1916 = vst [vmem:[%s1863] ss:$9 sm:$0xff] %v1852
        %1918 = vst [vmem:[%s1866] ss:$9 sm:$0xff] %v1853
        %1920 = vst [vmem:[%s1868] ss:$9 sm:$0xff] %v1854
        %1922 = vst [vmem:[%s1870] ss:$9 sm:$0xff] %v1855
        %1924 = vst [vmem:[%s1872] ss:$9 sm:$0xff] %v1856
        %v1925 = vld [vmem:[#allocation1] sm:$0xff]
        %1928 = vst [vmem:[#allocation1] ss:$9 sm:$0xff] %v537
        %v1929 = vld [vmem:[#allocation1] sm:$0xff]
        %1931 = vrot.lane.b32.xlu0 %v1874, 9
        %v1932 = vpop.permute.xlu0 %1931
        %1933 = vrot.lane.b32.xlu0 %v1886, 9
        %v1934 = vpop.permute.xlu0 %1933
        %1935 = vrot.lane.b32.xlu0 %v1898, 9
        %v1936 = vpop.permute.xlu0 %1935
        %1937 = vrot.lane.b32.xlu0 %v1910, 9
        %v1938 = vpop.permute.xlu0 %1937
        %1939 = vrot.lane.b32.xlu0 %v1925, 9
        %v1940 = vpop.permute.xlu0 %1939
        %1941 = vrot.lane.b32.xlu0 %v1929, 9
        %v1942 = vpop.permute.xlu0 %1941
        %v1945 = vsel %vm1106, %v1690, %v1762
        %v1948 = vsel %vm1106, %v1692, %v1764
        %v1951 = vsel %vm1106, %v1694, %v1766
        %v1954 = vsel %vm1106, %v1696, %v1768
        %v1957 = vsel %vm1106, %v1698, %v1770
        %v1960 = vsel %vm1106, %v1700, %v1772
        %v1962 = vsel %vm1125, %v1945, %v1834
        %v1964 = vsel %vm1125, %v1948, %v1836
        %v1966 = vsel %vm1125, %v1951, %v1838
        %v1968 = vsel %vm1125, %v1954, %v1840
        %v1970 = vsel %vm1125, %v1957, %v1842
        %v1972 = vsel %vm1125, %v1960, %v1844
        %v1974 = vsel %vm1138, %v1962, %v1932
        %v1976 = vsel %vm1138, %v1964, %v1934
        %v1978 = vsel %vm1138, %v1966, %v1936
        %v1980 = vsel %vm1138, %v1968, %v1938
        %v1982 = vsel %vm1138, %v1970, %v1940
        %v1984 = vsel %vm1138, %v1972, %v1942
        %v1985 = vsel %vm681, %v1974, 0
        %v1987 = vsel %vm681, %v1976, 0
        %v1989 = vsel %vm681, %v1978, 0
        %v1991 = vsel %vm681, %v1980, 0
        %v1993 = vsel %vm681, %v1982, 0
        %v1995 = vsel %vm681, %v1984, 0
        %1997 = vmatpush.bf16.msra.mxu0 0
        %1998 = vmatpush.bf16.msra.mxu0 0
        %1999 = vmatpush.bf16.msra.mxu0 0
        %2000 = vmatpush.bf16.msra.mxu0 0
        %2001 = vmatpush.bf16.msra.mxu0 0
        %2002 = vmatpush.bf16.msra.mxu0 0
        %2003 = vmatpush.bf16.msra.mxu0 0
        %2004 = vmatpush.bf16.msra.mxu0 %v696
        %2005 = vmatmul.bf16.gmra.mxu0 %v1985
        %v2006 = vpop.f32.mrf.mxu0
        %v2007 = vadd.f32 0.0, %v2006
        %v2008 = vpop.f32.mrf.mxu0
        %v2009 = vadd.f32 0.0, %v2008
        %2010 = vmatmul.bf16.gmra.mxu0 %v1987
        %v2011 = vpop.f32.mrf.mxu0
        %v2012 = vadd.f32 0.0, %v2011
        %v2013 = vpop.f32.mrf.mxu0
        %v2014 = vadd.f32 0.0, %v2013
        %2015 = vmatmul.bf16.gmra.mxu0 %v1989
        %v2016 = vpop.f32.mrf.mxu0
        %v2017 = vadd.f32 0.0, %v2016
        %v2018 = vpop.f32.mrf.mxu0
        %v2019 = vadd.f32 0.0, %v2018
        %2020 = vmatmul.bf16.gmra.mxu0 %v1991
        %v2021 = vpop.f32.mrf.mxu0
        %v2022 = vadd.f32 0.0, %v2021
        %v2023 = vpop.f32.mrf.mxu0
        %v2024 = vadd.f32 0.0, %v2023
        %2025 = vmatmul.bf16.gmra.mxu0 %v1993
        %v2026 = vpop.f32.mrf.mxu0
        %v2027 = vadd.f32 0.0, %v2026
        %v2028 = vpop.f32.mrf.mxu0
        %v2029 = vadd.f32 0.0, %v2028
        %2030 = vmatmul.bf16.gmra.mxu0 %v1995
        %v2031 = vpop.f32.mrf.mxu0
        %v2032 = vadd.f32 0.0, %v2031
        %v2033 = vpop.f32.mrf.mxu0
        %2034 = vdwg.mxu0
        %v2035 = vmax.f32 %v1618, %v2007
        %v2036 = vmax.f32 %v1619, %v2009
        %v2037 = vmax.f32 %v1620, %v2012
        %v2038 = vmax.f32 %v1621, %v2014
        %v2039 = vmax.f32 %v1622, %v2017
        %v2040 = vmax.f32 %v1623, %v2019
        %v2041 = vmax.f32 %v1624, %v2022
        %v2042 = vmax.f32 %v1625, %v2024
        %v2043 = vmax.f32 %v1626, %v2027
        %v2044 = vmax.f32 %v1627, %v2029
        %v2045 = vmax.f32 %v1628, %v2032
        %v2046 = vld [vmem:[#allocation4] sm:$0x1]
        %v2048 = vperm.slane %v2046, 0
        %v2050 = vadd.f32 %v2035, %v2048
        %v2051 = vadd.f32 %v2036, %v2048
        %v2052 = vadd.f32 %v2037, %v2048
        %v2053 = vadd.f32 %v2038, %v2048
        %v2054 = vadd.f32 %v2039, %v2048
        %v2055 = vadd.f32 %v2040, %v2048
        %v2056 = vadd.f32 %v2041, %v2048
        %v2057 = vadd.f32 %v2042, %v2048
        %v2058 = vadd.f32 %v2043, %v2048
        %v2059 = vadd.f32 %v2044, %v2048
        %v2060 = vadd.f32 %v2045, %v2048
        %v2061 = vmax.f32 %v2050, 0.0
        %v2062 = vmax.f32 %v2051, 0.0
        %v2063 = vmax.f32 %v2052, 0.0
        %v2064 = vmax.f32 %v2053, 0.0
        %v2065 = vmax.f32 %v2054, 0.0
        %v2066 = vmax.f32 %v2055, 0.0
        %v2067 = vmax.f32 %v2056, 0.0
        %v2068 = vmax.f32 %v2057, 0.0
        %v2069 = vmax.f32 %v2058, 0.0
        %v2070 = vmax.f32 %v2059, 0.0
        %v2071 = vmax.f32 %v2060, 0.0
        %v2083 = vrot.slane %v2061, 1
        %v2084 = vrot.slane %v2061, 2
        %v2085 = vrot.slane %v2061, 3
        %v2086 = vrot.slane %v2061, 4
        %v2087 = vrot.slane %v2061, 5
        %v2088 = vrot.slane %v2061, 6
        %v2089 = vrot.slane %v2061, 7
        %v2090 = vrot.slane %v2062, 1
        %v2091 = vrot.slane %v2062, 2
        %v2092 = vrot.slane %v2062, 3
        %v2093 = vrot.slane %v2062, 4
        %v2094 = vrot.slane %v2062, 5
        %v2095 = vrot.slane %v2062, 6
        %v2096 = vrot.slane %v2062, 7
        %v2097 = vrot.slane %v2063, 1
        %v2098 = vrot.slane %v2063, 2
        %v2099 = vrot.slane %v2063, 3
        %v2100 = vrot.slane %v2063, 4
        %v2101 = vrot.slane %v2063, 5
        %v2102 = vrot.slane %v2063, 6
        %v2103 = vrot.slane %v2063, 7
        %v2104 = vrot.slane %v2064, 1
        %v2105 = vrot.slane %v2064, 2
        %v2106 = vrot.slane %v2064, 3
        %v2107 = vrot.slane %v2064, 4
        %v2108 = vrot.slane %v2064, 5
        %v2109 = vrot.slane %v2064, 6
        %v2110 = vrot.slane %v2064, 7
        %v2111 = vrot.slane %v2065, 1
        %v2112 = vrot.slane %v2065, 2
        %v2113 = vrot.slane %v2065, 3
        %v2114 = vrot.slane %v2065, 4
        %v2115 = vrot.slane %v2065, 5
        %v2116 = vrot.slane %v2065, 6
        %v2117 = vrot.slane %v2065, 7
        %v2118 = vrot.slane %v2066, 1
        %v2119 = vrot.slane %v2066, 2
        %v2120 = vrot.slane %v2066, 3
        %v2121 = vrot.slane %v2066, 4
        %v2122 = vrot.slane %v2066, 5
        %v2123 = vrot.slane %v2066, 6
        %v2124 = vrot.slane %v2066, 7
        %v2125 = vrot.slane %v2067, 1
        %v2126 = vrot.slane %v2067, 2
        %v2127 = vrot.slane %v2067, 3
        %v2128 = vrot.slane %v2067, 4
        %v2129 = vrot.slane %v2067, 5
        %v2130 = vrot.slane %v2067, 6
        %v2131 = vrot.slane %v2067, 7
        %v2132 = vrot.slane %v2068, 1
        %v2133 = vrot.slane %v2068, 2
        %v2134 = vrot.slane %v2068, 3
        %v2135 = vrot.slane %v2068, 4
        %v2136 = vrot.slane %v2068, 5
        %v2137 = vrot.slane %v2068, 6
        %v2138 = vrot.slane %v2068, 7
        %v2139 = vrot.slane %v2069, 1
        %v2140 = vrot.slane %v2069, 2
        %v2141 = vrot.slane %v2069, 3
        %v2142 = vrot.slane %v2069, 4
        %v2143 = vrot.slane %v2069, 5
        %v2144 = vrot.slane %v2069, 6
        %v2145 = vrot.slane %v2069, 7
        %v2146 = vrot.slane %v2070, 1
        %v2147 = vrot.slane %v2070, 2
        %v2148 = vrot.slane %v2070, 3
        %v2149 = vrot.slane %v2070, 4
        %v2150 = vrot.slane %v2070, 5
        %v2151 = vrot.slane %v2070, 6
        %v2152 = vrot.slane %v2070, 7
        %2153 = vst [vmem:[#allocation1] ss:$9 sm:$0xff] %v2061
        %s2154 = scalar_lea.vmem [#allocation1], 1
        %2155 = vst [vmem:[%s2154] ss:$9 sm:$0xff] %v2083
        %s2156 = scalar_lea.vmem [#allocation1], 2
        %2157 = vst [vmem:[%s2156] ss:$9 sm:$0xff] %v2084
        %s2158 = scalar_lea.vmem [#allocation1], 3
        %2159 = vst [vmem:[%s2158] ss:$9 sm:$0xff] %v2085
        %s2160 = scalar_lea.vmem [#allocation1], 4
        %2161 = vst [vmem:[%s2160] ss:$9 sm:$0xff] %v2086
        %s2162 = scalar_lea.vmem [#allocation1], 5
        %2163 = vst [vmem:[%s2162] ss:$9 sm:$0xff] %v2087
        %s2164 = scalar_lea.vmem [#allocation1], 6
        %2165 = vst [vmem:[%s2164] ss:$9 sm:$0xff] %v2088
        %s2166 = scalar_lea.vmem [#allocation1], 7
        %2167 = vst [vmem:[%s2166] ss:$9 sm:$0xff] %v2089
        %v2168 = vld [vmem:[#allocation1] sm:$0xff]
        %2169 = vst [vmem:[#allocation1] ss:$9 sm:$0xff] %v2062
        %v2170 = vld [vmem:[#allocation1] sm:$0xff]
        %2171 = vst [vmem:[#allocation1] ss:$9 sm:$0xff] %v2090
        %2172 = vst [vmem:[%s2154] ss:$9 sm:$0xff] %v2091
        %2173 = vst [vmem:[%s2156] ss:$9 sm:$0xff] %v2092
        %2174 = vst [vmem:[%s2158] ss:$9 sm:$0xff] %v2093
        %2175 = vst [vmem:[%s2160] ss:$9 sm:$0xff] %v2094
        %2176 = vst [vmem:[%s2162] ss:$9 sm:$0xff] %v2095
        %2177 = vst [vmem:[%s2164] ss:$9 sm:$0xff] %v2096
        %2178 = vst [vmem:[%s2166] ss:$9 sm:$0xff] %v2063
        %v2179 = vld [vmem:[#allocation1] sm:$0xff]
        %2180 = vst [vmem:[#allocation1] ss:$9 sm:$0xff] %v2097
        %v2181 = vld [vmem:[#allocation1] sm:$0xff]
        %2182 = vst [vmem:[#allocation1] ss:$9 sm:$0xff] %v2098
        %2183 = vst [vmem:[%s2154] ss:$9 sm:$0xff] %v2099
        %2184 = vst [vmem:[%s2156] ss:$9 sm:$0xff] %v2100
        %2185 = vst [vmem:[%s2158] ss:$9 sm:$0xff] %v2101
        %2186 = vst [vmem:[%s2160] ss:$9 sm:$0xff] %v2102
        %2187 = vst [vmem:[%s2162] ss:$9 sm:$0xff] %v2103
        %2188 = vst [vmem:[%s2164] ss:$9 sm:$0xff] %v2064
        %2189 = vst [vmem:[%s2166] ss:$9 sm:$0xff] %v2104
        %v2190 = vld [vmem:[#allocation1] sm:$0xff]
        %2191 = vst [vmem:[#allocation1] ss:$9 sm:$0xff] %v2105
        %v2192 = vld [vmem:[#allocation1] sm:$0xff]
        %2193 = vst [vmem:[#allocation1] ss:$9 sm:$0xff] %v2106
        %2194 = vst [vmem:[%s2154] ss:$9 sm:$0xff] %v2107
        %2195 = vst [vmem:[%s2156] ss:$9 sm:$0xff] %v2108
        %2196 = vst [vmem:[%s2158] ss:$9 sm:$0xff] %v2109
        %2197 = vst [vmem:[%s2160] ss:$9 sm:$0xff] %v2110
        %2198 = vst [vmem:[%s2162] ss:$9 sm:$0xff] %v2065
        %2199 = vst [vmem:[%s2164] ss:$9 sm:$0xff] %v2111
        %2200 = vst [vmem:[%s2166] ss:$9 sm:$0xff] %v2112
        %v2201 = vld [vmem:[#allocation1] sm:$0xff]
        %2202 = vst [vmem:[#allocation1] ss:$9 sm:$0xff] %v2113
        %v2203 = vld [vmem:[#allocation1] sm:$0xff]
        %2204 = vst [vmem:[#allocation1] ss:$9 sm:$0xff] %v2114
        %2205 = vst [vmem:[%s2154] ss:$9 sm:$0xff] %v2115
        %2206 = vst [vmem:[%s2156] ss:$9 sm:$0xff] %v2116
        %2207 = vst [vmem:[%s2158] ss:$9 sm:$0xff] %v2117
        %2208 = vst [vmem:[%s2160] ss:$9 sm:$0xff] %v2066
        %2209 = vst [vmem:[%s2162] ss:$9 sm:$0xff] %v2118
        %2210 = vst [vmem:[%s2164] ss:$9 sm:$0xff] %v2119
        %2211 = vst [vmem:[%s2166] ss:$9 sm:$0xff] %v2120
        %v2212 = vld [vmem:[#allocation1] sm:$0xff]
        %2213 = vst [vmem:[#allocation1] ss:$9 sm:$0xff] %v2121
        %v2214 = vld [vmem:[#allocation1] sm:$0xff]
        %2215 = vst [vmem:[#allocation1] ss:$9 sm:$0xff] %v2122
        %2216 = vst [vmem:[%s2154] ss:$9 sm:$0xff] %v2123
        %2217 = vst [vmem:[%s2156] ss:$9 sm:$0xff] %v2124
        %2218 = vst [vmem:[%s2158] ss:$9 sm:$0xff] %v2067
        %2219 = vst [vmem:[%s2160] ss:$9 sm:$0xff] %v2125
        %2220 = vst [vmem:[%s2162] ss:$9 sm:$0xff] %v2126
        %2221 = vst [vmem:[%s2164] ss:$9 sm:$0xff] %v2127
        %2222 = vst [vmem:[%s2166] ss:$9 sm:$0xff] %v2128
        %v2223 = vld [vmem:[#allocation1] sm:$0xff]
        %2224 = vst [vmem:[#allocation1] ss:$9 sm:$0xff] %v2129
        %v2225 = vld [vmem:[#allocation1] sm:$0xff]
        %2226 = vst [vmem:[#allocation1] ss:$9 sm:$0xff] %v2130
        %2227 = vst [vmem:[%s2154] ss:$9 sm:$0xff] %v2131
        %2228 = vst [vmem:[%s2156] ss:$9 sm:$0xff] %v2068
        %2229 = vst [vmem:[%s2158] ss:$9 sm:$0xff] %v2132
        %2230 = vst [vmem:[%s2160] ss:$9 sm:$0xff] %v2133
        %2231 = vst [vmem:[%s2162] ss:$9 sm:$0xff] %v2134
        %2232 = vst [vmem:[%s2164] ss:$9 sm:$0xff] %v2135
        %2233 = vst [vmem:[%s2166] ss:$9 sm:$0xff] %v2136
        %v2234 = vld [vmem:[#allocation1] sm:$0xff]
        %2235 = vst [vmem:[#allocation1] ss:$9 sm:$0xff] %v2137
        %v2236 = vld [vmem:[#allocation1] sm:$0xff]
        %2237 = vst [vmem:[#allocation1] ss:$9 sm:$0xff] %v2138
        %2238 = vst [vmem:[%s2154] ss:$9 sm:$0xff] %v2069
        %2239 = vst [vmem:[%s2156] ss:$9 sm:$0xff] %v2139
        %2240 = vst [vmem:[%s2158] ss:$9 sm:$0xff] %v2140
        %2241 = vst [vmem:[%s2160] ss:$9 sm:$0xff] %v2141
        %2242 = vst [vmem:[%s2162] ss:$9 sm:$0xff] %v2142
        %2243 = vst [vmem:[%s2164] ss:$9 sm:$0xff] %v2143
        %2244 = vst [vmem:[%s2166] ss:$9 sm:$0xff] %v2144
        %v2245 = vld [vmem:[#allocation1] sm:$0xff]
        %2246 = vst [vmem:[#allocation1] ss:$9 sm:$0xff] %v2145
        %v2247 = vld [vmem:[#allocation1] sm:$0xff]
        %2248 = vst [vmem:[#allocation1] ss:$9 sm:$0xff] %v2070
        %2249 = vst [vmem:[%s2154] ss:$9 sm:$0xff] %v2146
        %2250 = vst [vmem:[%s2156] ss:$9 sm:$0xff] %v2147
        %2251 = vst [vmem:[%s2158] ss:$9 sm:$0xff] %v2148
        %2252 = vst [vmem:[%s2160] ss:$9 sm:$0xff] %v2149
        %2253 = vst [vmem:[%s2162] ss:$9 sm:$0xff] %v2150
        %2254 = vst [vmem:[%s2164] ss:$9 sm:$0xff] %v2151
        %2255 = vst [vmem:[%s2166] ss:$9 sm:$0xff] %v2152
        %v2256 = vld [vmem:[#allocation1] sm:$0xff]
        %2257 = vst [vmem:[#allocation1] ss:$9 sm:$0xff] %v2071
        %v2258 = vld [vmem:[#allocation1] sm:$0xff]
        %v2277 = vpack.c.bf16 %v2168, %v2168
        %v2278 = vpack.c.bf16 %v2170, %v2170
        %v2279 = vpack.c.bf16 %v2179, %v2179
        %v2280 = vpack.c.bf16 %v2181, %v2181
        %v2281 = vpack.c.bf16 %v2190, %v2190
        %v2282 = vpack.c.bf16 %v2192, %v2192
        %v2283 = vpack.c.bf16 %v2201, %v2201
        %v2284 = vpack.c.bf16 %v2203, %v2203
        %v2285 = vpack.c.bf16 %v2212, %v2212
        %v2286 = vpack.c.bf16 %v2214, %v2214
        %v2287 = vpack.c.bf16 %v2223, %v2223
        %v2288 = vpack.c.bf16 %v2225, %v2225
        %v2289 = vpack.c.bf16 %v2234, %v2234
        %v2290 = vpack.c.bf16 %v2236, %v2236
        %v2291 = vpack.c.bf16 %v2245, %v2245
        %v2292 = vpack.c.bf16 %v2247, %v2247
        %v2293 = vpack.c.bf16 %v2256, %v2256
        %v2294 = vpack.c.bf16 %v2258, %v2258
        %vm2295 = vcmask 519168
        %2296 = vst.msk [vmem:[%s202] sm:$0xf] %vm2295, %v2277
        %vm2297 = vcmask 516096
        %vm2298 = vsmask.f32 256
        %vm2299 = vmand %vm2297, %vm2298
        %v2300 = vld [vmem:[%s202 + $0x4] sm:$0x1]
        %v2301 = vsel %vm2299, %v2278, %v2300
        %2302 = vst [vmem:[%s202 + $0x4] sm:$0x1] %v2301
        %2303 = vst.msk [vmem:[%s202 + $0x8] sm:$0xf] %vm2295, %v2279
        %v2304 = vld [vmem:[%s202 + $0xc] sm:$0x1]
        %v2305 = vsel %vm2299, %v2280, %v2304
        %2306 = vst [vmem:[%s202 + $0xc] sm:$0x1] %v2305
        %2307 = vst.msk [vmem:[%s202 + $0x10] sm:$0xf] %vm2295, %v2281
        %v2308 = vld [vmem:[%s202 + $0x14] sm:$0x1]
        %v2309 = vsel %vm2299, %v2282, %v2308
        %2310 = vst [vmem:[%s202 + $0x14] sm:$0x1] %v2309
        %2311 = vst.msk [vmem:[%s202 + $0x18] sm:$0xf] %vm2295, %v2283
        %v2312 = vld [vmem:[%s202 + $0x1c] sm:$0x1]
        %v2313 = vsel %vm2299, %v2284, %v2312
        %2314 = vst [vmem:[%s202 + $0x1c] sm:$0x1] %v2313
        %2315 = vst.msk [vmem:[%s202 + $0x20] sm:$0xf] %vm2295, %v2285
        %v2316 = vld [vmem:[%s202 + $0x24] sm:$0x1]
        %v2317 = vsel %vm2299, %v2286, %v2316
        %2318 = vst [vmem:[%s202 + $0x24] sm:$0x1] %v2317
        %2319 = vst.msk [vmem:[%s202 + $0x28] sm:$0xf] %vm2295, %v2287
        %v2320 = vld [vmem:[%s202 + $0x2c] sm:$0x1]
        %v2321 = vsel %vm2299, %v2288, %v2320
        %2322 = vst [vmem:[%s202 + $0x2c] sm:$0x1] %v2321
        %2323 = vst.msk [vmem:[%s202 + $0x30] sm:$0xf] %vm2295, %v2289
        %v2324 = vld [vmem:[%s202 + $0x34] sm:$0x1]
        %v2325 = vsel %vm2299, %v2290, %v2324
        %2326 = vst [vmem:[%s202 + $0x34] sm:$0x1] %v2325
        %2327 = vst.msk [vmem:[%s202 + $0x38] sm:$0xf] %vm2295, %v2291
        %v2328 = vld [vmem:[%s202 + $0x3c] sm:$0x1]
        %v2329 = vsel %vm2299, %v2292, %v2328
        %2330 = vst [vmem:[%s202 + $0x3c] sm:$0x1] %v2329
        %2331 = vst.msk [vmem:[%s202 + $0x40] sm:$0xf] %vm2295, %v2293
        %v2332 = vld [vmem:[%s202 + $0x44] sm:$0x1]
        %v2333 = vsel %vm2299, %v2294, %v2332
        %2334 = vst [vmem:[%s202 + $0x44] sm:$0x1] %v2333
        %p2335 = scmp.lt.s32.totalorder %s16, 1
        %s2336 = scalar_select %p2335, %s16, 1
        %s2337 = smul.addr %s2336, 18
        %s2338 = smul.addr %s2337, 4
        %s2339 = scalar_lea.vmem %s3, %s2338
        // Predicated region
        $region41: #{simple_cnn_forward.3} parent=31 // pred_check
          %p2340 = pneg %p102
        $region42: #{simple_cnn_forward.3} parent=31 // pred_check_branch
          %2342 = sbr.rel (%p2340) target = $region44
        $region43: #{simple_cnn_forward.3} parent=31 // pred_region
          _
        $region44: #{simple_cnn_forward.3} parent=31 // pred_fallthru
          _
      $region32: #{simple_cnn_forward.3} parent=5 // pred_fallthru
        _
      %p2343 = scmp.le.s32.totalorder 2, %s11
      // Predicated region
      $region45: #{simple_cnn_forward.3} parent=5 // pred_check
        %p2344 = pneg %p2343
      $region46: #{simple_cnn_forward.3} parent=5 // pred_check_branch
        %2346 = sbr.rel (%p2344) target = $region48
      $region47: #{simple_cnn_forward.3} parent=5 // pred_region
        %s2347 = ssub.s32 %s11, 2
        // Predicated region
        $region49: #{simple_cnn_forward.3} parent=47 // pred_check
          %p2348 = pneg %p108
        $region50: #{simple_cnn_forward.3} parent=47 // pred_check_branch
          %2350 = sbr.rel (%p2348) target = $region52
        $region51: #{simple_cnn_forward.3} parent=47 // pred_region
          %p2351 = scmp.lt.s32.totalorder %s17, 1
          %s2352 = scalar_select %p2351, %s17, 1
          %s2353 = smul.addr %s2352, 18
          %s2354 = smul.addr %s2353, 4
          %s2355 = scalar_lea.vmem %s3, %s2354
        $region52: #{simple_cnn_forward.3} parent=47 // pred_fallthru
          _
      $region48: #{simple_cnn_forward.3} parent=5 // pred_fallthru
        _
    $region6: #{simple_cnn_forward.3} parent=1 // loop_footer
      %s15 = sadd.s32 1, %s11
    $region7: #{simple_cnn_forward.3} parent=1 // loop_footer_branch
      %10 = sbr.rel target = $region3
    $region8: #{simple_cnn_forward.3} parent=1 // loop_exit
      _
    %2356 = vsyncpa [#allocation3], 1
    %s2357 = scalar_lea.sflag [#allocation3], 1
    %2358 = vsyncpa %s2357, 1
    %2359 = vsyncpa [#allocation5], 1

// kernel: simple_cnn_forward.5
$region0: #{simple_cnn_forward.5}
  #allocation0 [shape = 'u32[]', space=smem, size = 0x4, offset = 0x4, fixed_abs, tag = 'smem constant byte address 0x4 - core index']
  #allocation1 [shape = 'u32[72,128]{1,0:T(1,128)}', space=vmem, size = 0x9000, scoped, tag = 'internal scratch']
  %s0 = inlined_call_operand.vmem [shape: bf16[2,4608], index: 0, kind: input, shape index: {}]
  %s1 = inlined_call_operand.hbm [shape: bf16[4608,256], index: 1, kind: input, shape index: {}]
  %s2 = inlined_call_operand.hbm [shape: f32[1,256], index: 2, kind: input, shape index: {}]
  %s3 = inlined_call_operand.hbm [shape: bf16[256,128], index: 3, kind: input, shape index: {}]
  %s4 = inlined_call_operand.hbm [shape: f32[1,128], index: 4, kind: input, shape index: {}]
  %s5 = inlined_call_operand.hbm [shape: f32[2,128], index: 5, kind: output, shape index: {}]
  %s6 = sld [smem:[#allocation0]]
  $region46: #{simple_cnn_forward.5} parent=0
    _
  %s8 = ssub.s32 1, %s6
  %s9 = scalar_select 0, %s8, %s6
  $region1: #{simple_cnn_forward.5} parent=0
    #allocation2 [shape = 'u8[2359296]{0}', space=vmem, size = 0x240000, scoped, tag = 'input window, operand 1, single buffered']
    #allocation3 [shape = 's32[1]{0}', space=sflag, size = 0x4, scoped, tag = 'scoped memory for simple_cnn_forward.5']
    #allocation4 [shape = 's32[1]{0}', space=sflag, size = 0x4, scoped, tag = 'scoped memory for simple_cnn_forward.5']
    #allocation5 [shape = 'u8[1024]{0}', space=vmem, size = 0x400, scoped, tag = 'input window, operand 2, single buffered']
    #allocation6 [shape = 's32[1]{0}', space=sflag, size = 0x4, scoped, tag = 'scoped memory for simple_cnn_forward.5']
    #allocation7 [shape = 'u8[65536]{0}', space=vmem, size = 0x10000, scoped, tag = 'input window, operand 3, single buffered']
    #allocation8 [shape = 'u8[512]{0}', space=vmem, size = 0x400, scoped, tag = 'input window, operand 4, single buffered']
    #allocation9 [shape = 's32[1]{0}', space=sflag, size = 0x4, scoped, tag = 'scoped memory for simple_cnn_forward.5']
    #allocation10 [shape = 'u8[1024]{0}', space=vmem, size = 0x400, scoped, tag = 'output window, operand 0, single buffered']
    %10 = vsyncpa [#allocation3], 0
    %11 = vsyncpa [#allocation6], 0
    %12 = vsyncpa [#allocation9], 0
    %13 = vsyncpa [#allocation4], 0
    // Predicated region
    $region2: #{simple_cnn_forward.5} parent=1 // pred_check
      _
    $region3: #{simple_cnn_forward.5} parent=1 // pred_check_branch
      %15 = sbr.rel (0) target = $region5
    $region4: #{simple_cnn_forward.5} parent=1 // pred_region
      _
    $region5: #{simple_cnn_forward.5} parent=1 // pred_fallthru
      _
    // Predicated region
    $region6: #{simple_cnn_forward.5} parent=1 // pred_check
      _
    $region7: #{simple_cnn_forward.5} parent=1 // pred_check_branch
      %17 = sbr.rel (0) target = $region9
    $region8: #{simple_cnn_forward.5} parent=1 // pred_region
      %19 = vsyncadd [#allocation3], 0
      %s20 = sshll.u32 %s1, 4
      %s21 = int_to_ptr.hbm [resolvable:$true] %s20
      %s22 = sshll.u32 [#allocation2], 4
      %s23 = int_to_ptr.vmem [resolvable:$true] %s22
      %28 = dma.hbm_to_vmem [thread:$0]  %s21, 73728, %s23, [#allocation3], 128, 128, 8
    $region9: #{simple_cnn_forward.5} parent=1 // pred_fallthru
      _
    // Predicated region
    $region10: #{simple_cnn_forward.5} parent=1 // pred_check
      _
    $region11: #{simple_cnn_forward.5} parent=1 // pred_check_branch
      %30 = sbr.rel (0) target = $region13
    $region12: #{simple_cnn_forward.5} parent=1 // pred_region
      %32 = vsyncadd [#allocation6], 0
      %s34 = sshll.u32 %s2, 4
      %s35 = int_to_ptr.hbm [resolvable:$true] %s34
      %s36 = sshll.u32 [#allocation5], 4
      %s37 = int_to_ptr.vmem [resolvable:$true] %s36
      %39 = dma.hbm_to_vmem [thread:$0]  %s35, 32, %s37, [#allocation6]
    $region13: #{simple_cnn_forward.5} parent=1 // pred_fallthru
      _
    // Predicated region
    $region14: #{simple_cnn_forward.5} parent=1 // pred_check
      _
    $region15: #{simple_cnn_forward.5} parent=1 // pred_check_branch
      %41 = sbr.rel (0) target = $region17
    $region16: #{simple_cnn_forward.5} parent=1 // pred_region
      %43 = vsyncadd [#allocation6], 0
      %s44 = sshll.u32 %s3, 4
      %s45 = int_to_ptr.hbm [resolvable:$true] %s44
      %s46 = sshll.u32 [#allocation7], 4
      %s47 = int_to_ptr.vmem [resolvable:$true] %s46
      %52 = dma.hbm_to_vmem [thread:$0]  %s45, 2048, %s47, [#allocation6], 64, 64, 4
    $region17: #{simple_cnn_forward.5} parent=1 // pred_fallthru
      _
    // Predicated region
    $region18: #{simple_cnn_forward.5} parent=1 // pred_check
      _
    $region19: #{simple_cnn_forward.5} parent=1 // pred_check_branch
      %54 = sbr.rel (0) target = $region21
    $region20: #{simple_cnn_forward.5} parent=1 // pred_region
      %56 = vsyncadd [#allocation9], 0
      %s58 = sshll.u32 %s4, 4
      %s59 = int_to_ptr.hbm [resolvable:$true] %s58
      %s60 = sshll.u32 [#allocation8], 4
      %s61 = int_to_ptr.vmem [resolvable:$true] %s60
      %63 = dma.hbm_to_vmem [thread:$0]  %s59, 16, %s61, [#allocation9]
    $region21: #{simple_cnn_forward.5} parent=1 // pred_fallthru
      _
    // Predicated region
    $region22: #{simple_cnn_forward.5} parent=1 // pred_check
      _
    $region23: #{simple_cnn_forward.5} parent=1 // pred_check_branch
      %65 = sbr.rel (0) target = $region25
    $region24: #{simple_cnn_forward.5} parent=1 // pred_region
      %67 = dma.done [#allocation3], 73728
    $region25: #{simple_cnn_forward.5} parent=1 // pred_fallthru
      _
    // Predicated region
    $region26: #{simple_cnn_forward.5} parent=1 // pred_check
      _
    $region27: #{simple_cnn_forward.5} parent=1 // pred_check_branch
      %69 = sbr.rel (0) target = $region29
    $region28: #{simple_cnn_forward.5} parent=1 // pred_region
      %71 = dma.done [#allocation6], 32
    $region29: #{simple_cnn_forward.5} parent=1 // pred_fallthru
      _
    // Predicated region
    $region30: #{simple_cnn_forward.5} parent=1 // pred_check
      _
    $region31: #{simple_cnn_forward.5} parent=1 // pred_check_branch
      %73 = sbr.rel (0) target = $region33
    $region32: #{simple_cnn_forward.5} parent=1 // pred_region
      %75 = dma.done [#allocation6], 2048
    $region33: #{simple_cnn_forward.5} parent=1 // pred_fallthru
      _
    // Predicated region
    $region34: #{simple_cnn_forward.5} parent=1 // pred_check
      _
    $region35: #{simple_cnn_forward.5} parent=1 // pred_check_branch
      %77 = sbr.rel (0) target = $region37
    $region36: #{simple_cnn_forward.5} parent=1 // pred_region
      %79 = dma.done [#allocation9], 16
    $region37: #{simple_cnn_forward.5} parent=1 // pred_fallthru
      _
    %v80 = vld [vmem:[%s0] sm:$0xff]
    %v81 = vld [vmem:[%s0 + $0x8] sm:$0xff]
    %v82 = vld [vmem:[%s0 + $0x10] sm:$0xff]
    %v83 = vld [vmem:[%s0 + $0x18] sm:$0xff]
    %v84 = vld [vmem:[%s0 + $0x20] sm:$0xf]
    %v85 = vld [vmem:[#allocation2] sm:$0xff]
    %v86 = vld [vmem:[#allocation2 + $0x8] sm:$0xff]
    %v87 = vld [vmem:[#allocation2 + $0x10] sm:$0xff]
    %v88 = vld [vmem:[#allocation2 + $0x18] sm:$0xff]
    %v89 = vld [vmem:[#allocation2 + $0x20] sm:$0xff]
    %v90 = vld [vmem:[#allocation2 + $0x28] sm:$0xff]
    %v91 = vld [vmem:[#allocation2 + $0x30] sm:$0xff]
    %v92 = vld [vmem:[#allocation2 + $0x38] sm:$0xff]
    %v93 = vld [vmem:[#allocation2 + $0x40] sm:$0xff]
    %v94 = vld [vmem:[#allocation2 + $0x48] sm:$0xff]
    %v95 = vld [vmem:[#allocation2 + $0x50] sm:$0xff]
    %v96 = vld [vmem:[#allocation2 + $0x58] sm:$0xff]
    %v97 = vld [vmem:[#allocation2 + $0x60] sm:$0xff]
    %v98 = vld [vmem:[#allocation2 + $0x68] sm:$0xff]
    %v99 = vld [vmem:[#allocation2 + $0x70] sm:$0xff]
    %v100 = vld [vmem:[#allocation2 + $0x78] sm:$0xff]
    %v101 = vld [vmem:[#allocation2 + $0x80] sm:$0xff]
    %v102 = vld [vmem:[#allocation2 + $0x88] sm:$0xff]
    %v103 = vld [vmem:[#allocation2 + $0x90] sm:$0xff]
    %v104 = vld [vmem:[#allocation2 + $0x98] sm:$0xff]
    %v105 = vld [vmem:[#allocation2 + $0xa0] sm:$0xff]
    %v106 = vld [vmem:[#allocation2 + $0xa8] sm:$0xff]
    %v107 = vld [vmem:[#allocation2 + $0xb0] sm:$0xff]
    %v108 = vld [vmem:[#allocation2 + $0xb8] sm:$0xff]
    %v109 = vld [vmem:[#allocation2 + $0xc0] sm:$0xff]
    %v110 = vld [vmem:[#allocation2 + $0xc8] sm:$0xff]
    %v111 = vld [vmem:[#allocation2 + $0xd0] sm:$0xff]
    %v112 = vld [vmem:[#allocation2 + $0xd8] sm:$0xff]
    %v113 = vld [vmem:[#allocation2 + $0xe0] sm:$0xff]
    %v114 = vld [vmem:[#allocation2 + $0xe8] sm:$0xff]
    %v115 = vld [vmem:[#allocation2 + $0xf0] sm:$0xff]
    %v116 = vld [vmem:[#allocation2 + $0xf8] sm:$0xff]
    %v117 = vld [vmem:[#allocation2 + $0x100] sm:$0xff]
    %v118 = vld [vmem:[#allocation2 + $0x108] sm:$0xff]
    %v119 = vld [vmem:[#allocation2 + $0x110] sm:$0xff]
    %v120 = vld [vmem:[#allocation2 + $0x118] sm:$0xff]
    %v121 = vld [vmem:[#allocation2 + $0x120] sm:$0xff]
    %v122 = vld [vmem:[#allocation2 + $0x128] sm:$0xff]
    %v123 = vld [vmem:[#allocation2 + $0x130] sm:$0xff]
    %v124 = vld [vmem:[#allocation2 + $0x138] sm:$0xff]
    %v125 = vld [vmem:[#allocation2 + $0x140] sm:$0xff]
    %v126 = vld [vmem:[#allocation2 + $0x148] sm:$0xff]
    %v127 = vld [vmem:[#allocation2 + $0x150] sm:$0xff]
    %v128 = vld [vmem:[#allocation2 + $0x158] sm:$0xff]
    %v129 = vld [vmem:[#allocation2 + $0x160] sm:$0xff]
    %v130 = vld [vmem:[#allocation2 + $0x168] sm:$0xff]
    %v131 = vld [vmem:[#allocation2 + $0x170] sm:$0xff]
    %v132 = vld [vmem:[#allocation2 + $0x178] sm:$0xff]
    %v133 = vld [vmem:[#allocation2 + $0x180] sm:$0xff]
    %v134 = vld [vmem:[#allocation2 + $0x188] sm:$0xff]
    %v135 = vld [vmem:[#allocation2 + $0x190] sm:$0xff]
    %v136 = vld [vmem:[#allocation2 + $0x198] sm:$0xff]
    %v137 = vld [vmem:[#allocation2 + $0x1a0] sm:$0xff]
    %v138 = vld [vmem:[#allocation2 + $0x1a8] sm:$0xff]
    %v139 = vld [vmem:[#allocation2 + $0x1b0] sm:$0xff]
    %v140 = vld [vmem:[#allocation2 + $0x1b8] sm:$0xff]
    %v141 = vld [vmem:[#allocation2 + $0x1c0] sm:$0xff]
    %v142 = vld [vmem:[#allocation2 + $0x1c8] sm:$0xff]
    %v143 = vld [vmem:[#allocation2 + $0x1d0] sm:$0xff]
    %v144 = vld [vmem:[#allocation2 + $0x1d8] sm:$0xff]
    %v145 = vld [vmem:[#allocation2 + $0x1e0] sm:$0xff]
    %v146 = vld [vmem:[#allocation2 + $0x1e8] sm:$0xff]
    %v147 = vld [vmem:[#allocation2 + $0x1f0] sm:$0xff]
    %v148 = vld [vmem:[#allocation2 + $0x1f8] sm:$0xff]
    %v149 = vld [vmem:[#allocation2 + $0x200] sm:$0xff]
    %v150 = vld [vmem:[#allocation2 + $0x208] sm:$0xff]
    %v151 = vld [vmem:[#allocation2 + $0x210] sm:$0xff]
    %v152 = vld [vmem:[#allocation2 + $0x218] sm:$0xff]
    %v153 = vld [vmem:[#allocation2 + $0x220] sm:$0xff]
    %v154 = vld [vmem:[#allocation2 + $0x228] sm:$0xff]
    %v155 = vld [vmem:[#allocation2 + $0x230] sm:$0xff]
    %v156 = vld [vmem:[#allocation2 + $0x238] sm:$0xff]
    %v157 = vld [vmem:[#allocation2 + $0x240] sm:$0xff]
    %v158 = vld [vmem:[#allocation2 + $0x248] sm:$0xff]
    %v159 = vld [vmem:[#allocation2 + $0x250] sm:$0xff]
    %v160 = vld [vmem:[#allocation2 + $0x258] sm:$0xff]
    %v161 = vld [vmem:[#allocation2 + $0x260] sm:$0xff]
    %v162 = vld [vmem:[#allocation2 + $0x268] sm:$0xff]
    %v163 = vld [vmem:[#allocation2 + $0x270] sm:$0xff]
    %v164 = vld [vmem:[#allocation2 + $0x278] sm:$0xff]
    %v165 = vld [vmem:[#allocation2 + $0x280] sm:$0xff]
    %v166 = vld [vmem:[#allocation2 + $0x288] sm:$0xff]
    %v167 = vld [vmem:[#allocation2 + $0x290] sm:$0xff]
    %v168 = vld [vmem:[#allocation2 + $0x298] sm:$0xff]
    %v169 = vld [vmem:[#allocation2 + $0x2a0] sm:$0xff]
    %v170 = vld [vmem:[#allocation2 + $0x2a8] sm:$0xff]
    %v171 = vld [vmem:[#allocation2 + $0x2b0] sm:$0xff]
    %v172 = vld [vmem:[#allocation2 + $0x2b8] sm:$0xff]
    %v173 = vld [vmem:[#allocation2 + $0x2c0] sm:$0xff]
    %v174 = vld [vmem:[#allocation2 + $0x2c8] sm:$0xff]
    %v175 = vld [vmem:[#allocation2 + $0x2d0] sm:$0xff]
    %v176 = vld [vmem:[#allocation2 + $0x2d8] sm:$0xff]
    %v177 = vld [vmem:[#allocation2 + $0x2e0] sm:$0xff]
    %v178 = vld [vmem:[#allocation2 + $0x2e8] sm:$0xff]
    %v179 = vld [vmem:[#allocation2 + $0x2f0] sm:$0xff]
    %v180 = vld [vmem:[#allocation2 + $0x2f8] sm:$0xff]
    %v181 = vld [vmem:[#allocation2 + $0x300] sm:$0xff]
    %v182 = vld [vmem:[#allocation2 + $0x308] sm:$0xff]
    %v183 = vld [vmem:[#allocation2 + $0x310] sm:$0xff]
    %v184 = vld [vmem:[#allocation2 + $0x318] sm:$0xff]
    %v185 = vld [vmem:[#allocation2 + $0x320] sm:$0xff]
    %v186 = vld [vmem:[#allocation2 + $0x328] sm:$0xff]
    %v187 = vld [vmem:[#allocation2 + $0x330] sm:$0xff]
    %v188 = vld [vmem:[#allocation2 + $0x338] sm:$0xff]
    %v189 = vld [vmem:[#allocation2 + $0x340] sm:$0xff]
    %v190 = vld [vmem:[#allocation2 + $0x348] sm:$0xff]
    %v191 = vld [vmem:[#allocation2 + $0x350] sm:$0xff]
    %v192 = vld [vmem:[#allocation2 + $0x358] sm:$0xff]
    %v193 = vld [vmem:[#allocation2 + $0x360] sm:$0xff]
    %v194 = vld [vmem:[#allocation2 + $0x368] sm:$0xff]
    %v195 = vld [vmem:[#allocation2 + $0x370] sm:$0xff]
    %v196 = vld [vmem:[#allocation2 + $0x378] sm:$0xff]
    %v197 = vld [vmem:[#allocation2 + $0x380] sm:$0xff]
    %v198 = vld [vmem:[#allocation2 + $0x388] sm:$0xff]
    %v199 = vld [vmem:[#allocation2 + $0x390] sm:$0xff]
    %v200 = vld [vmem:[#allocation2 + $0x398] sm:$0xff]
    %v201 = vld [vmem:[#allocation2 + $0x3a0] sm:$0xff]
    %v202 = vld [vmem:[#allocation2 + $0x3a8] sm:$0xff]
    %v203 = vld [vmem:[#allocation2 + $0x3b0] sm:$0xff]
    %v204 = vld [vmem:[#allocation2 + $0x3b8] sm:$0xff]
    %v205 = vld [vmem:[#allocation2 + $0x3c0] sm:$0xff]
    %v206 = vld [vmem:[#allocation2 + $0x3c8] sm:$0xff]
    %v207 = vld [vmem:[#allocation2 + $0x3d0] sm:$0xff]
    %v208 = vld [vmem:[#allocation2 + $0x3d8] sm:$0xff]
    %v209 = vld [vmem:[#allocation2 + $0x3e0] sm:$0xff]
    %v210 = vld [vmem:[#allocation2 + $0x3e8] sm:$0xff]
    %v211 = vld [vmem:[#allocation2 + $0x3f0] sm:$0xff]
    %v212 = vld [vmem:[#allocation2 + $0x3f8] sm:$0xff]
    %v213 = vld [vmem:[#allocation2 + $0x400] sm:$0xff]
    %v214 = vld [vmem:[#allocation2 + $0x408] sm:$0xff]
    %v215 = vld [vmem:[#allocation2 + $0x410] sm:$0xff]
    %v216 = vld [vmem:[#allocation2 + $0x418] sm:$0xff]
    %v217 = vld [vmem:[#allocation2 + $0x420] sm:$0xff]
    %v218 = vld [vmem:[#allocation2 + $0x428] sm:$0xff]
    %v219 = vld [vmem:[#allocation2 + $0x430] sm:$0xff]
    %v220 = vld [vmem:[#allocation2 + $0x438] sm:$0xff]
    %v221 = vld [vmem:[#allocation2 + $0x440] sm:$0xff]
    %v222 = vld [vmem:[#allocation2 + $0x448] sm:$0xff]
    %v223 = vld [vmem:[#allocation2 + $0x450] sm:$0xff]
    %v224 = vld [vmem:[#allocation2 + $0x458] sm:$0xff]
    %v225 = vld [vmem:[#allocation2 + $0x460] sm:$0xff]
    %v226 = vld [vmem:[#allocation2 + $0x468] sm:$0xff]
    %v227 = vld [vmem:[#allocation2 + $0x470] sm:$0xff]
    %v228 = vld [vmem:[#allocation2 + $0x478] sm:$0xff]
    %v229 = vld [vmem:[#allocation2 + $0x480] sm:$0xff]
    %v230 = vld [vmem:[#allocation2 + $0x488] sm:$0xff]
    %v231 = vld [vmem:[#allocation2 + $0x490] sm:$0xff]
    %v232 = vld [vmem:[#allocation2 + $0x498] sm:$0xff]
    %v233 = vld [vmem:[#allocation2 + $0x4a0] sm:$0xff]
    %v234 = vld [vmem:[#allocation2 + $0x4a8] sm:$0xff]
    %v235 = vld [vmem:[#allocation2 + $0x4b0] sm:$0xff]
    %v236 = vld [vmem:[#allocation2 + $0x4b8] sm:$0xff]
    %v237 = vld [vmem:[#allocation2 + $0x4c0] sm:$0xff]
    %v238 = vld [vmem:[#allocation2 + $0x4c8] sm:$0xff]
    %v239 = vld [vmem:[#allocation2 + $0x4d0] sm:$0xff]
    %v240 = vld [vmem:[#allocation2 + $0x4d8] sm:$0xff]
    %v241 = vld [vmem:[#allocation2 + $0x4e0] sm:$0xff]
    %v242 = vld [vmem:[#allocation2 + $0x4e8] sm:$0xff]
    %v243 = vld [vmem:[#allocation2 + $0x4f0] sm:$0xff]
    %v244 = vld [vmem:[#allocation2 + $0x4f8] sm:$0xff]
    %v245 = vld [vmem:[#allocation2 + $0x500] sm:$0xff]
    %v246 = vld [vmem:[#allocation2 + $0x508] sm:$0xff]
    %v247 = vld [vmem:[#allocation2 + $0x510] sm:$0xff]
    %v248 = vld [vmem:[#allocation2 + $0x518] sm:$0xff]
    %v249 = vld [vmem:[#allocation2 + $0x520] sm:$0xff]
    %v250 = vld [vmem:[#allocation2 + $0x528] sm:$0xff]
    %v251 = vld [vmem:[#allocation2 + $0x530] sm:$0xff]
    %v252 = vld [vmem:[#allocation2 + $0x538] sm:$0xff]
    %v253 = vld [vmem:[#allocation2 + $0x540] sm:$0xff]
    %v254 = vld [vmem:[#allocation2 + $0x548] sm:$0xff]
    %v255 = vld [vmem:[#allocation2 + $0x550] sm:$0xff]
    %v256 = vld [vmem:[#allocation2 + $0x558] sm:$0xff]
    %v257 = vld [vmem:[#allocation2 + $0x560] sm:$0xff]
    %v258 = vld [vmem:[#allocation2 + $0x568] sm:$0xff]
    %v259 = vld [vmem:[#allocation2 + $0x570] sm:$0xff]
    %v260 = vld [vmem:[#allocation2 + $0x578] sm:$0xff]
    %v261 = vld [vmem:[#allocation2 + $0x580] sm:$0xff]
    %v262 = vld [vmem:[#allocation2 + $0x588] sm:$0xff]
    %v263 = vld [vmem:[#allocation2 + $0x590] sm:$0xff]
    %v264 = vld [vmem:[#allocation2 + $0x598] sm:$0xff]
    %v265 = vld [vmem:[#allocation2 + $0x5a0] sm:$0xff]
    %v266 = vld [vmem:[#allocation2 + $0x5a8] sm:$0xff]
    %v267 = vld [vmem:[#allocation2 + $0x5b0] sm:$0xff]
    %v268 = vld [vmem:[#allocation2 + $0x5b8] sm:$0xff]
    %v269 = vld [vmem:[#allocation2 + $0x5c0] sm:$0xff]
    %v270 = vld [vmem:[#allocation2 + $0x5c8] sm:$0xff]
    %v271 = vld [vmem:[#allocation2 + $0x5d0] sm:$0xff]
    %v272 = vld [vmem:[#allocation2 + $0x5d8] sm:$0xff]
    %v273 = vld [vmem:[#allocation2 + $0x5e0] sm:$0xff]
    %v274 = vld [vmem:[#allocation2 + $0x5e8] sm:$0xff]
    %v275 = vld [vmem:[#allocation2 + $0x5f0] sm:$0xff]
    %v276 = vld [vmem:[#allocation2 + $0x5f8] sm:$0xff]
    %v277 = vld [vmem:[#allocation2 + $0x600] sm:$0xff]
    %v278 = vld [vmem:[#allocation2 + $0x608] sm:$0xff]
    %v279 = vld [vmem:[#allocation2 + $0x610] sm:$0xff]
    %v280 = vld [vmem:[#allocation2 + $0x618] sm:$0xff]
    %v281 = vld [vmem:[#allocation2 + $0x620] sm:$0xff]
    %v282 = vld [vmem:[#allocation2 + $0x628] sm:$0xff]
    %v283 = vld [vmem:[#allocation2 + $0x630] sm:$0xff]
    %v284 = vld [vmem:[#allocation2 + $0x638] sm:$0xff]
    %v285 = vld [vmem:[#allocation2 + $0x640] sm:$0xff]
    %v286 = vld [vmem:[#allocation2 + $0x648] sm:$0xff]
    %v287 = vld [vmem:[#allocation2 + $0x650] sm:$0xff]
    %v288 = vld [vmem:[#allocation2 + $0x658] sm:$0xff]
    %v289 = vld [vmem:[#allocation2 + $0x660] sm:$0xff]
    %v290 = vld [vmem:[#allocation2 + $0x668] sm:$0xff]
    %v291 = vld [vmem:[#allocation2 + $0x670] sm:$0xff]
    %v292 = vld [vmem:[#allocation2 + $0x678] sm:$0xff]
    %v293 = vld [vmem:[#allocation2 + $0x680] sm:$0xff]
    %v294 = vld [vmem:[#allocation2 + $0x688] sm:$0xff]
    %v295 = vld [vmem:[#allocation2 + $0x690] sm:$0xff]
    %v296 = vld [vmem:[#allocation2 + $0x698] sm:$0xff]
    %v297 = vld [vmem:[#allocation2 + $0x6a0] sm:$0xff]
    %v298 = vld [vmem:[#allocation2 + $0x6a8] sm:$0xff]
    %v299 = vld [vmem:[#allocation2 + $0x6b0] sm:$0xff]
    %v300 = vld [vmem:[#allocation2 + $0x6b8] sm:$0xff]
    %v301 = vld [vmem:[#allocation2 + $0x6c0] sm:$0xff]
    %v302 = vld [vmem:[#allocation2 + $0x6c8] sm:$0xff]
    %v303 = vld [vmem:[#allocation2 + $0x6d0] sm:$0xff]
    %v304 = vld [vmem:[#allocation2 + $0x6d8] sm:$0xff]
    %v305 = vld [vmem:[#allocation2 + $0x6e0] sm:$0xff]
    %v306 = vld [vmem:[#allocation2 + $0x6e8] sm:$0xff]
    %v307 = vld [vmem:[#allocation2 + $0x6f0] sm:$0xff]
    %v308 = vld [vmem:[#allocation2 + $0x6f8] sm:$0xff]
    %v309 = vld [vmem:[#allocation2 + $0x700] sm:$0xff]
    %v310 = vld [vmem:[#allocation2 + $0x708] sm:$0xff]
    %v311 = vld [vmem:[#allocation2 + $0x710] sm:$0xff]
    %v312 = vld [vmem:[#allocation2 + $0x718] sm:$0xff]
    %v313 = vld [vmem:[#allocation2 + $0x720] sm:$0xff]
    %v314 = vld [vmem:[#allocation2 + $0x728] sm:$0xff]
    %v315 = vld [vmem:[#allocation2 + $0x730] sm:$0xff]
    %v316 = vld [vmem:[#allocation2 + $0x738] sm:$0xff]
    %v317 = vld [vmem:[#allocation2 + $0x740] sm:$0xff]
    %v318 = vld [vmem:[#allocation2 + $0x748] sm:$0xff]
    %v319 = vld [vmem:[#allocation2 + $0x750] sm:$0xff]
    %v320 = vld [vmem:[#allocation2 + $0x758] sm:$0xff]
    %v321 = vld [vmem:[#allocation2 + $0x760] sm:$0xff]
    %v322 = vld [vmem:[#allocation2 + $0x768] sm:$0xff]
    %v323 = vld [vmem:[#allocation2 + $0x770] sm:$0xff]
    %v324 = vld [vmem:[#allocation2 + $0x778] sm:$0xff]
    %v325 = vld [vmem:[#allocation2 + $0x780] sm:$0xff]
    %v326 = vld [vmem:[#allocation2 + $0x788] sm:$0xff]
    %v327 = vld [vmem:[#allocation2 + $0x790] sm:$0xff]
    %v328 = vld [vmem:[#allocation2 + $0x798] sm:$0xff]
    %v329 = vld [vmem:[#allocation2 + $0x7a0] sm:$0xff]
    %v330 = vld [vmem:[#allocation2 + $0x7a8] sm:$0xff]
    %v331 = vld [vmem:[#allocation2 + $0x7b0] sm:$0xff]
    %v332 = vld [vmem:[#allocation2 + $0x7b8] sm:$0xff]
    %v333 = vld [vmem:[#allocation2 + $0x7c0] sm:$0xff]
    %v334 = vld [vmem:[#allocation2 + $0x7c8] sm:$0xff]
    %v335 = vld [vmem:[#allocation2 + $0x7d0] sm:$0xff]
    %v336 = vld [vmem:[#allocation2 + $0x7d8] sm:$0xff]
    %v337 = vld [vmem:[#allocation2 + $0x7e0] sm:$0xff]
    %v338 = vld [vmem:[#allocation2 + $0x7e8] sm:$0xff]
    %v339 = vld [vmem:[#allocation2 + $0x7f0] sm:$0xff]
    %v340 = vld [vmem:[#allocation2 + $0x7f8] sm:$0xff]
    %v341 = vld [vmem:[#allocation2 + $0x800] sm:$0xff]
    %v342 = vld [vmem:[#allocation2 + $0x808] sm:$0xff]
    %v343 = vld [vmem:[#allocation2 + $0x810] sm:$0xff]
    %v344 = vld [vmem:[#allocation2 + $0x818] sm:$0xff]
    %v345 = vld [vmem:[#allocation2 + $0x820] sm:$0xff]
    %v346 = vld [vmem:[#allocation2 + $0x828] sm:$0xff]
    %v347 = vld [vmem:[#allocation2 + $0x830] sm:$0xff]
    %v348 = vld [vmem:[#allocation2 + $0x838] sm:$0xff]
    %v349 = vld [vmem:[#allocation2 + $0x840] sm:$0xff]
    %v350 = vld [vmem:[#allocation2 + $0x848] sm:$0xff]
    %v351 = vld [vmem:[#allocation2 + $0x850] sm:$0xff]
    %v352 = vld [vmem:[#allocation2 + $0x858] sm:$0xff]
    %v353 = vld [vmem:[#allocation2 + $0x860] sm:$0xff]
    %v354 = vld [vmem:[#allocation2 + $0x868] sm:$0xff]
    %v355 = vld [vmem:[#allocation2 + $0x870] sm:$0xff]
    %v356 = vld [vmem:[#allocation2 + $0x878] sm:$0xff]
    %v357 = vld [vmem:[#allocation2 + $0x880] sm:$0xff]
    %v358 = vld [vmem:[#allocation2 + $0x888] sm:$0xff]
    %v359 = vld [vmem:[#allocation2 + $0x890] sm:$0xff]
    %v360 = vld [vmem:[#allocation2 + $0x898] sm:$0xff]
    %v361 = vld [vmem:[#allocation2 + $0x8a0] sm:$0xff]
    %v362 = vld [vmem:[#allocation2 + $0x8a8] sm:$0xff]
    %v363 = vld [vmem:[#allocation2 + $0x8b0] sm:$0xff]
    %v364 = vld [vmem:[#allocation2 + $0x8b8] sm:$0xff]
    %v365 = vld [vmem:[#allocation2 + $0x8c0] sm:$0xff]
    %v366 = vld [vmem:[#allocation2 + $0x8c8] sm:$0xff]
    %v367 = vld [vmem:[#allocation2 + $0x8d0] sm:$0xff]
    %v368 = vld [vmem:[#allocation2 + $0x8d8] sm:$0xff]
    %v369 = vld [vmem:[#allocation2 + $0x8e0] sm:$0xff]
    %v370 = vld [vmem:[#allocation2 + $0x8e8] sm:$0xff]
    %v371 = vld [vmem:[#allocation2 + $0x8f0] sm:$0xff]
    %v372 = vld [vmem:[#allocation2 + $0x8f8] sm:$0xff]
    %v373 = vld [vmem:[#allocation2 + $0x900] sm:$0xff]
    %v374 = vld [vmem:[#allocation2 + $0x908] sm:$0xff]
    %v375 = vld [vmem:[#allocation2 + $0x910] sm:$0xff]
    %v376 = vld [vmem:[#allocation2 + $0x918] sm:$0xff]
    %v377 = vld [vmem:[#allocation2 + $0x920] sm:$0xff]
    %v378 = vld [vmem:[#allocation2 + $0x928] sm:$0xff]
    %v379 = vld [vmem:[#allocation2 + $0x930] sm:$0xff]
    %v380 = vld [vmem:[#allocation2 + $0x938] sm:$0xff]
    %v381 = vld [vmem:[#allocation2 + $0x940] sm:$0xff]
    %v382 = vld [vmem:[#allocation2 + $0x948] sm:$0xff]
    %v383 = vld [vmem:[#allocation2 + $0x950] sm:$0xff]
    %v384 = vld [vmem:[#allocation2 + $0x958] sm:$0xff]
    %v385 = vld [vmem:[#allocation2 + $0x960] sm:$0xff]
    %v386 = vld [vmem:[#allocation2 + $0x968] sm:$0xff]
    %v387 = vld [vmem:[#allocation2 + $0x970] sm:$0xff]
    %v388 = vld [vmem:[#allocation2 + $0x978] sm:$0xff]
    %v389 = vld [vmem:[#allocation2 + $0x980] sm:$0xff]
    %v390 = vld [vmem:[#allocation2 + $0x988] sm:$0xff]
    %v391 = vld [vmem:[#allocation2 + $0x990] sm:$0xff]
    %v392 = vld [vmem:[#allocation2 + $0x998] sm:$0xff]
    %v393 = vld [vmem:[#allocation2 + $0x9a0] sm:$0xff]
    %v394 = vld [vmem:[#allocation2 + $0x9a8] sm:$0xff]
    %v395 = vld [vmem:[#allocation2 + $0x9b0] sm:$0xff]
    %v396 = vld [vmem:[#allocation2 + $0x9b8] sm:$0xff]
    %v397 = vld [vmem:[#allocation2 + $0x9c0] sm:$0xff]
    %v398 = vld [vmem:[#allocation2 + $0x9c8] sm:$0xff]
    %v399 = vld [vmem:[#allocation2 + $0x9d0] sm:$0xff]
    %v400 = vld [vmem:[#allocation2 + $0x9d8] sm:$0xff]
    %v401 = vld [vmem:[#allocation2 + $0x9e0] sm:$0xff]
    %v402 = vld [vmem:[#allocation2 + $0x9e8] sm:$0xff]
    %v403 = vld [vmem:[#allocation2 + $0x9f0] sm:$0xff]
    %v404 = vld [vmem:[#allocation2 + $0x9f8] sm:$0xff]
    %v405 = vld [vmem:[#allocation2 + $0xa00] sm:$0xff]
    %v406 = vld [vmem:[#allocation2 + $0xa08] sm:$0xff]
    %v407 = vld [vmem:[#allocation2 + $0xa10] sm:$0xff]
    %v408 = vld [vmem:[#allocation2 + $0xa18] sm:$0xff]
    %v409 = vld [vmem:[#allocation2 + $0xa20] sm:$0xff]
    %v410 = vld [vmem:[#allocation2 + $0xa28] sm:$0xff]
    %v411 = vld [vmem:[#allocation2 + $0xa30] sm:$0xff]
    %v412 = vld [vmem:[#allocation2 + $0xa38] sm:$0xff]
    %v413 = vld [vmem:[#allocation2 + $0xa40] sm:$0xff]
    %v414 = vld [vmem:[#allocation2 + $0xa48] sm:$0xff]
    %v415 = vld [vmem:[#allocation2 + $0xa50] sm:$0xff]
    %v416 = vld [vmem:[#allocation2 + $0xa58] sm:$0xff]
    %v417 = vld [vmem:[#allocation2 + $0xa60] sm:$0xff]
    %v418 = vld [vmem:[#allocation2 + $0xa68] sm:$0xff]
    %v419 = vld [vmem:[#allocation2 + $0xa70] sm:$0xff]
    %v420 = vld [vmem:[#allocation2 + $0xa78] sm:$0xff]
    %v421 = vld [vmem:[#allocation2 + $0xa80] sm:$0xff]
    %v422 = vld [vmem:[#allocation2 + $0xa88] sm:$0xff]
    %v423 = vld [vmem:[#allocation2 + $0xa90] sm:$0xff]
    %v424 = vld [vmem:[#allocation2 + $0xa98] sm:$0xff]
    %v425 = vld [vmem:[#allocation2 + $0xaa0] sm:$0xff]
    %v426 = vld [vmem:[#allocation2 + $0xaa8] sm:$0xff]
    %v427 = vld [vmem:[#allocation2 + $0xab0] sm:$0xff]
    %v428 = vld [vmem:[#allocation2 + $0xab8] sm:$0xff]
    %v429 = vld [vmem:[#allocation2 + $0xac0] sm:$0xff]
    %v430 = vld [vmem:[#allocation2 + $0xac8] sm:$0xff]
    %v431 = vld [vmem:[#allocation2 + $0xad0] sm:$0xff]
    %v432 = vld [vmem:[#allocation2 + $0xad8] sm:$0xff]
    %v433 = vld [vmem:[#allocation2 + $0xae0] sm:$0xff]
    %v434 = vld [vmem:[#allocation2 + $0xae8] sm:$0xff]
    %v435 = vld [vmem:[#allocation2 + $0xaf0] sm:$0xff]
    %v436 = vld [vmem:[#allocation2 + $0xaf8] sm:$0xff]
    %v437 = vld [vmem:[#allocation2 + $0xb00] sm:$0xff]
    %v438 = vld [vmem:[#allocation2 + $0xb08] sm:$0xff]
    %v439 = vld [vmem:[#allocation2 + $0xb10] sm:$0xff]
    %v440 = vld [vmem:[#allocation2 + $0xb18] sm:$0xff]
    %v441 = vld [vmem:[#allocation2 + $0xb20] sm:$0xff]
    %v442 = vld [vmem:[#allocation2 + $0xb28] sm:$0xff]
    %v443 = vld [vmem:[#allocation2 + $0xb30] sm:$0xff]
    %v444 = vld [vmem:[#allocation2 + $0xb38] sm:$0xff]
    %v445 = vld [vmem:[#allocation2 + $0xb40] sm:$0xff]
    %v446 = vld [vmem:[#allocation2 + $0xb48] sm:$0xff]
    %v447 = vld [vmem:[#allocation2 + $0xb50] sm:$0xff]
    %v448 = vld [vmem:[#allocation2 + $0xb58] sm:$0xff]
    %v449 = vld [vmem:[#allocation2 + $0xb60] sm:$0xff]
    %v450 = vld [vmem:[#allocation2 + $0xb68] sm:$0xff]
    %v451 = vld [vmem:[#allocation2 + $0xb70] sm:$0xff]
    %v452 = vld [vmem:[#allocation2 + $0xb78] sm:$0xff]
    %v453 = vld [vmem:[#allocation2 + $0xb80] sm:$0xff]
    %v454 = vld [vmem:[#allocation2 + $0xb88] sm:$0xff]
    %v455 = vld [vmem:[#allocation2 + $0xb90] sm:$0xff]
    %v456 = vld [vmem:[#allocation2 + $0xb98] sm:$0xff]
    %v457 = vld [vmem:[#allocation2 + $0xba0] sm:$0xff]
    %v458 = vld [vmem:[#allocation2 + $0xba8] sm:$0xff]
    %v459 = vld [vmem:[#allocation2 + $0xbb0] sm:$0xff]
    %v460 = vld [vmem:[#allocation2 + $0xbb8] sm:$0xff]
    %v461 = vld [vmem:[#allocation2 + $0xbc0] sm:$0xff]
    %v462 = vld [vmem:[#allocation2 + $0xbc8] sm:$0xff]
    %v463 = vld [vmem:[#allocation2 + $0xbd0] sm:$0xff]
    %v464 = vld [vmem:[#allocation2 + $0xbd8] sm:$0xff]
    %v465 = vld [vmem:[#allocation2 + $0xbe0] sm:$0xff]
    %v466 = vld [vmem:[#allocation2 + $0xbe8] sm:$0xff]
    %v467 = vld [vmem:[#allocation2 + $0xbf0] sm:$0xff]
    %v468 = vld [vmem:[#allocation2 + $0xbf8] sm:$0xff]
    %v469 = vld [vmem:[#allocation2 + $0xc00] sm:$0xff]
    %v470 = vld [vmem:[#allocation2 + $0xc08] sm:$0xff]
    %v471 = vld [vmem:[#allocation2 + $0xc10] sm:$0xff]
    %v472 = vld [vmem:[#allocation2 + $0xc18] sm:$0xff]
    %v473 = vld [vmem:[#allocation2 + $0xc20] sm:$0xff]
    %v474 = vld [vmem:[#allocation2 + $0xc28] sm:$0xff]
    %v475 = vld [vmem:[#allocation2 + $0xc30] sm:$0xff]
    %v476 = vld [vmem:[#allocation2 + $0xc38] sm:$0xff]
    %v477 = vld [vmem:[#allocation2 + $0xc40] sm:$0xff]
    %v478 = vld [vmem:[#allocation2 + $0xc48] sm:$0xff]
    %v479 = vld [vmem:[#allocation2 + $0xc50] sm:$0xff]
    %v480 = vld [vmem:[#allocation2 + $0xc58] sm:$0xff]
    %v481 = vld [vmem:[#allocation2 + $0xc60] sm:$0xff]
    %v482 = vld [vmem:[#allocation2 + $0xc68] sm:$0xff]
    %v483 = vld [vmem:[#allocation2 + $0xc70] sm:$0xff]
    %v484 = vld [vmem:[#allocation2 + $0xc78] sm:$0xff]
    %v485 = vld [vmem:[#allocation2 + $0xc80] sm:$0xff]
    %v486 = vld [vmem:[#allocation2 + $0xc88] sm:$0xff]
    %v487 = vld [vmem:[#allocation2 + $0xc90] sm:$0xff]
    %v488 = vld [vmem:[#allocation2 + $0xc98] sm:$0xff]
    %v489 = vld [vmem:[#allocation2 + $0xca0] sm:$0xff]
    %v490 = vld [vmem:[#allocation2 + $0xca8] sm:$0xff]
    %v491 = vld [vmem:[#allocation2 + $0xcb0] sm:$0xff]
    %v492 = vld [vmem:[#allocation2 + $0xcb8] sm:$0xff]
    %v493 = vld [vmem:[#allocation2 + $0xcc0] sm:$0xff]
    %v494 = vld [vmem:[#allocation2 + $0xcc8] sm:$0xff]
    %v495 = vld [vmem:[#allocation2 + $0xcd0] sm:$0xff]
    %v496 = vld [vmem:[#allocation2 + $0xcd8] sm:$0xff]
    %v497 = vld [vmem:[#allocation2 + $0xce0] sm:$0xff]
    %v498 = vld [vmem:[#allocation2 + $0xce8] sm:$0xff]
    %v499 = vld [vmem:[#allocation2 + $0xcf0] sm:$0xff]
    %v500 = vld [vmem:[#allocation2 + $0xcf8] sm:$0xff]
    %v501 = vld [vmem:[#allocation2 + $0xd00] sm:$0xff]
    %v502 = vld [vmem:[#allocation2 + $0xd08] sm:$0xff]
    %v503 = vld [vmem:[#allocation2 + $0xd10] sm:$0xff]
    %v504 = vld [vmem:[#allocation2 + $0xd18] sm:$0xff]
    %v505 = vld [vmem:[#allocation2 + $0xd20] sm:$0xff]
    %v506 = vld [vmem:[#allocation2 + $0xd28] sm:$0xff]
    %v507 = vld [vmem:[#allocation2 + $0xd30] sm:$0xff]
    %v508 = vld [vmem:[#allocation2 + $0xd38] sm:$0xff]
    %v509 = vld [vmem:[#allocation2 + $0xd40] sm:$0xff]
    %v510 = vld [vmem:[#allocation2 + $0xd48] sm:$0xff]
    %v511 = vld [vmem:[#allocation2 + $0xd50] sm:$0xff]
    %v512 = vld [vmem:[#allocation2 + $0xd58] sm:$0xff]
    %v513 = vld [vmem:[#allocation2 + $0xd60] sm:$0xff]
    %v514 = vld [vmem:[#allocation2 + $0xd68] sm:$0xff]
    %v515 = vld [vmem:[#allocation2 + $0xd70] sm:$0xff]
    %v516 = vld [vmem:[#allocation2 + $0xd78] sm:$0xff]
    %v517 = vld [vmem:[#allocation2 + $0xd80] sm:$0xff]
    %v518 = vld [vmem:[#allocation2 + $0xd88] sm:$0xff]
    %v519 = vld [vmem:[#allocation2 + $0xd90] sm:$0xff]
    %v520 = vld [vmem:[#allocation2 + $0xd98] sm:$0xff]
    %v521 = vld [vmem:[#allocation2 + $0xda0] sm:$0xff]
    %v522 = vld [vmem:[#allocation2 + $0xda8] sm:$0xff]
    %v523 = vld [vmem:[#allocation2 + $0xdb0] sm:$0xff]
    %v524 = vld [vmem:[#allocation2 + $0xdb8] sm:$0xff]
    %v525 = vld [vmem:[#allocation2 + $0xdc0] sm:$0xff]
    %v526 = vld [vmem:[#allocation2 + $0xdc8] sm:$0xff]
    %v527 = vld [vmem:[#allocation2 + $0xdd0] sm:$0xff]
    %v528 = vld [vmem:[#allocation2 + $0xdd8] sm:$0xff]
    %v529 = vld [vmem:[#allocation2 + $0xde0] sm:$0xff]
    %v530 = vld [vmem:[#allocation2 + $0xde8] sm:$0xff]
    %v531 = vld [vmem:[#allocation2 + $0xdf0] sm:$0xff]
    %v532 = vld [vmem:[#allocation2 + $0xdf8] sm:$0xff]
    %v533 = vld [vmem:[#allocation2 + $0xe00] sm:$0xff]
    %v534 = vld [vmem:[#allocation2 + $0xe08] sm:$0xff]
    %v535 = vld [vmem:[#allocation2 + $0xe10] sm:$0xff]
    %v536 = vld [vmem:[#allocation2 + $0xe18] sm:$0xff]
    %v537 = vld [vmem:[#allocation2 + $0xe20] sm:$0xff]
    %v538 = vld [vmem:[#allocation2 + $0xe28] sm:$0xff]
    %v539 = vld [vmem:[#allocation2 + $0xe30] sm:$0xff]
    %v540 = vld [vmem:[#allocation2 + $0xe38] sm:$0xff]
    %v541 = vld [vmem:[#allocation2 + $0xe40] sm:$0xff]
    %v542 = vld [vmem:[#allocation2 + $0xe48] sm:$0xff]
    %v543 = vld [vmem:[#allocation2 + $0xe50] sm:$0xff]
    %v544 = vld [vmem:[#allocation2 + $0xe58] sm:$0xff]
    %v545 = vld [vmem:[#allocation2 + $0xe60] sm:$0xff]
    %v546 = vld [vmem:[#allocation2 + $0xe68] sm:$0xff]
    %v547 = vld [vmem:[#allocation2 + $0xe70] sm:$0xff]
    %v548 = vld [vmem:[#allocation2 + $0xe78] sm:$0xff]
    %v549 = vld [vmem:[#allocation2 + $0xe80] sm:$0xff]
    %v550 = vld [vmem:[#allocation2 + $0xe88] sm:$0xff]
    %v551 = vld [vmem:[#allocation2 + $0xe90] sm:$0xff]
    %v552 = vld [vmem:[#allocation2 + $0xe98] sm:$0xff]
    %v553 = vld [vmem:[#allocation2 + $0xea0] sm:$0xff]
    %v554 = vld [vmem:[#allocation2 + $0xea8] sm:$0xff]
    %v555 = vld [vmem:[#allocation2 + $0xeb0] sm:$0xff]
    %v556 = vld [vmem:[#allocation2 + $0xeb8] sm:$0xff]
    %v557 = vld [vmem:[#allocation2 + $0xec0] sm:$0xff]
    %v558 = vld [vmem:[#allocation2 + $0xec8] sm:$0xff]
    %v559 = vld [vmem:[#allocation2 + $0xed0] sm:$0xff]
    %v560 = vld [vmem:[#allocation2 + $0xed8] sm:$0xff]
    %v561 = vld [vmem:[#allocation2 + $0xee0] sm:$0xff]
    %v562 = vld [vmem:[#allocation2 + $0xee8] sm:$0xff]
    %v563 = vld [vmem:[#allocation2 + $0xef0] sm:$0xff]
    %v564 = vld [vmem:[#allocation2 + $0xef8] sm:$0xff]
    %v565 = vld [vmem:[#allocation2 + $0xf00] sm:$0xff]
    %v566 = vld [vmem:[#allocation2 + $0xf08] sm:$0xff]
    %v567 = vld [vmem:[#allocation2 + $0xf10] sm:$0xff]
    %v568 = vld [vmem:[#allocation2 + $0xf18] sm:$0xff]
    %v569 = vld [vmem:[#allocation2 + $0xf20] sm:$0xff]
    %v570 = vld [vmem:[#allocation2 + $0xf28] sm:$0xff]
    %v571 = vld [vmem:[#allocation2 + $0xf30] sm:$0xff]
    %v572 = vld [vmem:[#allocation2 + $0xf38] sm:$0xff]
    %v573 = vld [vmem:[#allocation2 + $0xf40] sm:$0xff]
    %v574 = vld [vmem:[#allocation2 + $0xf48] sm:$0xff]
    %v575 = vld [vmem:[#allocation2 + $0xf50] sm:$0xff]
    %v576 = vld [vmem:[#allocation2 + $0xf58] sm:$0xff]
    %v577 = vld [vmem:[#allocation2 + $0xf60] sm:$0xff]
    %v578 = vld [vmem:[#allocation2 + $0xf68] sm:$0xff]
    %v579 = vld [vmem:[#allocation2 + $0xf70] sm:$0xff]
    %v580 = vld [vmem:[#allocation2 + $0xf78] sm:$0xff]
    %v581 = vld [vmem:[#allocation2 + $0xf80] sm:$0xff]
    %v582 = vld [vmem:[#allocation2 + $0xf88] sm:$0xff]
    %v583 = vld [vmem:[#allocation2 + $0xf90] sm:$0xff]
    %v584 = vld [vmem:[#allocation2 + $0xf98] sm:$0xff]
    %v585 = vld [vmem:[#allocation2 + $0xfa0] sm:$0xff]
    %v586 = vld [vmem:[#allocation2 + $0xfa8] sm:$0xff]
    %v587 = vld [vmem:[#allocation2 + $0xfb0] sm:$0xff]
    %v588 = vld [vmem:[#allocation2 + $0xfb8] sm:$0xff]
    %v589 = vld [vmem:[#allocation2 + $0xfc0] sm:$0xff]
    %v590 = vld [vmem:[#allocation2 + $0xfc8] sm:$0xff]
    %v591 = vld [vmem:[#allocation2 + $0xfd0] sm:$0xff]
    %v592 = vld [vmem:[#allocation2 + $0xfd8] sm:$0xff]
    %v593 = vld [vmem:[#allocation2 + $0xfe0] sm:$0xff]
    %v594 = vld [vmem:[#allocation2 + $0xfe8] sm:$0xff]
    %v595 = vld [vmem:[#allocation2 + $0xff0] sm:$0xff]
    %v596 = vld [vmem:[#allocation2 + $0xff8] sm:$0xff]
    %v597 = vld [vmem:[#allocation2 + $0x1000] sm:$0xff]
    %v598 = vld [vmem:[#allocation2 + $0x1008] sm:$0xff]
    %v599 = vld [vmem:[#allocation2 + $0x1010] sm:$0xff]
    %v600 = vld [vmem:[#allocation2 + $0x1018] sm:$0xff]
    %v601 = vld [vmem:[#allocation2 + $0x1020] sm:$0xff]
    %v602 = vld [vmem:[#allocation2 + $0x1028] sm:$0xff]
    %v603 = vld [vmem:[#allocation2 + $0x1030] sm:$0xff]
    %v604 = vld [vmem:[#allocation2 + $0x1038] sm:$0xff]
    %v605 = vld [vmem:[#allocation2 + $0x1040] sm:$0xff]
    %v606 = vld [vmem:[#allocation2 + $0x1048] sm:$0xff]
    %v607 = vld [vmem:[#allocation2 + $0x1050] sm:$0xff]
    %v608 = vld [vmem:[#allocation2 + $0x1058] sm:$0xff]
    %v609 = vld [vmem:[#allocation2 + $0x1060] sm:$0xff]
    %v610 = vld [vmem:[#allocation2 + $0x1068] sm:$0xff]
    %v611 = vld [vmem:[#allocation2 + $0x1070] sm:$0xff]
    %v612 = vld [vmem:[#allocation2 + $0x1078] sm:$0xff]
    %v613 = vld [vmem:[#allocation2 + $0x1080] sm:$0xff]
    %v614 = vld [vmem:[#allocation2 + $0x1088] sm:$0xff]
    %v615 = vld [vmem:[#allocation2 + $0x1090] sm:$0xff]
    %v616 = vld [vmem:[#allocation2 + $0x1098] sm:$0xff]
    %v617 = vld [vmem:[#allocation2 + $0x10a0] sm:$0xff]
    %v618 = vld [vmem:[#allocation2 + $0x10a8] sm:$0xff]
    %v619 = vld [vmem:[#allocation2 + $0x10b0] sm:$0xff]
    %v620 = vld [vmem:[#allocation2 + $0x10b8] sm:$0xff]
    %v621 = vld [vmem:[#allocation2 + $0x10c0] sm:$0xff]
    %v622 = vld [vmem:[#allocation2 + $0x10c8] sm:$0xff]
    %v623 = vld [vmem:[#allocation2 + $0x10d0] sm:$0xff]
    %v624 = vld [vmem:[#allocation2 + $0x10d8] sm:$0xff]
    %v625 = vld [vmem:[#allocation2 + $0x10e0] sm:$0xff]
    %v626 = vld [vmem:[#allocation2 + $0x10e8] sm:$0xff]
    %v627 = vld [vmem:[#allocation2 + $0x10f0] sm:$0xff]
    %v628 = vld [vmem:[#allocation2 + $0x10f8] sm:$0xff]
    %v629 = vld [vmem:[#allocation2 + $0x1100] sm:$0xff]
    %v630 = vld [vmem:[#allocation2 + $0x1108] sm:$0xff]
    %v631 = vld [vmem:[#allocation2 + $0x1110] sm:$0xff]
    %v632 = vld [vmem:[#allocation2 + $0x1118] sm:$0xff]
    %v633 = vld [vmem:[#allocation2 + $0x1120] sm:$0xff]
    %v634 = vld [vmem:[#allocation2 + $0x1128] sm:$0xff]
    %v635 = vld [vmem:[#allocation2 + $0x1130] sm:$0xff]
    %v636 = vld [vmem:[#allocation2 + $0x1138] sm:$0xff]
    %v637 = vld [vmem:[#allocation2 + $0x1140] sm:$0xff]
    %v638 = vld [vmem:[#allocation2 + $0x1148] sm:$0xff]
    %v639 = vld [vmem:[#allocation2 + $0x1150] sm:$0xff]
    %v640 = vld [vmem:[#allocation2 + $0x1158] sm:$0xff]
    %v641 = vld [vmem:[#allocation2 + $0x1160] sm:$0xff]
    %v642 = vld [vmem:[#allocation2 + $0x1168] sm:$0xff]
    %v643 = vld [vmem:[#allocation2 + $0x1170] sm:$0xff]
    %v644 = vld [vmem:[#allocation2 + $0x1178] sm:$0xff]
    %v645 = vld [vmem:[#allocation2 + $0x1180] sm:$0xff]
    %v646 = vld [vmem:[#allocation2 + $0x1188] sm:$0xff]
    %v647 = vld [vmem:[#allocation2 + $0x1190] sm:$0xff]
    %v648 = vld [vmem:[#allocation2 + $0x1198] sm:$0xff]
    %v649 = vld [vmem:[#allocation2 + $0x11a0] sm:$0xff]
    %v650 = vld [vmem:[#allocation2 + $0x11a8] sm:$0xff]
    %v651 = vld [vmem:[#allocation2 + $0x11b0] sm:$0xff]
    %v652 = vld [vmem:[#allocation2 + $0x11b8] sm:$0xff]
    %v653 = vld [vmem:[#allocation2 + $0x11c0] sm:$0xff]
    %v654 = vld [vmem:[#allocation2 + $0x11c8] sm:$0xff]
    %v655 = vld [vmem:[#allocation2 + $0x11d0] sm:$0xff]
    %v656 = vld [vmem:[#allocation2 + $0x11d8] sm:$0xff]
    %v657 = vld [vmem:[#allocation2 + $0x11e0] sm:$0xff]
    %v658 = vld [vmem:[#allocation2 + $0x11e8] sm:$0xff]
    %v659 = vld [vmem:[#allocation2 + $0x11f0] sm:$0xff]
    %v660 = vld [vmem:[#allocation2 + $0x11f8] sm:$0xff]
    %v661 = vld [vmem:[#allocation5] sm:$0x3]
    %v663 = vperm.slane %v661, 0
    %v664 = vperm.slane %v661, 1
    %668 = vst [vmem:[#allocation1] ss:$9 sm:$0xff] %v80
    %v669 = vld [vmem:[#allocation1] sm:$0xff]
    %v670 = vld [vmem:[#allocation1 + $0x9] sm:$0xff]
    %v671 = vld [vmem:[#allocation1 + $0x12] sm:$0xff]
    %v672 = vld [vmem:[#allocation1 + $0x1b] sm:$0xff]
    %v673 = vld [vmem:[#allocation1 + $0x24] sm:$0xff]
    %v674 = vld [vmem:[#allocation1 + $0x2d] sm:$0xff]
    %v675 = vld [vmem:[#allocation1 + $0x36] sm:$0xff]
    %v676 = vld [vmem:[#allocation1 + $0x3f] sm:$0xff]
    %678 = vst [vmem:[#allocation1] ss:$9 sm:$0xff] %v81
    %v679 = vld [vmem:[#allocation1] sm:$0xff]
    %v680 = vld [vmem:[#allocation1 + $0x9] sm:$0xff]
    %v681 = vld [vmem:[#allocation1 + $0x12] sm:$0xff]
    %v682 = vld [vmem:[#allocation1 + $0x1b] sm:$0xff]
    %v683 = vld [vmem:[#allocation1 + $0x24] sm:$0xff]
    %v684 = vld [vmem:[#allocation1 + $0x2d] sm:$0xff]
    %v685 = vld [vmem:[#allocation1 + $0x36] sm:$0xff]
    %v686 = vld [vmem:[#allocation1 + $0x3f] sm:$0xff]
    %688 = vst [vmem:[#allocation1] ss:$9 sm:$0xff] %v82
    %v689 = vld [vmem:[#allocation1] sm:$0xff]
    %v690 = vld [vmem:[#allocation1 + $0x9] sm:$0xff]
    %v691 = vld [vmem:[#allocation1 + $0x12] sm:$0xff]
    %v692 = vld [vmem:[#allocation1 + $0x1b] sm:$0xff]
    %v693 = vld [vmem:[#allocation1 + $0x24] sm:$0xff]
    %v694 = vld [vmem:[#allocation1 + $0x2d] sm:$0xff]
    %v695 = vld [vmem:[#allocation1 + $0x36] sm:$0xff]
    %v696 = vld [vmem:[#allocation1 + $0x3f] sm:$0xff]
    %698 = vst [vmem:[#allocation1] ss:$9 sm:$0xff] %v83
    %v699 = vld [vmem:[#allocation1] sm:$0xff]
    %v700 = vld [vmem:[#allocation1 + $0x9] sm:$0xff]
    %v701 = vld [vmem:[#allocation1 + $0x12] sm:$0xff]
    %v702 = vld [vmem:[#allocation1 + $0x1b] sm:$0xff]
    %v703 = vld [vmem:[#allocation1 + $0x24] sm:$0xff]
    %v704 = vld [vmem:[#allocation1 + $0x2d] sm:$0xff]
    %v705 = vld [vmem:[#allocation1 + $0x36] sm:$0xff]
    %v706 = vld [vmem:[#allocation1 + $0x3f] sm:$0xff]
    %708 = vst [vmem:[#allocation1] ss:$9 sm:$0xff] %v84
    %v709 = vld [vmem:[#allocation1] sm:$0xff]
    %v710 = vld [vmem:[#allocation1 + $0x9] sm:$0xff]
    %v711 = vld [vmem:[#allocation1 + $0x12] sm:$0xff]
    %v712 = vld [vmem:[#allocation1 + $0x1b] sm:$0xff]
    %v1325 = vunpack.c.l.b16 %v85
    %v1326 = vunpack.c.h.b16 %v85
    %v1327 = vunpack.c.l.b16 %v86
    %v1328 = vunpack.c.h.b16 %v86
    %v1329 = vunpack.c.l.b16 %v87
    %v1330 = vunpack.c.h.b16 %v87
    %v1331 = vunpack.c.l.b16 %v88
    %v1332 = vunpack.c.h.b16 %v88
    %v1333 = vunpack.c.l.b16 %v89
    %v1334 = vunpack.c.h.b16 %v89
    %v1335 = vunpack.c.l.b16 %v90
    %v1336 = vunpack.c.h.b16 %v90
    %v1337 = vunpack.c.l.b16 %v91
    %v1338 = vunpack.c.h.b16 %v91
    %v1339 = vunpack.c.l.b16 %v92
    %v1340 = vunpack.c.h.b16 %v92
    %v1341 = vunpack.c.l.b16 %v93
    %v1342 = vunpack.c.h.b16 %v93
    %v1343 = vunpack.c.l.b16 %v94
    %v1344 = vunpack.c.h.b16 %v94
    %v1345 = vunpack.c.l.b16 %v95
    %v1346 = vunpack.c.h.b16 %v95
    %v1347 = vunpack.c.l.b16 %v96
    %v1348 = vunpack.c.h.b16 %v96
    %v1349 = vunpack.c.l.b16 %v97
    %v1350 = vunpack.c.h.b16 %v97
    %v1351 = vunpack.c.l.b16 %v98
    %v1352 = vunpack.c.h.b16 %v98
    %v1353 = vunpack.c.l.b16 %v99
    %v1354 = vunpack.c.h.b16 %v99
    %v1355 = vunpack.c.l.b16 %v100
    %v1356 = vunpack.c.h.b16 %v100
    %v1357 = vunpack.c.l.b16 %v101
    %v1358 = vunpack.c.h.b16 %v101
    %v1359 = vunpack.c.l.b16 %v102
    %v1360 = vunpack.c.h.b16 %v102
    %v1361 = vunpack.c.l.b16 %v103
    %v1362 = vunpack.c.h.b16 %v103
    %v1363 = vunpack.c.l.b16 %v104
    %v1364 = vunpack.c.h.b16 %v104
    %v1365 = vunpack.c.l.b16 %v105
    %v1366 = vunpack.c.h.b16 %v105
    %v1367 = vunpack.c.l.b16 %v106
    %v1368 = vunpack.c.h.b16 %v106
    %v1369 = vunpack.c.l.b16 %v107
    %v1370 = vunpack.c.h.b16 %v107
    %v1371 = vunpack.c.l.b16 %v108
    %v1372 = vunpack.c.h.b16 %v108
    %v1373 = vunpack.c.l.b16 %v109
    %v1374 = vunpack.c.h.b16 %v109
    %v1375 = vunpack.c.l.b16 %v110
    %v1376 = vunpack.c.h.b16 %v110
    %v1377 = vunpack.c.l.b16 %v111
    %v1378 = vunpack.c.h.b16 %v111
    %v1379 = vunpack.c.l.b16 %v112
    %v1380 = vunpack.c.h.b16 %v112
    %v1381 = vunpack.c.l.b16 %v113
    %v1382 = vunpack.c.h.b16 %v113
    %v1383 = vunpack.c.l.b16 %v114
    %v1384 = vunpack.c.h.b16 %v114
    %v1385 = vunpack.c.l.b16 %v115
    %v1386 = vunpack.c.h.b16 %v115
    %v1387 = vunpack.c.l.b16 %v116
    %v1388 = vunpack.c.h.b16 %v116
    %v1389 = vunpack.c.l.b16 %v117
    %v1390 = vunpack.c.h.b16 %v117
    %v1391 = vunpack.c.l.b16 %v118
    %v1392 = vunpack.c.h.b16 %v118
    %v1393 = vunpack.c.l.b16 %v119
    %v1394 = vunpack.c.h.b16 %v119
    %v1395 = vunpack.c.l.b16 %v120
    %v1396 = vunpack.c.h.b16 %v120
    %v1397 = vunpack.c.l.b16 %v121
    %v1398 = vunpack.c.h.b16 %v121
    %v1399 = vunpack.c.l.b16 %v122
    %v1400 = vunpack.c.h.b16 %v122
    %v1401 = vunpack.c.l.b16 %v123
    %v1402 = vunpack.c.h.b16 %v123
    %v1403 = vunpack.c.l.b16 %v124
    %v1404 = vunpack.c.h.b16 %v124
    %v1405 = vunpack.c.l.b16 %v125
    %v1406 = vunpack.c.h.b16 %v125
    %v1407 = vunpack.c.l.b16 %v126
    %v1408 = vunpack.c.h.b16 %v126
    %v1409 = vunpack.c.l.b16 %v127
    %v1410 = vunpack.c.h.b16 %v127
    %v1411 = vunpack.c.l.b16 %v128
    %v1412 = vunpack.c.h.b16 %v128
    %v1413 = vunpack.c.l.b16 %v129
    %v1414 = vunpack.c.h.b16 %v129
    %v1415 = vunpack.c.l.b16 %v130
    %v1416 = vunpack.c.h.b16 %v130
    %v1417 = vunpack.c.l.b16 %v131
    %v1418 = vunpack.c.h.b16 %v131
    %v1419 = vunpack.c.l.b16 %v132
    %v1420 = vunpack.c.h.b16 %v132
    %v1421 = vunpack.c.l.b16 %v133
    %v1422 = vunpack.c.h.b16 %v133
    %v1423 = vunpack.c.l.b16 %v134
    %v1424 = vunpack.c.h.b16 %v134
    %v1425 = vunpack.c.l.b16 %v135
    %v1426 = vunpack.c.h.b16 %v135
    %v1427 = vunpack.c.l.b16 %v136
    %v1428 = vunpack.c.h.b16 %v136
    %v1429 = vunpack.c.l.b16 %v137
    %v1430 = vunpack.c.h.b16 %v137
    %v1431 = vunpack.c.l.b16 %v138
    %v1432 = vunpack.c.h.b16 %v138
    %v1433 = vunpack.c.l.b16 %v139
    %v1434 = vunpack.c.h.b16 %v139
    %v1435 = vunpack.c.l.b16 %v140
    %v1436 = vunpack.c.h.b16 %v140
    %v1437 = vunpack.c.l.b16 %v141
    %v1438 = vunpack.c.h.b16 %v141
    %v1439 = vunpack.c.l.b16 %v142
    %v1440 = vunpack.c.h.b16 %v142
    %v1441 = vunpack.c.l.b16 %v143
    %v1442 = vunpack.c.h.b16 %v143
    %v1443 = vunpack.c.l.b16 %v144
    %v1444 = vunpack.c.h.b16 %v144
    %v1445 = vunpack.c.l.b16 %v145
    %v1446 = vunpack.c.h.b16 %v145
    %v1447 = vunpack.c.l.b16 %v146
    %v1448 = vunpack.c.h.b16 %v146
    %v1449 = vunpack.c.l.b16 %v147
    %v1450 = vunpack.c.h.b16 %v147
    %v1451 = vunpack.c.l.b16 %v148
    %v1452 = vunpack.c.h.b16 %v148
    %v1453 = vunpack.c.l.b16 %v149
    %v1454 = vunpack.c.h.b16 %v149
    %v1455 = vunpack.c.l.b16 %v150
    %v1456 = vunpack.c.h.b16 %v150
    %v1457 = vunpack.c.l.b16 %v151
    %v1458 = vunpack.c.h.b16 %v151
    %v1459 = vunpack.c.l.b16 %v152
    %v1460 = vunpack.c.h.b16 %v152
    %v1461 = vunpack.c.l.b16 %v153
    %v1462 = vunpack.c.h.b16 %v153
    %v1463 = vunpack.c.l.b16 %v154
    %v1464 = vunpack.c.h.b16 %v154
    %v1465 = vunpack.c.l.b16 %v155
    %v1466 = vunpack.c.h.b16 %v155
    %v1467 = vunpack.c.l.b16 %v156
    %v1468 = vunpack.c.h.b16 %v156
    %v1469 = vunpack.c.l.b16 %v157
    %v1470 = vunpack.c.h.b16 %v157
    %v1471 = vunpack.c.l.b16 %v158
    %v1472 = vunpack.c.h.b16 %v158
    %v1473 = vunpack.c.l.b16 %v159
    %v1474 = vunpack.c.h.b16 %v159
    %v1475 = vunpack.c.l.b16 %v160
    %v1476 = vunpack.c.h.b16 %v160
    %v1477 = vunpack.c.l.b16 %v161
    %v1478 = vunpack.c.h.b16 %v161
    %v1479 = vunpack.c.l.b16 %v162
    %v1480 = vunpack.c.h.b16 %v162
    %v1481 = vunpack.c.l.b16 %v163
    %v1482 = vunpack.c.h.b16 %v163
    %v1483 = vunpack.c.l.b16 %v164
    %v1484 = vunpack.c.h.b16 %v164
    %v1485 = vunpack.c.l.b16 %v165
    %v1486 = vunpack.c.h.b16 %v165
    %v1487 = vunpack.c.l.b16 %v166
    %v1488 = vunpack.c.h.b16 %v166
    %v1489 = vunpack.c.l.b16 %v167
    %v1490 = vunpack.c.h.b16 %v167
    %v1491 = vunpack.c.l.b16 %v168
    %v1492 = vunpack.c.h.b16 %v168
    %v1493 = vunpack.c.l.b16 %v169
    %v1494 = vunpack.c.h.b16 %v169
    %v1495 = vunpack.c.l.b16 %v170
    %v1496 = vunpack.c.h.b16 %v170
    %v1497 = vunpack.c.l.b16 %v171
    %v1498 = vunpack.c.h.b16 %v171
    %v1499 = vunpack.c.l.b16 %v172
    %v1500 = vunpack.c.h.b16 %v172
    %v1501 = vunpack.c.l.b16 %v173
    %v1502 = vunpack.c.h.b16 %v173
    %v1503 = vunpack.c.l.b16 %v174
    %v1504 = vunpack.c.h.b16 %v174
    %v1505 = vunpack.c.l.b16 %v175
    %v1506 = vunpack.c.h.b16 %v175
    %v1507 = vunpack.c.l.b16 %v176
    %v1508 = vunpack.c.h.b16 %v176
    %v1509 = vunpack.c.l.b16 %v177
    %v1510 = vunpack.c.h.b16 %v177
    %v1511 = vunpack.c.l.b16 %v178
    %v1512 = vunpack.c.h.b16 %v178
    %v1513 = vunpack.c.l.b16 %v179
    %v1514 = vunpack.c.h.b16 %v179
    %v1515 = vunpack.c.l.b16 %v180
    %v1516 = vunpack.c.h.b16 %v180
    %v1517 = vunpack.c.l.b16 %v181
    %v1518 = vunpack.c.h.b16 %v181
    %v1519 = vunpack.c.l.b16 %v182
    %v1520 = vunpack.c.h.b16 %v182
    %v1521 = vunpack.c.l.b16 %v183
    %v1522 = vunpack.c.h.b16 %v183
    %v1523 = vunpack.c.l.b16 %v184
    %v1524 = vunpack.c.h.b16 %v184
    %v1525 = vunpack.c.l.b16 %v185
    %v1526 = vunpack.c.h.b16 %v185
    %v1527 = vunpack.c.l.b16 %v186
    %v1528 = vunpack.c.h.b16 %v186
    %v1529 = vunpack.c.l.b16 %v187
    %v1530 = vunpack.c.h.b16 %v187
    %v1531 = vunpack.c.l.b16 %v188
    %v1532 = vunpack.c.h.b16 %v188
    %v1533 = vunpack.c.l.b16 %v189
    %v1534 = vunpack.c.h.b16 %v189
    %v1535 = vunpack.c.l.b16 %v190
    %v1536 = vunpack.c.h.b16 %v190
    %v1537 = vunpack.c.l.b16 %v191
    %v1538 = vunpack.c.h.b16 %v191
    %v1539 = vunpack.c.l.b16 %v192
    %v1540 = vunpack.c.h.b16 %v192
    %v1541 = vunpack.c.l.b16 %v193
    %v1542 = vunpack.c.h.b16 %v193
    %v1543 = vunpack.c.l.b16 %v194
    %v1544 = vunpack.c.h.b16 %v194
    %v1545 = vunpack.c.l.b16 %v195
    %v1546 = vunpack.c.h.b16 %v195
    %v1547 = vunpack.c.l.b16 %v196
    %v1548 = vunpack.c.h.b16 %v196
    %v1549 = vunpack.c.l.b16 %v197
    %v1550 = vunpack.c.h.b16 %v197
    %v1551 = vunpack.c.l.b16 %v198
    %v1552 = vunpack.c.h.b16 %v198
    %v1553 = vunpack.c.l.b16 %v199
    %v1554 = vunpack.c.h.b16 %v199
    %v1555 = vunpack.c.l.b16 %v200
    %v1556 = vunpack.c.h.b16 %v200
    %v1557 = vunpack.c.l.b16 %v201
    %v1558 = vunpack.c.h.b16 %v201
    %v1559 = vunpack.c.l.b16 %v202
    %v1560 = vunpack.c.h.b16 %v202
    %v1561 = vunpack.c.l.b16 %v203
    %v1562 = vunpack.c.h.b16 %v203
    %v1563 = vunpack.c.l.b16 %v204
    %v1564 = vunpack.c.h.b16 %v204
    %v1565 = vunpack.c.l.b16 %v205
    %v1566 = vunpack.c.h.b16 %v205
    %v1567 = vunpack.c.l.b16 %v206
    %v1568 = vunpack.c.h.b16 %v206
    %v1569 = vunpack.c.l.b16 %v207
    %v1570 = vunpack.c.h.b16 %v207
    %v1571 = vunpack.c.l.b16 %v208
    %v1572 = vunpack.c.h.b16 %v208
    %v1573 = vunpack.c.l.b16 %v209
    %v1574 = vunpack.c.h.b16 %v209
    %v1575 = vunpack.c.l.b16 %v210
    %v1576 = vunpack.c.h.b16 %v210
    %v1577 = vunpack.c.l.b16 %v211
    %v1578 = vunpack.c.h.b16 %v211
    %v1579 = vunpack.c.l.b16 %v212
    %v1580 = vunpack.c.h.b16 %v212
    %v1581 = vunpack.c.l.b16 %v213
    %v1582 = vunpack.c.h.b16 %v213
    %v1583 = vunpack.c.l.b16 %v214
    %v1584 = vunpack.c.h.b16 %v214
    %v1585 = vunpack.c.l.b16 %v215
    %v1586 = vunpack.c.h.b16 %v215
    %v1587 = vunpack.c.l.b16 %v216
    %v1588 = vunpack.c.h.b16 %v216
    %v1589 = vunpack.c.l.b16 %v217
    %v1590 = vunpack.c.h.b16 %v217
    %v1591 = vunpack.c.l.b16 %v218
    %v1592 = vunpack.c.h.b16 %v218
    %v1593 = vunpack.c.l.b16 %v219
    %v1594 = vunpack.c.h.b16 %v219
    %v1595 = vunpack.c.l.b16 %v220
    %v1596 = vunpack.c.h.b16 %v220
    %v1597 = vunpack.c.l.b16 %v221
    %v1598 = vunpack.c.h.b16 %v221
    %v1599 = vunpack.c.l.b16 %v222
    %v1600 = vunpack.c.h.b16 %v222
    %v1601 = vunpack.c.l.b16 %v223
    %v1602 = vunpack.c.h.b16 %v223
    %v1603 = vunpack.c.l.b16 %v224
    %v1604 = vunpack.c.h.b16 %v224
    %v1605 = vunpack.c.l.b16 %v225
    %v1606 = vunpack.c.h.b16 %v225
    %v1607 = vunpack.c.l.b16 %v226
    %v1608 = vunpack.c.h.b16 %v226
    %v1609 = vunpack.c.l.b16 %v227
    %v1610 = vunpack.c.h.b16 %v227
    %v1611 = vunpack.c.l.b16 %v228
    %v1612 = vunpack.c.h.b16 %v228
    %v1613 = vunpack.c.l.b16 %v229
    %v1614 = vunpack.c.h.b16 %v229
    %v1615 = vunpack.c.l.b16 %v230
    %v1616 = vunpack.c.h.b16 %v230
    %v1617 = vunpack.c.l.b16 %v231
    %v1618 = vunpack.c.h.b16 %v231
    %v1619 = vunpack.c.l.b16 %v232
    %v1620 = vunpack.c.h.b16 %v232
    %v1621 = vunpack.c.l.b16 %v233
    %v1622 = vunpack.c.h.b16 %v233
    %v1623 = vunpack.c.l.b16 %v234
    %v1624 = vunpack.c.h.b16 %v234
    %v1625 = vunpack.c.l.b16 %v235
    %v1626 = vunpack.c.h.b16 %v235
    %v1627 = vunpack.c.l.b16 %v236
    %v1628 = vunpack.c.h.b16 %v236
    %v1629 = vunpack.c.l.b16 %v237
    %v1630 = vunpack.c.h.b16 %v237
    %v1631 = vunpack.c.l.b16 %v238
    %v1632 = vunpack.c.h.b16 %v238
    %v1633 = vunpack.c.l.b16 %v239
    %v1634 = vunpack.c.h.b16 %v239
    %v1635 = vunpack.c.l.b16 %v240
    %v1636 = vunpack.c.h.b16 %v240
    %v1637 = vunpack.c.l.b16 %v241
    %v1638 = vunpack.c.h.b16 %v241
    %v1639 = vunpack.c.l.b16 %v242
    %v1640 = vunpack.c.h.b16 %v242
    %v1641 = vunpack.c.l.b16 %v243
    %v1642 = vunpack.c.h.b16 %v243
    %v1643 = vunpack.c.l.b16 %v244
    %v1644 = vunpack.c.h.b16 %v244
    %v1645 = vunpack.c.l.b16 %v245
    %v1646 = vunpack.c.h.b16 %v245
    %v1647 = vunpack.c.l.b16 %v246
    %v1648 = vunpack.c.h.b16 %v246
    %v1649 = vunpack.c.l.b16 %v247
    %v1650 = vunpack.c.h.b16 %v247
    %v1651 = vunpack.c.l.b16 %v248
    %v1652 = vunpack.c.h.b16 %v248
    %v1653 = vunpack.c.l.b16 %v249
    %v1654 = vunpack.c.h.b16 %v249
    %v1655 = vunpack.c.l.b16 %v250
    %v1656 = vunpack.c.h.b16 %v250
    %v1657 = vunpack.c.l.b16 %v251
    %v1658 = vunpack.c.h.b16 %v251
    %v1659 = vunpack.c.l.b16 %v252
    %v1660 = vunpack.c.h.b16 %v252
    %v1661 = vunpack.c.l.b16 %v253
    %v1662 = vunpack.c.h.b16 %v253
    %v1663 = vunpack.c.l.b16 %v254
    %v1664 = vunpack.c.h.b16 %v254
    %v1665 = vunpack.c.l.b16 %v255
    %v1666 = vunpack.c.h.b16 %v255
    %v1667 = vunpack.c.l.b16 %v256
    %v1668 = vunpack.c.h.b16 %v256
    %v1669 = vunpack.c.l.b16 %v257
    %v1670 = vunpack.c.h.b16 %v257
    %v1671 = vunpack.c.l.b16 %v258
    %v1672 = vunpack.c.h.b16 %v258
    %v1673 = vunpack.c.l.b16 %v259
    %v1674 = vunpack.c.h.b16 %v259
    %v1675 = vunpack.c.l.b16 %v260
    %v1676 = vunpack.c.h.b16 %v260
    %v1677 = vunpack.c.l.b16 %v261
    %v1678 = vunpack.c.h.b16 %v261
    %v1679 = vunpack.c.l.b16 %v262
    %v1680 = vunpack.c.h.b16 %v262
    %v1681 = vunpack.c.l.b16 %v263
    %v1682 = vunpack.c.h.b16 %v263
    %v1683 = vunpack.c.l.b16 %v264
    %v1684 = vunpack.c.h.b16 %v264
    %v1685 = vunpack.c.l.b16 %v265
    %v1686 = vunpack.c.h.b16 %v265
    %v1687 = vunpack.c.l.b16 %v266
    %v1688 = vunpack.c.h.b16 %v266
    %v1689 = vunpack.c.l.b16 %v267
    %v1690 = vunpack.c.h.b16 %v267
    %v1691 = vunpack.c.l.b16 %v268
    %v1692 = vunpack.c.h.b16 %v268
    %v1693 = vunpack.c.l.b16 %v269
    %v1694 = vunpack.c.h.b16 %v269
    %v1695 = vunpack.c.l.b16 %v270
    %v1696 = vunpack.c.h.b16 %v270
    %v1697 = vunpack.c.l.b16 %v271
    %v1698 = vunpack.c.h.b16 %v271
    %v1699 = vunpack.c.l.b16 %v272
    %v1700 = vunpack.c.h.b16 %v272
    %v1701 = vunpack.c.l.b16 %v273
    %v1702 = vunpack.c.h.b16 %v273
    %v1703 = vunpack.c.l.b16 %v274
    %v1704 = vunpack.c.h.b16 %v274
    %v1705 = vunpack.c.l.b16 %v275
    %v1706 = vunpack.c.h.b16 %v275
    %v1707 = vunpack.c.l.b16 %v276
    %v1708 = vunpack.c.h.b16 %v276
    %v1709 = vunpack.c.l.b16 %v277
    %v1710 = vunpack.c.h.b16 %v277
    %v1711 = vunpack.c.l.b16 %v278
    %v1712 = vunpack.c.h.b16 %v278
    %v1713 = vunpack.c.l.b16 %v279
    %v1714 = vunpack.c.h.b16 %v279
    %v1715 = vunpack.c.l.b16 %v280
    %v1716 = vunpack.c.h.b16 %v280
    %v1717 = vunpack.c.l.b16 %v281
    %v1718 = vunpack.c.h.b16 %v281
    %v1719 = vunpack.c.l.b16 %v282
    %v1720 = vunpack.c.h.b16 %v282
    %v1721 = vunpack.c.l.b16 %v283
    %v1722 = vunpack.c.h.b16 %v283
    %v1723 = vunpack.c.l.b16 %v284
    %v1724 = vunpack.c.h.b16 %v284
    %v1725 = vunpack.c.l.b16 %v285
    %v1726 = vunpack.c.h.b16 %v285
    %v1727 = vunpack.c.l.b16 %v286
    %v1728 = vunpack.c.h.b16 %v286
    %v1729 = vunpack.c.l.b16 %v287
    %v1730 = vunpack.c.h.b16 %v287
    %v1731 = vunpack.c.l.b16 %v288
    %v1732 = vunpack.c.h.b16 %v288
    %v1733 = vunpack.c.l.b16 %v289
    %v1734 = vunpack.c.h.b16 %v289
    %v1735 = vunpack.c.l.b16 %v290
    %v1736 = vunpack.c.h.b16 %v290
    %v1737 = vunpack.c.l.b16 %v291
    %v1738 = vunpack.c.h.b16 %v291
    %v1739 = vunpack.c.l.b16 %v292
    %v1740 = vunpack.c.h.b16 %v292
    %v1741 = vunpack.c.l.b16 %v293
    %v1742 = vunpack.c.h.b16 %v293
    %v1743 = vunpack.c.l.b16 %v294
    %v1744 = vunpack.c.h.b16 %v294
    %v1745 = vunpack.c.l.b16 %v295
    %v1746 = vunpack.c.h.b16 %v295
    %v1747 = vunpack.c.l.b16 %v296
    %v1748 = vunpack.c.h.b16 %v296
    %v1749 = vunpack.c.l.b16 %v297
    %v1750 = vunpack.c.h.b16 %v297
    %v1751 = vunpack.c.l.b16 %v298
    %v1752 = vunpack.c.h.b16 %v298
    %v1753 = vunpack.c.l.b16 %v299
    %v1754 = vunpack.c.h.b16 %v299
    %v1755 = vunpack.c.l.b16 %v300
    %v1756 = vunpack.c.h.b16 %v300
    %v1757 = vunpack.c.l.b16 %v301
    %v1758 = vunpack.c.h.b16 %v301
    %v1759 = vunpack.c.l.b16 %v302
    %v1760 = vunpack.c.h.b16 %v302
    %v1761 = vunpack.c.l.b16 %v303
    %v1762 = vunpack.c.h.b16 %v303
    %v1763 = vunpack.c.l.b16 %v304
    %v1764 = vunpack.c.h.b16 %v304
    %v1765 = vunpack.c.l.b16 %v305
    %v1766 = vunpack.c.h.b16 %v305
    %v1767 = vunpack.c.l.b16 %v306
    %v1768 = vunpack.c.h.b16 %v306
    %v1769 = vunpack.c.l.b16 %v307
    %v1770 = vunpack.c.h.b16 %v307
    %v1771 = vunpack.c.l.b16 %v308
    %v1772 = vunpack.c.h.b16 %v308
    %v1773 = vunpack.c.l.b16 %v309
    %v1774 = vunpack.c.h.b16 %v309
    %v1775 = vunpack.c.l.b16 %v310
    %v1776 = vunpack.c.h.b16 %v310
    %v1777 = vunpack.c.l.b16 %v311
    %v1778 = vunpack.c.h.b16 %v311
    %v1779 = vunpack.c.l.b16 %v312
    %v1780 = vunpack.c.h.b16 %v312
    %v1781 = vunpack.c.l.b16 %v313
    %v1782 = vunpack.c.h.b16 %v313
    %v1783 = vunpack.c.l.b16 %v314
    %v1784 = vunpack.c.h.b16 %v314
    %v1785 = vunpack.c.l.b16 %v315
    %v1786 = vunpack.c.h.b16 %v315
    %v1787 = vunpack.c.l.b16 %v316
    %v1788 = vunpack.c.h.b16 %v316
    %v1789 = vunpack.c.l.b16 %v317
    %v1790 = vunpack.c.h.b16 %v317
    %v1791 = vunpack.c.l.b16 %v318
    %v1792 = vunpack.c.h.b16 %v318
    %v1793 = vunpack.c.l.b16 %v319
    %v1794 = vunpack.c.h.b16 %v319
    %v1795 = vunpack.c.l.b16 %v320
    %v1796 = vunpack.c.h.b16 %v320
    %v1797 = vunpack.c.l.b16 %v321
    %v1798 = vunpack.c.h.b16 %v321
    %v1799 = vunpack.c.l.b16 %v322
    %v1800 = vunpack.c.h.b16 %v322
    %v1801 = vunpack.c.l.b16 %v323
    %v1802 = vunpack.c.h.b16 %v323
    %v1803 = vunpack.c.l.b16 %v324
    %v1804 = vunpack.c.h.b16 %v324
    %v1805 = vunpack.c.l.b16 %v325
    %v1806 = vunpack.c.h.b16 %v325
    %v1807 = vunpack.c.l.b16 %v326
    %v1808 = vunpack.c.h.b16 %v326
    %v1809 = vunpack.c.l.b16 %v327
    %v1810 = vunpack.c.h.b16 %v327
    %v1811 = vunpack.c.l.b16 %v328
    %v1812 = vunpack.c.h.b16 %v328
    %v1813 = vunpack.c.l.b16 %v329
    %v1814 = vunpack.c.h.b16 %v329
    %v1815 = vunpack.c.l.b16 %v330
    %v1816 = vunpack.c.h.b16 %v330
    %v1817 = vunpack.c.l.b16 %v331
    %v1818 = vunpack.c.h.b16 %v331
    %v1819 = vunpack.c.l.b16 %v332
    %v1820 = vunpack.c.h.b16 %v332
    %v1821 = vunpack.c.l.b16 %v333
    %v1822 = vunpack.c.h.b16 %v333
    %v1823 = vunpack.c.l.b16 %v334
    %v1824 = vunpack.c.h.b16 %v334
    %v1825 = vunpack.c.l.b16 %v335
    %v1826 = vunpack.c.h.b16 %v335
    %v1827 = vunpack.c.l.b16 %v336
    %v1828 = vunpack.c.h.b16 %v336
    %v1829 = vunpack.c.l.b16 %v337
    %v1830 = vunpack.c.h.b16 %v337
    %v1831 = vunpack.c.l.b16 %v338
    %v1832 = vunpack.c.h.b16 %v338
    %v1833 = vunpack.c.l.b16 %v339
    %v1834 = vunpack.c.h.b16 %v339
    %v1835 = vunpack.c.l.b16 %v340
    %v1836 = vunpack.c.h.b16 %v340
    %v1837 = vunpack.c.l.b16 %v341
    %v1838 = vunpack.c.h.b16 %v341
    %v1839 = vunpack.c.l.b16 %v342
    %v1840 = vunpack.c.h.b16 %v342
    %v1841 = vunpack.c.l.b16 %v343
    %v1842 = vunpack.c.h.b16 %v343
    %v1843 = vunpack.c.l.b16 %v344
    %v1844 = vunpack.c.h.b16 %v344
    %v1845 = vunpack.c.l.b16 %v345
    %v1846 = vunpack.c.h.b16 %v345
    %v1847 = vunpack.c.l.b16 %v346
    %v1848 = vunpack.c.h.b16 %v346
    %v1849 = vunpack.c.l.b16 %v347
    %v1850 = vunpack.c.h.b16 %v347
    %v1851 = vunpack.c.l.b16 %v348
    %v1852 = vunpack.c.h.b16 %v348
    %v1853 = vunpack.c.l.b16 %v349
    %v1854 = vunpack.c.h.b16 %v349
    %v1855 = vunpack.c.l.b16 %v350
    %v1856 = vunpack.c.h.b16 %v350
    %v1857 = vunpack.c.l.b16 %v351
    %v1858 = vunpack.c.h.b16 %v351
    %v1859 = vunpack.c.l.b16 %v352
    %v1860 = vunpack.c.h.b16 %v352
    %v1861 = vunpack.c.l.b16 %v353
    %v1862 = vunpack.c.h.b16 %v353
    %v1863 = vunpack.c.l.b16 %v354
    %v1864 = vunpack.c.h.b16 %v354
    %v1865 = vunpack.c.l.b16 %v355
    %v1866 = vunpack.c.h.b16 %v355
    %v1867 = vunpack.c.l.b16 %v356
    %v1868 = vunpack.c.h.b16 %v356
    %v1869 = vunpack.c.l.b16 %v357
    %v1870 = vunpack.c.h.b16 %v357
    %v1871 = vunpack.c.l.b16 %v358
    %v1872 = vunpack.c.h.b16 %v358
    %v1873 = vunpack.c.l.b16 %v359
    %v1874 = vunpack.c.h.b16 %v359
    %v1875 = vunpack.c.l.b16 %v360
    %v1876 = vunpack.c.h.b16 %v360
    %v1877 = vunpack.c.l.b16 %v361
    %v1878 = vunpack.c.h.b16 %v361
    %v1879 = vunpack.c.l.b16 %v362
    %v1880 = vunpack.c.h.b16 %v362
    %v1881 = vunpack.c.l.b16 %v363
    %v1882 = vunpack.c.h.b16 %v363
    %v1883 = vunpack.c.l.b16 %v364
    %v1884 = vunpack.c.h.b16 %v364
    %v1885 = vunpack.c.l.b16 %v365
    %v1886 = vunpack.c.h.b16 %v365
    %v1887 = vunpack.c.l.b16 %v366
    %v1888 = vunpack.c.h.b16 %v366
    %v1889 = vunpack.c.l.b16 %v367
    %v1890 = vunpack.c.h.b16 %v367
    %v1891 = vunpack.c.l.b16 %v368
    %v1892 = vunpack.c.h.b16 %v368
    %v1893 = vunpack.c.l.b16 %v369
    %v1894 = vunpack.c.h.b16 %v369
    %v1895 = vunpack.c.l.b16 %v370
    %v1896 = vunpack.c.h.b16 %v370
    %v1897 = vunpack.c.l.b16 %v371
    %v1898 = vunpack.c.h.b16 %v371
    %v1899 = vunpack.c.l.b16 %v372
    %v1900 = vunpack.c.h.b16 %v372
    %v1901 = vunpack.c.l.b16 %v373
    %v1902 = vunpack.c.h.b16 %v373
    %v1903 = vunpack.c.l.b16 %v374
    %v1904 = vunpack.c.h.b16 %v374
    %v1905 = vunpack.c.l.b16 %v375
    %v1906 = vunpack.c.h.b16 %v375
    %v1907 = vunpack.c.l.b16 %v376
    %v1908 = vunpack.c.h.b16 %v376
    %v1909 = vunpack.c.l.b16 %v377
    %v1910 = vunpack.c.h.b16 %v377
    %v1911 = vunpack.c.l.b16 %v378
    %v1912 = vunpack.c.h.b16 %v378
    %v1913 = vunpack.c.l.b16 %v379
    %v1914 = vunpack.c.h.b16 %v379
    %v1915 = vunpack.c.l.b16 %v380
    %v1916 = vunpack.c.h.b16 %v380
    %v1917 = vunpack.c.l.b16 %v381
    %v1918 = vunpack.c.h.b16 %v381
    %v1919 = vunpack.c.l.b16 %v382
    %v1920 = vunpack.c.h.b16 %v382
    %v1921 = vunpack.c.l.b16 %v383
    %v1922 = vunpack.c.h.b16 %v383
    %v1923 = vunpack.c.l.b16 %v384
    %v1924 = vunpack.c.h.b16 %v384
    %v1925 = vunpack.c.l.b16 %v385
    %v1926 = vunpack.c.h.b16 %v385
    %v1927 = vunpack.c.l.b16 %v386
    %v1928 = vunpack.c.h.b16 %v386
    %v1929 = vunpack.c.l.b16 %v387
    %v1930 = vunpack.c.h.b16 %v387
    %v1931 = vunpack.c.l.b16 %v388
    %v1932 = vunpack.c.h.b16 %v388
    %v1933 = vunpack.c.l.b16 %v389
    %v1934 = vunpack.c.h.b16 %v389
    %v1935 = vunpack.c.l.b16 %v390
    %v1936 = vunpack.c.h.b16 %v390
    %v1937 = vunpack.c.l.b16 %v391
    %v1938 = vunpack.c.h.b16 %v391
    %v1939 = vunpack.c.l.b16 %v392
    %v1940 = vunpack.c.h.b16 %v392
    %v1941 = vunpack.c.l.b16 %v393
    %v1942 = vunpack.c.h.b16 %v393
    %v1943 = vunpack.c.l.b16 %v394
    %v1944 = vunpack.c.h.b16 %v394
    %v1945 = vunpack.c.l.b16 %v395
    %v1946 = vunpack.c.h.b16 %v395
    %v1947 = vunpack.c.l.b16 %v396
    %v1948 = vunpack.c.h.b16 %v396
    %v1949 = vunpack.c.l.b16 %v397
    %v1950 = vunpack.c.h.b16 %v397
    %v1951 = vunpack.c.l.b16 %v398
    %v1952 = vunpack.c.h.b16 %v398
    %v1953 = vunpack.c.l.b16 %v399
    %v1954 = vunpack.c.h.b16 %v399
    %v1955 = vunpack.c.l.b16 %v400
    %v1956 = vunpack.c.h.b16 %v400
    %v1957 = vunpack.c.l.b16 %v401
    %v1958 = vunpack.c.h.b16 %v401
    %v1959 = vunpack.c.l.b16 %v402
    %v1960 = vunpack.c.h.b16 %v402
    %v1961 = vunpack.c.l.b16 %v403
    %v1962 = vunpack.c.h.b16 %v403
    %v1963 = vunpack.c.l.b16 %v404
    %v1964 = vunpack.c.h.b16 %v404
    %v1965 = vunpack.c.l.b16 %v405
    %v1966 = vunpack.c.h.b16 %v405
    %v1967 = vunpack.c.l.b16 %v406
    %v1968 = vunpack.c.h.b16 %v406
    %v1969 = vunpack.c.l.b16 %v407
    %v1970 = vunpack.c.h.b16 %v407
    %v1971 = vunpack.c.l.b16 %v408
    %v1972 = vunpack.c.h.b16 %v408
    %v1973 = vunpack.c.l.b16 %v409
    %v1974 = vunpack.c.h.b16 %v409
    %v1975 = vunpack.c.l.b16 %v410
    %v1976 = vunpack.c.h.b16 %v410
    %v1977 = vunpack.c.l.b16 %v411
    %v1978 = vunpack.c.h.b16 %v411
    %v1979 = vunpack.c.l.b16 %v412
    %v1980 = vunpack.c.h.b16 %v412
    %v1981 = vunpack.c.l.b16 %v413
    %v1982 = vunpack.c.h.b16 %v413
    %v1983 = vunpack.c.l.b16 %v414
    %v1984 = vunpack.c.h.b16 %v414
    %v1985 = vunpack.c.l.b16 %v415
    %v1986 = vunpack.c.h.b16 %v415
    %v1987 = vunpack.c.l.b16 %v416
    %v1988 = vunpack.c.h.b16 %v416
    %v1989 = vunpack.c.l.b16 %v417
    %v1990 = vunpack.c.h.b16 %v417
    %v1991 = vunpack.c.l.b16 %v418
    %v1992 = vunpack.c.h.b16 %v418
    %v1993 = vunpack.c.l.b16 %v419
    %v1994 = vunpack.c.h.b16 %v419
    %v1995 = vunpack.c.l.b16 %v420
    %v1996 = vunpack.c.h.b16 %v420
    %v1997 = vunpack.c.l.b16 %v421
    %v1998 = vunpack.c.h.b16 %v421
    %v1999 = vunpack.c.l.b16 %v422
    %v2000 = vunpack.c.h.b16 %v422
    %v2001 = vunpack.c.l.b16 %v423
    %v2002 = vunpack.c.h.b16 %v423
    %v2003 = vunpack.c.l.b16 %v424
    %v2004 = vunpack.c.h.b16 %v424
    %v2005 = vunpack.c.l.b16 %v425
    %v2006 = vunpack.c.h.b16 %v425
    %v2007 = vunpack.c.l.b16 %v426
    %v2008 = vunpack.c.h.b16 %v426
    %v2009 = vunpack.c.l.b16 %v427
    %v2010 = vunpack.c.h.b16 %v427
    %v2011 = vunpack.c.l.b16 %v428
    %v2012 = vunpack.c.h.b16 %v428
    %v2013 = vunpack.c.l.b16 %v429
    %v2014 = vunpack.c.h.b16 %v429
    %v2015 = vunpack.c.l.b16 %v430
    %v2016 = vunpack.c.h.b16 %v430
    %v2017 = vunpack.c.l.b16 %v431
    %v2018 = vunpack.c.h.b16 %v431
    %v2019 = vunpack.c.l.b16 %v432
    %v2020 = vunpack.c.h.b16 %v432
    %v2021 = vunpack.c.l.b16 %v433
    %v2022 = vunpack.c.h.b16 %v433
    %v2023 = vunpack.c.l.b16 %v434
    %v2024 = vunpack.c.h.b16 %v434
    %v2025 = vunpack.c.l.b16 %v435
    %v2026 = vunpack.c.h.b16 %v435
    %v2027 = vunpack.c.l.b16 %v436
    %v2028 = vunpack.c.h.b16 %v436
    %v2029 = vunpack.c.l.b16 %v437
    %v2030 = vunpack.c.h.b16 %v437
    %v2031 = vunpack.c.l.b16 %v438
    %v2032 = vunpack.c.h.b16 %v438
    %v2033 = vunpack.c.l.b16 %v439
    %v2034 = vunpack.c.h.b16 %v439
    %v2035 = vunpack.c.l.b16 %v440
    %v2036 = vunpack.c.h.b16 %v440
    %v2037 = vunpack.c.l.b16 %v441
    %v2038 = vunpack.c.h.b16 %v441
    %v2039 = vunpack.c.l.b16 %v442
    %v2040 = vunpack.c.h.b16 %v442
    %v2041 = vunpack.c.l.b16 %v443
    %v2042 = vunpack.c.h.b16 %v443
    %v2043 = vunpack.c.l.b16 %v444
    %v2044 = vunpack.c.h.b16 %v444
    %v2045 = vunpack.c.l.b16 %v445
    %v2046 = vunpack.c.h.b16 %v445
    %v2047 = vunpack.c.l.b16 %v446
    %v2048 = vunpack.c.h.b16 %v446
    %v2049 = vunpack.c.l.b16 %v447
    %v2050 = vunpack.c.h.b16 %v447
    %v2051 = vunpack.c.l.b16 %v448
    %v2052 = vunpack.c.h.b16 %v448
    %v2053 = vunpack.c.l.b16 %v449
    %v2054 = vunpack.c.h.b16 %v449
    %v2055 = vunpack.c.l.b16 %v450
    %v2056 = vunpack.c.h.b16 %v450
    %v2057 = vunpack.c.l.b16 %v451
    %v2058 = vunpack.c.h.b16 %v451
    %v2059 = vunpack.c.l.b16 %v452
    %v2060 = vunpack.c.h.b16 %v452
    %v2061 = vunpack.c.l.b16 %v453
    %v2062 = vunpack.c.h.b16 %v453
    %v2063 = vunpack.c.l.b16 %v454
    %v2064 = vunpack.c.h.b16 %v454
    %v2065 = vunpack.c.l.b16 %v455
    %v2066 = vunpack.c.h.b16 %v455
    %v2067 = vunpack.c.l.b16 %v456
    %v2068 = vunpack.c.h.b16 %v456
    %v2069 = vunpack.c.l.b16 %v457
    %v2070 = vunpack.c.h.b16 %v457
    %v2071 = vunpack.c.l.b16 %v458
    %v2072 = vunpack.c.h.b16 %v458
    %v2073 = vunpack.c.l.b16 %v459
    %v2074 = vunpack.c.h.b16 %v459
    %v2075 = vunpack.c.l.b16 %v460
    %v2076 = vunpack.c.h.b16 %v460
    %v2077 = vunpack.c.l.b16 %v461
    %v2078 = vunpack.c.h.b16 %v461
    %v2079 = vunpack.c.l.b16 %v462
    %v2080 = vunpack.c.h.b16 %v462
    %v2081 = vunpack.c.l.b16 %v463
    %v2082 = vunpack.c.h.b16 %v463
    %v2083 = vunpack.c.l.b16 %v464
    %v2084 = vunpack.c.h.b16 %v464
    %v2085 = vunpack.c.l.b16 %v465
    %v2086 = vunpack.c.h.b16 %v465
    %v2087 = vunpack.c.l.b16 %v466
    %v2088 = vunpack.c.h.b16 %v466
    %v2089 = vunpack.c.l.b16 %v467
    %v2090 = vunpack.c.h.b16 %v467
    %v2091 = vunpack.c.l.b16 %v468
    %v2092 = vunpack.c.h.b16 %v468
    %v2093 = vunpack.c.l.b16 %v469
    %v2094 = vunpack.c.h.b16 %v469
    %v2095 = vunpack.c.l.b16 %v470
    %v2096 = vunpack.c.h.b16 %v470
    %v2097 = vunpack.c.l.b16 %v471
    %v2098 = vunpack.c.h.b16 %v471
    %v2099 = vunpack.c.l.b16 %v472
    %v2100 = vunpack.c.h.b16 %v472
    %v2101 = vunpack.c.l.b16 %v473
    %v2102 = vunpack.c.h.b16 %v473
    %v2103 = vunpack.c.l.b16 %v474
    %v2104 = vunpack.c.h.b16 %v474
    %v2105 = vunpack.c.l.b16 %v475
    %v2106 = vunpack.c.h.b16 %v475
    %v2107 = vunpack.c.l.b16 %v476
    %v2108 = vunpack.c.h.b16 %v476
    %v2109 = vunpack.c.l.b16 %v477
    %v2110 = vunpack.c.h.b16 %v477
    %v2111 = vunpack.c.l.b16 %v478
    %v2112 = vunpack.c.h.b16 %v478
    %v2113 = vunpack.c.l.b16 %v479
    %v2114 = vunpack.c.h.b16 %v479
    %v2115 = vunpack.c.l.b16 %v480
    %v2116 = vunpack.c.h.b16 %v480
    %v2117 = vunpack.c.l.b16 %v481
    %v2118 = vunpack.c.h.b16 %v481
    %v2119 = vunpack.c.l.b16 %v482
    %v2120 = vunpack.c.h.b16 %v482
    %v2121 = vunpack.c.l.b16 %v483
    %v2122 = vunpack.c.h.b16 %v483
    %v2123 = vunpack.c.l.b16 %v484
    %v2124 = vunpack.c.h.b16 %v484
    %v2125 = vunpack.c.l.b16 %v485
    %v2126 = vunpack.c.h.b16 %v485
    %v2127 = vunpack.c.l.b16 %v486
    %v2128 = vunpack.c.h.b16 %v486
    %v2129 = vunpack.c.l.b16 %v487
    %v2130 = vunpack.c.h.b16 %v487
    %v2131 = vunpack.c.l.b16 %v488
    %v2132 = vunpack.c.h.b16 %v488
    %v2133 = vunpack.c.l.b16 %v489
    %v2134 = vunpack.c.h.b16 %v489
    %v2135 = vunpack.c.l.b16 %v490
    %v2136 = vunpack.c.h.b16 %v490
    %v2137 = vunpack.c.l.b16 %v491
    %v2138 = vunpack.c.h.b16 %v491
    %v2139 = vunpack.c.l.b16 %v492
    %v2140 = vunpack.c.h.b16 %v492
    %v2141 = vunpack.c.l.b16 %v493
    %v2142 = vunpack.c.h.b16 %v493
    %v2143 = vunpack.c.l.b16 %v494
    %v2144 = vunpack.c.h.b16 %v494
    %v2145 = vunpack.c.l.b16 %v495
    %v2146 = vunpack.c.h.b16 %v495
    %v2147 = vunpack.c.l.b16 %v496
    %v2148 = vunpack.c.h.b16 %v496
    %v2149 = vunpack.c.l.b16 %v497
    %v2150 = vunpack.c.h.b16 %v497
    %v2151 = vunpack.c.l.b16 %v498
    %v2152 = vunpack.c.h.b16 %v498
    %v2153 = vunpack.c.l.b16 %v499
    %v2154 = vunpack.c.h.b16 %v499
    %v2155 = vunpack.c.l.b16 %v500
    %v2156 = vunpack.c.h.b16 %v500
    %v2157 = vunpack.c.l.b16 %v501
    %v2158 = vunpack.c.h.b16 %v501
    %v2159 = vunpack.c.l.b16 %v502
    %v2160 = vunpack.c.h.b16 %v502
    %v2161 = vunpack.c.l.b16 %v503
    %v2162 = vunpack.c.h.b16 %v503
    %v2163 = vunpack.c.l.b16 %v504
    %v2164 = vunpack.c.h.b16 %v504
    %v2165 = vunpack.c.l.b16 %v505
    %v2166 = vunpack.c.h.b16 %v505
    %v2167 = vunpack.c.l.b16 %v506
    %v2168 = vunpack.c.h.b16 %v506
    %v2169 = vunpack.c.l.b16 %v507
    %v2170 = vunpack.c.h.b16 %v507
    %v2171 = vunpack.c.l.b16 %v508
    %v2172 = vunpack.c.h.b16 %v508
    %v2173 = vunpack.c.l.b16 %v509
    %v2174 = vunpack.c.h.b16 %v509
    %v2175 = vunpack.c.l.b16 %v510
    %v2176 = vunpack.c.h.b16 %v510
    %v2177 = vunpack.c.l.b16 %v511
    %v2178 = vunpack.c.h.b16 %v511
    %v2179 = vunpack.c.l.b16 %v512
    %v2180 = vunpack.c.h.b16 %v512
    %v2181 = vunpack.c.l.b16 %v513
    %v2182 = vunpack.c.h.b16 %v513
    %v2183 = vunpack.c.l.b16 %v514
    %v2184 = vunpack.c.h.b16 %v514
    %v2185 = vunpack.c.l.b16 %v515
    %v2186 = vunpack.c.h.b16 %v515
    %v2187 = vunpack.c.l.b16 %v516
    %v2188 = vunpack.c.h.b16 %v516
    %v2189 = vunpack.c.l.b16 %v517
    %v2190 = vunpack.c.h.b16 %v517
    %v2191 = vunpack.c.l.b16 %v518
    %v2192 = vunpack.c.h.b16 %v518
    %v2193 = vunpack.c.l.b16 %v519
    %v2194 = vunpack.c.h.b16 %v519
    %v2195 = vunpack.c.l.b16 %v520
    %v2196 = vunpack.c.h.b16 %v520
    %v2197 = vunpack.c.l.b16 %v521
    %v2198 = vunpack.c.h.b16 %v521
    %v2199 = vunpack.c.l.b16 %v522
    %v2200 = vunpack.c.h.b16 %v522
    %v2201 = vunpack.c.l.b16 %v523
    %v2202 = vunpack.c.h.b16 %v523
    %v2203 = vunpack.c.l.b16 %v524
    %v2204 = vunpack.c.h.b16 %v524
    %v2205 = vunpack.c.l.b16 %v525
    %v2206 = vunpack.c.h.b16 %v525
    %v2207 = vunpack.c.l.b16 %v526
    %v2208 = vunpack.c.h.b16 %v526
    %v2209 = vunpack.c.l.b16 %v527
    %v2210 = vunpack.c.h.b16 %v527
    %v2211 = vunpack.c.l.b16 %v528
    %v2212 = vunpack.c.h.b16 %v528
    %v2213 = vunpack.c.l.b16 %v529
    %v2214 = vunpack.c.h.b16 %v529
    %v2215 = vunpack.c.l.b16 %v530
    %v2216 = vunpack.c.h.b16 %v530
    %v2217 = vunpack.c.l.b16 %v531
    %v2218 = vunpack.c.h.b16 %v531
    %v2219 = vunpack.c.l.b16 %v532
    %v2220 = vunpack.c.h.b16 %v532
    %v2221 = vunpack.c.l.b16 %v533
    %v2222 = vunpack.c.h.b16 %v533
    %v2223 = vunpack.c.l.b16 %v534
    %v2224 = vunpack.c.h.b16 %v534
    %v2225 = vunpack.c.l.b16 %v535
    %v2226 = vunpack.c.h.b16 %v535
    %v2227 = vunpack.c.l.b16 %v536
    %v2228 = vunpack.c.h.b16 %v536
    %v2229 = vunpack.c.l.b16 %v537
    %v2230 = vunpack.c.h.b16 %v537
    %v2231 = vunpack.c.l.b16 %v538
    %v2232 = vunpack.c.h.b16 %v538
    %v2233 = vunpack.c.l.b16 %v539
    %v2234 = vunpack.c.h.b16 %v539
    %v2235 = vunpack.c.l.b16 %v540
    %v2236 = vunpack.c.h.b16 %v540
    %v2237 = vunpack.c.l.b16 %v541
    %v2238 = vunpack.c.h.b16 %v541
    %v2239 = vunpack.c.l.b16 %v542
    %v2240 = vunpack.c.h.b16 %v542
    %v2241 = vunpack.c.l.b16 %v543
    %v2242 = vunpack.c.h.b16 %v543
    %v2243 = vunpack.c.l.b16 %v544
    %v2244 = vunpack.c.h.b16 %v544
    %v2245 = vunpack.c.l.b16 %v545
    %v2246 = vunpack.c.h.b16 %v545
    %v2247 = vunpack.c.l.b16 %v546
    %v2248 = vunpack.c.h.b16 %v546
    %v2249 = vunpack.c.l.b16 %v547
    %v2250 = vunpack.c.h.b16 %v547
    %v2251 = vunpack.c.l.b16 %v548
    %v2252 = vunpack.c.h.b16 %v548
    %v2253 = vunpack.c.l.b16 %v549
    %v2254 = vunpack.c.h.b16 %v549
    %v2255 = vunpack.c.l.b16 %v550
    %v2256 = vunpack.c.h.b16 %v550
    %v2257 = vunpack.c.l.b16 %v551
    %v2258 = vunpack.c.h.b16 %v551
    %v2259 = vunpack.c.l.b16 %v552
    %v2260 = vunpack.c.h.b16 %v552
    %v2261 = vunpack.c.l.b16 %v553
    %v2262 = vunpack.c.h.b16 %v553
    %v2263 = vunpack.c.l.b16 %v554
    %v2264 = vunpack.c.h.b16 %v554
    %v2265 = vunpack.c.l.b16 %v555
    %v2266 = vunpack.c.h.b16 %v555
    %v2267 = vunpack.c.l.b16 %v556
    %v2268 = vunpack.c.h.b16 %v556
    %v2269 = vunpack.c.l.b16 %v557
    %v2270 = vunpack.c.h.b16 %v557
    %v2271 = vunpack.c.l.b16 %v558
    %v2272 = vunpack.c.h.b16 %v558
    %v2273 = vunpack.c.l.b16 %v559
    %v2274 = vunpack.c.h.b16 %v559
    %v2275 = vunpack.c.l.b16 %v560
    %v2276 = vunpack.c.h.b16 %v560
    %v2277 = vunpack.c.l.b16 %v561
    %v2278 = vunpack.c.h.b16 %v561
    %v2279 = vunpack.c.l.b16 %v562
    %v2280 = vunpack.c.h.b16 %v562
    %v2281 = vunpack.c.l.b16 %v563
    %v2282 = vunpack.c.h.b16 %v563
    %v2283 = vunpack.c.l.b16 %v564
    %v2284 = vunpack.c.h.b16 %v564
    %v2285 = vunpack.c.l.b16 %v565
    %v2286 = vunpack.c.h.b16 %v565
    %v2287 = vunpack.c.l.b16 %v566
    %v2288 = vunpack.c.h.b16 %v566
    %v2289 = vunpack.c.l.b16 %v567
    %v2290 = vunpack.c.h.b16 %v567
    %v2291 = vunpack.c.l.b16 %v568
    %v2292 = vunpack.c.h.b16 %v568
    %v2293 = vunpack.c.l.b16 %v569
    %v2294 = vunpack.c.h.b16 %v569
    %v2295 = vunpack.c.l.b16 %v570
    %v2296 = vunpack.c.h.b16 %v570
    %v2297 = vunpack.c.l.b16 %v571
    %v2298 = vunpack.c.h.b16 %v571
    %v2299 = vunpack.c.l.b16 %v572
    %v2300 = vunpack.c.h.b16 %v572
    %v2301 = vunpack.c.l.b16 %v573
    %v2302 = vunpack.c.h.b16 %v573
    %v2303 = vunpack.c.l.b16 %v574
    %v2304 = vunpack.c.h.b16 %v574
    %v2305 = vunpack.c.l.b16 %v575
    %v2306 = vunpack.c.h.b16 %v575
    %v2307 = vunpack.c.l.b16 %v576
    %v2308 = vunpack.c.h.b16 %v576
    %v2309 = vunpack.c.l.b16 %v577
    %v2310 = vunpack.c.h.b16 %v577
    %v2311 = vunpack.c.l.b16 %v578
    %v2312 = vunpack.c.h.b16 %v578
    %v2313 = vunpack.c.l.b16 %v579
    %v2314 = vunpack.c.h.b16 %v579
    %v2315 = vunpack.c.l.b16 %v580
    %v2316 = vunpack.c.h.b16 %v580
    %v2317 = vunpack.c.l.b16 %v581
    %v2318 = vunpack.c.h.b16 %v581
    %v2319 = vunpack.c.l.b16 %v582
    %v2320 = vunpack.c.h.b16 %v582
    %v2321 = vunpack.c.l.b16 %v583
    %v2322 = vunpack.c.h.b16 %v583
    %v2323 = vunpack.c.l.b16 %v584
    %v2324 = vunpack.c.h.b16 %v584
    %v2325 = vunpack.c.l.b16 %v585
    %v2326 = vunpack.c.h.b16 %v585
    %v2327 = vunpack.c.l.b16 %v586
    %v2328 = vunpack.c.h.b16 %v586
    %v2329 = vunpack.c.l.b16 %v587
    %v2330 = vunpack.c.h.b16 %v587
    %v2331 = vunpack.c.l.b16 %v588
    %v2332 = vunpack.c.h.b16 %v588
    %v2333 = vunpack.c.l.b16 %v589
    %v2334 = vunpack.c.h.b16 %v589
    %v2335 = vunpack.c.l.b16 %v590
    %v2336 = vunpack.c.h.b16 %v590
    %v2337 = vunpack.c.l.b16 %v591
    %v2338 = vunpack.c.h.b16 %v591
    %v2339 = vunpack.c.l.b16 %v592
    %v2340 = vunpack.c.h.b16 %v592
    %v2341 = vunpack.c.l.b16 %v593
    %v2342 = vunpack.c.h.b16 %v593
    %v2343 = vunpack.c.l.b16 %v594
    %v2344 = vunpack.c.h.b16 %v594
    %v2345 = vunpack.c.l.b16 %v595
    %v2346 = vunpack.c.h.b16 %v595
    %v2347 = vunpack.c.l.b16 %v596
    %v2348 = vunpack.c.h.b16 %v596
    %v2349 = vunpack.c.l.b16 %v597
    %v2350 = vunpack.c.h.b16 %v597
    %v2351 = vunpack.c.l.b16 %v598
    %v2352 = vunpack.c.h.b16 %v598
    %v2353 = vunpack.c.l.b16 %v599
    %v2354 = vunpack.c.h.b16 %v599
    %v2355 = vunpack.c.l.b16 %v600
    %v2356 = vunpack.c.h.b16 %v600
    %v2357 = vunpack.c.l.b16 %v601
    %v2358 = vunpack.c.h.b16 %v601
    %v2359 = vunpack.c.l.b16 %v602
    %v2360 = vunpack.c.h.b16 %v602
    %v2361 = vunpack.c.l.b16 %v603
    %v2362 = vunpack.c.h.b16 %v603
    %v2363 = vunpack.c.l.b16 %v604
    %v2364 = vunpack.c.h.b16 %v604
    %v2365 = vunpack.c.l.b16 %v605
    %v2366 = vunpack.c.h.b16 %v605
    %v2367 = vunpack.c.l.b16 %v606
    %v2368 = vunpack.c.h.b16 %v606
    %v2369 = vunpack.c.l.b16 %v607
    %v2370 = vunpack.c.h.b16 %v607
    %v2371 = vunpack.c.l.b16 %v608
    %v2372 = vunpack.c.h.b16 %v608
    %v2373 = vunpack.c.l.b16 %v609
    %v2374 = vunpack.c.h.b16 %v609
    %v2375 = vunpack.c.l.b16 %v610
    %v2376 = vunpack.c.h.b16 %v610
    %v2377 = vunpack.c.l.b16 %v611
    %v2378 = vunpack.c.h.b16 %v611
    %v2379 = vunpack.c.l.b16 %v612
    %v2380 = vunpack.c.h.b16 %v612
    %v2381 = vunpack.c.l.b16 %v613
    %v2382 = vunpack.c.h.b16 %v613
    %v2383 = vunpack.c.l.b16 %v614
    %v2384 = vunpack.c.h.b16 %v614
    %v2385 = vunpack.c.l.b16 %v615
    %v2386 = vunpack.c.h.b16 %v615
    %v2387 = vunpack.c.l.b16 %v616
    %v2388 = vunpack.c.h.b16 %v616
    %v2389 = vunpack.c.l.b16 %v617
    %v2390 = vunpack.c.h.b16 %v617
    %v2391 = vunpack.c.l.b16 %v618
    %v2392 = vunpack.c.h.b16 %v618
    %v2393 = vunpack.c.l.b16 %v619
    %v2394 = vunpack.c.h.b16 %v619
    %v2395 = vunpack.c.l.b16 %v620
    %v2396 = vunpack.c.h.b16 %v620
    %v2397 = vunpack.c.l.b16 %v621
    %v2398 = vunpack.c.h.b16 %v621
    %v2399 = vunpack.c.l.b16 %v622
    %v2400 = vunpack.c.h.b16 %v622
    %v2401 = vunpack.c.l.b16 %v623
    %v2402 = vunpack.c.h.b16 %v623
    %v2403 = vunpack.c.l.b16 %v624
    %v2404 = vunpack.c.h.b16 %v624
    %v2405 = vunpack.c.l.b16 %v625
    %v2406 = vunpack.c.h.b16 %v625
    %v2407 = vunpack.c.l.b16 %v626
    %v2408 = vunpack.c.h.b16 %v626
    %v2409 = vunpack.c.l.b16 %v627
    %v2410 = vunpack.c.h.b16 %v627
    %v2411 = vunpack.c.l.b16 %v628
    %v2412 = vunpack.c.h.b16 %v628
    %v2413 = vunpack.c.l.b16 %v629
    %v2414 = vunpack.c.h.b16 %v629
    %v2415 = vunpack.c.l.b16 %v630
    %v2416 = vunpack.c.h.b16 %v630
    %v2417 = vunpack.c.l.b16 %v631
    %v2418 = vunpack.c.h.b16 %v631
    %v2419 = vunpack.c.l.b16 %v632
    %v2420 = vunpack.c.h.b16 %v632
    %v2421 = vunpack.c.l.b16 %v633
    %v2422 = vunpack.c.h.b16 %v633
    %v2423 = vunpack.c.l.b16 %v634
    %v2424 = vunpack.c.h.b16 %v634
    %v2425 = vunpack.c.l.b16 %v635
    %v2426 = vunpack.c.h.b16 %v635
    %v2427 = vunpack.c.l.b16 %v636
    %v2428 = vunpack.c.h.b16 %v636
    %v2429 = vunpack.c.l.b16 %v637
    %v2430 = vunpack.c.h.b16 %v637
    %v2431 = vunpack.c.l.b16 %v638
    %v2432 = vunpack.c.h.b16 %v638
    %v2433 = vunpack.c.l.b16 %v639
    %v2434 = vunpack.c.h.b16 %v639
    %v2435 = vunpack.c.l.b16 %v640
    %v2436 = vunpack.c.h.b16 %v640
    %v2437 = vunpack.c.l.b16 %v641
    %v2438 = vunpack.c.h.b16 %v641
    %v2439 = vunpack.c.l.b16 %v642
    %v2440 = vunpack.c.h.b16 %v642
    %v2441 = vunpack.c.l.b16 %v643
    %v2442 = vunpack.c.h.b16 %v643
    %v2443 = vunpack.c.l.b16 %v644
    %v2444 = vunpack.c.h.b16 %v644
    %v2445 = vunpack.c.l.b16 %v645
    %v2446 = vunpack.c.h.b16 %v645
    %v2447 = vunpack.c.l.b16 %v646
    %v2448 = vunpack.c.h.b16 %v646
    %v2449 = vunpack.c.l.b16 %v647
    %v2450 = vunpack.c.h.b16 %v647
    %v2451 = vunpack.c.l.b16 %v648
    %v2452 = vunpack.c.h.b16 %v648
    %v2453 = vunpack.c.l.b16 %v649
    %v2454 = vunpack.c.h.b16 %v649
    %v2455 = vunpack.c.l.b16 %v650
    %v2456 = vunpack.c.h.b16 %v650
    %v2457 = vunpack.c.l.b16 %v651
    %v2458 = vunpack.c.h.b16 %v651
    %v2459 = vunpack.c.l.b16 %v652
    %v2460 = vunpack.c.h.b16 %v652
    %v2461 = vunpack.c.l.b16 %v653
    %v2462 = vunpack.c.h.b16 %v653
    %v2463 = vunpack.c.l.b16 %v654
    %v2464 = vunpack.c.h.b16 %v654
    %v2465 = vunpack.c.l.b16 %v655
    %v2466 = vunpack.c.h.b16 %v655
    %v2467 = vunpack.c.l.b16 %v656
    %v2468 = vunpack.c.h.b16 %v656
    %v2469 = vunpack.c.l.b16 %v657
    %v2470 = vunpack.c.h.b16 %v657
    %v2471 = vunpack.c.l.b16 %v658
    %v2472 = vunpack.c.h.b16 %v658
    %v2473 = vunpack.c.l.b16 %v659
    %v2474 = vunpack.c.h.b16 %v659
    %v2475 = vunpack.c.l.b16 %v660
    %v2476 = vunpack.c.h.b16 %v660
    %v2477 = vpack.c.b16 %v1327, %v1325
    %v2478 = vpack.c.b16 %v1328, %v1326
    %v2479 = vpack.c.b16 %v1331, %v1329
    %v2480 = vpack.c.b16 %v1332, %v1330
    %v2481 = vpack.c.b16 %v1335, %v1333
    %v2482 = vpack.c.b16 %v1336, %v1334
    %v2483 = vpack.c.b16 %v1339, %v1337
    %v2484 = vpack.c.b16 %v1340, %v1338
    %v2485 = vpack.c.b16 %v1343, %v1341
    %v2486 = vpack.c.b16 %v1344, %v1342
    %v2487 = vpack.c.b16 %v1347, %v1345
    %v2488 = vpack.c.b16 %v1348, %v1346
    %v2489 = vpack.c.b16 %v1351, %v1349
    %v2490 = vpack.c.b16 %v1352, %v1350
    %v2491 = vpack.c.b16 %v1355, %v1353
    %v2492 = vpack.c.b16 %v1356, %v1354
    %v2493 = vpack.c.b16 %v1359, %v1357
    %v2494 = vpack.c.b16 %v1360, %v1358
    %v2495 = vpack.c.b16 %v1363, %v1361
    %v2496 = vpack.c.b16 %v1364, %v1362
    %v2497 = vpack.c.b16 %v1367, %v1365
    %v2498 = vpack.c.b16 %v1368, %v1366
    %v2499 = vpack.c.b16 %v1371, %v1369
    %v2500 = vpack.c.b16 %v1372, %v1370
    %v2501 = vpack.c.b16 %v1375, %v1373
    %v2502 = vpack.c.b16 %v1376, %v1374
    %v2503 = vpack.c.b16 %v1379, %v1377
    %v2504 = vpack.c.b16 %v1380, %v1378
    %v2505 = vpack.c.b16 %v1383, %v1381
    %v2506 = vpack.c.b16 %v1384, %v1382
    %v2507 = vpack.c.b16 %v1387, %v1385
    %v2508 = vpack.c.b16 %v1388, %v1386
    %v2509 = vpack.c.b16 %v1391, %v1389
    %v2510 = vpack.c.b16 %v1392, %v1390
    %v2511 = vpack.c.b16 %v1395, %v1393
    %v2512 = vpack.c.b16 %v1396, %v1394
    %v2513 = vpack.c.b16 %v1399, %v1397
    %v2514 = vpack.c.b16 %v1400, %v1398
    %v2515 = vpack.c.b16 %v1403, %v1401
    %v2516 = vpack.c.b16 %v1404, %v1402
    %v2517 = vpack.c.b16 %v1407, %v1405
    %v2518 = vpack.c.b16 %v1408, %v1406
    %v2519 = vpack.c.b16 %v1411, %v1409
    %v2520 = vpack.c.b16 %v1412, %v1410
    %v2521 = vpack.c.b16 %v1415, %v1413
    %v2522 = vpack.c.b16 %v1416, %v1414
    %v2523 = vpack.c.b16 %v1419, %v1417
    %v2524 = vpack.c.b16 %v1420, %v1418
    %v2525 = vpack.c.b16 %v1423, %v1421
    %v2526 = vpack.c.b16 %v1424, %v1422
    %v2527 = vpack.c.b16 %v1427, %v1425
    %v2528 = vpack.c.b16 %v1428, %v1426
    %v2529 = vpack.c.b16 %v1431, %v1429
    %v2530 = vpack.c.b16 %v1432, %v1430
    %v2531 = vpack.c.b16 %v1435, %v1433
    %v2532 = vpack.c.b16 %v1436, %v1434
    %v2533 = vpack.c.b16 %v1439, %v1437
    %v2534 = vpack.c.b16 %v1440, %v1438
    %v2535 = vpack.c.b16 %v1443, %v1441
    %v2536 = vpack.c.b16 %v1444, %v1442
    %v2537 = vpack.c.b16 %v1447, %v1445
    %v2538 = vpack.c.b16 %v1448, %v1446
    %v2539 = vpack.c.b16 %v1451, %v1449
    %v2540 = vpack.c.b16 %v1452, %v1450
    %v2541 = vpack.c.b16 %v1455, %v1453
    %v2542 = vpack.c.b16 %v1456, %v1454
    %v2543 = vpack.c.b16 %v1459, %v1457
    %v2544 = vpack.c.b16 %v1460, %v1458
    %v2545 = vpack.c.b16 %v1463, %v1461
    %v2546 = vpack.c.b16 %v1464, %v1462
    %v2547 = vpack.c.b16 %v1467, %v1465
    %v2548 = vpack.c.b16 %v1468, %v1466
    %v2549 = vpack.c.b16 %v1471, %v1469
    %v2550 = vpack.c.b16 %v1472, %v1470
    %v2551 = vpack.c.b16 %v1475, %v1473
    %v2552 = vpack.c.b16 %v1476, %v1474
    %v2553 = vpack.c.b16 %v1479, %v1477
    %v2554 = vpack.c.b16 %v1480, %v1478
    %v2555 = vpack.c.b16 %v1483, %v1481
    %v2556 = vpack.c.b16 %v1484, %v1482
    %v2557 = vpack.c.b16 %v1487, %v1485
    %v2558 = vpack.c.b16 %v1488, %v1486
    %v2559 = vpack.c.b16 %v1491, %v1489
    %v2560 = vpack.c.b16 %v1492, %v1490
    %v2561 = vpack.c.b16 %v1495, %v1493
    %v2562 = vpack.c.b16 %v1496, %v1494
    %v2563 = vpack.c.b16 %v1499, %v1497
    %v2564 = vpack.c.b16 %v1500, %v1498
    %v2565 = vpack.c.b16 %v1503, %v1501
    %v2566 = vpack.c.b16 %v1504, %v1502
    %v2567 = vpack.c.b16 %v1507, %v1505
    %v2568 = vpack.c.b16 %v1508, %v1506
    %v2569 = vpack.c.b16 %v1511, %v1509
    %v2570 = vpack.c.b16 %v1512, %v1510
    %v2571 = vpack.c.b16 %v1515, %v1513
    %v2572 = vpack.c.b16 %v1516, %v1514
    %v2573 = vpack.c.b16 %v1519, %v1517
    %v2574 = vpack.c.b16 %v1520, %v1518
    %v2575 = vpack.c.b16 %v1523, %v1521
    %v2576 = vpack.c.b16 %v1524, %v1522
    %v2577 = vpack.c.b16 %v1527, %v1525
    %v2578 = vpack.c.b16 %v1528, %v1526
    %v2579 = vpack.c.b16 %v1531, %v1529
    %v2580 = vpack.c.b16 %v1532, %v1530
    %v2581 = vpack.c.b16 %v1535, %v1533
    %v2582 = vpack.c.b16 %v1536, %v1534
    %v2583 = vpack.c.b16 %v1539, %v1537
    %v2584 = vpack.c.b16 %v1540, %v1538
    %v2585 = vpack.c.b16 %v1543, %v1541
    %v2586 = vpack.c.b16 %v1544, %v1542
    %v2587 = vpack.c.b16 %v1547, %v1545
    %v2588 = vpack.c.b16 %v1548, %v1546
    %v2589 = vpack.c.b16 %v1551, %v1549
    %v2590 = vpack.c.b16 %v1552, %v1550
    %v2591 = vpack.c.b16 %v1555, %v1553
    %v2592 = vpack.c.b16 %v1556, %v1554
    %v2593 = vpack.c.b16 %v1559, %v1557
    %v2594 = vpack.c.b16 %v1560, %v1558
    %v2595 = vpack.c.b16 %v1563, %v1561
    %v2596 = vpack.c.b16 %v1564, %v1562
    %v2597 = vpack.c.b16 %v1567, %v1565
    %v2598 = vpack.c.b16 %v1568, %v1566
    %v2599 = vpack.c.b16 %v1571, %v1569
    %v2600 = vpack.c.b16 %v1572, %v1570
    %v2601 = vpack.c.b16 %v1575, %v1573
    %v2602 = vpack.c.b16 %v1576, %v1574
    %v2603 = vpack.c.b16 %v1579, %v1577
    %v2604 = vpack.c.b16 %v1580, %v1578
    %v2605 = vpack.c.b16 %v1583, %v1581
    %v2606 = vpack.c.b16 %v1584, %v1582
    %v2607 = vpack.c.b16 %v1587, %v1585
    %v2608 = vpack.c.b16 %v1588, %v1586
    %v2609 = vpack.c.b16 %v1591, %v1589
    %v2610 = vpack.c.b16 %v1592, %v1590
    %v2611 = vpack.c.b16 %v1595, %v1593
    %v2612 = vpack.c.b16 %v1596, %v1594
    %v2613 = vpack.c.b16 %v1599, %v1597
    %v2614 = vpack.c.b16 %v1600, %v1598
    %v2615 = vpack.c.b16 %v1603, %v1601
    %v2616 = vpack.c.b16 %v1604, %v1602
    %v2617 = vpack.c.b16 %v1607, %v1605
    %v2618 = vpack.c.b16 %v1608, %v1606
    %v2619 = vpack.c.b16 %v1611, %v1609
    %v2620 = vpack.c.b16 %v1612, %v1610
    %v2621 = vpack.c.b16 %v1615, %v1613
    %v2622 = vpack.c.b16 %v1616, %v1614
    %v2623 = vpack.c.b16 %v1619, %v1617
    %v2624 = vpack.c.b16 %v1620, %v1618
    %v2625 = vpack.c.b16 %v1623, %v1621
    %v2626 = vpack.c.b16 %v1624, %v1622
    %v2627 = vpack.c.b16 %v1627, %v1625
    %v2628 = vpack.c.b16 %v1628, %v1626
    %v2629 = vpack.c.b16 %v1631, %v1629
    %v2630 = vpack.c.b16 %v1632, %v1630
    %v2631 = vpack.c.b16 %v1635, %v1633
    %v2632 = vpack.c.b16 %v1636, %v1634
    %v2633 = vpack.c.b16 %v1639, %v1637
    %v2634 = vpack.c.b16 %v1640, %v1638
    %v2635 = vpack.c.b16 %v1643, %v1641
    %v2636 = vpack.c.b16 %v1644, %v1642
    %v2637 = vpack.c.b16 %v1647, %v1645
    %v2638 = vpack.c.b16 %v1648, %v1646
    %v2639 = vpack.c.b16 %v1651, %v1649
    %v2640 = vpack.c.b16 %v1652, %v1650
    %v2641 = vpack.c.b16 %v1655, %v1653
    %v2642 = vpack.c.b16 %v1656, %v1654
    %v2643 = vpack.c.b16 %v1659, %v1657
    %v2644 = vpack.c.b16 %v1660, %v1658
    %v2645 = vpack.c.b16 %v1663, %v1661
    %v2646 = vpack.c.b16 %v1664, %v1662
    %v2647 = vpack.c.b16 %v1667, %v1665
    %v2648 = vpack.c.b16 %v1668, %v1666
    %v2649 = vpack.c.b16 %v1671, %v1669
    %v2650 = vpack.c.b16 %v1672, %v1670
    %v2651 = vpack.c.b16 %v1675, %v1673
    %v2652 = vpack.c.b16 %v1676, %v1674
    %v2653 = vpack.c.b16 %v1679, %v1677
    %v2654 = vpack.c.b16 %v1680, %v1678
    %v2655 = vpack.c.b16 %v1683, %v1681
    %v2656 = vpack.c.b16 %v1684, %v1682
    %v2657 = vpack.c.b16 %v1687, %v1685
    %v2658 = vpack.c.b16 %v1688, %v1686
    %v2659 = vpack.c.b16 %v1691, %v1689
    %v2660 = vpack.c.b16 %v1692, %v1690
    %v2661 = vpack.c.b16 %v1695, %v1693
    %v2662 = vpack.c.b16 %v1696, %v1694
    %v2663 = vpack.c.b16 %v1699, %v1697
    %v2664 = vpack.c.b16 %v1700, %v1698
    %v2665 = vpack.c.b16 %v1703, %v1701
    %v2666 = vpack.c.b16 %v1704, %v1702
    %v2667 = vpack.c.b16 %v1707, %v1705
    %v2668 = vpack.c.b16 %v1708, %v1706
    %v2669 = vpack.c.b16 %v1711, %v1709
    %v2670 = vpack.c.b16 %v1712, %v1710
    %v2671 = vpack.c.b16 %v1715, %v1713
    %v2672 = vpack.c.b16 %v1716, %v1714
    %v2673 = vpack.c.b16 %v1719, %v1717
    %v2674 = vpack.c.b16 %v1720, %v1718
    %v2675 = vpack.c.b16 %v1723, %v1721
    %v2676 = vpack.c.b16 %v1724, %v1722
    %v2677 = vpack.c.b16 %v1727, %v1725
    %v2678 = vpack.c.b16 %v1728, %v1726
    %v2679 = vpack.c.b16 %v1731, %v1729
    %v2680 = vpack.c.b16 %v1732, %v1730
    %v2681 = vpack.c.b16 %v1735, %v1733
    %v2682 = vpack.c.b16 %v1736, %v1734
    %v2683 = vpack.c.b16 %v1739, %v1737
    %v2684 = vpack.c.b16 %v1740, %v1738
    %v2685 = vpack.c.b16 %v1743, %v1741
    %v2686 = vpack.c.b16 %v1744, %v1742
    %v2687 = vpack.c.b16 %v1747, %v1745
    %v2688 = vpack.c.b16 %v1748, %v1746
    %v2689 = vpack.c.b16 %v1751, %v1749
    %v2690 = vpack.c.b16 %v1752, %v1750
    %v2691 = vpack.c.b16 %v1755, %v1753
    %v2692 = vpack.c.b16 %v1756, %v1754
    %v2693 = vpack.c.b16 %v1759, %v1757
    %v2694 = vpack.c.b16 %v1760, %v1758
    %v2695 = vpack.c.b16 %v1763, %v1761
    %v2696 = vpack.c.b16 %v1764, %v1762
    %v2697 = vpack.c.b16 %v1767, %v1765
    %v2698 = vpack.c.b16 %v1768, %v1766
    %v2699 = vpack.c.b16 %v1771, %v1769
    %v2700 = vpack.c.b16 %v1772, %v1770
    %v2701 = vpack.c.b16 %v1775, %v1773
    %v2702 = vpack.c.b16 %v1776, %v1774
    %v2703 = vpack.c.b16 %v1779, %v1777
    %v2704 = vpack.c.b16 %v1780, %v1778
    %v2705 = vpack.c.b16 %v1783, %v1781
    %v2706 = vpack.c.b16 %v1784, %v1782
    %v2707 = vpack.c.b16 %v1787, %v1785
    %v2708 = vpack.c.b16 %v1788, %v1786
    %v2709 = vpack.c.b16 %v1791, %v1789
    %v2710 = vpack.c.b16 %v1792, %v1790
    %v2711 = vpack.c.b16 %v1795, %v1793
    %v2712 = vpack.c.b16 %v1796, %v1794
    %v2713 = vpack.c.b16 %v1799, %v1797
    %v2714 = vpack.c.b16 %v1800, %v1798
    %v2715 = vpack.c.b16 %v1803, %v1801
    %v2716 = vpack.c.b16 %v1804, %v1802
    %v2717 = vpack.c.b16 %v1807, %v1805
    %v2718 = vpack.c.b16 %v1808, %v1806
    %v2719 = vpack.c.b16 %v1811, %v1809
    %v2720 = vpack.c.b16 %v1812, %v1810
    %v2721 = vpack.c.b16 %v1815, %v1813
    %v2722 = vpack.c.b16 %v1816, %v1814
    %v2723 = vpack.c.b16 %v1819, %v1817
    %v2724 = vpack.c.b16 %v1820, %v1818
    %v2725 = vpack.c.b16 %v1823, %v1821
    %v2726 = vpack.c.b16 %v1824, %v1822
    %v2727 = vpack.c.b16 %v1827, %v1825
    %v2728 = vpack.c.b16 %v1828, %v1826
    %v2729 = vpack.c.b16 %v1831, %v1829
    %v2730 = vpack.c.b16 %v1832, %v1830
    %v2731 = vpack.c.b16 %v1835, %v1833
    %v2732 = vpack.c.b16 %v1836, %v1834
    %v2733 = vpack.c.b16 %v1839, %v1837
    %v2734 = vpack.c.b16 %v1840, %v1838
    %v2735 = vpack.c.b16 %v1843, %v1841
    %v2736 = vpack.c.b16 %v1844, %v1842
    %v2737 = vpack.c.b16 %v1847, %v1845
    %v2738 = vpack.c.b16 %v1848, %v1846
    %v2739 = vpack.c.b16 %v1851, %v1849
    %v2740 = vpack.c.b16 %v1852, %v1850
    %v2741 = vpack.c.b16 %v1855, %v1853
    %v2742 = vpack.c.b16 %v1856, %v1854
    %v2743 = vpack.c.b16 %v1859, %v1857
    %v2744 = vpack.c.b16 %v1860, %v1858
    %v2745 = vpack.c.b16 %v1863, %v1861
    %v2746 = vpack.c.b16 %v1864, %v1862
    %v2747 = vpack.c.b16 %v1867, %v1865
    %v2748 = vpack.c.b16 %v1868, %v1866
    %v2749 = vpack.c.b16 %v1871, %v1869
    %v2750 = vpack.c.b16 %v1872, %v1870
    %v2751 = vpack.c.b16 %v1875, %v1873
    %v2752 = vpack.c.b16 %v1876, %v1874
    %v2753 = vpack.c.b16 %v1879, %v1877
    %v2754 = vpack.c.b16 %v1880, %v1878
    %v2755 = vpack.c.b16 %v1883, %v1881
    %v2756 = vpack.c.b16 %v1884, %v1882
    %v2757 = vpack.c.b16 %v1887, %v1885
    %v2758 = vpack.c.b16 %v1888, %v1886
    %v2759 = vpack.c.b16 %v1891, %v1889
    %v2760 = vpack.c.b16 %v1892, %v1890
    %v2761 = vpack.c.b16 %v1895, %v1893
    %v2762 = vpack.c.b16 %v1896, %v1894
    %v2763 = vpack.c.b16 %v1899, %v1897
    %v2764 = vpack.c.b16 %v1900, %v1898
    %v2765 = vpack.c.b16 %v1903, %v1901
    %v2766 = vpack.c.b16 %v1904, %v1902
    %v2767 = vpack.c.b16 %v1907, %v1905
    %v2768 = vpack.c.b16 %v1908, %v1906
    %v2769 = vpack.c.b16 %v1911, %v1909
    %v2770 = vpack.c.b16 %v1912, %v1910
    %v2771 = vpack.c.b16 %v1915, %v1913
    %v2772 = vpack.c.b16 %v1916, %v1914
    %v2773 = vpack.c.b16 %v1919, %v1917
    %v2774 = vpack.c.b16 %v1920, %v1918
    %v2775 = vpack.c.b16 %v1923, %v1921
    %v2776 = vpack.c.b16 %v1924, %v1922
    %v2777 = vpack.c.b16 %v1927, %v1925
    %v2778 = vpack.c.b16 %v1928, %v1926
    %v2779 = vpack.c.b16 %v1931, %v1929
    %v2780 = vpack.c.b16 %v1932, %v1930
    %v2781 = vpack.c.b16 %v1935, %v1933
    %v2782 = vpack.c.b16 %v1936, %v1934
    %v2783 = vpack.c.b16 %v1939, %v1937
    %v2784 = vpack.c.b16 %v1940, %v1938
    %v2785 = vpack.c.b16 %v1943, %v1941
    %v2786 = vpack.c.b16 %v1944, %v1942
    %v2787 = vpack.c.b16 %v1947, %v1945
    %v2788 = vpack.c.b16 %v1948, %v1946
    %v2789 = vpack.c.b16 %v1951, %v1949
    %v2790 = vpack.c.b16 %v1952, %v1950
    %v2791 = vpack.c.b16 %v1955, %v1953
    %v2792 = vpack.c.b16 %v1956, %v1954
    %v2793 = vpack.c.b16 %v1959, %v1957
    %v2794 = vpack.c.b16 %v1960, %v1958
    %v2795 = vpack.c.b16 %v1963, %v1961
    %v2796 = vpack.c.b16 %v1964, %v1962
    %v2797 = vpack.c.b16 %v1967, %v1965
    %v2798 = vpack.c.b16 %v1968, %v1966
    %v2799 = vpack.c.b16 %v1971, %v1969
    %v2800 = vpack.c.b16 %v1972, %v1970
    %v2801 = vpack.c.b16 %v1975, %v1973
    %v2802 = vpack.c.b16 %v1976, %v1974
    %v2803 = vpack.c.b16 %v1979, %v1977
    %v2804 = vpack.c.b16 %v1980, %v1978
    %v2805 = vpack.c.b16 %v1983, %v1981
    %v2806 = vpack.c.b16 %v1984, %v1982
    %v2807 = vpack.c.b16 %v1987, %v1985
    %v2808 = vpack.c.b16 %v1988, %v1986
    %v2809 = vpack.c.b16 %v1991, %v1989
    %v2810 = vpack.c.b16 %v1992, %v1990
    %v2811 = vpack.c.b16 %v1995, %v1993
    %v2812 = vpack.c.b16 %v1996, %v1994
    %v2813 = vpack.c.b16 %v1999, %v1997
    %v2814 = vpack.c.b16 %v2000, %v1998
    %v2815 = vpack.c.b16 %v2003, %v2001
    %v2816 = vpack.c.b16 %v2004, %v2002
    %v2817 = vpack.c.b16 %v2007, %v2005
    %v2818 = vpack.c.b16 %v2008, %v2006
    %v2819 = vpack.c.b16 %v2011, %v2009
    %v2820 = vpack.c.b16 %v2012, %v2010
    %v2821 = vpack.c.b16 %v2015, %v2013
    %v2822 = vpack.c.b16 %v2016, %v2014
    %v2823 = vpack.c.b16 %v2019, %v2017
    %v2824 = vpack.c.b16 %v2020, %v2018
    %v2825 = vpack.c.b16 %v2023, %v2021
    %v2826 = vpack.c.b16 %v2024, %v2022
    %v2827 = vpack.c.b16 %v2027, %v2025
    %v2828 = vpack.c.b16 %v2028, %v2026
    %v2829 = vpack.c.b16 %v2031, %v2029
    %v2830 = vpack.c.b16 %v2032, %v2030
    %v2831 = vpack.c.b16 %v2035, %v2033
    %v2832 = vpack.c.b16 %v2036, %v2034
    %v2833 = vpack.c.b16 %v2039, %v2037
    %v2834 = vpack.c.b16 %v2040, %v2038
    %v2835 = vpack.c.b16 %v2043, %v2041
    %v2836 = vpack.c.b16 %v2044, %v2042
    %v2837 = vpack.c.b16 %v2047, %v2045
    %v2838 = vpack.c.b16 %v2048, %v2046
    %v2839 = vpack.c.b16 %v2051, %v2049
    %v2840 = vpack.c.b16 %v2052, %v2050
    %v2841 = vpack.c.b16 %v2055, %v2053
    %v2842 = vpack.c.b16 %v2056, %v2054
    %v2843 = vpack.c.b16 %v2059, %v2057
    %v2844 = vpack.c.b16 %v2060, %v2058
    %v2845 = vpack.c.b16 %v2063, %v2061
    %v2846 = vpack.c.b16 %v2064, %v2062
    %v2847 = vpack.c.b16 %v2067, %v2065
    %v2848 = vpack.c.b16 %v2068, %v2066
    %v2849 = vpack.c.b16 %v2071, %v2069
    %v2850 = vpack.c.b16 %v2072, %v2070
    %v2851 = vpack.c.b16 %v2075, %v2073
    %v2852 = vpack.c.b16 %v2076, %v2074
    %v2853 = vpack.c.b16 %v2079, %v2077
    %v2854 = vpack.c.b16 %v2080, %v2078
    %v2855 = vpack.c.b16 %v2083, %v2081
    %v2856 = vpack.c.b16 %v2084, %v2082
    %v2857 = vpack.c.b16 %v2087, %v2085
    %v2858 = vpack.c.b16 %v2088, %v2086
    %v2859 = vpack.c.b16 %v2091, %v2089
    %v2860 = vpack.c.b16 %v2092, %v2090
    %v2861 = vpack.c.b16 %v2095, %v2093
    %v2862 = vpack.c.b16 %v2096, %v2094
    %v2863 = vpack.c.b16 %v2099, %v2097
    %v2864 = vpack.c.b16 %v2100, %v2098
    %v2865 = vpack.c.b16 %v2103, %v2101
    %v2866 = vpack.c.b16 %v2104, %v2102
    %v2867 = vpack.c.b16 %v2107, %v2105
    %v2868 = vpack.c.b16 %v2108, %v2106
    %v2869 = vpack.c.b16 %v2111, %v2109
    %v2870 = vpack.c.b16 %v2112, %v2110
    %v2871 = vpack.c.b16 %v2115, %v2113
    %v2872 = vpack.c.b16 %v2116, %v2114
    %v2873 = vpack.c.b16 %v2119, %v2117
    %v2874 = vpack.c.b16 %v2120, %v2118
    %v2875 = vpack.c.b16 %v2123, %v2121
    %v2876 = vpack.c.b16 %v2124, %v2122
    %v2877 = vpack.c.b16 %v2127, %v2125
    %v2878 = vpack.c.b16 %v2128, %v2126
    %v2879 = vpack.c.b16 %v2131, %v2129
    %v2880 = vpack.c.b16 %v2132, %v2130
    %v2881 = vpack.c.b16 %v2135, %v2133
    %v2882 = vpack.c.b16 %v2136, %v2134
    %v2883 = vpack.c.b16 %v2139, %v2137
    %v2884 = vpack.c.b16 %v2140, %v2138
    %v2885 = vpack.c.b16 %v2143, %v2141
    %v2886 = vpack.c.b16 %v2144, %v2142
    %v2887 = vpack.c.b16 %v2147, %v2145
    %v2888 = vpack.c.b16 %v2148, %v2146
    %v2889 = vpack.c.b16 %v2151, %v2149
    %v2890 = vpack.c.b16 %v2152, %v2150
    %v2891 = vpack.c.b16 %v2155, %v2153
    %v2892 = vpack.c.b16 %v2156, %v2154
    %v2893 = vpack.c.b16 %v2159, %v2157
    %v2894 = vpack.c.b16 %v2160, %v2158
    %v2895 = vpack.c.b16 %v2163, %v2161
    %v2896 = vpack.c.b16 %v2164, %v2162
    %v2897 = vpack.c.b16 %v2167, %v2165
    %v2898 = vpack.c.b16 %v2168, %v2166
    %v2899 = vpack.c.b16 %v2171, %v2169
    %v2900 = vpack.c.b16 %v2172, %v2170
    %v2901 = vpack.c.b16 %v2175, %v2173
    %v2902 = vpack.c.b16 %v2176, %v2174
    %v2903 = vpack.c.b16 %v2179, %v2177
    %v2904 = vpack.c.b16 %v2180, %v2178
    %v2905 = vpack.c.b16 %v2183, %v2181
    %v2906 = vpack.c.b16 %v2184, %v2182
    %v2907 = vpack.c.b16 %v2187, %v2185
    %v2908 = vpack.c.b16 %v2188, %v2186
    %v2909 = vpack.c.b16 %v2191, %v2189
    %v2910 = vpack.c.b16 %v2192, %v2190
    %v2911 = vpack.c.b16 %v2195, %v2193
    %v2912 = vpack.c.b16 %v2196, %v2194
    %v2913 = vpack.c.b16 %v2199, %v2197
    %v2914 = vpack.c.b16 %v2200, %v2198
    %v2915 = vpack.c.b16 %v2203, %v2201
    %v2916 = vpack.c.b16 %v2204, %v2202
    %v2917 = vpack.c.b16 %v2207, %v2205
    %v2918 = vpack.c.b16 %v2208, %v2206
    %v2919 = vpack.c.b16 %v2211, %v2209
    %v2920 = vpack.c.b16 %v2212, %v2210
    %v2921 = vpack.c.b16 %v2215, %v2213
    %v2922 = vpack.c.b16 %v2216, %v2214
    %v2923 = vpack.c.b16 %v2219, %v2217
    %v2924 = vpack.c.b16 %v2220, %v2218
    %v2925 = vpack.c.b16 %v2223, %v2221
    %v2926 = vpack.c.b16 %v2224, %v2222
    %v2927 = vpack.c.b16 %v2227, %v2225
    %v2928 = vpack.c.b16 %v2228, %v2226
    %v2929 = vpack.c.b16 %v2231, %v2229
    %v2930 = vpack.c.b16 %v2232, %v2230
    %v2931 = vpack.c.b16 %v2235, %v2233
    %v2932 = vpack.c.b16 %v2236, %v2234
    %v2933 = vpack.c.b16 %v2239, %v2237
    %v2934 = vpack.c.b16 %v2240, %v2238
    %v2935 = vpack.c.b16 %v2243, %v2241
    %v2936 = vpack.c.b16 %v2244, %v2242
    %v2937 = vpack.c.b16 %v2247, %v2245
    %v2938 = vpack.c.b16 %v2248, %v2246
    %v2939 = vpack.c.b16 %v2251, %v2249
    %v2940 = vpack.c.b16 %v2252, %v2250
    %v2941 = vpack.c.b16 %v2255, %v2253
    %v2942 = vpack.c.b16 %v2256, %v2254
    %v2943 = vpack.c.b16 %v2259, %v2257
    %v2944 = vpack.c.b16 %v2260, %v2258
    %v2945 = vpack.c.b16 %v2263, %v2261
    %v2946 = vpack.c.b16 %v2264, %v2262
    %v2947 = vpack.c.b16 %v2267, %v2265
    %v2948 = vpack.c.b16 %v2268, %v2266
    %v2949 = vpack.c.b16 %v2271, %v2269
    %v2950 = vpack.c.b16 %v2272, %v2270
    %v2951 = vpack.c.b16 %v2275, %v2273
    %v2952 = vpack.c.b16 %v2276, %v2274
    %v2953 = vpack.c.b16 %v2279, %v2277
    %v2954 = vpack.c.b16 %v2280, %v2278
    %v2955 = vpack.c.b16 %v2283, %v2281
    %v2956 = vpack.c.b16 %v2284, %v2282
    %v2957 = vpack.c.b16 %v2287, %v2285
    %v2958 = vpack.c.b16 %v2288, %v2286
    %v2959 = vpack.c.b16 %v2291, %v2289
    %v2960 = vpack.c.b16 %v2292, %v2290
    %v2961 = vpack.c.b16 %v2295, %v2293
    %v2962 = vpack.c.b16 %v2296, %v2294
    %v2963 = vpack.c.b16 %v2299, %v2297
    %v2964 = vpack.c.b16 %v2300, %v2298
    %v2965 = vpack.c.b16 %v2303, %v2301
    %v2966 = vpack.c.b16 %v2304, %v2302
    %v2967 = vpack.c.b16 %v2307, %v2305
    %v2968 = vpack.c.b16 %v2308, %v2306
    %v2969 = vpack.c.b16 %v2311, %v2309
    %v2970 = vpack.c.b16 %v2312, %v2310
    %v2971 = vpack.c.b16 %v2315, %v2313
    %v2972 = vpack.c.b16 %v2316, %v2314
    %v2973 = vpack.c.b16 %v2319, %v2317
    %v2974 = vpack.c.b16 %v2320, %v2318
    %v2975 = vpack.c.b16 %v2323, %v2321
    %v2976 = vpack.c.b16 %v2324, %v2322
    %v2977 = vpack.c.b16 %v2327, %v2325
    %v2978 = vpack.c.b16 %v2328, %v2326
    %v2979 = vpack.c.b16 %v2331, %v2329
    %v2980 = vpack.c.b16 %v2332, %v2330
    %v2981 = vpack.c.b16 %v2335, %v2333
    %v2982 = vpack.c.b16 %v2336, %v2334
    %v2983 = vpack.c.b16 %v2339, %v2337
    %v2984 = vpack.c.b16 %v2340, %v2338
    %v2985 = vpack.c.b16 %v2343, %v2341
    %v2986 = vpack.c.b16 %v2344, %v2342
    %v2987 = vpack.c.b16 %v2347, %v2345
    %v2988 = vpack.c.b16 %v2348, %v2346
    %v2989 = vpack.c.b16 %v2351, %v2349
    %v2990 = vpack.c.b16 %v2352, %v2350
    %v2991 = vpack.c.b16 %v2355, %v2353
    %v2992 = vpack.c.b16 %v2356, %v2354
    %v2993 = vpack.c.b16 %v2359, %v2357
    %v2994 = vpack.c.b16 %v2360, %v2358
    %v2995 = vpack.c.b16 %v2363, %v2361
    %v2996 = vpack.c.b16 %v2364, %v2362
    %v2997 = vpack.c.b16 %v2367, %v2365
    %v2998 = vpack.c.b16 %v2368, %v2366
    %v2999 = vpack.c.b16 %v2371, %v2369
    %v3000 = vpack.c.b16 %v2372, %v2370
    %v3001 = vpack.c.b16 %v2375, %v2373
    %v3002 = vpack.c.b16 %v2376, %v2374
    %v3003 = vpack.c.b16 %v2379, %v2377
    %v3004 = vpack.c.b16 %v2380, %v2378
    %v3005 = vpack.c.b16 %v2383, %v2381
    %v3006 = vpack.c.b16 %v2384, %v2382
    %v3007 = vpack.c.b16 %v2387, %v2385
    %v3008 = vpack.c.b16 %v2388, %v2386
    %v3009 = vpack.c.b16 %v2391, %v2389
    %v3010 = vpack.c.b16 %v2392, %v2390
    %v3011 = vpack.c.b16 %v2395, %v2393
    %v3012 = vpack.c.b16 %v2396, %v2394
    %v3013 = vpack.c.b16 %v2399, %v2397
    %v3014 = vpack.c.b16 %v2400, %v2398
    %v3015 = vpack.c.b16 %v2403, %v2401
    %v3016 = vpack.c.b16 %v2404, %v2402
    %v3017 = vpack.c.b16 %v2407, %v2405
    %v3018 = vpack.c.b16 %v2408, %v2406
    %v3019 = vpack.c.b16 %v2411, %v2409
    %v3020 = vpack.c.b16 %v2412, %v2410
    %v3021 = vpack.c.b16 %v2415, %v2413
    %v3022 = vpack.c.b16 %v2416, %v2414
    %v3023 = vpack.c.b16 %v2419, %v2417
    %v3024 = vpack.c.b16 %v2420, %v2418
    %v3025 = vpack.c.b16 %v2423, %v2421
    %v3026 = vpack.c.b16 %v2424, %v2422
    %v3027 = vpack.c.b16 %v2427, %v2425
    %v3028 = vpack.c.b16 %v2428, %v2426
    %v3029 = vpack.c.b16 %v2431, %v2429
    %v3030 = vpack.c.b16 %v2432, %v2430
    %v3031 = vpack.c.b16 %v2435, %v2433
    %v3032 = vpack.c.b16 %v2436, %v2434
    %v3033 = vpack.c.b16 %v2439, %v2437
    %v3034 = vpack.c.b16 %v2440, %v2438
    %v3035 = vpack.c.b16 %v2443, %v2441
    %v3036 = vpack.c.b16 %v2444, %v2442
    %v3037 = vpack.c.b16 %v2447, %v2445
    %v3038 = vpack.c.b16 %v2448, %v2446
    %v3039 = vpack.c.b16 %v2451, %v2449
    %v3040 = vpack.c.b16 %v2452, %v2450
    %v3041 = vpack.c.b16 %v2455, %v2453
    %v3042 = vpack.c.b16 %v2456, %v2454
    %v3043 = vpack.c.b16 %v2459, %v2457
    %v3044 = vpack.c.b16 %v2460, %v2458
    %v3045 = vpack.c.b16 %v2463, %v2461
    %v3046 = vpack.c.b16 %v2464, %v2462
    %v3047 = vpack.c.b16 %v2467, %v2465
    %v3048 = vpack.c.b16 %v2468, %v2466
    %v3049 = vpack.c.b16 %v2471, %v2469
    %v3050 = vpack.c.b16 %v2472, %v2470
    %v3051 = vpack.c.b16 %v2475, %v2473
    %v3052 = vpack.c.b16 %v2476, %v2474
    %3629 = vmatpush.bf16.msra.mxu0 %v2491
    %3630 = vmatpush.bf16.msra.mxu0 %v2489
    %3631 = vmatpush.bf16.msra.mxu0 %v2487
    %3632 = vmatpush.bf16.msra.mxu0 %v2485
    %3633 = vmatpush.bf16.msra.mxu0 %v2483
    %3634 = vmatpush.bf16.msra.mxu0 %v2481
    %3635 = vmatpush.bf16.msra.mxu0 %v2479
    %3636 = vmatpush.bf16.msra.mxu0 %v2477
    %3637 = vmatmul.bf16.gmra.mxu0 %v669
    %v3638 = vpop.f32.mrf.mxu0
    %v3639 = vadd.f32 %v663, %v3638
    %v3640 = vpop.f32.mrf.mxu0
    %3641 = vdwg.mxu0
    %3642 = vmatpush.bf16.msra.mxu0 %v2507
    %3643 = vmatpush.bf16.msra.mxu0 %v2505
    %3644 = vmatpush.bf16.msra.mxu0 %v2503
    %3645 = vmatpush.bf16.msra.mxu0 %v2501
    %3646 = vmatpush.bf16.msra.mxu0 %v2499
    %3647 = vmatpush.bf16.msra.mxu0 %v2497
    %3648 = vmatpush.bf16.msra.mxu0 %v2495
    %3649 = vmatpush.bf16.msra.mxu0 %v2493
    %3650 = vmatmul.bf16.gmra.mxu0 %v670
    %v3651 = vpop.f32.mrf.mxu0
    %v3652 = vadd.f32 %v3639, %v3651
    %v3653 = vpop.f32.mrf.mxu0
    %3654 = vdwg.mxu0
    %3655 = vmatpush.bf16.msra.mxu0 %v2523
    %3656 = vmatpush.bf16.msra.mxu0 %v2521
    %3657 = vmatpush.bf16.msra.mxu0 %v2519
    %3658 = vmatpush.bf16.msra.mxu0 %v2517
    %3659 = vmatpush.bf16.msra.mxu0 %v2515
    %3660 = vmatpush.bf16.msra.mxu0 %v2513
    %3661 = vmatpush.bf16.msra.mxu0 %v2511
    %3662 = vmatpush.bf16.msra.mxu0 %v2509
    %3663 = vmatmul.bf16.gmra.mxu0 %v671
    %v3664 = vpop.f32.mrf.mxu0
    %v3665 = vadd.f32 %v3652, %v3664
    %v3666 = vpop.f32.mrf.mxu0
    %3667 = vdwg.mxu0
    %3668 = vmatpush.bf16.msra.mxu0 %v2539
    %3669 = vmatpush.bf16.msra.mxu0 %v2537
    %3670 = vmatpush.bf16.msra.mxu0 %v2535
    %3671 = vmatpush.bf16.msra.mxu0 %v2533
    %3672 = vmatpush.bf16.msra.mxu0 %v2531
    %3673 = vmatpush.bf16.msra.mxu0 %v2529
    %3674 = vmatpush.bf16.msra.mxu0 %v2527
    %3675 = vmatpush.bf16.msra.mxu0 %v2525
    %3676 = vmatmul.bf16.gmra.mxu0 %v672
    %v3677 = vpop.f32.mrf.mxu0
    %v3678 = vadd.f32 %v3665, %v3677
    %v3679 = vpop.f32.mrf.mxu0
    %3680 = vdwg.mxu0
    %3681 = vmatpush.bf16.msra.mxu0 %v2555
    %3682 = vmatpush.bf16.msra.mxu0 %v2553
    %3683 = vmatpush.bf16.msra.mxu0 %v2551
    %3684 = vmatpush.bf16.msra.mxu0 %v2549
    %3685 = vmatpush.bf16.msra.mxu0 %v2547
    %3686 = vmatpush.bf16.msra.mxu0 %v2545
    %3687 = vmatpush.bf16.msra.mxu0 %v2543
    %3688 = vmatpush.bf16.msra.mxu0 %v2541
    %3689 = vmatmul.bf16.gmra.mxu0 %v673
    %v3690 = vpop.f32.mrf.mxu0
    %v3691 = vadd.f32 %v3678, %v3690
    %v3692 = vpop.f32.mrf.mxu0
    %3693 = vdwg.mxu0
    %3694 = vmatpush.bf16.msra.mxu0 %v2571
    %3695 = vmatpush.bf16.msra.mxu0 %v2569
    %3696 = vmatpush.bf16.msra.mxu0 %v2567
    %3697 = vmatpush.bf16.msra.mxu0 %v2565
    %3698 = vmatpush.bf16.msra.mxu0 %v2563
    %3699 = vmatpush.bf16.msra.mxu0 %v2561
    %3700 = vmatpush.bf16.msra.mxu0 %v2559
    %3701 = vmatpush.bf16.msra.mxu0 %v2557
    %3702 = vmatmul.bf16.gmra.mxu0 %v674
    %v3703 = vpop.f32.mrf.mxu0
    %v3704 = vadd.f32 %v3691, %v3703
    %v3705 = vpop.f32.mrf.mxu0
    %3706 = vdwg.mxu0
    %3707 = vmatpush.bf16.msra.mxu0 %v2587
    %3708 = vmatpush.bf16.msra.mxu0 %v2585
    %3709 = vmatpush.bf16.msra.mxu0 %v2583
    %3710 = vmatpush.bf16.msra.mxu0 %v2581
    %3711 = vmatpush.bf16.msra.mxu0 %v2579
    %3712 = vmatpush.bf16.msra.mxu0 %v2577
    %3713 = vmatpush.bf16.msra.mxu0 %v2575
    %3714 = vmatpush.bf16.msra.mxu0 %v2573
    %3715 = vmatmul.bf16.gmra.mxu0 %v675
    %v3716 = vpop.f32.mrf.mxu0
    %v3717 = vadd.f32 %v3704, %v3716
    %v3718 = vpop.f32.mrf.mxu0
    %3719 = vdwg.mxu0
    %3720 = vmatpush.bf16.msra.mxu0 %v2603
    %3721 = vmatpush.bf16.msra.mxu0 %v2601
    %3722 = vmatpush.bf16.msra.mxu0 %v2599
    %3723 = vmatpush.bf16.msra.mxu0 %v2597
    %3724 = vmatpush.bf16.msra.mxu0 %v2595
    %3725 = vmatpush.bf16.msra.mxu0 %v2593
    %3726 = vmatpush.bf16.msra.mxu0 %v2591
    %3727 = vmatpush.bf16.msra.mxu0 %v2589
    %3728 = vmatmul.bf16.gmra.mxu0 %v676
    %v3729 = vpop.f32.mrf.mxu0
    %v3730 = vadd.f32 %v3717, %v3729
    %v3731 = vpop.f32.mrf.mxu0
    %3732 = vdwg.mxu0
    %3733 = vmatpush.bf16.msra.mxu0 %v2619
    %3734 = vmatpush.bf16.msra.mxu0 %v2617
    %3735 = vmatpush.bf16.msra.mxu0 %v2615
    %3736 = vmatpush.bf16.msra.mxu0 %v2613
    %3737 = vmatpush.bf16.msra.mxu0 %v2611
    %3738 = vmatpush.bf16.msra.mxu0 %v2609
    %3739 = vmatpush.bf16.msra.mxu0 %v2607
    %3740 = vmatpush.bf16.msra.mxu0 %v2605
    %3741 = vmatmul.bf16.gmra.mxu0 %v679
    %v3742 = vpop.f32.mrf.mxu0
    %v3743 = vadd.f32 %v3730, %v3742
    %v3744 = vpop.f32.mrf.mxu0
    %3745 = vdwg.mxu0
    %3746 = vmatpush.bf16.msra.mxu0 %v2635
    %3747 = vmatpush.bf16.msra.mxu0 %v2633
    %3748 = vmatpush.bf16.msra.mxu0 %v2631
    %3749 = vmatpush.bf16.msra.mxu0 %v2629
    %3750 = vmatpush.bf16.msra.mxu0 %v2627
    %3751 = vmatpush.bf16.msra.mxu0 %v2625
    %3752 = vmatpush.bf16.msra.mxu0 %v2623
    %3753 = vmatpush.bf16.msra.mxu0 %v2621
    %3754 = vmatmul.bf16.gmra.mxu0 %v680
    %v3755 = vpop.f32.mrf.mxu0
    %v3756 = vadd.f32 %v3743, %v3755
    %v3757 = vpop.f32.mrf.mxu0
    %3758 = vdwg.mxu0
    %3759 = vmatpush.bf16.msra.mxu0 %v2651
    %3760 = vmatpush.bf16.msra.mxu0 %v2649
    %3761 = vmatpush.bf16.msra.mxu0 %v2647
    %3762 = vmatpush.bf16.msra.mxu0 %v2645
    %3763 = vmatpush.bf16.msra.mxu0 %v2643
    %3764 = vmatpush.bf16.msra.mxu0 %v2641
    %3765 = vmatpush.bf16.msra.mxu0 %v2639
    %3766 = vmatpush.bf16.msra.mxu0 %v2637
    %3767 = vmatmul.bf16.gmra.mxu0 %v681
    %v3768 = vpop.f32.mrf.mxu0
    %v3769 = vadd.f32 %v3756, %v3768
    %v3770 = vpop.f32.mrf.mxu0
    %3771 = vdwg.mxu0
    %3772 = vmatpush.bf16.msra.mxu0 %v2667
    %3773 = vmatpush.bf16.msra.mxu0 %v2665
    %3774 = vmatpush.bf16.msra.mxu0 %v2663
    %3775 = vmatpush.bf16.msra.mxu0 %v2661
    %3776 = vmatpush.bf16.msra.mxu0 %v2659
    %3777 = vmatpush.bf16.msra.mxu0 %v2657
    %3778 = vmatpush.bf16.msra.mxu0 %v2655
    %3779 = vmatpush.bf16.msra.mxu0 %v2653
    %3780 = vmatmul.bf16.gmra.mxu0 %v682
    %v3781 = vpop.f32.mrf.mxu0
    %v3782 = vadd.f32 %v3769, %v3781
    %v3783 = vpop.f32.mrf.mxu0
    %3784 = vdwg.mxu0
    %3785 = vmatpush.bf16.msra.mxu0 %v2683
    %3786 = vmatpush.bf16.msra.mxu0 %v2681
    %3787 = vmatpush.bf16.msra.mxu0 %v2679
    %3788 = vmatpush.bf16.msra.mxu0 %v2677
    %3789 = vmatpush.bf16.msra.mxu0 %v2675
    %3790 = vmatpush.bf16.msra.mxu0 %v2673
    %3791 = vmatpush.bf16.msra.mxu0 %v2671
    %3792 = vmatpush.bf16.msra.mxu0 %v2669
    %3793 = vmatmul.bf16.gmra.mxu0 %v683
    %v3794 = vpop.f32.mrf.mxu0
    %v3795 = vadd.f32 %v3782, %v3794
    %v3796 = vpop.f32.mrf.mxu0
    %3797 = vdwg.mxu0
    %3798 = vmatpush.bf16.msra.mxu0 %v2699
    %3799 = vmatpush.bf16.msra.mxu0 %v2697
    %3800 = vmatpush.bf16.msra.mxu0 %v2695
    %3801 = vmatpush.bf16.msra.mxu0 %v2693
    %3802 = vmatpush.bf16.msra.mxu0 %v2691
    %3803 = vmatpush.bf16.msra.mxu0 %v2689
    %3804 = vmatpush.bf16.msra.mxu0 %v2687
    %3805 = vmatpush.bf16.msra.mxu0 %v2685
    %3806 = vmatmul.bf16.gmra.mxu0 %v684
    %v3807 = vpop.f32.mrf.mxu0
    %v3808 = vadd.f32 %v3795, %v3807
    %v3809 = vpop.f32.mrf.mxu0
    %3810 = vdwg.mxu0
    %3811 = vmatpush.bf16.msra.mxu0 %v2715
    %3812 = vmatpush.bf16.msra.mxu0 %v2713
    %3813 = vmatpush.bf16.msra.mxu0 %v2711
    %3814 = vmatpush.bf16.msra.mxu0 %v2709
    %3815 = vmatpush.bf16.msra.mxu0 %v2707
    %3816 = vmatpush.bf16.msra.mxu0 %v2705
    %3817 = vmatpush.bf16.msra.mxu0 %v2703
    %3818 = vmatpush.bf16.msra.mxu0 %v2701
    %3819 = vmatmul.bf16.gmra.mxu0 %v685
    %v3820 = vpop.f32.mrf.mxu0
    %v3821 = vadd.f32 %v3808, %v3820
    %v3822 = vpop.f32.mrf.mxu0
    %3823 = vdwg.mxu0
    %3824 = vmatpush.bf16.msra.mxu0 %v2731
    %3825 = vmatpush.bf16.msra.mxu0 %v2729
    %3826 = vmatpush.bf16.msra.mxu0 %v2727
    %3827 = vmatpush.bf16.msra.mxu0 %v2725
    %3828 = vmatpush.bf16.msra.mxu0 %v2723
    %3829 = vmatpush.bf16.msra.mxu0 %v2721
    %3830 = vmatpush.bf16.msra.mxu0 %v2719
    %3831 = vmatpush.bf16.msra.mxu0 %v2717
    %3832 = vmatmul.bf16.gmra.mxu0 %v686
    %v3833 = vpop.f32.mrf.mxu0
    %v3834 = vadd.f32 %v3821, %v3833
    %v3835 = vpop.f32.mrf.mxu0
    %3836 = vdwg.mxu0
    %3837 = vmatpush.bf16.msra.mxu0 %v2747
    %3838 = vmatpush.bf16.msra.mxu0 %v2745
    %3839 = vmatpush.bf16.msra.mxu0 %v2743
    %3840 = vmatpush.bf16.msra.mxu0 %v2741
    %3841 = vmatpush.bf16.msra.mxu0 %v2739
    %3842 = vmatpush.bf16.msra.mxu0 %v2737
    %3843 = vmatpush.bf16.msra.mxu0 %v2735
    %3844 = vmatpush.bf16.msra.mxu0 %v2733
    %3845 = vmatmul.bf16.gmra.mxu0 %v689
    %v3846 = vpop.f32.mrf.mxu0
    %v3847 = vadd.f32 %v3834, %v3846
    %v3848 = vpop.f32.mrf.mxu0
    %3849 = vdwg.mxu0
    %3850 = vmatpush.bf16.msra.mxu0 %v2763
    %3851 = vmatpush.bf16.msra.mxu0 %v2761
    %3852 = vmatpush.bf16.msra.mxu0 %v2759
    %3853 = vmatpush.bf16.msra.mxu0 %v2757
    %3854 = vmatpush.bf16.msra.mxu0 %v2755
    %3855 = vmatpush.bf16.msra.mxu0 %v2753
    %3856 = vmatpush.bf16.msra.mxu0 %v2751
    %3857 = vmatpush.bf16.msra.mxu0 %v2749
    %3858 = vmatmul.bf16.gmra.mxu0 %v690
    %v3859 = vpop.f32.mrf.mxu0
    %v3860 = vadd.f32 %v3847, %v3859
    %v3861 = vpop.f32.mrf.mxu0
    %3862 = vdwg.mxu0
    %3863 = vmatpush.bf16.msra.mxu0 %v2779
    %3864 = vmatpush.bf16.msra.mxu0 %v2777
    %3865 = vmatpush.bf16.msra.mxu0 %v2775
    %3866 = vmatpush.bf16.msra.mxu0 %v2773
    %3867 = vmatpush.bf16.msra.mxu0 %v2771
    %3868 = vmatpush.bf16.msra.mxu0 %v2769
    %3869 = vmatpush.bf16.msra.mxu0 %v2767
    %3870 = vmatpush.bf16.msra.mxu0 %v2765
    %3871 = vmatmul.bf16.gmra.mxu0 %v691
    %v3872 = vpop.f32.mrf.mxu0
    %v3873 = vadd.f32 %v3860, %v3872
    %v3874 = vpop.f32.mrf.mxu0
    %3875 = vdwg.mxu0
    %3876 = vmatpush.bf16.msra.mxu0 %v2795
    %3877 = vmatpush.bf16.msra.mxu0 %v2793
    %3878 = vmatpush.bf16.msra.mxu0 %v2791
    %3879 = vmatpush.bf16.msra.mxu0 %v2789
    %3880 = vmatpush.bf16.msra.mxu0 %v2787
    %3881 = vmatpush.bf16.msra.mxu0 %v2785
    %3882 = vmatpush.bf16.msra.mxu0 %v2783
    %3883 = vmatpush.bf16.msra.mxu0 %v2781
    %3884 = vmatmul.bf16.gmra.mxu0 %v692
    %v3885 = vpop.f32.mrf.mxu0
    %v3886 = vadd.f32 %v3873, %v3885
    %v3887 = vpop.f32.mrf.mxu0
    %3888 = vdwg.mxu0
    %3889 = vmatpush.bf16.msra.mxu0 %v2811
    %3890 = vmatpush.bf16.msra.mxu0 %v2809
    %3891 = vmatpush.bf16.msra.mxu0 %v2807
    %3892 = vmatpush.bf16.msra.mxu0 %v2805
    %3893 = vmatpush.bf16.msra.mxu0 %v2803
    %3894 = vmatpush.bf16.msra.mxu0 %v2801
    %3895 = vmatpush.bf16.msra.mxu0 %v2799
    %3896 = vmatpush.bf16.msra.mxu0 %v2797
    %3897 = vmatmul.bf16.gmra.mxu0 %v693
    %v3898 = vpop.f32.mrf.mxu0
    %v3899 = vadd.f32 %v3886, %v3898
    %v3900 = vpop.f32.mrf.mxu0
    %3901 = vdwg.mxu0
    %3902 = vmatpush.bf16.msra.mxu0 %v2827
    %3903 = vmatpush.bf16.msra.mxu0 %v2825
    %3904 = vmatpush.bf16.msra.mxu0 %v2823
    %3905 = vmatpush.bf16.msra.mxu0 %v2821
    %3906 = vmatpush.bf16.msra.mxu0 %v2819
    %3907 = vmatpush.bf16.msra.mxu0 %v2817
    %3908 = vmatpush.bf16.msra.mxu0 %v2815
    %3909 = vmatpush.bf16.msra.mxu0 %v2813
    %3910 = vmatmul.bf16.gmra.mxu0 %v694
    %v3911 = vpop.f32.mrf.mxu0
    %v3912 = vadd.f32 %v3899, %v3911
    %v3913 = vpop.f32.mrf.mxu0
    %3914 = vdwg.mxu0
    %3915 = vmatpush.bf16.msra.mxu0 %v2843
    %3916 = vmatpush.bf16.msra.mxu0 %v2841
    %3917 = vmatpush.bf16.msra.mxu0 %v2839
    %3918 = vmatpush.bf16.msra.mxu0 %v2837
    %3919 = vmatpush.bf16.msra.mxu0 %v2835
    %3920 = vmatpush.bf16.msra.mxu0 %v2833
    %3921 = vmatpush.bf16.msra.mxu0 %v2831
    %3922 = vmatpush.bf16.msra.mxu0 %v2829
    %3923 = vmatmul.bf16.gmra.mxu0 %v695
    %v3924 = vpop.f32.mrf.mxu0
    %v3925 = vadd.f32 %v3912, %v3924
    %v3926 = vpop.f32.mrf.mxu0
    %3927 = vdwg.mxu0
    %3928 = vmatpush.bf16.msra.mxu0 %v2859
    %3929 = vmatpush.bf16.msra.mxu0 %v2857
    %3930 = vmatpush.bf16.msra.mxu0 %v2855
    %3931 = vmatpush.bf16.msra.mxu0 %v2853
    %3932 = vmatpush.bf16.msra.mxu0 %v2851
    %3933 = vmatpush.bf16.msra.mxu0 %v2849
    %3934 = vmatpush.bf16.msra.mxu0 %v2847
    %3935 = vmatpush.bf16.msra.mxu0 %v2845
    %3936 = vmatmul.bf16.gmra.mxu0 %v696
    %v3937 = vpop.f32.mrf.mxu0
    %v3938 = vadd.f32 %v3925, %v3937
    %v3939 = vpop.f32.mrf.mxu0
    %3940 = vdwg.mxu0
    %3941 = vmatpush.bf16.msra.mxu0 %v2875
    %3942 = vmatpush.bf16.msra.mxu0 %v2873
    %3943 = vmatpush.bf16.msra.mxu0 %v2871
    %3944 = vmatpush.bf16.msra.mxu0 %v2869
    %3945 = vmatpush.bf16.msra.mxu0 %v2867
    %3946 = vmatpush.bf16.msra.mxu0 %v2865
    %3947 = vmatpush.bf16.msra.mxu0 %v2863
    %3948 = vmatpush.bf16.msra.mxu0 %v2861
    %3949 = vmatmul.bf16.gmra.mxu0 %v699
    %v3950 = vpop.f32.mrf.mxu0
    %v3951 = vadd.f32 %v3938, %v3950
    %v3952 = vpop.f32.mrf.mxu0
    %3953 = vdwg.mxu0
    %3954 = vmatpush.bf16.msra.mxu0 %v2891
    %3955 = vmatpush.bf16.msra.mxu0 %v2889
    %3956 = vmatpush.bf16.msra.mxu0 %v2887
    %3957 = vmatpush.bf16.msra.mxu0 %v2885
    %3958 = vmatpush.bf16.msra.mxu0 %v2883
    %3959 = vmatpush.bf16.msra.mxu0 %v2881
    %3960 = vmatpush.bf16.msra.mxu0 %v2879
    %3961 = vmatpush.bf16.msra.mxu0 %v2877
    %3962 = vmatmul.bf16.gmra.mxu0 %v700
    %v3963 = vpop.f32.mrf.mxu0
    %v3964 = vadd.f32 %v3951, %v3963
    %v3965 = vpop.f32.mrf.mxu0
    %3966 = vdwg.mxu0
    %3967 = vmatpush.bf16.msra.mxu0 %v2907
    %3968 = vmatpush.bf16.msra.mxu0 %v2905
    %3969 = vmatpush.bf16.msra.mxu0 %v2903
    %3970 = vmatpush.bf16.msra.mxu0 %v2901
    %3971 = vmatpush.bf16.msra.mxu0 %v2899
    %3972 = vmatpush.bf16.msra.mxu0 %v2897
    %3973 = vmatpush.bf16.msra.mxu0 %v2895
    %3974 = vmatpush.bf16.msra.mxu0 %v2893
    %3975 = vmatmul.bf16.gmra.mxu0 %v701
    %v3976 = vpop.f32.mrf.mxu0
    %v3977 = vadd.f32 %v3964, %v3976
    %v3978 = vpop.f32.mrf.mxu0
    %3979 = vdwg.mxu0
    %3980 = vmatpush.bf16.msra.mxu0 %v2923
    %3981 = vmatpush.bf16.msra.mxu0 %v2921
    %3982 = vmatpush.bf16.msra.mxu0 %v2919
    %3983 = vmatpush.bf16.msra.mxu0 %v2917
    %3984 = vmatpush.bf16.msra.mxu0 %v2915
    %3985 = vmatpush.bf16.msra.mxu0 %v2913
    %3986 = vmatpush.bf16.msra.mxu0 %v2911
    %3987 = vmatpush.bf16.msra.mxu0 %v2909
    %3988 = vmatmul.bf16.gmra.mxu0 %v702
    %v3989 = vpop.f32.mrf.mxu0
    %v3990 = vadd.f32 %v3977, %v3989
    %v3991 = vpop.f32.mrf.mxu0
    %3992 = vdwg.mxu0
    %3993 = vmatpush.bf16.msra.mxu0 %v2939
    %3994 = vmatpush.bf16.msra.mxu0 %v2937
    %3995 = vmatpush.bf16.msra.mxu0 %v2935
    %3996 = vmatpush.bf16.msra.mxu0 %v2933
    %3997 = vmatpush.bf16.msra.mxu0 %v2931
    %3998 = vmatpush.bf16.msra.mxu0 %v2929
    %3999 = vmatpush.bf16.msra.mxu0 %v2927
    %4000 = vmatpush.bf16.msra.mxu0 %v2925
    %4001 = vmatmul.bf16.gmra.mxu0 %v703
    %v4002 = vpop.f32.mrf.mxu0
    %v4003 = vadd.f32 %v3990, %v4002
    %v4004 = vpop.f32.mrf.mxu0
    %4005 = vdwg.mxu0
    %4006 = vmatpush.bf16.msra.mxu0 %v2955
    %4007 = vmatpush.bf16.msra.mxu0 %v2953
    %4008 = vmatpush.bf16.msra.mxu0 %v2951
    %4009 = vmatpush.bf16.msra.mxu0 %v2949
    %4010 = vmatpush.bf16.msra.mxu0 %v2947
    %4011 = vmatpush.bf16.msra.mxu0 %v2945
    %4012 = vmatpush.bf16.msra.mxu0 %v2943
    %4013 = vmatpush.bf16.msra.mxu0 %v2941
    %4014 = vmatmul.bf16.gmra.mxu0 %v704
    %v4015 = vpop.f32.mrf.mxu0
    %v4016 = vadd.f32 %v4003, %v4015
    %v4017 = vpop.f32.mrf.mxu0
    %4018 = vdwg.mxu0
    %4019 = vmatpush.bf16.msra.mxu0 %v2971
    %4020 = vmatpush.bf16.msra.mxu0 %v2969
    %4021 = vmatpush.bf16.msra.mxu0 %v2967
    %4022 = vmatpush.bf16.msra.mxu0 %v2965
    %4023 = vmatpush.bf16.msra.mxu0 %v2963
    %4024 = vmatpush.bf16.msra.mxu0 %v2961
    %4025 = vmatpush.bf16.msra.mxu0 %v2959
    %4026 = vmatpush.bf16.msra.mxu0 %v2957
    %4027 = vmatmul.bf16.gmra.mxu0 %v705
    %v4028 = vpop.f32.mrf.mxu0
    %v4029 = vadd.f32 %v4016, %v4028
    %v4030 = vpop.f32.mrf.mxu0
    %4031 = vdwg.mxu0
    %4032 = vmatpush.bf16.msra.mxu0 %v2987
    %4033 = vmatpush.bf16.msra.mxu0 %v2985
    %4034 = vmatpush.bf16.msra.mxu0 %v2983
    %4035 = vmatpush.bf16.msra.mxu0 %v2981
    %4036 = vmatpush.bf16.msra.mxu0 %v2979
    %4037 = vmatpush.bf16.msra.mxu0 %v2977
    %4038 = vmatpush.bf16.msra.mxu0 %v2975
    %4039 = vmatpush.bf16.msra.mxu0 %v2973
    %4040 = vmatmul.bf16.gmra.mxu0 %v706
    %v4041 = vpop.f32.mrf.mxu0
    %v4042 = vadd.f32 %v4029, %v4041
    %v4043 = vpop.f32.mrf.mxu0
    %4044 = vdwg.mxu0
    %4045 = vmatpush.bf16.msra.mxu0 %v3003
    %4046 = vmatpush.bf16.msra.mxu0 %v3001
    %4047 = vmatpush.bf16.msra.mxu0 %v2999
    %4048 = vmatpush.bf16.msra.mxu0 %v2997
    %4049 = vmatpush.bf16.msra.mxu0 %v2995
    %4050 = vmatpush.bf16.msra.mxu0 %v2993
    %4051 = vmatpush.bf16.msra.mxu0 %v2991
    %4052 = vmatpush.bf16.msra.mxu0 %v2989
    %4053 = vmatmul.bf16.gmra.mxu0 %v709
    %v4054 = vpop.f32.mrf.mxu0
    %v4055 = vadd.f32 %v4042, %v4054
    %v4056 = vpop.f32.mrf.mxu0
    %4057 = vdwg.mxu0
    %4058 = vmatpush.bf16.msra.mxu0 %v3019
    %4059 = vmatpush.bf16.msra.mxu0 %v3017
    %4060 = vmatpush.bf16.msra.mxu0 %v3015
    %4061 = vmatpush.bf16.msra.mxu0 %v3013
    %4062 = vmatpush.bf16.msra.mxu0 %v3011
    %4063 = vmatpush.bf16.msra.mxu0 %v3009
    %4064 = vmatpush.bf16.msra.mxu0 %v3007
    %4065 = vmatpush.bf16.msra.mxu0 %v3005
    %4066 = vmatmul.bf16.gmra.mxu0 %v710
    %v4067 = vpop.f32.mrf.mxu0
    %v4068 = vadd.f32 %v4055, %v4067
    %v4069 = vpop.f32.mrf.mxu0
    %4070 = vdwg.mxu0
    %4071 = vmatpush.bf16.msra.mxu0 %v3035
    %4072 = vmatpush.bf16.msra.mxu0 %v3033
    %4073 = vmatpush.bf16.msra.mxu0 %v3031
    %4074 = vmatpush.bf16.msra.mxu0 %v3029
    %4075 = vmatpush.bf16.msra.mxu0 %v3027
    %4076 = vmatpush.bf16.msra.mxu0 %v3025
    %4077 = vmatpush.bf16.msra.mxu0 %v3023
    %4078 = vmatpush.bf16.msra.mxu0 %v3021
    %4079 = vmatmul.bf16.gmra.mxu0 %v711
    %v4080 = vpop.f32.mrf.mxu0
    %v4081 = vadd.f32 %v4068, %v4080
    %v4082 = vpop.f32.mrf.mxu0
    %4083 = vdwg.mxu0
    %4084 = vmatpush.bf16.msra.mxu0 %v3051
    %4085 = vmatpush.bf16.msra.mxu0 %v3049
    %4086 = vmatpush.bf16.msra.mxu0 %v3047
    %4087 = vmatpush.bf16.msra.mxu0 %v3045
    %4088 = vmatpush.bf16.msra.mxu0 %v3043
    %4089 = vmatpush.bf16.msra.mxu0 %v3041
    %4090 = vmatpush.bf16.msra.mxu0 %v3039
    %4091 = vmatpush.bf16.msra.mxu0 %v3037
    %4092 = vmatmul.bf16.gmra.mxu0 %v712
    %v4093 = vpop.f32.mrf.mxu0
    %v4094 = vadd.f32 %v4081, %v4093
    %v4095 = vpop.f32.mrf.mxu0
    %4096 = vdwg.mxu0
    %4097 = vmatpush.bf16.msra.mxu0 %v2492
    %4098 = vmatpush.bf16.msra.mxu0 %v2490
    %4099 = vmatpush.bf16.msra.mxu0 %v2488
    %4100 = vmatpush.bf16.msra.mxu0 %v2486
    %4101 = vmatpush.bf16.msra.mxu0 %v2484
    %4102 = vmatpush.bf16.msra.mxu0 %v2482
    %4103 = vmatpush.bf16.msra.mxu0 %v2480
    %4104 = vmatpush.bf16.msra.mxu0 %v2478
    %4105 = vmatmul.bf16.gmra.mxu0 %v669
    %v4106 = vpop.f32.mrf.mxu0
    %v4107 = vadd.f32 %v664, %v4106
    %v4108 = vpop.f32.mrf.mxu0
    %4109 = vdwg.mxu0
    %4110 = vmatpush.bf16.msra.mxu0 %v2508
    %4111 = vmatpush.bf16.msra.mxu0 %v2506
    %4112 = vmatpush.bf16.msra.mxu0 %v2504
    %4113 = vmatpush.bf16.msra.mxu0 %v2502
    %4114 = vmatpush.bf16.msra.mxu0 %v2500
    %4115 = vmatpush.bf16.msra.mxu0 %v2498
    %4116 = vmatpush.bf16.msra.mxu0 %v2496
    %4117 = vmatpush.bf16.msra.mxu0 %v2494
    %4118 = vmatmul.bf16.gmra.mxu0 %v670
    %v4119 = vpop.f32.mrf.mxu0
    %v4120 = vadd.f32 %v4107, %v4119
    %v4121 = vpop.f32.mrf.mxu0
    %4122 = vdwg.mxu0
    %4123 = vmatpush.bf16.msra.mxu0 %v2524
    %4124 = vmatpush.bf16.msra.mxu0 %v2522
    %4125 = vmatpush.bf16.msra.mxu0 %v2520
    %4126 = vmatpush.bf16.msra.mxu0 %v2518
    %4127 = vmatpush.bf16.msra.mxu0 %v2516
    %4128 = vmatpush.bf16.msra.mxu0 %v2514
    %4129 = vmatpush.bf16.msra.mxu0 %v2512
    %4130 = vmatpush.bf16.msra.mxu0 %v2510
    %4131 = vmatmul.bf16.gmra.mxu0 %v671
    %v4132 = vpop.f32.mrf.mxu0
    %v4133 = vadd.f32 %v4120, %v4132
    %v4134 = vpop.f32.mrf.mxu0
    %4135 = vdwg.mxu0
    %4136 = vmatpush.bf16.msra.mxu0 %v2540
    %4137 = vmatpush.bf16.msra.mxu0 %v2538
    %4138 = vmatpush.bf16.msra.mxu0 %v2536
    %4139 = vmatpush.bf16.msra.mxu0 %v2534
    %4140 = vmatpush.bf16.msra.mxu0 %v2532
    %4141 = vmatpush.bf16.msra.mxu0 %v2530
    %4142 = vmatpush.bf16.msra.mxu0 %v2528
    %4143 = vmatpush.bf16.msra.mxu0 %v2526
    %4144 = vmatmul.bf16.gmra.mxu0 %v672
    %v4145 = vpop.f32.mrf.mxu0
    %v4146 = vadd.f32 %v4133, %v4145
    %v4147 = vpop.f32.mrf.mxu0
    %4148 = vdwg.mxu0
    %4149 = vmatpush.bf16.msra.mxu0 %v2556
    %4150 = vmatpush.bf16.msra.mxu0 %v2554
    %4151 = vmatpush.bf16.msra.mxu0 %v2552
    %4152 = vmatpush.bf16.msra.mxu0 %v2550
    %4153 = vmatpush.bf16.msra.mxu0 %v2548
    %4154 = vmatpush.bf16.msra.mxu0 %v2546
    %4155 = vmatpush.bf16.msra.mxu0 %v2544
    %4156 = vmatpush.bf16.msra.mxu0 %v2542
    %4157 = vmatmul.bf16.gmra.mxu0 %v673
    %v4158 = vpop.f32.mrf.mxu0
    %v4159 = vadd.f32 %v4146, %v4158
    %v4160 = vpop.f32.mrf.mxu0
    %4161 = vdwg.mxu0
    %4162 = vmatpush.bf16.msra.mxu0 %v2572
    %4163 = vmatpush.bf16.msra.mxu0 %v2570
    %4164 = vmatpush.bf16.msra.mxu0 %v2568
    %4165 = vmatpush.bf16.msra.mxu0 %v2566
    %4166 = vmatpush.bf16.msra.mxu0 %v2564
    %4167 = vmatpush.bf16.msra.mxu0 %v2562
    %4168 = vmatpush.bf16.msra.mxu0 %v2560
    %4169 = vmatpush.bf16.msra.mxu0 %v2558
    %4170 = vmatmul.bf16.gmra.mxu0 %v674
    %v4171 = vpop.f32.mrf.mxu0
    %v4172 = vadd.f32 %v4159, %v4171
    %v4173 = vpop.f32.mrf.mxu0
    %4174 = vdwg.mxu0
    %4175 = vmatpush.bf16.msra.mxu0 %v2588
    %4176 = vmatpush.bf16.msra.mxu0 %v2586
    %4177 = vmatpush.bf16.msra.mxu0 %v2584
    %4178 = vmatpush.bf16.msra.mxu0 %v2582
    %4179 = vmatpush.bf16.msra.mxu0 %v2580
    %4180 = vmatpush.bf16.msra.mxu0 %v2578
    %4181 = vmatpush.bf16.msra.mxu0 %v2576
    %4182 = vmatpush.bf16.msra.mxu0 %v2574
    %4183 = vmatmul.bf16.gmra.mxu0 %v675
    %v4184 = vpop.f32.mrf.mxu0
    %v4185 = vadd.f32 %v4172, %v4184
    %v4186 = vpop.f32.mrf.mxu0
    %4187 = vdwg.mxu0
    %4188 = vmatpush.bf16.msra.mxu0 %v2604
    %4189 = vmatpush.bf16.msra.mxu0 %v2602
    %4190 = vmatpush.bf16.msra.mxu0 %v2600
    %4191 = vmatpush.bf16.msra.mxu0 %v2598
    %4192 = vmatpush.bf16.msra.mxu0 %v2596
    %4193 = vmatpush.bf16.msra.mxu0 %v2594
    %4194 = vmatpush.bf16.msra.mxu0 %v2592
    %4195 = vmatpush.bf16.msra.mxu0 %v2590
    %4196 = vmatmul.bf16.gmra.mxu0 %v676
    %v4197 = vpop.f32.mrf.mxu0
    %v4198 = vadd.f32 %v4185, %v4197
    %v4199 = vpop.f32.mrf.mxu0
    %4200 = vdwg.mxu0
    %4201 = vmatpush.bf16.msra.mxu0 %v2620
    %4202 = vmatpush.bf16.msra.mxu0 %v2618
    %4203 = vmatpush.bf16.msra.mxu0 %v2616
    %4204 = vmatpush.bf16.msra.mxu0 %v2614
    %4205 = vmatpush.bf16.msra.mxu0 %v2612
    %4206 = vmatpush.bf16.msra.mxu0 %v2610
    %4207 = vmatpush.bf16.msra.mxu0 %v2608
    %4208 = vmatpush.bf16.msra.mxu0 %v2606
    %4209 = vmatmul.bf16.gmra.mxu0 %v679
    %v4210 = vpop.f32.mrf.mxu0
    %v4211 = vadd.f32 %v4198, %v4210
    %v4212 = vpop.f32.mrf.mxu0
    %4213 = vdwg.mxu0
    %4214 = vmatpush.bf16.msra.mxu0 %v2636
    %4215 = vmatpush.bf16.msra.mxu0 %v2634
    %4216 = vmatpush.bf16.msra.mxu0 %v2632
    %4217 = vmatpush.bf16.msra.mxu0 %v2630
    %4218 = vmatpush.bf16.msra.mxu0 %v2628
    %4219 = vmatpush.bf16.msra.mxu0 %v2626
    %4220 = vmatpush.bf16.msra.mxu0 %v2624
    %4221 = vmatpush.bf16.msra.mxu0 %v2622
    %4222 = vmatmul.bf16.gmra.mxu0 %v680
    %v4223 = vpop.f32.mrf.mxu0
    %v4224 = vadd.f32 %v4211, %v4223
    %v4225 = vpop.f32.mrf.mxu0
    %4226 = vdwg.mxu0
    %4227 = vmatpush.bf16.msra.mxu0 %v2652
    %4228 = vmatpush.bf16.msra.mxu0 %v2650
    %4229 = vmatpush.bf16.msra.mxu0 %v2648
    %4230 = vmatpush.bf16.msra.mxu0 %v2646
    %4231 = vmatpush.bf16.msra.mxu0 %v2644
    %4232 = vmatpush.bf16.msra.mxu0 %v2642
    %4233 = vmatpush.bf16.msra.mxu0 %v2640
    %4234 = vmatpush.bf16.msra.mxu0 %v2638
    %4235 = vmatmul.bf16.gmra.mxu0 %v681
    %v4236 = vpop.f32.mrf.mxu0
    %v4237 = vadd.f32 %v4224, %v4236
    %v4238 = vpop.f32.mrf.mxu0
    %4239 = vdwg.mxu0
    %4240 = vmatpush.bf16.msra.mxu0 %v2668
    %4241 = vmatpush.bf16.msra.mxu0 %v2666
    %4242 = vmatpush.bf16.msra.mxu0 %v2664
    %4243 = vmatpush.bf16.msra.mxu0 %v2662
    %4244 = vmatpush.bf16.msra.mxu0 %v2660
    %4245 = vmatpush.bf16.msra.mxu0 %v2658
    %4246 = vmatpush.bf16.msra.mxu0 %v2656
    %4247 = vmatpush.bf16.msra.mxu0 %v2654
    %4248 = vmatmul.bf16.gmra.mxu0 %v682
    %v4249 = vpop.f32.mrf.mxu0
    %v4250 = vadd.f32 %v4237, %v4249
    %v4251 = vpop.f32.mrf.mxu0
    %4252 = vdwg.mxu0
    %4253 = vmatpush.bf16.msra.mxu0 %v2684
    %4254 = vmatpush.bf16.msra.mxu0 %v2682
    %4255 = vmatpush.bf16.msra.mxu0 %v2680
    %4256 = vmatpush.bf16.msra.mxu0 %v2678
    %4257 = vmatpush.bf16.msra.mxu0 %v2676
    %4258 = vmatpush.bf16.msra.mxu0 %v2674
    %4259 = vmatpush.bf16.msra.mxu0 %v2672
    %4260 = vmatpush.bf16.msra.mxu0 %v2670
    %4261 = vmatmul.bf16.gmra.mxu0 %v683
    %v4262 = vpop.f32.mrf.mxu0
    %v4263 = vadd.f32 %v4250, %v4262
    %v4264 = vpop.f32.mrf.mxu0
    %4265 = vdwg.mxu0
    %4266 = vmatpush.bf16.msra.mxu0 %v2700
    %4267 = vmatpush.bf16.msra.mxu0 %v2698
    %4268 = vmatpush.bf16.msra.mxu0 %v2696
    %4269 = vmatpush.bf16.msra.mxu0 %v2694
    %4270 = vmatpush.bf16.msra.mxu0 %v2692
    %4271 = vmatpush.bf16.msra.mxu0 %v2690
    %4272 = vmatpush.bf16.msra.mxu0 %v2688
    %4273 = vmatpush.bf16.msra.mxu0 %v2686
    %4274 = vmatmul.bf16.gmra.mxu0 %v684
    %v4275 = vpop.f32.mrf.mxu0
    %v4276 = vadd.f32 %v4263, %v4275
    %v4277 = vpop.f32.mrf.mxu0
    %4278 = vdwg.mxu0
    %4279 = vmatpush.bf16.msra.mxu0 %v2716
    %4280 = vmatpush.bf16.msra.mxu0 %v2714
    %4281 = vmatpush.bf16.msra.mxu0 %v2712
    %4282 = vmatpush.bf16.msra.mxu0 %v2710
    %4283 = vmatpush.bf16.msra.mxu0 %v2708
    %4284 = vmatpush.bf16.msra.mxu0 %v2706
    %4285 = vmatpush.bf16.msra.mxu0 %v2704
    %4286 = vmatpush.bf16.msra.mxu0 %v2702
    %4287 = vmatmul.bf16.gmra.mxu0 %v685
    %v4288 = vpop.f32.mrf.mxu0
    %v4289 = vadd.f32 %v4276, %v4288
    %v4290 = vpop.f32.mrf.mxu0
    %4291 = vdwg.mxu0
    %4292 = vmatpush.bf16.msra.mxu0 %v2732
    %4293 = vmatpush.bf16.msra.mxu0 %v2730
    %4294 = vmatpush.bf16.msra.mxu0 %v2728
    %4295 = vmatpush.bf16.msra.mxu0 %v2726
    %4296 = vmatpush.bf16.msra.mxu0 %v2724
    %4297 = vmatpush.bf16.msra.mxu0 %v2722
    %4298 = vmatpush.bf16.msra.mxu0 %v2720
    %4299 = vmatpush.bf16.msra.mxu0 %v2718
    %4300 = vmatmul.bf16.gmra.mxu0 %v686
    %v4301 = vpop.f32.mrf.mxu0
    %v4302 = vadd.f32 %v4289, %v4301
    %v4303 = vpop.f32.mrf.mxu0
    %4304 = vdwg.mxu0
    %4305 = vmatpush.bf16.msra.mxu0 %v2748
    %4306 = vmatpush.bf16.msra.mxu0 %v2746
    %4307 = vmatpush.bf16.msra.mxu0 %v2744
    %4308 = vmatpush.bf16.msra.mxu0 %v2742
    %4309 = vmatpush.bf16.msra.mxu0 %v2740
    %4310 = vmatpush.bf16.msra.mxu0 %v2738
    %4311 = vmatpush.bf16.msra.mxu0 %v2736
    %4312 = vmatpush.bf16.msra.mxu0 %v2734
    %4313 = vmatmul.bf16.gmra.mxu0 %v689
    %v4314 = vpop.f32.mrf.mxu0
    %v4315 = vadd.f32 %v4302, %v4314
    %v4316 = vpop.f32.mrf.mxu0
    %4317 = vdwg.mxu0
    %4318 = vmatpush.bf16.msra.mxu0 %v2764
    %4319 = vmatpush.bf16.msra.mxu0 %v2762
    %4320 = vmatpush.bf16.msra.mxu0 %v2760
    %4321 = vmatpush.bf16.msra.mxu0 %v2758
    %4322 = vmatpush.bf16.msra.mxu0 %v2756
    %4323 = vmatpush.bf16.msra.mxu0 %v2754
    %4324 = vmatpush.bf16.msra.mxu0 %v2752
    %4325 = vmatpush.bf16.msra.mxu0 %v2750
    %4326 = vmatmul.bf16.gmra.mxu0 %v690
    %v4327 = vpop.f32.mrf.mxu0
    %v4328 = vadd.f32 %v4315, %v4327
    %v4329 = vpop.f32.mrf.mxu0
    %4330 = vdwg.mxu0
    %4331 = vmatpush.bf16.msra.mxu0 %v2780
    %4332 = vmatpush.bf16.msra.mxu0 %v2778
    %4333 = vmatpush.bf16.msra.mxu0 %v2776
    %4334 = vmatpush.bf16.msra.mxu0 %v2774
    %4335 = vmatpush.bf16.msra.mxu0 %v2772
    %4336 = vmatpush.bf16.msra.mxu0 %v2770
    %4337 = vmatpush.bf16.msra.mxu0 %v2768
    %4338 = vmatpush.bf16.msra.mxu0 %v2766
    %4339 = vmatmul.bf16.gmra.mxu0 %v691
    %v4340 = vpop.f32.mrf.mxu0
    %v4341 = vadd.f32 %v4328, %v4340
    %v4342 = vpop.f32.mrf.mxu0
    %4343 = vdwg.mxu0
    %4344 = vmatpush.bf16.msra.mxu0 %v2796
    %4345 = vmatpush.bf16.msra.mxu0 %v2794
    %4346 = vmatpush.bf16.msra.mxu0 %v2792
    %4347 = vmatpush.bf16.msra.mxu0 %v2790
    %4348 = vmatpush.bf16.msra.mxu0 %v2788
    %4349 = vmatpush.bf16.msra.mxu0 %v2786
    %4350 = vmatpush.bf16.msra.mxu0 %v2784
    %4351 = vmatpush.bf16.msra.mxu0 %v2782
    %4352 = vmatmul.bf16.gmra.mxu0 %v692
    %v4353 = vpop.f32.mrf.mxu0
    %v4354 = vadd.f32 %v4341, %v4353
    %v4355 = vpop.f32.mrf.mxu0
    %4356 = vdwg.mxu0
    %4357 = vmatpush.bf16.msra.mxu0 %v2812
    %4358 = vmatpush.bf16.msra.mxu0 %v2810
    %4359 = vmatpush.bf16.msra.mxu0 %v2808
    %4360 = vmatpush.bf16.msra.mxu0 %v2806
    %4361 = vmatpush.bf16.msra.mxu0 %v2804
    %4362 = vmatpush.bf16.msra.mxu0 %v2802
    %4363 = vmatpush.bf16.msra.mxu0 %v2800
    %4364 = vmatpush.bf16.msra.mxu0 %v2798
    %4365 = vmatmul.bf16.gmra.mxu0 %v693
    %v4366 = vpop.f32.mrf.mxu0
    %v4367 = vadd.f32 %v4354, %v4366
    %v4368 = vpop.f32.mrf.mxu0
    %4369 = vdwg.mxu0
    %4370 = vmatpush.bf16.msra.mxu0 %v2828
    %4371 = vmatpush.bf16.msra.mxu0 %v2826
    %4372 = vmatpush.bf16.msra.mxu0 %v2824
    %4373 = vmatpush.bf16.msra.mxu0 %v2822
    %4374 = vmatpush.bf16.msra.mxu0 %v2820
    %4375 = vmatpush.bf16.msra.mxu0 %v2818
    %4376 = vmatpush.bf16.msra.mxu0 %v2816
    %4377 = vmatpush.bf16.msra.mxu0 %v2814
    %4378 = vmatmul.bf16.gmra.mxu0 %v694
    %v4379 = vpop.f32.mrf.mxu0
    %v4380 = vadd.f32 %v4367, %v4379
    %v4381 = vpop.f32.mrf.mxu0
    %4382 = vdwg.mxu0
    %4383 = vmatpush.bf16.msra.mxu0 %v2844
    %4384 = vmatpush.bf16.msra.mxu0 %v2842
    %4385 = vmatpush.bf16.msra.mxu0 %v2840
    %4386 = vmatpush.bf16.msra.mxu0 %v2838
    %4387 = vmatpush.bf16.msra.mxu0 %v2836
    %4388 = vmatpush.bf16.msra.mxu0 %v2834
    %4389 = vmatpush.bf16.msra.mxu0 %v2832
    %4390 = vmatpush.bf16.msra.mxu0 %v2830
    %4391 = vmatmul.bf16.gmra.mxu0 %v695
    %v4392 = vpop.f32.mrf.mxu0
    %v4393 = vadd.f32 %v4380, %v4392
    %v4394 = vpop.f32.mrf.mxu0
    %4395 = vdwg.mxu0
    %4396 = vmatpush.bf16.msra.mxu0 %v2860
    %4397 = vmatpush.bf16.msra.mxu0 %v2858
    %4398 = vmatpush.bf16.msra.mxu0 %v2856
    %4399 = vmatpush.bf16.msra.mxu0 %v2854
    %4400 = vmatpush.bf16.msra.mxu0 %v2852
    %4401 = vmatpush.bf16.msra.mxu0 %v2850
    %4402 = vmatpush.bf16.msra.mxu0 %v2848
    %4403 = vmatpush.bf16.msra.mxu0 %v2846
    %4404 = vmatmul.bf16.gmra.mxu0 %v696
    %v4405 = vpop.f32.mrf.mxu0
    %v4406 = vadd.f32 %v4393, %v4405
    %v4407 = vpop.f32.mrf.mxu0
    %4408 = vdwg.mxu0
    %4409 = vmatpush.bf16.msra.mxu0 %v2876
    %4410 = vmatpush.bf16.msra.mxu0 %v2874
    %4411 = vmatpush.bf16.msra.mxu0 %v2872
    %4412 = vmatpush.bf16.msra.mxu0 %v2870
    %4413 = vmatpush.bf16.msra.mxu0 %v2868
    %4414 = vmatpush.bf16.msra.mxu0 %v2866
    %4415 = vmatpush.bf16.msra.mxu0 %v2864
    %4416 = vmatpush.bf16.msra.mxu0 %v2862
    %4417 = vmatmul.bf16.gmra.mxu0 %v699
    %v4418 = vpop.f32.mrf.mxu0
    %v4419 = vadd.f32 %v4406, %v4418
    %v4420 = vpop.f32.mrf.mxu0
    %4421 = vdwg.mxu0
    %4422 = vmatpush.bf16.msra.mxu0 %v2892
    %4423 = vmatpush.bf16.msra.mxu0 %v2890
    %4424 = vmatpush.bf16.msra.mxu0 %v2888
    %4425 = vmatpush.bf16.msra.mxu0 %v2886
    %4426 = vmatpush.bf16.msra.mxu0 %v2884
    %4427 = vmatpush.bf16.msra.mxu0 %v2882
    %4428 = vmatpush.bf16.msra.mxu0 %v2880
    %4429 = vmatpush.bf16.msra.mxu0 %v2878
    %4430 = vmatmul.bf16.gmra.mxu0 %v700
    %v4431 = vpop.f32.mrf.mxu0
    %v4432 = vadd.f32 %v4419, %v4431
    %v4433 = vpop.f32.mrf.mxu0
    %4434 = vdwg.mxu0
    %4435 = vmatpush.bf16.msra.mxu0 %v2908
    %4436 = vmatpush.bf16.msra.mxu0 %v2906
    %4437 = vmatpush.bf16.msra.mxu0 %v2904
    %4438 = vmatpush.bf16.msra.mxu0 %v2902
    %4439 = vmatpush.bf16.msra.mxu0 %v2900
    %4440 = vmatpush.bf16.msra.mxu0 %v2898
    %4441 = vmatpush.bf16.msra.mxu0 %v2896
    %4442 = vmatpush.bf16.msra.mxu0 %v2894
    %4443 = vmatmul.bf16.gmra.mxu0 %v701
    %v4444 = vpop.f32.mrf.mxu0
    %v4445 = vadd.f32 %v4432, %v4444
    %v4446 = vpop.f32.mrf.mxu0
    %4447 = vdwg.mxu0
    %4448 = vmatpush.bf16.msra.mxu0 %v2924
    %4449 = vmatpush.bf16.msra.mxu0 %v2922
    %4450 = vmatpush.bf16.msra.mxu0 %v2920
    %4451 = vmatpush.bf16.msra.mxu0 %v2918
    %4452 = vmatpush.bf16.msra.mxu0 %v2916
    %4453 = vmatpush.bf16.msra.mxu0 %v2914
    %4454 = vmatpush.bf16.msra.mxu0 %v2912
    %4455 = vmatpush.bf16.msra.mxu0 %v2910
    %4456 = vmatmul.bf16.gmra.mxu0 %v702
    %v4457 = vpop.f32.mrf.mxu0
    %v4458 = vadd.f32 %v4445, %v4457
    %v4459 = vpop.f32.mrf.mxu0
    %4460 = vdwg.mxu0
    %4461 = vmatpush.bf16.msra.mxu0 %v2940
    %4462 = vmatpush.bf16.msra.mxu0 %v2938
    %4463 = vmatpush.bf16.msra.mxu0 %v2936
    %4464 = vmatpush.bf16.msra.mxu0 %v2934
    %4465 = vmatpush.bf16.msra.mxu0 %v2932
    %4466 = vmatpush.bf16.msra.mxu0 %v2930
    %4467 = vmatpush.bf16.msra.mxu0 %v2928
    %4468 = vmatpush.bf16.msra.mxu0 %v2926
    %4469 = vmatmul.bf16.gmra.mxu0 %v703
    %v4470 = vpop.f32.mrf.mxu0
    %v4471 = vadd.f32 %v4458, %v4470
    %v4472 = vpop.f32.mrf.mxu0
    %4473 = vdwg.mxu0
    %4474 = vmatpush.bf16.msra.mxu0 %v2956
    %4475 = vmatpush.bf16.msra.mxu0 %v2954
    %4476 = vmatpush.bf16.msra.mxu0 %v2952
    %4477 = vmatpush.bf16.msra.mxu0 %v2950
    %4478 = vmatpush.bf16.msra.mxu0 %v2948
    %4479 = vmatpush.bf16.msra.mxu0 %v2946
    %4480 = vmatpush.bf16.msra.mxu0 %v2944
    %4481 = vmatpush.bf16.msra.mxu0 %v2942
    %4482 = vmatmul.bf16.gmra.mxu0 %v704
    %v4483 = vpop.f32.mrf.mxu0
    %v4484 = vadd.f32 %v4471, %v4483
    %v4485 = vpop.f32.mrf.mxu0
    %4486 = vdwg.mxu0
    %4487 = vmatpush.bf16.msra.mxu0 %v2972
    %4488 = vmatpush.bf16.msra.mxu0 %v2970
    %4489 = vmatpush.bf16.msra.mxu0 %v2968
    %4490 = vmatpush.bf16.msra.mxu0 %v2966
    %4491 = vmatpush.bf16.msra.mxu0 %v2964
    %4492 = vmatpush.bf16.msra.mxu0 %v2962
    %4493 = vmatpush.bf16.msra.mxu0 %v2960
    %4494 = vmatpush.bf16.msra.mxu0 %v2958
    %4495 = vmatmul.bf16.gmra.mxu0 %v705
    %v4496 = vpop.f32.mrf.mxu0
    %v4497 = vadd.f32 %v4484, %v4496
    %v4498 = vpop.f32.mrf.mxu0
    %4499 = vdwg.mxu0
    %4500 = vmatpush.bf16.msra.mxu0 %v2988
    %4501 = vmatpush.bf16.msra.mxu0 %v2986
    %4502 = vmatpush.bf16.msra.mxu0 %v2984
    %4503 = vmatpush.bf16.msra.mxu0 %v2982
    %4504 = vmatpush.bf16.msra.mxu0 %v2980
    %4505 = vmatpush.bf16.msra.mxu0 %v2978
    %4506 = vmatpush.bf16.msra.mxu0 %v2976
    %4507 = vmatpush.bf16.msra.mxu0 %v2974
    %4508 = vmatmul.bf16.gmra.mxu0 %v706
    %v4509 = vpop.f32.mrf.mxu0
    %v4510 = vadd.f32 %v4497, %v4509
    %v4511 = vpop.f32.mrf.mxu0
    %4512 = vdwg.mxu0
    %4513 = vmatpush.bf16.msra.mxu0 %v3004
    %4514 = vmatpush.bf16.msra.mxu0 %v3002
    %4515 = vmatpush.bf16.msra.mxu0 %v3000
    %4516 = vmatpush.bf16.msra.mxu0 %v2998
    %4517 = vmatpush.bf16.msra.mxu0 %v2996
    %4518 = vmatpush.bf16.msra.mxu0 %v2994
    %4519 = vmatpush.bf16.msra.mxu0 %v2992
    %4520 = vmatpush.bf16.msra.mxu0 %v2990
    %4521 = vmatmul.bf16.gmra.mxu0 %v709
    %v4522 = vpop.f32.mrf.mxu0
    %v4523 = vadd.f32 %v4510, %v4522
    %v4524 = vpop.f32.mrf.mxu0
    %4525 = vdwg.mxu0
    %4526 = vmatpush.bf16.msra.mxu0 %v3020
    %4527 = vmatpush.bf16.msra.mxu0 %v3018
    %4528 = vmatpush.bf16.msra.mxu0 %v3016
    %4529 = vmatpush.bf16.msra.mxu0 %v3014
    %4530 = vmatpush.bf16.msra.mxu0 %v3012
    %4531 = vmatpush.bf16.msra.mxu0 %v3010
    %4532 = vmatpush.bf16.msra.mxu0 %v3008
    %4533 = vmatpush.bf16.msra.mxu0 %v3006
    %4534 = vmatmul.bf16.gmra.mxu0 %v710
    %v4535 = vpop.f32.mrf.mxu0
    %v4536 = vadd.f32 %v4523, %v4535
    %v4537 = vpop.f32.mrf.mxu0
    %4538 = vdwg.mxu0
    %4539 = vmatpush.bf16.msra.mxu0 %v3036
    %4540 = vmatpush.bf16.msra.mxu0 %v3034
    %4541 = vmatpush.bf16.msra.mxu0 %v3032
    %4542 = vmatpush.bf16.msra.mxu0 %v3030
    %4543 = vmatpush.bf16.msra.mxu0 %v3028
    %4544 = vmatpush.bf16.msra.mxu0 %v3026
    %4545 = vmatpush.bf16.msra.mxu0 %v3024
    %4546 = vmatpush.bf16.msra.mxu0 %v3022
    %4547 = vmatmul.bf16.gmra.mxu0 %v711
    %v4548 = vpop.f32.mrf.mxu0
    %v4549 = vadd.f32 %v4536, %v4548
    %v4550 = vpop.f32.mrf.mxu0
    %4551 = vdwg.mxu0
    %4552 = vmatpush.bf16.msra.mxu0 %v3052
    %4553 = vmatpush.bf16.msra.mxu0 %v3050
    %4554 = vmatpush.bf16.msra.mxu0 %v3048
    %4555 = vmatpush.bf16.msra.mxu0 %v3046
    %4556 = vmatpush.bf16.msra.mxu0 %v3044
    %4557 = vmatpush.bf16.msra.mxu0 %v3042
    %4558 = vmatpush.bf16.msra.mxu0 %v3040
    %4559 = vmatpush.bf16.msra.mxu0 %v3038
    %4560 = vmatmul.bf16.gmra.mxu0 %v712
    %v4561 = vpop.f32.mrf.mxu0
    %v4562 = vadd.f32 %v4549, %v4561
    %v4563 = vpop.f32.mrf.mxu0
    %4564 = vdwg.mxu0
    %v4565 = vmax.f32 %v4094, 0.0
    %v4566 = vmax.f32 %v4562, 0.0
    %v4567 = vpack.c.bf16 %v4565, %v4565
    %v4568 = vpack.c.bf16 %v4566, %v4566
    %v4569 = vld [vmem:[#allocation7] sm:$0xf]
    %v4570 = vld [vmem:[#allocation7 + $0x4] sm:$0xf]
    %v4571 = vld [vmem:[#allocation7 + $0x8] sm:$0xf]
    %v4572 = vld [vmem:[#allocation7 + $0xc] sm:$0xf]
    %v4573 = vld [vmem:[#allocation7 + $0x10] sm:$0xf]
    %v4574 = vld [vmem:[#allocation7 + $0x14] sm:$0xf]
    %v4575 = vld [vmem:[#allocation7 + $0x18] sm:$0xf]
    %v4576 = vld [vmem:[#allocation7 + $0x1c] sm:$0xf]
    %v4577 = vld [vmem:[#allocation7 + $0x20] sm:$0xf]
    %v4578 = vld [vmem:[#allocation7 + $0x24] sm:$0xf]
    %v4579 = vld [vmem:[#allocation7 + $0x28] sm:$0xf]
    %v4580 = vld [vmem:[#allocation7 + $0x2c] sm:$0xf]
    %v4581 = vld [vmem:[#allocation7 + $0x30] sm:$0xf]
    %v4582 = vld [vmem:[#allocation7 + $0x34] sm:$0xf]
    %v4583 = vld [vmem:[#allocation7 + $0x38] sm:$0xf]
    %v4584 = vld [vmem:[#allocation7 + $0x3c] sm:$0xf]
    %v4585 = vld [vmem:[#allocation7 + $0x40] sm:$0xf]
    %v4586 = vld [vmem:[#allocation7 + $0x44] sm:$0xf]
    %v4587 = vld [vmem:[#allocation7 + $0x48] sm:$0xf]
    %v4588 = vld [vmem:[#allocation7 + $0x4c] sm:$0xf]
    %v4589 = vld [vmem:[#allocation7 + $0x50] sm:$0xf]
    %v4590 = vld [vmem:[#allocation7 + $0x54] sm:$0xf]
    %v4591 = vld [vmem:[#allocation7 + $0x58] sm:$0xf]
    %v4592 = vld [vmem:[#allocation7 + $0x5c] sm:$0xf]
    %v4593 = vld [vmem:[#allocation7 + $0x60] sm:$0xf]
    %v4594 = vld [vmem:[#allocation7 + $0x64] sm:$0xf]
    %v4595 = vld [vmem:[#allocation7 + $0x68] sm:$0xf]
    %v4596 = vld [vmem:[#allocation7 + $0x6c] sm:$0xf]
    %v4597 = vld [vmem:[#allocation7 + $0x70] sm:$0xf]
    %v4598 = vld [vmem:[#allocation7 + $0x74] sm:$0xf]
    %v4599 = vld [vmem:[#allocation7 + $0x78] sm:$0xf]
    %v4600 = vld [vmem:[#allocation7 + $0x7c] sm:$0xf]
    %v4601 = vld [vmem:[#allocation8] sm:$0x1]
    %v4603 = vperm.slane %v4601, 0
    %v4637 = vunpack.c.l.b16 %v4569
    %v4638 = vunpack.c.l.b16 %v4570
    %v4639 = vunpack.c.l.b16 %v4571
    %v4640 = vunpack.c.l.b16 %v4572
    %v4641 = vunpack.c.l.b16 %v4573
    %v4642 = vunpack.c.l.b16 %v4574
    %v4643 = vunpack.c.l.b16 %v4575
    %v4644 = vunpack.c.l.b16 %v4576
    %v4645 = vunpack.c.l.b16 %v4577
    %v4646 = vunpack.c.l.b16 %v4578
    %v4647 = vunpack.c.l.b16 %v4579
    %v4648 = vunpack.c.l.b16 %v4580
    %v4649 = vunpack.c.l.b16 %v4581
    %v4650 = vunpack.c.l.b16 %v4582
    %v4651 = vunpack.c.l.b16 %v4583
    %v4652 = vunpack.c.l.b16 %v4584
    %v4653 = vunpack.c.l.b16 %v4585
    %v4654 = vunpack.c.l.b16 %v4586
    %v4655 = vunpack.c.l.b16 %v4587
    %v4656 = vunpack.c.l.b16 %v4588
    %v4657 = vunpack.c.l.b16 %v4589
    %v4658 = vunpack.c.l.b16 %v4590
    %v4659 = vunpack.c.l.b16 %v4591
    %v4660 = vunpack.c.l.b16 %v4592
    %v4661 = vunpack.c.l.b16 %v4593
    %v4662 = vunpack.c.l.b16 %v4594
    %v4663 = vunpack.c.l.b16 %v4595
    %v4664 = vunpack.c.l.b16 %v4596
    %v4665 = vunpack.c.l.b16 %v4597
    %v4666 = vunpack.c.l.b16 %v4598
    %v4667 = vunpack.c.l.b16 %v4599
    %v4668 = vunpack.c.l.b16 %v4600
    %v4669 = vpack.c.b16 %v4638, %v4637
    %v4670 = vpack.c.b16 %v4640, %v4639
    %v4671 = vpack.c.b16 %v4642, %v4641
    %v4672 = vpack.c.b16 %v4644, %v4643
    %v4673 = vpack.c.b16 %v4646, %v4645
    %v4674 = vpack.c.b16 %v4648, %v4647
    %v4675 = vpack.c.b16 %v4650, %v4649
    %v4676 = vpack.c.b16 %v4652, %v4651
    %v4677 = vpack.c.b16 %v4654, %v4653
    %v4678 = vpack.c.b16 %v4656, %v4655
    %v4679 = vpack.c.b16 %v4658, %v4657
    %v4680 = vpack.c.b16 %v4660, %v4659
    %v4681 = vpack.c.b16 %v4662, %v4661
    %v4682 = vpack.c.b16 %v4664, %v4663
    %v4683 = vpack.c.b16 %v4666, %v4665
    %v4684 = vpack.c.b16 %v4668, %v4667
    %4701 = vmatpush.bf16.msra.mxu0 %v4676
    %4702 = vmatpush.bf16.msra.mxu0 %v4675
    %4703 = vmatpush.bf16.msra.mxu0 %v4674
    %4704 = vmatpush.bf16.msra.mxu0 %v4673
    %4705 = vmatpush.bf16.msra.mxu0 %v4672
    %4706 = vmatpush.bf16.msra.mxu0 %v4671
    %4707 = vmatpush.bf16.msra.mxu0 %v4670
    %4708 = vmatpush.bf16.msra.mxu0 %v4669
    %4709 = vmatmul.bf16.gmra.mxu0 %v4567
    %v4710 = vpop.f32.mrf.mxu0
    %v4711 = vadd.f32 %v4603, %v4710
    %v4712 = vpop.f32.mrf.mxu0
    %4713 = vdwg.mxu0
    %4714 = vmatpush.bf16.msra.mxu0 %v4684
    %4715 = vmatpush.bf16.msra.mxu0 %v4683
    %4716 = vmatpush.bf16.msra.mxu0 %v4682
    %4717 = vmatpush.bf16.msra.mxu0 %v4681
    %4718 = vmatpush.bf16.msra.mxu0 %v4680
    %4719 = vmatpush.bf16.msra.mxu0 %v4679
    %4720 = vmatpush.bf16.msra.mxu0 %v4678
    %4721 = vmatpush.bf16.msra.mxu0 %v4677
    %4722 = vmatmul.bf16.gmra.mxu0 %v4568
    %v4723 = vpop.f32.mrf.mxu0
    %v4724 = vadd.f32 %v4711, %v4723
    %v4725 = vpop.f32.mrf.mxu0
    %4726 = vdwg.mxu0
    %4727 = vst [vmem:[#allocation10] sm:$0x3] %v4724
    // Predicated region
    $region38: #{simple_cnn_forward.5} parent=1 // pred_check
      _
    $region39: #{simple_cnn_forward.5} parent=1 // pred_check_branch
      %4729 = sbr.rel (0) target = $region41
    $region40: #{simple_cnn_forward.5} parent=1 // pred_region
      %4731 = vsyncadd [#allocation4], 0
      %s4733 = sshll.u32 [#allocation10], 4
      %s4734 = int_to_ptr.vmem [resolvable:$true] %s4733
      %s4735 = sshll.u32 %s5, 4
      %s4736 = int_to_ptr.hbm [resolvable:$true] %s4735
      %4738 = dma.vmem_to_hbm [thread:$0]  %s4734, 32, %s4736, [#allocation4]
    $region41: #{simple_cnn_forward.5} parent=1 // pred_fallthru
      _
    // Predicated region
    $region42: #{simple_cnn_forward.5} parent=1 // pred_check
      _
    $region43: #{simple_cnn_forward.5} parent=1 // pred_check_branch
      %4740 = sbr.rel (0) target = $region45
    $region44: #{simple_cnn_forward.5} parent=1 // pred_region
      %4742 = dma.done [#allocation4], 32
    $region45: #{simple_cnn_forward.5} parent=1 // pred_fallthru
      _
    %4743 = vsyncpa [#allocation3], 1
    %4744 = vsyncpa [#allocation6], 1
    %4745 = vsyncpa [#allocation9], 1
    %4746 = vsyncpa [#allocation4], 1

</llo_original>
